<compile_context>
chip_gen: v7x
topology: tpu7x:2x2x1
jax: 0.10.0
libtpu: 0.0.40
codegen_flags: <defaults>
</compile_context>

<pallas_src>
import numpy as np
import jax
import jax.numpy as jnp
from jax.experimental import pallas as pl
from jax.experimental.pallas import tpu as pltpu


# ----------------------------------------------------------------------------
# In-kernel helpers (operate on loaded jnp values + weight Refs)
# ----------------------------------------------------------------------------
def _conv3(x, w_ref):
    """Conv1d(kernel=3, padding=1), PyTorch cross-correlation, bias elided.

    x: [B, L, Ci] value; w_ref: [3*Ci, Co] packed (tap-major) weight ref,
    row k*Ci+ci == W_torch[co, ci, k].  Single MXU matmul with K = 3*Ci over
    the flattened [B*L, 3*Ci] taps.
    """
    B, L, C = x.shape
    z = jnp.zeros((B, 1, C), jnp.float32)
    xm1 = jnp.concatenate([z, x[:, : L - 1, :]], axis=1)     # tap at x[l-1]
    xp1 = jnp.concatenate([x[:, 1:, :], z], axis=1)          # tap at x[l+1]
    taps = jnp.concatenate([xm1, x, xp1], axis=-1)           # [B, L, 3*Ci]
    w = w_ref[...]
    y = jnp.dot(taps.reshape(B * L, 3 * C), w, preferred_element_type=jnp.float32)
    return y.reshape(B, L, w.shape[-1])


def _matmul2d(x, w_ref):
    """1x1 conv: [B, L, Ci] @ [Ci, Co] -> [B, L, Co] as one flat 2-D MXU op."""
    B, L, C = x.shape
    w = w_ref[...]
    y = jnp.dot(x.reshape(B * L, C), w, preferred_element_type=jnp.float32)
    return y.reshape(B, L, w.shape[-1])


def _bn_scale_shift(h, g_ref, b_ref, eps=1e-5):
    """Training-mode BatchNorm1d over (B, L), biased variance, single pass,
    folded into one per-channel (scale, shift) pair."""
    inv_n = 1.0 / (h.shape[0] * h.shape[1])
    s = jnp.sum(h, axis=(0, 1), keepdims=True)
    ss = jnp.sum(h * h, axis=(0, 1), keepdims=True)
    mean = s * inv_n
    var = jnp.maximum(ss * inv_n - mean * mean, 0.0)
    scale = jax.lax.rsqrt(var + eps) * g_ref[...][None]      # [1, 1, C]
    shift = b_ref[...][None] - mean * scale                  # [1, 1, C]
    return scale, shift


def _resample(x, m_ref):
    """Apply a constant L-resampling matrix: [B, Lin, C] -> [B, Lout, C].

    AvgPool1d(2) / Upsample(x2, linear, align_corners=False) as small per-batch
    MXU matmuls; x[b] is a free leading-axis slice (no lane-level transposes).
    """
    m = m_ref[...]
    return jnp.stack(
        [jnp.dot(m, x[b], preferred_element_type=jnp.float32)
         for b in range(x.shape[0])],
        axis=0,
    )


def _unet_block(xs, t_emb, p):
    """UNetBlock on the (virtual) channel-concat of `xs`.

    The concat is never built: conv1 / residual weights are pre-split per part.
    """
    # time_mlp + ReLU, broadcast over L
    te = jnp.dot(t_emb, p["time_w"][...], preferred_element_type=jnp.float32)
    te = jnp.maximum(te + p["time_b"][...], 0.0)             # [B, Co]

    # conv1 -> bn1 -> +time -> relu   (conv bias cancels through train-mode BN)
    h = _conv3(xs[0], p["conv1_w"][0])
    for k in range(1, len(xs)):
        h = h + _conv3(xs[k], p["conv1_w"][k])
    sc1, sh1 = _bn_scale_shift(h, p["bn1_g"], p["bn1_b"])
    h = jnp.maximum(h * sc1 + (sh1 + te[:, None, :]), 0.0)   # fused bn+time+relu

    # conv2 -> bn2 -> relu            (conv bias cancels through train-mode BN)
    h = _conv3(h, p["conv2_w"])
    sc2, sh2 = _bn_scale_shift(h, p["bn2_g"], p["bn2_b"])
    h = jnp.maximum(h * sc2 + sh2, 0.0)

    # residual: 1x1 conv when Cin != Cout, else nn.Identity (no matmul at all)
    if "res_w" in p:
        res = p["res_b"][...][None]
        for k in range(len(xs)):
            res = res + _matmul2d(xs[k], p["res_w"][k])
    else:
        res = xs[0]
    return h + res


# ----------------------------------------------------------------------------
# Constant resampling matrices (built on host, passed as kernel operands)
# ----------------------------------------------------------------------------
def _avgpool_matrix(lin):
    m = np.zeros((lin // 2, lin), np.float32)
    idx = np.arange(lin // 2)
    m[idx, 2 * idx] = 0.5
    m[idx, 2 * idx + 1] = 0.5
    return jnp.asarray(m)


def _upsample_matrix(lin):
    """nn.Upsample(scale_factor=2, mode='linear', align_corners=False)."""
    lout = 2 * lin
    m = np.zeros((lout, lin), np.float32)
    for j in range(lout):
        src = min(max((j + 0.5) / 2.0 - 0.5, 0.0), float(lin - 1))
        lo = int(np.floor(src))
        hi = min(lo + 1, lin - 1)
        f = src - lo
        m[j, lo] += 1.0 - f
        m[j, hi] += f
    return jnp.asarray(m)


# ----------------------------------------------------------------------------
# Fused forward: one pallas_call for the entire model
# ----------------------------------------------------------------------------
def diffusion_forward(params, x, t):
    """x: [B, L] float32, t: [B] float32  ->  [B, L] float32."""
    B, L = x.shape
    ops = {
        "p": params,
        "rs": dict(
            pool_l=_avgpool_matrix(L),           # L   -> L/2
            pool_l2=_avgpool_matrix(L // 2),     # L/2 -> L/4
            up_l4=_upsample_matrix(L // 4),      # L/4 -> L/2
            up_l2=_upsample_matrix(L // 2),      # L/2 -> L
        ),
    }
    leaves, treedef = jax.tree_util.tree_flatten(ops)

    def kernel(x_ref, t_ref, *rest):
        o_ref = rest[-1]
        tree = jax.tree_util.tree_unflatten(treedef, rest[:-1])
        p, rs = tree["p"], tree["rs"]

        # --- time embedding: Linear(1,T) on the VPU (K=1) -> SiLU -> Linear(T,T)
        t_in = t_ref[...]                                    # [B, 1]
        tm = p["time_mlp"]
        ht = t_in * tm["w1"][...] + tm["b1"][...]            # [B, T]
        ht = ht * (1.0 / (1.0 + jnp.exp(-ht)))               # SiLU (EUP exp)
        t_emb = jnp.dot(ht, tm["w2"][...], preferred_element_type=jnp.float32)
        t_emb = t_emb + tm["b2"][...]                        # [B, T]

        # --- input projection: Conv1d(1, H, k=1) == VPU broadcast mul-add
        xin = x_ref[...]                                     # [B, L, 1]
        h = xin * p["in_w"][...][None] + p["in_b"][...][None]    # [B, L, H]

        # --- UNet
        h1 = _unet_block([h], t_emb, p["down1"])                            # [B, L,   H]
        h2 = _unet_block([_resample(h1, rs["pool_l"])], t_emb, p["down2"])  # [B, L/2, 2H]
        # TODO(synk): reference forward has a shape bug at torch.cat([h, h2]);
        # extra downsample inserted before mid1 (see header note).
        hm = _unet_block([_resample(h2, rs["pool_l2"])], t_emb, p["mid1"])  # [B, L/4, 2H]
        hm = _unet_block([hm], t_emb, p["mid2"])                            # [B, L/4, 2H]
        hm = _resample(hm, rs["up_l4"])                                     # [B, L/2, 2H]
        hm = _unet_block([hm, h2], t_emb, p["up1"])                         # [B, L/2, H]
        hm = _resample(hm, rs["up_l2"])                                     # [B, L,   H]
        hm = _unet_block([hm, h1], t_emb, p["up2"])                         # [B, L,   H]

        # --- output projection: Conv1d(H, 1, k=1) as a VPU/XLU lane-reduce
        out = jnp.sum(hm * p["out_w"][...][None], axis=-1) + p["out_b"][...]
        o_ref[...] = out                                     # lane-dense [B, L]

    vmem = pl.BlockSpec(memory_space=pltpu.MemorySpace.VMEM)
    return pl.pallas_call(
        kernel,
        out_shape=jax.ShapeDtypeStruct((B, L), jnp.float32),
        in_specs=[vmem] * (2 + len(leaves)),
        out_specs=vmem,
    )(x[:, :, None], t[:, None], *leaves)


# ----------------------------------------------------------------------------
# Parameter construction (deterministic, shapes per the PyTorch __init__)
# ----------------------------------------------------------------------------
def _pack3(w3):
    """[3, Ci, Co] -> [3*Ci, Co], tap-major (matches the in-kernel tap concat)."""
    return w3.reshape(3 * w3.shape[1], w3.shape[2])


def _make_block_params(key, cins, cout, tdim):
    cin = int(sum(cins))
    ks = jax.random.split(key, 4)
    w1 = jax.random.normal(ks[1], (3, cin, cout), jnp.float32) / np.sqrt(3.0 * cin)
    w2 = jax.random.normal(ks[2], (3, cout, cout), jnp.float32) / np.sqrt(3.0 * cout)
    offs = np.cumsum([0] + list(cins))
    # NOTE: conv1/conv2 biases are omitted on purpose — a per-channel constant
    # added before a training-mode BatchNorm is absorbed into the batch mean
    # and cancels exactly, so carrying/adding them is pure overhead.
    p = dict(
        time_w=jax.random.normal(ks[0], (tdim, cout), jnp.float32) * 0.1,
        time_b=jnp.zeros((1, cout), jnp.float32),
        # conv1 weights pre-split per input part -> skip concat never built.
        conv1_w=tuple(
            _pack3(w1[:, offs[k]:offs[k + 1], :]) for k in range(len(cins))
        ),
        bn1_g=jnp.ones((1, cout), jnp.float32),
        bn1_b=jnp.zeros((1, cout), jnp.float32),
        conv2_w=_pack3(w2),
        bn2_g=jnp.ones((1, cout), jnp.float32),
        bn2_b=jnp.zeros((1, cout), jnp.float32),
    )
    if cin != cout:  # 1x1-conv residual; otherwise nn.Identity (no params)
        wr = jax.random.normal(ks[3], (cin, cout), jnp.float32) / np.sqrt(cin)
        p["res_w"] = tuple(wr[offs[k]:offs[k + 1], :] for k in range(len(cins)))
        p["res_b"] = jnp.zeros((1, cout), jnp.float32)
    return p


def init_params(key, hidden_dim=32, time_emb_dim=32):
    ks = jax.random.split(key, 10)
    H, T = hidden_dim, time_emb_dim
    return dict(
        time_mlp=dict(
            w1=jax.random.normal(ks[0], (1, T), jnp.float32) * 0.5,
            b1=jnp.zeros((1, T), jnp.float32),
            w2=jax.random.normal(ks[1], (T, T), jnp.float32) / np.sqrt(T),
            b2=jnp.zeros((1, T), jnp.float32),
        ),
        in_w=jax.random.normal(ks[2], (1, H), jnp.float32),
        in_b=jnp.zeros((1, H), jnp.float32),
        down1=_make_block_params(ks[3], (H,), H, T),
        down2=_make_block_params(ks[4], (H,), 2 * H, T),
        mid1=_make_block_params(ks[5], (2 * H,), 2 * H, T),
        mid2=_make_block_params(ks[6], (2 * H,), 2 * H, T),
        up1=_make_block_params(ks[7], (2 * H, 2 * H), H, T),
        up2=_make_block_params(ks[8], (H, H), H, T),
        out_w=jax.random.normal(ks[9], (1, H), jnp.float32) / np.sqrt(H),
        out_b=jnp.zeros((1, 1), jnp.float32),
    )


# ----------------------------------------------------------------------------
if __name__ == "__main__":
    B, L, H, T = 2, 32, 32, 32

    key = jax.random.PRNGKey(0)
    k_params, k_x, k_t = jax.random.split(key, 3)

    params = init_params(k_params, hidden_dim=H, time_emb_dim=T)
    x = jax.random.normal(k_x, (B, L), jnp.float32)
    t = jax.random.uniform(k_t, (B,), jnp.float32)

    fwd = jax.jit(diffusion_forward)
    out = jax.block_until_ready(fwd(params, x, t))

    assert out.shape == (B, L), out.shape
    assert bool(jnp.all(jnp.isfinite(out)))
    print("KERNEL_OK")
</pallas_src>

<mosaic_0001>
module attributes {stable_mosaic.version = 11 : i64} {
  func.func @kernel(%arg0: memref<2x32x1xf32, #tpu.memory_space<vmem>>, %arg1: memref<2x1xf32, #tpu.memory_space<vmem>>, %arg2: memref<1x32xf32, #tpu.memory_space<vmem>>, %arg3: memref<1x32xf32, #tpu.memory_space<vmem>>, %arg4: memref<1x32xf32, #tpu.memory_space<vmem>>, %arg5: memref<1x32xf32, #tpu.memory_space<vmem>>, %arg6: memref<96x32xf32, #tpu.memory_space<vmem>>, %arg7: memref<96x32xf32, #tpu.memory_space<vmem>>, %arg8: memref<1x32xf32, #tpu.memory_space<vmem>>, %arg9: memref<32x32xf32, #tpu.memory_space<vmem>>, %arg10: memref<1x64xf32, #tpu.memory_space<vmem>>, %arg11: memref<1x64xf32, #tpu.memory_space<vmem>>, %arg12: memref<1x64xf32, #tpu.memory_space<vmem>>, %arg13: memref<1x64xf32, #tpu.memory_space<vmem>>, %arg14: memref<96x64xf32, #tpu.memory_space<vmem>>, %arg15: memref<192x64xf32, #tpu.memory_space<vmem>>, %arg16: memref<1x64xf32, #tpu.memory_space<vmem>>, %arg17: memref<32x64xf32, #tpu.memory_space<vmem>>, %arg18: memref<1x64xf32, #tpu.memory_space<vmem>>, %arg19: memref<32x64xf32, #tpu.memory_space<vmem>>, %arg20: memref<1x32xf32, #tpu.memory_space<vmem>>, %arg21: memref<1x32xf32, #tpu.memory_space<vmem>>, %arg22: memref<1x64xf32, #tpu.memory_space<vmem>>, %arg23: memref<1x64xf32, #tpu.memory_space<vmem>>, %arg24: memref<1x64xf32, #tpu.memory_space<vmem>>, %arg25: memref<1x64xf32, #tpu.memory_space<vmem>>, %arg26: memref<192x64xf32, #tpu.memory_space<vmem>>, %arg27: memref<192x64xf32, #tpu.memory_space<vmem>>, %arg28: memref<1x64xf32, #tpu.memory_space<vmem>>, %arg29: memref<32x64xf32, #tpu.memory_space<vmem>>, %arg30: memref<1x64xf32, #tpu.memory_space<vmem>>, %arg31: memref<1x64xf32, #tpu.memory_space<vmem>>, %arg32: memref<1x64xf32, #tpu.memory_space<vmem>>, %arg33: memref<1x64xf32, #tpu.memory_space<vmem>>, %arg34: memref<192x64xf32, #tpu.memory_space<vmem>>, %arg35: memref<192x64xf32, #tpu.memory_space<vmem>>, %arg36: memref<1x64xf32, #tpu.memory_space<vmem>>, %arg37: memref<32x64xf32, #tpu.memory_space<vmem>>, %arg38: memref<1x1xf32, #tpu.memory_space<vmem>>, %arg39: memref<1x32xf32, #tpu.memory_space<vmem>>, %arg40: memref<1x32xf32, #tpu.memory_space<vmem>>, %arg41: memref<1x32xf32, #tpu.memory_space<vmem>>, %arg42: memref<1x32xf32, #tpu.memory_space<vmem>>, %arg43: memref<32x32xf32, #tpu.memory_space<vmem>>, %arg44: memref<1x32xf32, #tpu.memory_space<vmem>>, %arg45: memref<1x32xf32, #tpu.memory_space<vmem>>, %arg46: memref<1x32xf32, #tpu.memory_space<vmem>>, %arg47: memref<1x32xf32, #tpu.memory_space<vmem>>, %arg48: memref<192x32xf32, #tpu.memory_space<vmem>>, %arg49: memref<192x32xf32, #tpu.memory_space<vmem>>, %arg50: memref<96x32xf32, #tpu.memory_space<vmem>>, %arg51: memref<1x32xf32, #tpu.memory_space<vmem>>, %arg52: memref<64x32xf32, #tpu.memory_space<vmem>>, %arg53: memref<64x32xf32, #tpu.memory_space<vmem>>, %arg54: memref<1x32xf32, #tpu.memory_space<vmem>>, %arg55: memref<32x32xf32, #tpu.memory_space<vmem>>, %arg56: memref<1x32xf32, #tpu.memory_space<vmem>>, %arg57: memref<1x32xf32, #tpu.memory_space<vmem>>, %arg58: memref<1x32xf32, #tpu.memory_space<vmem>>, %arg59: memref<1x32xf32, #tpu.memory_space<vmem>>, %arg60: memref<96x32xf32, #tpu.memory_space<vmem>>, %arg61: memref<96x32xf32, #tpu.memory_space<vmem>>, %arg62: memref<96x32xf32, #tpu.memory_space<vmem>>, %arg63: memref<1x32xf32, #tpu.memory_space<vmem>>, %arg64: memref<32x32xf32, #tpu.memory_space<vmem>>, %arg65: memref<32x32xf32, #tpu.memory_space<vmem>>, %arg66: memref<1x32xf32, #tpu.memory_space<vmem>>, %arg67: memref<32x32xf32, #tpu.memory_space<vmem>>, %arg68: memref<16x32xf32, #tpu.memory_space<vmem>>, %arg69: memref<8x16xf32, #tpu.memory_space<vmem>>, %arg70: memref<32x16xf32, #tpu.memory_space<vmem>>, %arg71: memref<16x8xf32, #tpu.memory_space<vmem>>, %arg72: memref<2x32xf32, #tpu.memory_space<vmem>>) attributes {dimension_semantics = [], scalar_prefetch = 0 : i64, scratch_operands = 0 : i64, tpu.core_type = #tpu.core_type<tc>} {
    %c0 = arith.constant 0 : index
    %c0_0 = arith.constant 0 : index
    %0 = vector.load %arg1[%c0, %c0_0] : memref<2x1xf32, #tpu.memory_space<vmem>>, vector<2x1xf32>
    %c0_1 = arith.constant 0 : index
    %c0_2 = arith.constant 0 : index
    %1 = vector.load %arg42[%c0_1, %c0_2] : memref<1x32xf32, #tpu.memory_space<vmem>>, vector<1x32xf32>
    %2 = vector.broadcast %0 : vector<2x1xf32> to vector<2x32xf32>
    %3 = vector.broadcast %1 : vector<1x32xf32> to vector<2x32xf32>
    %4 = arith.mulf %2, %3 : vector<2x32xf32>
    %c0_3 = arith.constant 0 : index
    %c0_4 = arith.constant 0 : index
    %5 = vector.load %arg40[%c0_3, %c0_4] : memref<1x32xf32, #tpu.memory_space<vmem>>, vector<1x32xf32>
    %6 = vector.broadcast %5 : vector<1x32xf32> to vector<2x32xf32>
    %7 = arith.addf %4, %6 : vector<2x32xf32>
    %cst = arith.constant 0.000000e+00 : f32
    %8 = vector.broadcast %cst : f32 to vector<2x32xf32>
    %9 = arith.subf %8, %7 : vector<2x32xf32>
    %10 = math.exp %9 : vector<2x32xf32>
    %cst_5 = arith.constant 1.000000e+00 : f32
    %11 = vector.broadcast %cst_5 : f32 to vector<2x32xf32>
    %12 = arith.addf %11, %10 : vector<2x32xf32>
    %cst_6 = arith.constant 1.000000e+00 : f32
    %13 = vector.broadcast %cst_6 : f32 to vector<2x32xf32>
    %14 = arith.divf %13, %12 : vector<2x32xf32>
    %15 = arith.mulf %7, %14 : vector<2x32xf32>
    %c0_7 = arith.constant 0 : index
    %c0_8 = arith.constant 0 : index
    %16 = vector.load %arg43[%c0_7, %c0_8] : memref<32x32xf32, #tpu.memory_space<vmem>>, vector<32x32xf32>
    %cst_9 = arith.constant dense<0.000000e+00> : vector<2x32xf32>
    %17 = tpu.matmul %15, %16, %cst_9 {dimension_numbers = #tpu.dot_dimension_numbers<[1], [0], [0], [1], [0, 0, 1, 1], [], []>} : vector<2x32xf32>, vector<32x32xf32>, vector<2x32xf32> -> vector<2x32xf32>
    %c0_10 = arith.constant 0 : index
    %c0_11 = arith.constant 0 : index
    %18 = vector.load %arg41[%c0_10, %c0_11] : memref<1x32xf32, #tpu.memory_space<vmem>>, vector<1x32xf32>
    %19 = vector.broadcast %18 : vector<1x32xf32> to vector<2x32xf32>
    %20 = arith.addf %17, %19 : vector<2x32xf32>
    %c0_12 = arith.constant 0 : index
    %c0_13 = arith.constant 0 : index
    %c0_14 = arith.constant 0 : index
    %21 = vector.load %arg0[%c0_12, %c0_13, %c0_14] : memref<2x32x1xf32, #tpu.memory_space<vmem>>, vector<2x32x1xf32>
    %c0_15 = arith.constant 0 : index
    %c0_16 = arith.constant 0 : index
    %22 = vector.load %arg21[%c0_15, %c0_16] : memref<1x32xf32, #tpu.memory_space<vmem>>, vector<1x32xf32>
    %23 = vector.shape_cast %22 : vector<1x32xf32> to vector<1x1x32xf32>
    %24 = vector.broadcast %21 : vector<2x32x1xf32> to vector<2x32x32xf32>
    %25 = vector.broadcast %23 : vector<1x1x32xf32> to vector<2x32x32xf32>
    %26 = arith.mulf %24, %25 : vector<2x32x32xf32>
    %c0_17 = arith.constant 0 : index
    %c0_18 = arith.constant 0 : index
    %27 = vector.load %arg20[%c0_17, %c0_18] : memref<1x32xf32, #tpu.memory_space<vmem>>, vector<1x32xf32>
    %28 = vector.shape_cast %27 : vector<1x32xf32> to vector<1x1x32xf32>
    %29 = vector.broadcast %28 : vector<1x1x32xf32> to vector<2x32x32xf32>
    %30 = arith.addf %26, %29 : vector<2x32x32xf32>
    %c0_19 = arith.constant 0 : index
    %c0_20 = arith.constant 0 : index
    %31 = vector.load %arg9[%c0_19, %c0_20] : memref<32x32xf32, #tpu.memory_space<vmem>>, vector<32x32xf32>
    %cst_21 = arith.constant dense<0.000000e+00> : vector<2x32xf32>
    %32 = tpu.matmul %20, %31, %cst_21 {dimension_numbers = #tpu.dot_dimension_numbers<[1], [0], [0], [1], [0, 0, 1, 1], [], []>} : vector<2x32xf32>, vector<32x32xf32>, vector<2x32xf32> -> vector<2x32xf32>
    %c0_22 = arith.constant 0 : index
    %c0_23 = arith.constant 0 : index
    %33 = vector.load %arg8[%c0_22, %c0_23] : memref<1x32xf32, #tpu.memory_space<vmem>>, vector<1x32xf32>
    %34 = vector.broadcast %33 : vector<1x32xf32> to vector<2x32xf32>
    %35 = arith.addf %32, %34 : vector<2x32xf32>
    %cst_24 = arith.constant 0.000000e+00 : f32
    %36 = vector.broadcast %cst_24 : f32 to vector<2x32xf32>
    %37 = arith.maximumf %35, %36 : vector<2x32xf32>
    %cst_25 = arith.constant 0.000000e+00 : f32
    %38 = vector.broadcast %cst_25 : f32 to vector<2x1x32xf32>
    %39 = vector.extract_strided_slice %30 {offsets = [0, 0, 0], sizes = [2, 31, 32], strides = [1, 1, 1]} : vector<2x32x32xf32> to vector<2x31x32xf32>
    %40 = tpu.concatenate %38, %39 in 1 : vector<2x1x32xf32>, vector<2x31x32xf32> -> vector<2x32x32xf32>
    %41 = vector.extract_strided_slice %30 {offsets = [0, 1, 0], sizes = [2, 31, 32], strides = [1, 1, 1]} : vector<2x32x32xf32> to vector<2x31x32xf32>
    %42 = tpu.concatenate %41, %38 in 1 : vector<2x31x32xf32>, vector<2x1x32xf32> -> vector<2x32x32xf32>
    %43 = tpu.concatenate %40, %30, %42 in 2 : vector<2x32x32xf32>, vector<2x32x32xf32>, vector<2x32x32xf32> -> vector<2x32x96xf32>
    %c0_26 = arith.constant 0 : index
    %c0_27 = arith.constant 0 : index
    %44 = vector.load %arg6[%c0_26, %c0_27] : memref<96x32xf32, #tpu.memory_space<vmem>>, vector<96x32xf32>
    %45 = vector.shape_cast %43 : vector<2x32x96xf32> to vector<64x96xf32>
    %cst_28 = arith.constant dense<0.000000e+00> : vector<64x32xf32>
    %46 = tpu.matmul %45, %44, %cst_28 {dimension_numbers = #tpu.dot_dimension_numbers<[1], [0], [0], [1], [0, 0, 1, 1], [], []>} : vector<64x96xf32>, vector<96x32xf32>, vector<64x32xf32> -> vector<64x32xf32>
    %47 = vector.shape_cast %46 : vector<64x32xf32> to vector<2x32x32xf32>
    %cst_29 = arith.constant dense<0.000000e+00> : vector<32xf32>
    %48 = vector.multi_reduction <add>, %47, %cst_29 [0, 1] : vector<2x32x32xf32> to vector<32xf32>
    %49 = vector.shape_cast %48 : vector<32xf32> to vector<1x1x32xf32>
    %50 = arith.mulf %47, %47 : vector<2x32x32xf32>
    %cst_30 = arith.constant dense<0.000000e+00> : vector<32xf32>
    %51 = vector.multi_reduction <add>, %50, %cst_30 [0, 1] : vector<2x32x32xf32> to vector<32xf32>
    %52 = vector.shape_cast %51 : vector<32xf32> to vector<1x1x32xf32>
    %cst_31 = arith.constant 1.562500e-02 : f32
    %53 = vector.broadcast %cst_31 : f32 to vector<1x1x32xf32>
    %54 = arith.mulf %49, %53 : vector<1x1x32xf32>
    %cst_32 = arith.constant 1.562500e-02 : f32
    %55 = vector.broadcast %cst_32 : f32 to vector<1x1x32xf32>
    %56 = arith.mulf %52, %55 : vector<1x1x32xf32>
    %57 = arith.mulf %54, %54 : vector<1x1x32xf32>
    %58 = arith.subf %56, %57 : vector<1x1x32xf32>
    %cst_33 = arith.constant 0.000000e+00 : f32
    %59 = vector.broadcast %cst_33 : f32 to vector<1x1x32xf32>
    %60 = arith.maximumf %58, %59 : vector<1x1x32xf32>
    %cst_34 = arith.constant 9.99999974E-6 : f32
    %61 = vector.broadcast %cst_34 : f32 to vector<1x1x32xf32>
    %62 = arith.addf %60, %61 : vector<1x1x32xf32>
    %63 = math.rsqrt %62 : vector<1x1x32xf32>
    %c0_35 = arith.constant 0 : index
    %c0_36 = arith.constant 0 : index
    %64 = vector.load %arg3[%c0_35, %c0_36] : memref<1x32xf32, #tpu.memory_space<vmem>>, vector<1x32xf32>
    %65 = vector.shape_cast %64 : vector<1x32xf32> to vector<1x1x32xf32>
    %66 = arith.mulf %63, %65 : vector<1x1x32xf32>
    %c0_37 = arith.constant 0 : index
    %c0_38 = arith.constant 0 : index
    %67 = vector.load %arg2[%c0_37, %c0_38] : memref<1x32xf32, #tpu.memory_space<vmem>>, vector<1x32xf32>
    %68 = vector.shape_cast %67 : vector<1x32xf32> to vector<1x1x32xf32>
    %69 = arith.mulf %54, %66 : vector<1x1x32xf32>
    %70 = arith.subf %68, %69 : vector<1x1x32xf32>
    %71 = vector.broadcast %66 : vector<1x1x32xf32> to vector<2x32x32xf32>
    %72 = arith.mulf %47, %71 : vector<2x32x32xf32>
    %73 = vector.shape_cast %37 : vector<2x32xf32> to vector<2x1x32xf32>
    %74 = vector.broadcast %70 : vector<1x1x32xf32> to vector<2x1x32xf32>
    %75 = arith.addf %74, %73 : vector<2x1x32xf32>
    %76 = vector.broadcast %75 : vector<2x1x32xf32> to vector<2x32x32xf32>
    %77 = arith.addf %72, %76 : vector<2x32x32xf32>
    %cst_39 = arith.constant 0.000000e+00 : f32
    %78 = vector.broadcast %cst_39 : f32 to vector<2x32x32xf32>
    %79 = arith.maximumf %77, %78 : vector<2x32x32xf32>
    %cst_40 = arith.constant 0.000000e+00 : f32
    %80 = vector.broadcast %cst_40 : f32 to vector<2x1x32xf32>
    %81 = vector.extract_strided_slice %79 {offsets = [0, 0, 0], sizes = [2, 31, 32], strides = [1, 1, 1]} : vector<2x32x32xf32> to vector<2x31x32xf32>
    %82 = tpu.concatenate %80, %81 in 1 : vector<2x1x32xf32>, vector<2x31x32xf32> -> vector<2x32x32xf32>
    %83 = vector.extract_strided_slice %79 {offsets = [0, 1, 0], sizes = [2, 31, 32], strides = [1, 1, 1]} : vector<2x32x32xf32> to vector<2x31x32xf32>
    %84 = tpu.concatenate %83, %80 in 1 : vector<2x31x32xf32>, vector<2x1x32xf32> -> vector<2x32x32xf32>
    %85 = tpu.concatenate %82, %79, %84 in 2 : vector<2x32x32xf32>, vector<2x32x32xf32>, vector<2x32x32xf32> -> vector<2x32x96xf32>
    %c0_41 = arith.constant 0 : index
    %c0_42 = arith.constant 0 : index
    %86 = vector.load %arg7[%c0_41, %c0_42] : memref<96x32xf32, #tpu.memory_space<vmem>>, vector<96x32xf32>
    %87 = vector.shape_cast %85 : vector<2x32x96xf32> to vector<64x96xf32>
    %cst_43 = arith.constant dense<0.000000e+00> : vector<64x32xf32>
    %88 = tpu.matmul %87, %86, %cst_43 {dimension_numbers = #tpu.dot_dimension_numbers<[1], [0], [0], [1], [0, 0, 1, 1], [], []>} : vector<64x96xf32>, vector<96x32xf32>, vector<64x32xf32> -> vector<64x32xf32>
    %89 = vector.shape_cast %88 : vector<64x32xf32> to vector<2x32x32xf32>
    %cst_44 = arith.constant dense<0.000000e+00> : vector<32xf32>
    %90 = vector.multi_reduction <add>, %89, %cst_44 [0, 1] : vector<2x32x32xf32> to vector<32xf32>
    %91 = vector.shape_cast %90 : vector<32xf32> to vector<1x1x32xf32>
    %92 = arith.mulf %89, %89 : vector<2x32x32xf32>
    %cst_45 = arith.constant dense<0.000000e+00> : vector<32xf32>
    %93 = vector.multi_reduction <add>, %92, %cst_45 [0, 1] : vector<2x32x32xf32> to vector<32xf32>
    %94 = vector.shape_cast %93 : vector<32xf32> to vector<1x1x32xf32>
    %cst_46 = arith.constant 1.562500e-02 : f32
    %95 = vector.broadcast %cst_46 : f32 to vector<1x1x32xf32>
    %96 = arith.mulf %91, %95 : vector<1x1x32xf32>
    %cst_47 = arith.constant 1.562500e-02 : f32
    %97 = vector.broadcast %cst_47 : f32 to vector<1x1x32xf32>
    %98 = arith.mulf %94, %97 : vector<1x1x32xf32>
    %99 = arith.mulf %96, %96 : vector<1x1x32xf32>
    %100 = arith.subf %98, %99 : vector<1x1x32xf32>
    %cst_48 = arith.constant 0.000000e+00 : f32
    %101 = vector.broadcast %cst_48 : f32 to vector<1x1x32xf32>
    %102 = arith.maximumf %100, %101 : vector<1x1x32xf32>
    %cst_49 = arith.constant 9.99999974E-6 : f32
    %103 = vector.broadcast %cst_49 : f32 to vector<1x1x32xf32>
    %104 = arith.addf %102, %103 : vector<1x1x32xf32>
    %105 = math.rsqrt %104 : vector<1x1x32xf32>
    %c0_50 = arith.constant 0 : index
    %c0_51 = arith.constant 0 : index
    %106 = vector.load %arg5[%c0_50, %c0_51] : memref<1x32xf32, #tpu.memory_space<vmem>>, vector<1x32xf32>
    %107 = vector.shape_cast %106 : vector<1x32xf32> to vector<1x1x32xf32>
    %108 = arith.mulf %105, %107 : vector<1x1x32xf32>
    %c0_52 = arith.constant 0 : index
    %c0_53 = arith.constant 0 : index
    %109 = vector.load %arg4[%c0_52, %c0_53] : memref<1x32xf32, #tpu.memory_space<vmem>>, vector<1x32xf32>
    %110 = vector.shape_cast %109 : vector<1x32xf32> to vector<1x1x32xf32>
    %111 = arith.mulf %96, %108 : vector<1x1x32xf32>
    %112 = arith.subf %110, %111 : vector<1x1x32xf32>
    %113 = vector.broadcast %108 : vector<1x1x32xf32> to vector<2x32x32xf32>
    %114 = arith.mulf %89, %113 : vector<2x32x32xf32>
    %115 = vector.broadcast %112 : vector<1x1x32xf32> to vector<2x32x32xf32>
    %116 = arith.addf %114, %115 : vector<2x32x32xf32>
    %cst_54 = arith.constant 0.000000e+00 : f32
    %117 = vector.broadcast %cst_54 : f32 to vector<2x32x32xf32>
    %118 = arith.maximumf %116, %117 : vector<2x32x32xf32>
    %119 = arith.addf %118, %30 : vector<2x32x32xf32>
    %c0_55 = arith.constant 0 : index
    %c0_56 = arith.constant 0 : index
    %120 = vector.load %arg68[%c0_55, %c0_56] : memref<16x32xf32, #tpu.memory_space<vmem>>, vector<16x32xf32>
    %121 = vector.extract_strided_slice %119 {offsets = [0, 0, 0], sizes = [1, 32, 32], strides = [1, 1, 1]} : vector<2x32x32xf32> to vector<1x32x32xf32>
    %122 = vector.shape_cast %121 : vector<1x32x32xf32> to vector<32x32xf32>
    %cst_57 = arith.constant dense<0.000000e+00> : vector<16x32xf32>
    %123 = tpu.matmul %120, %122, %cst_57 {dimension_numbers = #tpu.dot_dimension_numbers<[1], [0], [0], [1], [0, 0, 1, 1], [], []>} : vector<16x32xf32>, vector<32x32xf32>, vector<16x32xf32> -> vector<16x32xf32>
    %124 = vector.extract_strided_slice %119 {offsets = [1, 0, 0], sizes = [1, 32, 32], strides = [1, 1, 1]} : vector<2x32x32xf32> to vector<1x32x32xf32>
    %125 = vector.shape_cast %124 : vector<1x32x32xf32> to vector<32x32xf32>
    %cst_58 = arith.constant dense<0.000000e+00> : vector<16x32xf32>
    %126 = tpu.matmul %120, %125, %cst_58 {dimension_numbers = #tpu.dot_dimension_numbers<[1], [0], [0], [1], [0, 0, 1, 1], [], []>} : vector<16x32xf32>, vector<32x32xf32>, vector<16x32xf32> -> vector<16x32xf32>
    %127 = vector.shape_cast %123 : vector<16x32xf32> to vector<1x16x32xf32>
    %128 = vector.shape_cast %126 : vector<16x32xf32> to vector<1x16x32xf32>
    %129 = tpu.concatenate %127, %128 in 0 : vector<1x16x32xf32>, vector<1x16x32xf32> -> vector<2x16x32xf32>
    %c0_59 = arith.constant 0 : index
    %c0_60 = arith.constant 0 : index
    %130 = vector.load %arg19[%c0_59, %c0_60] : memref<32x64xf32, #tpu.memory_space<vmem>>, vector<32x64xf32>
    %cst_61 = arith.constant dense<0.000000e+00> : vector<2x64xf32>
    %131 = tpu.matmul %20, %130, %cst_61 {dimension_numbers = #tpu.dot_dimension_numbers<[1], [0], [0], [1], [0, 0, 1, 1], [], []>} : vector<2x32xf32>, vector<32x64xf32>, vector<2x64xf32> -> vector<2x64xf32>
    %c0_62 = arith.constant 0 : index
    %c0_63 = arith.constant 0 : index
    %132 = vector.load %arg18[%c0_62, %c0_63] : memref<1x64xf32, #tpu.memory_space<vmem>>, vector<1x64xf32>
    %133 = vector.broadcast %132 : vector<1x64xf32> to vector<2x64xf32>
    %134 = arith.addf %131, %133 : vector<2x64xf32>
    %cst_64 = arith.constant 0.000000e+00 : f32
    %135 = vector.broadcast %cst_64 : f32 to vector<2x64xf32>
    %136 = arith.maximumf %134, %135 : vector<2x64xf32>
    %cst_65 = arith.constant 0.000000e+00 : f32
    %137 = vector.broadcast %cst_65 : f32 to vector<2x1x32xf32>
    %138 = vector.extract_strided_slice %129 {offsets = [0, 0, 0], sizes = [2, 15, 32], strides = [1, 1, 1]} : vector<2x16x32xf32> to vector<2x15x32xf32>
    %139 = tpu.concatenate %137, %138 in 1 : vector<2x1x32xf32>, vector<2x15x32xf32> -> vector<2x16x32xf32>
    %140 = vector.extract_strided_slice %129 {offsets = [0, 1, 0], sizes = [2, 15, 32], strides = [1, 1, 1]} : vector<2x16x32xf32> to vector<2x15x32xf32>
    %141 = tpu.concatenate %140, %137 in 1 : vector<2x15x32xf32>, vector<2x1x32xf32> -> vector<2x16x32xf32>
    %142 = tpu.concatenate %139, %129, %141 in 2 : vector<2x16x32xf32>, vector<2x16x32xf32>, vector<2x16x32xf32> -> vector<2x16x96xf32>
    %c0_66 = arith.constant 0 : index
    %c0_67 = arith.constant 0 : index
    %143 = vector.load %arg14[%c0_66, %c0_67] : memref<96x64xf32, #tpu.memory_space<vmem>>, vector<96x64xf32>
    %144 = vector.shape_cast %142 : vector<2x16x96xf32> to vector<32x96xf32>
    %cst_68 = arith.constant dense<0.000000e+00> : vector<32x64xf32>
    %145 = tpu.matmul %144, %143, %cst_68 {dimension_numbers = #tpu.dot_dimension_numbers<[1], [0], [0], [1], [0, 0, 1, 1], [], []>} : vector<32x96xf32>, vector<96x64xf32>, vector<32x64xf32> -> vector<32x64xf32>
    %146 = vector.shape_cast %145 : vector<32x64xf32> to vector<2x16x64xf32>
    %cst_69 = arith.constant dense<0.000000e+00> : vector<64xf32>
    %147 = vector.multi_reduction <add>, %146, %cst_69 [0, 1] : vector<2x16x64xf32> to vector<64xf32>
    %148 = vector.shape_cast %147 : vector<64xf32> to vector<1x1x64xf32>
    %149 = arith.mulf %146, %146 : vector<2x16x64xf32>
    %cst_70 = arith.constant dense<0.000000e+00> : vector<64xf32>
    %150 = vector.multi_reduction <add>, %149, %cst_70 [0, 1] : vector<2x16x64xf32> to vector<64xf32>
    %151 = vector.shape_cast %150 : vector<64xf32> to vector<1x1x64xf32>
    %cst_71 = arith.constant 3.125000e-02 : f32
    %152 = vector.broadcast %cst_71 : f32 to vector<1x1x64xf32>
    %153 = arith.mulf %148, %152 : vector<1x1x64xf32>
    %cst_72 = arith.constant 3.125000e-02 : f32
    %154 = vector.broadcast %cst_72 : f32 to vector<1x1x64xf32>
    %155 = arith.mulf %151, %154 : vector<1x1x64xf32>
    %156 = arith.mulf %153, %153 : vector<1x1x64xf32>
    %157 = arith.subf %155, %156 : vector<1x1x64xf32>
    %cst_73 = arith.constant 0.000000e+00 : f32
    %158 = vector.broadcast %cst_73 : f32 to vector<1x1x64xf32>
    %159 = arith.maximumf %157, %158 : vector<1x1x64xf32>
    %cst_74 = arith.constant 9.99999974E-6 : f32
    %160 = vector.broadcast %cst_74 : f32 to vector<1x1x64xf32>
    %161 = arith.addf %159, %160 : vector<1x1x64xf32>
    %162 = math.rsqrt %161 : vector<1x1x64xf32>
    %c0_75 = arith.constant 0 : index
    %c0_76 = arith.constant 0 : index
    %163 = vector.load %arg11[%c0_75, %c0_76] : memref<1x64xf32, #tpu.memory_space<vmem>>, vector<1x64xf32>
    %164 = vector.shape_cast %163 : vector<1x64xf32> to vector<1x1x64xf32>
    %165 = arith.mulf %162, %164 : vector<1x1x64xf32>
    %c0_77 = arith.constant 0 : index
    %c0_78 = arith.constant 0 : index
    %166 = vector.load %arg10[%c0_77, %c0_78] : memref<1x64xf32, #tpu.memory_space<vmem>>, vector<1x64xf32>
    %167 = vector.shape_cast %166 : vector<1x64xf32> to vector<1x1x64xf32>
    %168 = arith.mulf %153, %165 : vector<1x1x64xf32>
    %169 = arith.subf %167, %168 : vector<1x1x64xf32>
    %170 = vector.broadcast %165 : vector<1x1x64xf32> to vector<2x16x64xf32>
    %171 = arith.mulf %146, %170 : vector<2x16x64xf32>
    %172 = vector.shape_cast %136 : vector<2x64xf32> to vector<2x1x64xf32>
    %173 = vector.broadcast %169 : vector<1x1x64xf32> to vector<2x1x64xf32>
    %174 = arith.addf %173, %172 : vector<2x1x64xf32>
    %175 = vector.broadcast %174 : vector<2x1x64xf32> to vector<2x16x64xf32>
    %176 = arith.addf %171, %175 : vector<2x16x64xf32>
    %cst_79 = arith.constant 0.000000e+00 : f32
    %177 = vector.broadcast %cst_79 : f32 to vector<2x16x64xf32>
    %178 = arith.maximumf %176, %177 : vector<2x16x64xf32>
    %cst_80 = arith.constant 0.000000e+00 : f32
    %179 = vector.broadcast %cst_80 : f32 to vector<2x1x64xf32>
    %180 = vector.extract_strided_slice %178 {offsets = [0, 0, 0], sizes = [2, 15, 64], strides = [1, 1, 1]} : vector<2x16x64xf32> to vector<2x15x64xf32>
    %181 = tpu.concatenate %179, %180 in 1 : vector<2x1x64xf32>, vector<2x15x64xf32> -> vector<2x16x64xf32>
    %182 = vector.extract_strided_slice %178 {offsets = [0, 1, 0], sizes = [2, 15, 64], strides = [1, 1, 1]} : vector<2x16x64xf32> to vector<2x15x64xf32>
    %183 = tpu.concatenate %182, %179 in 1 : vector<2x15x64xf32>, vector<2x1x64xf32> -> vector<2x16x64xf32>
    %184 = tpu.concatenate %181, %178, %183 in 2 : vector<2x16x64xf32>, vector<2x16x64xf32>, vector<2x16x64xf32> -> vector<2x16x192xf32>
    %c0_81 = arith.constant 0 : index
    %c0_82 = arith.constant 0 : index
    %185 = vector.load %arg15[%c0_81, %c0_82] : memref<192x64xf32, #tpu.memory_space<vmem>>, vector<192x64xf32>
    %186 = vector.shape_cast %184 : vector<2x16x192xf32> to vector<32x192xf32>
    %cst_83 = arith.constant dense<0.000000e+00> : vector<32x64xf32>
    %187 = tpu.matmul %186, %185, %cst_83 {dimension_numbers = #tpu.dot_dimension_numbers<[1], [0], [0], [1], [0, 0, 1, 1], [], []>} : vector<32x192xf32>, vector<192x64xf32>, vector<32x64xf32> -> vector<32x64xf32>
    %188 = vector.shape_cast %187 : vector<32x64xf32> to vector<2x16x64xf32>
    %cst_84 = arith.constant dense<0.000000e+00> : vector<64xf32>
    %189 = vector.multi_reduction <add>, %188, %cst_84 [0, 1] : vector<2x16x64xf32> to vector<64xf32>
    %190 = vector.shape_cast %189 : vector<64xf32> to vector<1x1x64xf32>
    %191 = arith.mulf %188, %188 : vector<2x16x64xf32>
    %cst_85 = arith.constant dense<0.000000e+00> : vector<64xf32>
    %192 = vector.multi_reduction <add>, %191, %cst_85 [0, 1] : vector<2x16x64xf32> to vector<64xf32>
    %193 = vector.shape_cast %192 : vector<64xf32> to vector<1x1x64xf32>
    %cst_86 = arith.constant 3.125000e-02 : f32
    %194 = vector.broadcast %cst_86 : f32 to vector<1x1x64xf32>
    %195 = arith.mulf %190, %194 : vector<1x1x64xf32>
    %cst_87 = arith.constant 3.125000e-02 : f32
    %196 = vector.broadcast %cst_87 : f32 to vector<1x1x64xf32>
    %197 = arith.mulf %193, %196 : vector<1x1x64xf32>
    %198 = arith.mulf %195, %195 : vector<1x1x64xf32>
    %199 = arith.subf %197, %198 : vector<1x1x64xf32>
    %cst_88 = arith.constant 0.000000e+00 : f32
    %200 = vector.broadcast %cst_88 : f32 to vector<1x1x64xf32>
    %201 = arith.maximumf %199, %200 : vector<1x1x64xf32>
    %cst_89 = arith.constant 9.99999974E-6 : f32
    %202 = vector.broadcast %cst_89 : f32 to vector<1x1x64xf32>
    %203 = arith.addf %201, %202 : vector<1x1x64xf32>
    %204 = math.rsqrt %203 : vector<1x1x64xf32>
    %c0_90 = arith.constant 0 : index
    %c0_91 = arith.constant 0 : index
    %205 = vector.load %arg13[%c0_90, %c0_91] : memref<1x64xf32, #tpu.memory_space<vmem>>, vector<1x64xf32>
    %206 = vector.shape_cast %205 : vector<1x64xf32> to vector<1x1x64xf32>
    %207 = arith.mulf %204, %206 : vector<1x1x64xf32>
    %c0_92 = arith.constant 0 : index
    %c0_93 = arith.constant 0 : index
    %208 = vector.load %arg12[%c0_92, %c0_93] : memref<1x64xf32, #tpu.memory_space<vmem>>, vector<1x64xf32>
    %209 = vector.shape_cast %208 : vector<1x64xf32> to vector<1x1x64xf32>
    %210 = arith.mulf %195, %207 : vector<1x1x64xf32>
    %211 = arith.subf %209, %210 : vector<1x1x64xf32>
    %212 = vector.broadcast %207 : vector<1x1x64xf32> to vector<2x16x64xf32>
    %213 = arith.mulf %188, %212 : vector<2x16x64xf32>
    %214 = vector.broadcast %211 : vector<1x1x64xf32> to vector<2x16x64xf32>
    %215 = arith.addf %213, %214 : vector<2x16x64xf32>
    %cst_94 = arith.constant 0.000000e+00 : f32
    %216 = vector.broadcast %cst_94 : f32 to vector<2x16x64xf32>
    %217 = arith.maximumf %215, %216 : vector<2x16x64xf32>
    %c0_95 = arith.constant 0 : index
    %c0_96 = arith.constant 0 : index
    %218 = vector.load %arg16[%c0_95, %c0_96] : memref<1x64xf32, #tpu.memory_space<vmem>>, vector<1x64xf32>
    %219 = vector.shape_cast %218 : vector<1x64xf32> to vector<1x1x64xf32>
    %c0_97 = arith.constant 0 : index
    %c0_98 = arith.constant 0 : index
    %220 = vector.load %arg17[%c0_97, %c0_98] : memref<32x64xf32, #tpu.memory_space<vmem>>, vector<32x64xf32>
    %221 = vector.shape_cast %129 : vector<2x16x32xf32> to vector<32x32xf32>
    %cst_99 = arith.constant dense<0.000000e+00> : vector<32x64xf32>
    %222 = tpu.matmul %221, %220, %cst_99 {dimension_numbers = #tpu.dot_dimension_numbers<[1], [0], [0], [1], [0, 0, 1, 1], [], []>} : vector<32x32xf32>, vector<32x64xf32>, vector<32x64xf32> -> vector<32x64xf32>
    %223 = vector.shape_cast %222 : vector<32x64xf32> to vector<2x16x64xf32>
    %224 = vector.broadcast %219 : vector<1x1x64xf32> to vector<2x16x64xf32>
    %225 = arith.addf %224, %223 : vector<2x16x64xf32>
    %226 = arith.addf %217, %225 : vector<2x16x64xf32>
    %c0_100 = arith.constant 0 : index
    %c0_101 = arith.constant 0 : index
    %227 = vector.load %arg69[%c0_100, %c0_101] : memref<8x16xf32, #tpu.memory_space<vmem>>, vector<8x16xf32>
    %228 = vector.extract_strided_slice %226 {offsets = [0, 0, 0], sizes = [1, 16, 64], strides = [1, 1, 1]} : vector<2x16x64xf32> to vector<1x16x64xf32>
    %229 = vector.shape_cast %228 : vector<1x16x64xf32> to vector<16x64xf32>
    %cst_102 = arith.constant dense<0.000000e+00> : vector<8x64xf32>
    %230 = tpu.matmul %227, %229, %cst_102 {dimension_numbers = #tpu.dot_dimension_numbers<[1], [0], [0], [1], [0, 0, 1, 1], [], []>} : vector<8x16xf32>, vector<16x64xf32>, vector<8x64xf32> -> vector<8x64xf32>
    %231 = vector.extract_strided_slice %226 {offsets = [1, 0, 0], sizes = [1, 16, 64], strides = [1, 1, 1]} : vector<2x16x64xf32> to vector<1x16x64xf32>
    %232 = vector.shape_cast %231 : vector<1x16x64xf32> to vector<16x64xf32>
    %cst_103 = arith.constant dense<0.000000e+00> : vector<8x64xf32>
    %233 = tpu.matmul %227, %232, %cst_103 {dimension_numbers = #tpu.dot_dimension_numbers<[1], [0], [0], [1], [0, 0, 1, 1], [], []>} : vector<8x16xf32>, vector<16x64xf32>, vector<8x64xf32> -> vector<8x64xf32>
    %234 = vector.shape_cast %230 : vector<8x64xf32> to vector<1x8x64xf32>
    %235 = vector.shape_cast %233 : vector<8x64xf32> to vector<1x8x64xf32>
    %236 = tpu.concatenate %234, %235 in 0 : vector<1x8x64xf32>, vector<1x8x64xf32> -> vector<2x8x64xf32>
    %c0_104 = arith.constant 0 : index
    %c0_105 = arith.constant 0 : index
    %237 = vector.load %arg29[%c0_104, %c0_105] : memref<32x64xf32, #tpu.memory_space<vmem>>, vector<32x64xf32>
    %cst_106 = arith.constant dense<0.000000e+00> : vector<2x64xf32>
    %238 = tpu.matmul %20, %237, %cst_106 {dimension_numbers = #tpu.dot_dimension_numbers<[1], [0], [0], [1], [0, 0, 1, 1], [], []>} : vector<2x32xf32>, vector<32x64xf32>, vector<2x64xf32> -> vector<2x64xf32>
    %c0_107 = arith.constant 0 : index
    %c0_108 = arith.constant 0 : index
    %239 = vector.load %arg28[%c0_107, %c0_108] : memref<1x64xf32, #tpu.memory_space<vmem>>, vector<1x64xf32>
    %240 = vector.broadcast %239 : vector<1x64xf32> to vector<2x64xf32>
    %241 = arith.addf %238, %240 : vector<2x64xf32>
    %cst_109 = arith.constant 0.000000e+00 : f32
    %242 = vector.broadcast %cst_109 : f32 to vector<2x64xf32>
    %243 = arith.maximumf %241, %242 : vector<2x64xf32>
    %cst_110 = arith.constant 0.000000e+00 : f32
    %244 = vector.broadcast %cst_110 : f32 to vector<2x1x64xf32>
    %245 = vector.extract_strided_slice %236 {offsets = [0, 0, 0], sizes = [2, 7, 64], strides = [1, 1, 1]} : vector<2x8x64xf32> to vector<2x7x64xf32>
    %246 = tpu.concatenate %244, %245 in 1 : vector<2x1x64xf32>, vector<2x7x64xf32> -> vector<2x8x64xf32>
    %247 = vector.extract_strided_slice %236 {offsets = [0, 1, 0], sizes = [2, 7, 64], strides = [1, 1, 1]} : vector<2x8x64xf32> to vector<2x7x64xf32>
    %248 = tpu.concatenate %247, %244 in 1 : vector<2x7x64xf32>, vector<2x1x64xf32> -> vector<2x8x64xf32>
    %249 = tpu.concatenate %246, %236, %248 in 2 : vector<2x8x64xf32>, vector<2x8x64xf32>, vector<2x8x64xf32> -> vector<2x8x192xf32>
    %c0_111 = arith.constant 0 : index
    %c0_112 = arith.constant 0 : index
    %250 = vector.load %arg26[%c0_111, %c0_112] : memref<192x64xf32, #tpu.memory_space<vmem>>, vector<192x64xf32>
    %251 = vector.shape_cast %249 : vector<2x8x192xf32> to vector<16x192xf32>
    %cst_113 = arith.constant dense<0.000000e+00> : vector<16x64xf32>
    %252 = tpu.matmul %251, %250, %cst_113 {dimension_numbers = #tpu.dot_dimension_numbers<[1], [0], [0], [1], [0, 0, 1, 1], [], []>} : vector<16x192xf32>, vector<192x64xf32>, vector<16x64xf32> -> vector<16x64xf32>
    %253 = vector.shape_cast %252 : vector<16x64xf32> to vector<2x8x64xf32>
    %cst_114 = arith.constant dense<0.000000e+00> : vector<64xf32>
    %254 = vector.multi_reduction <add>, %253, %cst_114 [0, 1] : vector<2x8x64xf32> to vector<64xf32>
    %255 = vector.shape_cast %254 : vector<64xf32> to vector<1x1x64xf32>
    %256 = arith.mulf %253, %253 : vector<2x8x64xf32>
    %cst_115 = arith.constant dense<0.000000e+00> : vector<64xf32>
    %257 = vector.multi_reduction <add>, %256, %cst_115 [0, 1] : vector<2x8x64xf32> to vector<64xf32>
    %258 = vector.shape_cast %257 : vector<64xf32> to vector<1x1x64xf32>
    %cst_116 = arith.constant 6.250000e-02 : f32
    %259 = vector.broadcast %cst_116 : f32 to vector<1x1x64xf32>
    %260 = arith.mulf %255, %259 : vector<1x1x64xf32>
    %cst_117 = arith.constant 6.250000e-02 : f32
    %261 = vector.broadcast %cst_117 : f32 to vector<1x1x64xf32>
    %262 = arith.mulf %258, %261 : vector<1x1x64xf32>
    %263 = arith.mulf %260, %260 : vector<1x1x64xf32>
    %264 = arith.subf %262, %263 : vector<1x1x64xf32>
    %cst_118 = arith.constant 0.000000e+00 : f32
    %265 = vector.broadcast %cst_118 : f32 to vector<1x1x64xf32>
    %266 = arith.maximumf %264, %265 : vector<1x1x64xf32>
    %cst_119 = arith.constant 9.99999974E-6 : f32
    %267 = vector.broadcast %cst_119 : f32 to vector<1x1x64xf32>
    %268 = arith.addf %266, %267 : vector<1x1x64xf32>
    %269 = math.rsqrt %268 : vector<1x1x64xf32>
    %c0_120 = arith.constant 0 : index
    %c0_121 = arith.constant 0 : index
    %270 = vector.load %arg23[%c0_120, %c0_121] : memref<1x64xf32, #tpu.memory_space<vmem>>, vector<1x64xf32>
    %271 = vector.shape_cast %270 : vector<1x64xf32> to vector<1x1x64xf32>
    %272 = arith.mulf %269, %271 : vector<1x1x64xf32>
    %c0_122 = arith.constant 0 : index
    %c0_123 = arith.constant 0 : index
    %273 = vector.load %arg22[%c0_122, %c0_123] : memref<1x64xf32, #tpu.memory_space<vmem>>, vector<1x64xf32>
    %274 = vector.shape_cast %273 : vector<1x64xf32> to vector<1x1x64xf32>
    %275 = arith.mulf %260, %272 : vector<1x1x64xf32>
    %276 = arith.subf %274, %275 : vector<1x1x64xf32>
    %277 = vector.broadcast %272 : vector<1x1x64xf32> to vector<2x8x64xf32>
    %278 = arith.mulf %253, %277 : vector<2x8x64xf32>
    %279 = vector.shape_cast %243 : vector<2x64xf32> to vector<2x1x64xf32>
    %280 = vector.broadcast %276 : vector<1x1x64xf32> to vector<2x1x64xf32>
    %281 = arith.addf %280, %279 : vector<2x1x64xf32>
    %282 = vector.broadcast %281 : vector<2x1x64xf32> to vector<2x8x64xf32>
    %283 = arith.addf %278, %282 : vector<2x8x64xf32>
    %cst_124 = arith.constant 0.000000e+00 : f32
    %284 = vector.broadcast %cst_124 : f32 to vector<2x8x64xf32>
    %285 = arith.maximumf %283, %284 : vector<2x8x64xf32>
    %cst_125 = arith.constant 0.000000e+00 : f32
    %286 = vector.broadcast %cst_125 : f32 to vector<2x1x64xf32>
    %287 = vector.extract_strided_slice %285 {offsets = [0, 0, 0], sizes = [2, 7, 64], strides = [1, 1, 1]} : vector<2x8x64xf32> to vector<2x7x64xf32>
    %288 = tpu.concatenate %286, %287 in 1 : vector<2x1x64xf32>, vector<2x7x64xf32> -> vector<2x8x64xf32>
    %289 = vector.extract_strided_slice %285 {offsets = [0, 1, 0], sizes = [2, 7, 64], strides = [1, 1, 1]} : vector<2x8x64xf32> to vector<2x7x64xf32>
    %290 = tpu.concatenate %289, %286 in 1 : vector<2x7x64xf32>, vector<2x1x64xf32> -> vector<2x8x64xf32>
    %291 = tpu.concatenate %288, %285, %290 in 2 : vector<2x8x64xf32>, vector<2x8x64xf32>, vector<2x8x64xf32> -> vector<2x8x192xf32>
    %c0_126 = arith.constant 0 : index
    %c0_127 = arith.constant 0 : index
    %292 = vector.load %arg27[%c0_126, %c0_127] : memref<192x64xf32, #tpu.memory_space<vmem>>, vector<192x64xf32>
    %293 = vector.shape_cast %291 : vector<2x8x192xf32> to vector<16x192xf32>
    %cst_128 = arith.constant dense<0.000000e+00> : vector<16x64xf32>
    %294 = tpu.matmul %293, %292, %cst_128 {dimension_numbers = #tpu.dot_dimension_numbers<[1], [0], [0], [1], [0, 0, 1, 1], [], []>} : vector<16x192xf32>, vector<192x64xf32>, vector<16x64xf32> -> vector<16x64xf32>
    %295 = vector.shape_cast %294 : vector<16x64xf32> to vector<2x8x64xf32>
    %cst_129 = arith.constant dense<0.000000e+00> : vector<64xf32>
    %296 = vector.multi_reduction <add>, %295, %cst_129 [0, 1] : vector<2x8x64xf32> to vector<64xf32>
    %297 = vector.shape_cast %296 : vector<64xf32> to vector<1x1x64xf32>
    %298 = arith.mulf %295, %295 : vector<2x8x64xf32>
    %cst_130 = arith.constant dense<0.000000e+00> : vector<64xf32>
    %299 = vector.multi_reduction <add>, %298, %cst_130 [0, 1] : vector<2x8x64xf32> to vector<64xf32>
    %300 = vector.shape_cast %299 : vector<64xf32> to vector<1x1x64xf32>
    %cst_131 = arith.constant 6.250000e-02 : f32
    %301 = vector.broadcast %cst_131 : f32 to vector<1x1x64xf32>
    %302 = arith.mulf %297, %301 : vector<1x1x64xf32>
    %cst_132 = arith.constant 6.250000e-02 : f32
    %303 = vector.broadcast %cst_132 : f32 to vector<1x1x64xf32>
    %304 = arith.mulf %300, %303 : vector<1x1x64xf32>
    %305 = arith.mulf %302, %302 : vector<1x1x64xf32>
    %306 = arith.subf %304, %305 : vector<1x1x64xf32>
    %cst_133 = arith.constant 0.000000e+00 : f32
    %307 = vector.broadcast %cst_133 : f32 to vector<1x1x64xf32>
    %308 = arith.maximumf %306, %307 : vector<1x1x64xf32>
    %cst_134 = arith.constant 9.99999974E-6 : f32
    %309 = vector.broadcast %cst_134 : f32 to vector<1x1x64xf32>
    %310 = arith.addf %308, %309 : vector<1x1x64xf32>
    %311 = math.rsqrt %310 : vector<1x1x64xf32>
    %c0_135 = arith.constant 0 : index
    %c0_136 = arith.constant 0 : index
    %312 = vector.load %arg25[%c0_135, %c0_136] : memref<1x64xf32, #tpu.memory_space<vmem>>, vector<1x64xf32>
    %313 = vector.shape_cast %312 : vector<1x64xf32> to vector<1x1x64xf32>
    %314 = arith.mulf %311, %313 : vector<1x1x64xf32>
    %c0_137 = arith.constant 0 : index
    %c0_138 = arith.constant 0 : index
    %315 = vector.load %arg24[%c0_137, %c0_138] : memref<1x64xf32, #tpu.memory_space<vmem>>, vector<1x64xf32>
    %316 = vector.shape_cast %315 : vector<1x64xf32> to vector<1x1x64xf32>
    %317 = arith.mulf %302, %314 : vector<1x1x64xf32>
    %318 = arith.subf %316, %317 : vector<1x1x64xf32>
    %319 = vector.broadcast %314 : vector<1x1x64xf32> to vector<2x8x64xf32>
    %320 = arith.mulf %295, %319 : vector<2x8x64xf32>
    %321 = vector.broadcast %318 : vector<1x1x64xf32> to vector<2x8x64xf32>
    %322 = arith.addf %320, %321 : vector<2x8x64xf32>
    %cst_139 = arith.constant 0.000000e+00 : f32
    %323 = vector.broadcast %cst_139 : f32 to vector<2x8x64xf32>
    %324 = arith.maximumf %322, %323 : vector<2x8x64xf32>
    %325 = arith.addf %324, %236 : vector<2x8x64xf32>
    %c0_140 = arith.constant 0 : index
    %c0_141 = arith.constant 0 : index
    %326 = vector.load %arg37[%c0_140, %c0_141] : memref<32x64xf32, #tpu.memory_space<vmem>>, vector<32x64xf32>
    %cst_142 = arith.constant dense<0.000000e+00> : vector<2x64xf32>
    %327 = tpu.matmul %20, %326, %cst_142 {dimension_numbers = #tpu.dot_dimension_numbers<[1], [0], [0], [1], [0, 0, 1, 1], [], []>} : vector<2x32xf32>, vector<32x64xf32>, vector<2x64xf32> -> vector<2x64xf32>
    %c0_143 = arith.constant 0 : index
    %c0_144 = arith.constant 0 : index
    %328 = vector.load %arg36[%c0_143, %c0_144] : memref<1x64xf32, #tpu.memory_space<vmem>>, vector<1x64xf32>
    %329 = vector.broadcast %328 : vector<1x64xf32> to vector<2x64xf32>
    %330 = arith.addf %327, %329 : vector<2x64xf32>
    %cst_145 = arith.constant 0.000000e+00 : f32
    %331 = vector.broadcast %cst_145 : f32 to vector<2x64xf32>
    %332 = arith.maximumf %330, %331 : vector<2x64xf32>
    %cst_146 = arith.constant 0.000000e+00 : f32
    %333 = vector.broadcast %cst_146 : f32 to vector<2x1x64xf32>
    %334 = vector.extract_strided_slice %325 {offsets = [0, 0, 0], sizes = [2, 7, 64], strides = [1, 1, 1]} : vector<2x8x64xf32> to vector<2x7x64xf32>
    %335 = tpu.concatenate %333, %334 in 1 : vector<2x1x64xf32>, vector<2x7x64xf32> -> vector<2x8x64xf32>
    %336 = vector.extract_strided_slice %325 {offsets = [0, 1, 0], sizes = [2, 7, 64], strides = [1, 1, 1]} : vector<2x8x64xf32> to vector<2x7x64xf32>
    %337 = tpu.concatenate %336, %333 in 1 : vector<2x7x64xf32>, vector<2x1x64xf32> -> vector<2x8x64xf32>
    %338 = tpu.concatenate %335, %325, %337 in 2 : vector<2x8x64xf32>, vector<2x8x64xf32>, vector<2x8x64xf32> -> vector<2x8x192xf32>
    %c0_147 = arith.constant 0 : index
    %c0_148 = arith.constant 0 : index
    %339 = vector.load %arg34[%c0_147, %c0_148] : memref<192x64xf32, #tpu.memory_space<vmem>>, vector<192x64xf32>
    %340 = vector.shape_cast %338 : vector<2x8x192xf32> to vector<16x192xf32>
    %cst_149 = arith.constant dense<0.000000e+00> : vector<16x64xf32>
    %341 = tpu.matmul %340, %339, %cst_149 {dimension_numbers = #tpu.dot_dimension_numbers<[1], [0], [0], [1], [0, 0, 1, 1], [], []>} : vector<16x192xf32>, vector<192x64xf32>, vector<16x64xf32> -> vector<16x64xf32>
    %342 = vector.shape_cast %341 : vector<16x64xf32> to vector<2x8x64xf32>
    %cst_150 = arith.constant dense<0.000000e+00> : vector<64xf32>
    %343 = vector.multi_reduction <add>, %342, %cst_150 [0, 1] : vector<2x8x64xf32> to vector<64xf32>
    %344 = vector.shape_cast %343 : vector<64xf32> to vector<1x1x64xf32>
    %345 = arith.mulf %342, %342 : vector<2x8x64xf32>
    %cst_151 = arith.constant dense<0.000000e+00> : vector<64xf32>
    %346 = vector.multi_reduction <add>, %345, %cst_151 [0, 1] : vector<2x8x64xf32> to vector<64xf32>
    %347 = vector.shape_cast %346 : vector<64xf32> to vector<1x1x64xf32>
    %cst_152 = arith.constant 6.250000e-02 : f32
    %348 = vector.broadcast %cst_152 : f32 to vector<1x1x64xf32>
    %349 = arith.mulf %344, %348 : vector<1x1x64xf32>
    %cst_153 = arith.constant 6.250000e-02 : f32
    %350 = vector.broadcast %cst_153 : f32 to vector<1x1x64xf32>
    %351 = arith.mulf %347, %350 : vector<1x1x64xf32>
    %352 = arith.mulf %349, %349 : vector<1x1x64xf32>
    %353 = arith.subf %351, %352 : vector<1x1x64xf32>
    %cst_154 = arith.constant 0.000000e+00 : f32
    %354 = vector.broadcast %cst_154 : f32 to vector<1x1x64xf32>
    %355 = arith.maximumf %353, %354 : vector<1x1x64xf32>
    %cst_155 = arith.constant 9.99999974E-6 : f32
    %356 = vector.broadcast %cst_155 : f32 to vector<1x1x64xf32>
    %357 = arith.addf %355, %356 : vector<1x1x64xf32>
    %358 = math.rsqrt %357 : vector<1x1x64xf32>
    %c0_156 = arith.constant 0 : index
    %c0_157 = arith.constant 0 : index
    %359 = vector.load %arg31[%c0_156, %c0_157] : memref<1x64xf32, #tpu.memory_space<vmem>>, vector<1x64xf32>
    %360 = vector.shape_cast %359 : vector<1x64xf32> to vector<1x1x64xf32>
    %361 = arith.mulf %358, %360 : vector<1x1x64xf32>
    %c0_158 = arith.constant 0 : index
    %c0_159 = arith.constant 0 : index
    %362 = vector.load %arg30[%c0_158, %c0_159] : memref<1x64xf32, #tpu.memory_space<vmem>>, vector<1x64xf32>
    %363 = vector.shape_cast %362 : vector<1x64xf32> to vector<1x1x64xf32>
    %364 = arith.mulf %349, %361 : vector<1x1x64xf32>
    %365 = arith.subf %363, %364 : vector<1x1x64xf32>
    %366 = vector.broadcast %361 : vector<1x1x64xf32> to vector<2x8x64xf32>
    %367 = arith.mulf %342, %366 : vector<2x8x64xf32>
    %368 = vector.shape_cast %332 : vector<2x64xf32> to vector<2x1x64xf32>
    %369 = vector.broadcast %365 : vector<1x1x64xf32> to vector<2x1x64xf32>
    %370 = arith.addf %369, %368 : vector<2x1x64xf32>
    %371 = vector.broadcast %370 : vector<2x1x64xf32> to vector<2x8x64xf32>
    %372 = arith.addf %367, %371 : vector<2x8x64xf32>
    %cst_160 = arith.constant 0.000000e+00 : f32
    %373 = vector.broadcast %cst_160 : f32 to vector<2x8x64xf32>
    %374 = arith.maximumf %372, %373 : vector<2x8x64xf32>
    %cst_161 = arith.constant 0.000000e+00 : f32
    %375 = vector.broadcast %cst_161 : f32 to vector<2x1x64xf32>
    %376 = vector.extract_strided_slice %374 {offsets = [0, 0, 0], sizes = [2, 7, 64], strides = [1, 1, 1]} : vector<2x8x64xf32> to vector<2x7x64xf32>
    %377 = tpu.concatenate %375, %376 in 1 : vector<2x1x64xf32>, vector<2x7x64xf32> -> vector<2x8x64xf32>
    %378 = vector.extract_strided_slice %374 {offsets = [0, 1, 0], sizes = [2, 7, 64], strides = [1, 1, 1]} : vector<2x8x64xf32> to vector<2x7x64xf32>
    %379 = tpu.concatenate %378, %375 in 1 : vector<2x7x64xf32>, vector<2x1x64xf32> -> vector<2x8x64xf32>
    %380 = tpu.concatenate %377, %374, %379 in 2 : vector<2x8x64xf32>, vector<2x8x64xf32>, vector<2x8x64xf32> -> vector<2x8x192xf32>
    %c0_162 = arith.constant 0 : index
    %c0_163 = arith.constant 0 : index
    %381 = vector.load %arg35[%c0_162, %c0_163] : memref<192x64xf32, #tpu.memory_space<vmem>>, vector<192x64xf32>
    %382 = vector.shape_cast %380 : vector<2x8x192xf32> to vector<16x192xf32>
    %cst_164 = arith.constant dense<0.000000e+00> : vector<16x64xf32>
    %383 = tpu.matmul %382, %381, %cst_164 {dimension_numbers = #tpu.dot_dimension_numbers<[1], [0], [0], [1], [0, 0, 1, 1], [], []>} : vector<16x192xf32>, vector<192x64xf32>, vector<16x64xf32> -> vector<16x64xf32>
    %384 = vector.shape_cast %383 : vector<16x64xf32> to vector<2x8x64xf32>
    %cst_165 = arith.constant dense<0.000000e+00> : vector<64xf32>
    %385 = vector.multi_reduction <add>, %384, %cst_165 [0, 1] : vector<2x8x64xf32> to vector<64xf32>
    %386 = vector.shape_cast %385 : vector<64xf32> to vector<1x1x64xf32>
    %387 = arith.mulf %384, %384 : vector<2x8x64xf32>
    %cst_166 = arith.constant dense<0.000000e+00> : vector<64xf32>
    %388 = vector.multi_reduction <add>, %387, %cst_166 [0, 1] : vector<2x8x64xf32> to vector<64xf32>
    %389 = vector.shape_cast %388 : vector<64xf32> to vector<1x1x64xf32>
    %cst_167 = arith.constant 6.250000e-02 : f32
    %390 = vector.broadcast %cst_167 : f32 to vector<1x1x64xf32>
    %391 = arith.mulf %386, %390 : vector<1x1x64xf32>
    %cst_168 = arith.constant 6.250000e-02 : f32
    %392 = vector.broadcast %cst_168 : f32 to vector<1x1x64xf32>
    %393 = arith.mulf %389, %392 : vector<1x1x64xf32>
    %394 = arith.mulf %391, %391 : vector<1x1x64xf32>
    %395 = arith.subf %393, %394 : vector<1x1x64xf32>
    %cst_169 = arith.constant 0.000000e+00 : f32
    %396 = vector.broadcast %cst_169 : f32 to vector<1x1x64xf32>
    %397 = arith.maximumf %395, %396 : vector<1x1x64xf32>
    %cst_170 = arith.constant 9.99999974E-6 : f32
    %398 = vector.broadcast %cst_170 : f32 to vector<1x1x64xf32>
    %399 = arith.addf %397, %398 : vector<1x1x64xf32>
    %400 = math.rsqrt %399 : vector<1x1x64xf32>
    %c0_171 = arith.constant 0 : index
    %c0_172 = arith.constant 0 : index
    %401 = vector.load %arg33[%c0_171, %c0_172] : memref<1x64xf32, #tpu.memory_space<vmem>>, vector<1x64xf32>
    %402 = vector.shape_cast %401 : vector<1x64xf32> to vector<1x1x64xf32>
    %403 = arith.mulf %400, %402 : vector<1x1x64xf32>
    %c0_173 = arith.constant 0 : index
    %c0_174 = arith.constant 0 : index
    %404 = vector.load %arg32[%c0_173, %c0_174] : memref<1x64xf32, #tpu.memory_space<vmem>>, vector<1x64xf32>
    %405 = vector.shape_cast %404 : vector<1x64xf32> to vector<1x1x64xf32>
    %406 = arith.mulf %391, %403 : vector<1x1x64xf32>
    %407 = arith.subf %405, %406 : vector<1x1x64xf32>
    %408 = vector.broadcast %403 : vector<1x1x64xf32> to vector<2x8x64xf32>
    %409 = arith.mulf %384, %408 : vector<2x8x64xf32>
    %410 = vector.broadcast %407 : vector<1x1x64xf32> to vector<2x8x64xf32>
    %411 = arith.addf %409, %410 : vector<2x8x64xf32>
    %cst_175 = arith.constant 0.000000e+00 : f32
    %412 = vector.broadcast %cst_175 : f32 to vector<2x8x64xf32>
    %413 = arith.maximumf %411, %412 : vector<2x8x64xf32>
    %414 = arith.addf %413, %325 : vector<2x8x64xf32>
    %c0_176 = arith.constant 0 : index
    %c0_177 = arith.constant 0 : index
    %415 = vector.load %arg71[%c0_176, %c0_177] : memref<16x8xf32, #tpu.memory_space<vmem>>, vector<16x8xf32>
    %416 = vector.extract_strided_slice %414 {offsets = [0, 0, 0], sizes = [1, 8, 64], strides = [1, 1, 1]} : vector<2x8x64xf32> to vector<1x8x64xf32>
    %417 = vector.shape_cast %416 : vector<1x8x64xf32> to vector<8x64xf32>
    %cst_178 = arith.constant dense<0.000000e+00> : vector<16x64xf32>
    %418 = tpu.matmul %415, %417, %cst_178 {dimension_numbers = #tpu.dot_dimension_numbers<[1], [0], [0], [1], [0, 0, 1, 1], [], []>} : vector<16x8xf32>, vector<8x64xf32>, vector<16x64xf32> -> vector<16x64xf32>
    %419 = vector.extract_strided_slice %414 {offsets = [1, 0, 0], sizes = [1, 8, 64], strides = [1, 1, 1]} : vector<2x8x64xf32> to vector<1x8x64xf32>
    %420 = vector.shape_cast %419 : vector<1x8x64xf32> to vector<8x64xf32>
    %cst_179 = arith.constant dense<0.000000e+00> : vector<16x64xf32>
    %421 = tpu.matmul %415, %420, %cst_179 {dimension_numbers = #tpu.dot_dimension_numbers<[1], [0], [0], [1], [0, 0, 1, 1], [], []>} : vector<16x8xf32>, vector<8x64xf32>, vector<16x64xf32> -> vector<16x64xf32>
    %422 = vector.shape_cast %418 : vector<16x64xf32> to vector<1x16x64xf32>
    %423 = vector.shape_cast %421 : vector<16x64xf32> to vector<1x16x64xf32>
    %424 = tpu.concatenate %422, %423 in 0 : vector<1x16x64xf32>, vector<1x16x64xf32> -> vector<2x16x64xf32>
    %c0_180 = arith.constant 0 : index
    %c0_181 = arith.constant 0 : index
    %425 = vector.load %arg55[%c0_180, %c0_181] : memref<32x32xf32, #tpu.memory_space<vmem>>, vector<32x32xf32>
    %cst_182 = arith.constant dense<0.000000e+00> : vector<2x32xf32>
    %426 = tpu.matmul %20, %425, %cst_182 {dimension_numbers = #tpu.dot_dimension_numbers<[1], [0], [0], [1], [0, 0, 1, 1], [], []>} : vector<2x32xf32>, vector<32x32xf32>, vector<2x32xf32> -> vector<2x32xf32>
    %c0_183 = arith.constant 0 : index
    %c0_184 = arith.constant 0 : index
    %427 = vector.load %arg54[%c0_183, %c0_184] : memref<1x32xf32, #tpu.memory_space<vmem>>, vector<1x32xf32>
    %428 = vector.broadcast %427 : vector<1x32xf32> to vector<2x32xf32>
    %429 = arith.addf %426, %428 : vector<2x32xf32>
    %cst_185 = arith.constant 0.000000e+00 : f32
    %430 = vector.broadcast %cst_185 : f32 to vector<2x32xf32>
    %431 = arith.maximumf %429, %430 : vector<2x32xf32>
    %cst_186 = arith.constant 0.000000e+00 : f32
    %432 = vector.broadcast %cst_186 : f32 to vector<2x1x64xf32>
    %433 = vector.extract_strided_slice %424 {offsets = [0, 0, 0], sizes = [2, 15, 64], strides = [1, 1, 1]} : vector<2x16x64xf32> to vector<2x15x64xf32>
    %434 = tpu.concatenate %432, %433 in 1 : vector<2x1x64xf32>, vector<2x15x64xf32> -> vector<2x16x64xf32>
    %435 = vector.extract_strided_slice %424 {offsets = [0, 1, 0], sizes = [2, 15, 64], strides = [1, 1, 1]} : vector<2x16x64xf32> to vector<2x15x64xf32>
    %436 = tpu.concatenate %435, %432 in 1 : vector<2x15x64xf32>, vector<2x1x64xf32> -> vector<2x16x64xf32>
    %437 = tpu.concatenate %434, %424, %436 in 2 : vector<2x16x64xf32>, vector<2x16x64xf32>, vector<2x16x64xf32> -> vector<2x16x192xf32>
    %c0_187 = arith.constant 0 : index
    %c0_188 = arith.constant 0 : index
    %438 = vector.load %arg48[%c0_187, %c0_188] : memref<192x32xf32, #tpu.memory_space<vmem>>, vector<192x32xf32>
    %439 = vector.shape_cast %437 : vector<2x16x192xf32> to vector<32x192xf32>
    %cst_189 = arith.constant dense<0.000000e+00> : vector<32x32xf32>
    %440 = tpu.matmul %439, %438, %cst_189 {dimension_numbers = #tpu.dot_dimension_numbers<[1], [0], [0], [1], [0, 0, 1, 1], [], []>} : vector<32x192xf32>, vector<192x32xf32>, vector<32x32xf32> -> vector<32x32xf32>
    %441 = vector.shape_cast %440 : vector<32x32xf32> to vector<2x16x32xf32>
    %cst_190 = arith.constant 0.000000e+00 : f32
    %442 = vector.broadcast %cst_190 : f32 to vector<2x1x64xf32>
    %443 = vector.extract_strided_slice %226 {offsets = [0, 0, 0], sizes = [2, 15, 64], strides = [1, 1, 1]} : vector<2x16x64xf32> to vector<2x15x64xf32>
    %444 = tpu.concatenate %442, %443 in 1 : vector<2x1x64xf32>, vector<2x15x64xf32> -> vector<2x16x64xf32>
    %445 = vector.extract_strided_slice %226 {offsets = [0, 1, 0], sizes = [2, 15, 64], strides = [1, 1, 1]} : vector<2x16x64xf32> to vector<2x15x64xf32>
    %446 = tpu.concatenate %445, %442 in 1 : vector<2x15x64xf32>, vector<2x1x64xf32> -> vector<2x16x64xf32>
    %447 = tpu.concatenate %444, %226, %446 in 2 : vector<2x16x64xf32>, vector<2x16x64xf32>, vector<2x16x64xf32> -> vector<2x16x192xf32>
    %c0_191 = arith.constant 0 : index
    %c0_192 = arith.constant 0 : index
    %448 = vector.load %arg49[%c0_191, %c0_192] : memref<192x32xf32, #tpu.memory_space<vmem>>, vector<192x32xf32>
    %449 = vector.shape_cast %447 : vector<2x16x192xf32> to vector<32x192xf32>
    %cst_193 = arith.constant dense<0.000000e+00> : vector<32x32xf32>
    %450 = tpu.matmul %449, %448, %cst_193 {dimension_numbers = #tpu.dot_dimension_numbers<[1], [0], [0], [1], [0, 0, 1, 1], [], []>} : vector<32x192xf32>, vector<192x32xf32>, vector<32x32xf32> -> vector<32x32xf32>
    %451 = vector.shape_cast %450 : vector<32x32xf32> to vector<2x16x32xf32>
    %452 = arith.addf %441, %451 : vector<2x16x32xf32>
    %cst_194 = arith.constant dense<0.000000e+00> : vector<32xf32>
    %453 = vector.multi_reduction <add>, %452, %cst_194 [0, 1] : vector<2x16x32xf32> to vector<32xf32>
    %454 = vector.shape_cast %453 : vector<32xf32> to vector<1x1x32xf32>
    %455 = arith.mulf %452, %452 : vector<2x16x32xf32>
    %cst_195 = arith.constant dense<0.000000e+00> : vector<32xf32>
    %456 = vector.multi_reduction <add>, %455, %cst_195 [0, 1] : vector<2x16x32xf32> to vector<32xf32>
    %457 = vector.shape_cast %456 : vector<32xf32> to vector<1x1x32xf32>
    %cst_196 = arith.constant 3.125000e-02 : f32
    %458 = vector.broadcast %cst_196 : f32 to vector<1x1x32xf32>
    %459 = arith.mulf %454, %458 : vector<1x1x32xf32>
    %cst_197 = arith.constant 3.125000e-02 : f32
    %460 = vector.broadcast %cst_197 : f32 to vector<1x1x32xf32>
    %461 = arith.mulf %457, %460 : vector<1x1x32xf32>
    %462 = arith.mulf %459, %459 : vector<1x1x32xf32>
    %463 = arith.subf %461, %462 : vector<1x1x32xf32>
    %cst_198 = arith.constant 0.000000e+00 : f32
    %464 = vector.broadcast %cst_198 : f32 to vector<1x1x32xf32>
    %465 = arith.maximumf %463, %464 : vector<1x1x32xf32>
    %cst_199 = arith.constant 9.99999974E-6 : f32
    %466 = vector.broadcast %cst_199 : f32 to vector<1x1x32xf32>
    %467 = arith.addf %465, %466 : vector<1x1x32xf32>
    %468 = math.rsqrt %467 : vector<1x1x32xf32>
    %c0_200 = arith.constant 0 : index
    %c0_201 = arith.constant 0 : index
    %469 = vector.load %arg45[%c0_200, %c0_201] : memref<1x32xf32, #tpu.memory_space<vmem>>, vector<1x32xf32>
    %470 = vector.shape_cast %469 : vector<1x32xf32> to vector<1x1x32xf32>
    %471 = arith.mulf %468, %470 : vector<1x1x32xf32>
    %c0_202 = arith.constant 0 : index
    %c0_203 = arith.constant 0 : index
    %472 = vector.load %arg44[%c0_202, %c0_203] : memref<1x32xf32, #tpu.memory_space<vmem>>, vector<1x32xf32>
    %473 = vector.shape_cast %472 : vector<1x32xf32> to vector<1x1x32xf32>
    %474 = arith.mulf %459, %471 : vector<1x1x32xf32>
    %475 = arith.subf %473, %474 : vector<1x1x32xf32>
    %476 = vector.broadcast %471 : vector<1x1x32xf32> to vector<2x16x32xf32>
    %477 = arith.mulf %452, %476 : vector<2x16x32xf32>
    %478 = vector.shape_cast %431 : vector<2x32xf32> to vector<2x1x32xf32>
    %479 = vector.broadcast %475 : vector<1x1x32xf32> to vector<2x1x32xf32>
    %480 = arith.addf %479, %478 : vector<2x1x32xf32>
    %481 = vector.broadcast %480 : vector<2x1x32xf32> to vector<2x16x32xf32>
    %482 = arith.addf %477, %481 : vector<2x16x32xf32>
    %cst_204 = arith.constant 0.000000e+00 : f32
    %483 = vector.broadcast %cst_204 : f32 to vector<2x16x32xf32>
    %484 = arith.maximumf %482, %483 : vector<2x16x32xf32>
    %cst_205 = arith.constant 0.000000e+00 : f32
    %485 = vector.broadcast %cst_205 : f32 to vector<2x1x32xf32>
    %486 = vector.extract_strided_slice %484 {offsets = [0, 0, 0], sizes = [2, 15, 32], strides = [1, 1, 1]} : vector<2x16x32xf32> to vector<2x15x32xf32>
    %487 = tpu.concatenate %485, %486 in 1 : vector<2x1x32xf32>, vector<2x15x32xf32> -> vector<2x16x32xf32>
    %488 = vector.extract_strided_slice %484 {offsets = [0, 1, 0], sizes = [2, 15, 32], strides = [1, 1, 1]} : vector<2x16x32xf32> to vector<2x15x32xf32>
    %489 = tpu.concatenate %488, %485 in 1 : vector<2x15x32xf32>, vector<2x1x32xf32> -> vector<2x16x32xf32>
    %490 = tpu.concatenate %487, %484, %489 in 2 : vector<2x16x32xf32>, vector<2x16x32xf32>, vector<2x16x32xf32> -> vector<2x16x96xf32>
    %c0_206 = arith.constant 0 : index
    %c0_207 = arith.constant 0 : index
    %491 = vector.load %arg50[%c0_206, %c0_207] : memref<96x32xf32, #tpu.memory_space<vmem>>, vector<96x32xf32>
    %492 = vector.shape_cast %490 : vector<2x16x96xf32> to vector<32x96xf32>
    %cst_208 = arith.constant dense<0.000000e+00> : vector<32x32xf32>
    %493 = tpu.matmul %492, %491, %cst_208 {dimension_numbers = #tpu.dot_dimension_numbers<[1], [0], [0], [1], [0, 0, 1, 1], [], []>} : vector<32x96xf32>, vector<96x32xf32>, vector<32x32xf32> -> vector<32x32xf32>
    %494 = vector.shape_cast %493 : vector<32x32xf32> to vector<2x16x32xf32>
    %cst_209 = arith.constant dense<0.000000e+00> : vector<32xf32>
    %495 = vector.multi_reduction <add>, %494, %cst_209 [0, 1] : vector<2x16x32xf32> to vector<32xf32>
    %496 = vector.shape_cast %495 : vector<32xf32> to vector<1x1x32xf32>
    %497 = arith.mulf %494, %494 : vector<2x16x32xf32>
    %cst_210 = arith.constant dense<0.000000e+00> : vector<32xf32>
    %498 = vector.multi_reduction <add>, %497, %cst_210 [0, 1] : vector<2x16x32xf32> to vector<32xf32>
    %499 = vector.shape_cast %498 : vector<32xf32> to vector<1x1x32xf32>
    %cst_211 = arith.constant 3.125000e-02 : f32
    %500 = vector.broadcast %cst_211 : f32 to vector<1x1x32xf32>
    %501 = arith.mulf %496, %500 : vector<1x1x32xf32>
    %cst_212 = arith.constant 3.125000e-02 : f32
    %502 = vector.broadcast %cst_212 : f32 to vector<1x1x32xf32>
    %503 = arith.mulf %499, %502 : vector<1x1x32xf32>
    %504 = arith.mulf %501, %501 : vector<1x1x32xf32>
    %505 = arith.subf %503, %504 : vector<1x1x32xf32>
    %cst_213 = arith.constant 0.000000e+00 : f32
    %506 = vector.broadcast %cst_213 : f32 to vector<1x1x32xf32>
    %507 = arith.maximumf %505, %506 : vector<1x1x32xf32>
    %cst_214 = arith.constant 9.99999974E-6 : f32
    %508 = vector.broadcast %cst_214 : f32 to vector<1x1x32xf32>
    %509 = arith.addf %507, %508 : vector<1x1x32xf32>
    %510 = math.rsqrt %509 : vector<1x1x32xf32>
    %c0_215 = arith.constant 0 : index
    %c0_216 = arith.constant 0 : index
    %511 = vector.load %arg47[%c0_215, %c0_216] : memref<1x32xf32, #tpu.memory_space<vmem>>, vector<1x32xf32>
    %512 = vector.shape_cast %511 : vector<1x32xf32> to vector<1x1x32xf32>
    %513 = arith.mulf %510, %512 : vector<1x1x32xf32>
    %c0_217 = arith.constant 0 : index
    %c0_218 = arith.constant 0 : index
    %514 = vector.load %arg46[%c0_217, %c0_218] : memref<1x32xf32, #tpu.memory_space<vmem>>, vector<1x32xf32>
    %515 = vector.shape_cast %514 : vector<1x32xf32> to vector<1x1x32xf32>
    %516 = arith.mulf %501, %513 : vector<1x1x32xf32>
    %517 = arith.subf %515, %516 : vector<1x1x32xf32>
    %518 = vector.broadcast %513 : vector<1x1x32xf32> to vector<2x16x32xf32>
    %519 = arith.mulf %494, %518 : vector<2x16x32xf32>
    %520 = vector.broadcast %517 : vector<1x1x32xf32> to vector<2x16x32xf32>
    %521 = arith.addf %519, %520 : vector<2x16x32xf32>
    %cst_219 = arith.constant 0.000000e+00 : f32
    %522 = vector.broadcast %cst_219 : f32 to vector<2x16x32xf32>
    %523 = arith.maximumf %521, %522 : vector<2x16x32xf32>
    %c0_220 = arith.constant 0 : index
    %c0_221 = arith.constant 0 : index
    %524 = vector.load %arg51[%c0_220, %c0_221] : memref<1x32xf32, #tpu.memory_space<vmem>>, vector<1x32xf32>
    %525 = vector.shape_cast %524 : vector<1x32xf32> to vector<1x1x32xf32>
    %c0_222 = arith.constant 0 : index
    %c0_223 = arith.constant 0 : index
    %526 = vector.load %arg52[%c0_222, %c0_223] : memref<64x32xf32, #tpu.memory_space<vmem>>, vector<64x32xf32>
    %527 = vector.shape_cast %424 : vector<2x16x64xf32> to vector<32x64xf32>
    %cst_224 = arith.constant dense<0.000000e+00> : vector<32x32xf32>
    %528 = tpu.matmul %527, %526, %cst_224 {dimension_numbers = #tpu.dot_dimension_numbers<[1], [0], [0], [1], [0, 0, 1, 1], [], []>} : vector<32x64xf32>, vector<64x32xf32>, vector<32x32xf32> -> vector<32x32xf32>
    %529 = vector.shape_cast %528 : vector<32x32xf32> to vector<2x16x32xf32>
    %530 = vector.broadcast %525 : vector<1x1x32xf32> to vector<2x16x32xf32>
    %531 = arith.addf %530, %529 : vector<2x16x32xf32>
    %c0_225 = arith.constant 0 : index
    %c0_226 = arith.constant 0 : index
    %532 = vector.load %arg53[%c0_225, %c0_226] : memref<64x32xf32, #tpu.memory_space<vmem>>, vector<64x32xf32>
    %533 = vector.shape_cast %226 : vector<2x16x64xf32> to vector<32x64xf32>
    %cst_227 = arith.constant dense<0.000000e+00> : vector<32x32xf32>
    %534 = tpu.matmul %533, %532, %cst_227 {dimension_numbers = #tpu.dot_dimension_numbers<[1], [0], [0], [1], [0, 0, 1, 1], [], []>} : vector<32x64xf32>, vector<64x32xf32>, vector<32x32xf32> -> vector<32x32xf32>
    %535 = vector.shape_cast %534 : vector<32x32xf32> to vector<2x16x32xf32>
    %536 = arith.addf %531, %535 : vector<2x16x32xf32>
    %537 = arith.addf %523, %536 : vector<2x16x32xf32>
    %c0_228 = arith.constant 0 : index
    %c0_229 = arith.constant 0 : index
    %538 = vector.load %arg70[%c0_228, %c0_229] : memref<32x16xf32, #tpu.memory_space<vmem>>, vector<32x16xf32>
    %539 = vector.extract_strided_slice %537 {offsets = [0, 0, 0], sizes = [1, 16, 32], strides = [1, 1, 1]} : vector<2x16x32xf32> to vector<1x16x32xf32>
    %540 = vector.shape_cast %539 : vector<1x16x32xf32> to vector<16x32xf32>
    %cst_230 = arith.constant dense<0.000000e+00> : vector<32x32xf32>
    %541 = tpu.matmul %538, %540, %cst_230 {dimension_numbers = #tpu.dot_dimension_numbers<[1], [0], [0], [1], [0, 0, 1, 1], [], []>} : vector<32x16xf32>, vector<16x32xf32>, vector<32x32xf32> -> vector<32x32xf32>
    %542 = vector.extract_strided_slice %537 {offsets = [1, 0, 0], sizes = [1, 16, 32], strides = [1, 1, 1]} : vector<2x16x32xf32> to vector<1x16x32xf32>
    %543 = vector.shape_cast %542 : vector<1x16x32xf32> to vector<16x32xf32>
    %cst_231 = arith.constant dense<0.000000e+00> : vector<32x32xf32>
    %544 = tpu.matmul %538, %543, %cst_231 {dimension_numbers = #tpu.dot_dimension_numbers<[1], [0], [0], [1], [0, 0, 1, 1], [], []>} : vector<32x16xf32>, vector<16x32xf32>, vector<32x32xf32> -> vector<32x32xf32>
    %545 = vector.shape_cast %541 : vector<32x32xf32> to vector<1x32x32xf32>
    %546 = vector.shape_cast %544 : vector<32x32xf32> to vector<1x32x32xf32>
    %547 = tpu.concatenate %545, %546 in 0 : vector<1x32x32xf32>, vector<1x32x32xf32> -> vector<2x32x32xf32>
    %c0_232 = arith.constant 0 : index
    %c0_233 = arith.constant 0 : index
    %548 = vector.load %arg67[%c0_232, %c0_233] : memref<32x32xf32, #tpu.memory_space<vmem>>, vector<32x32xf32>
    %cst_234 = arith.constant dense<0.000000e+00> : vector<2x32xf32>
    %549 = tpu.matmul %20, %548, %cst_234 {dimension_numbers = #tpu.dot_dimension_numbers<[1], [0], [0], [1], [0, 0, 1, 1], [], []>} : vector<2x32xf32>, vector<32x32xf32>, vector<2x32xf32> -> vector<2x32xf32>
    %c0_235 = arith.constant 0 : index
    %c0_236 = arith.constant 0 : index
    %550 = vector.load %arg66[%c0_235, %c0_236] : memref<1x32xf32, #tpu.memory_space<vmem>>, vector<1x32xf32>
    %551 = vector.broadcast %550 : vector<1x32xf32> to vector<2x32xf32>
    %552 = arith.addf %549, %551 : vector<2x32xf32>
    %cst_237 = arith.constant 0.000000e+00 : f32
    %553 = vector.broadcast %cst_237 : f32 to vector<2x32xf32>
    %554 = arith.maximumf %552, %553 : vector<2x32xf32>
    %cst_238 = arith.constant 0.000000e+00 : f32
    %555 = vector.broadcast %cst_238 : f32 to vector<2x1x32xf32>
    %556 = vector.extract_strided_slice %547 {offsets = [0, 0, 0], sizes = [2, 31, 32], strides = [1, 1, 1]} : vector<2x32x32xf32> to vector<2x31x32xf32>
    %557 = tpu.concatenate %555, %556 in 1 : vector<2x1x32xf32>, vector<2x31x32xf32> -> vector<2x32x32xf32>
    %558 = vector.extract_strided_slice %547 {offsets = [0, 1, 0], sizes = [2, 31, 32], strides = [1, 1, 1]} : vector<2x32x32xf32> to vector<2x31x32xf32>
    %559 = tpu.concatenate %558, %555 in 1 : vector<2x31x32xf32>, vector<2x1x32xf32> -> vector<2x32x32xf32>
    %560 = tpu.concatenate %557, %547, %559 in 2 : vector<2x32x32xf32>, vector<2x32x32xf32>, vector<2x32x32xf32> -> vector<2x32x96xf32>
    %c0_239 = arith.constant 0 : index
    %c0_240 = arith.constant 0 : index
    %561 = vector.load %arg60[%c0_239, %c0_240] : memref<96x32xf32, #tpu.memory_space<vmem>>, vector<96x32xf32>
    %562 = vector.shape_cast %560 : vector<2x32x96xf32> to vector<64x96xf32>
    %cst_241 = arith.constant dense<0.000000e+00> : vector<64x32xf32>
    %563 = tpu.matmul %562, %561, %cst_241 {dimension_numbers = #tpu.dot_dimension_numbers<[1], [0], [0], [1], [0, 0, 1, 1], [], []>} : vector<64x96xf32>, vector<96x32xf32>, vector<64x32xf32> -> vector<64x32xf32>
    %564 = vector.shape_cast %563 : vector<64x32xf32> to vector<2x32x32xf32>
    %cst_242 = arith.constant 0.000000e+00 : f32
    %565 = vector.broadcast %cst_242 : f32 to vector<2x1x32xf32>
    %566 = vector.extract_strided_slice %119 {offsets = [0, 0, 0], sizes = [2, 31, 32], strides = [1, 1, 1]} : vector<2x32x32xf32> to vector<2x31x32xf32>
    %567 = tpu.concatenate %565, %566 in 1 : vector<2x1x32xf32>, vector<2x31x32xf32> -> vector<2x32x32xf32>
    %568 = vector.extract_strided_slice %119 {offsets = [0, 1, 0], sizes = [2, 31, 32], strides = [1, 1, 1]} : vector<2x32x32xf32> to vector<2x31x32xf32>
    %569 = tpu.concatenate %568, %565 in 1 : vector<2x31x32xf32>, vector<2x1x32xf32> -> vector<2x32x32xf32>
    %570 = tpu.concatenate %567, %119, %569 in 2 : vector<2x32x32xf32>, vector<2x32x32xf32>, vector<2x32x32xf32> -> vector<2x32x96xf32>
    %c0_243 = arith.constant 0 : index
    %c0_244 = arith.constant 0 : index
    %571 = vector.load %arg61[%c0_243, %c0_244] : memref<96x32xf32, #tpu.memory_space<vmem>>, vector<96x32xf32>
    %572 = vector.shape_cast %570 : vector<2x32x96xf32> to vector<64x96xf32>
    %cst_245 = arith.constant dense<0.000000e+00> : vector<64x32xf32>
    %573 = tpu.matmul %572, %571, %cst_245 {dimension_numbers = #tpu.dot_dimension_numbers<[1], [0], [0], [1], [0, 0, 1, 1], [], []>} : vector<64x96xf32>, vector<96x32xf32>, vector<64x32xf32> -> vector<64x32xf32>
    %574 = vector.shape_cast %573 : vector<64x32xf32> to vector<2x32x32xf32>
    %575 = arith.addf %564, %574 : vector<2x32x32xf32>
    %cst_246 = arith.constant dense<0.000000e+00> : vector<32xf32>
    %576 = vector.multi_reduction <add>, %575, %cst_246 [0, 1] : vector<2x32x32xf32> to vector<32xf32>
    %577 = vector.shape_cast %576 : vector<32xf32> to vector<1x1x32xf32>
    %578 = arith.mulf %575, %575 : vector<2x32x32xf32>
    %cst_247 = arith.constant dense<0.000000e+00> : vector<32xf32>
    %579 = vector.multi_reduction <add>, %578, %cst_247 [0, 1] : vector<2x32x32xf32> to vector<32xf32>
    %580 = vector.shape_cast %579 : vector<32xf32> to vector<1x1x32xf32>
    %cst_248 = arith.constant 1.562500e-02 : f32
    %581 = vector.broadcast %cst_248 : f32 to vector<1x1x32xf32>
    %582 = arith.mulf %577, %581 : vector<1x1x32xf32>
    %cst_249 = arith.constant 1.562500e-02 : f32
    %583 = vector.broadcast %cst_249 : f32 to vector<1x1x32xf32>
    %584 = arith.mulf %580, %583 : vector<1x1x32xf32>
    %585 = arith.mulf %582, %582 : vector<1x1x32xf32>
    %586 = arith.subf %584, %585 : vector<1x1x32xf32>
    %cst_250 = arith.constant 0.000000e+00 : f32
    %587 = vector.broadcast %cst_250 : f32 to vector<1x1x32xf32>
    %588 = arith.maximumf %586, %587 : vector<1x1x32xf32>
    %cst_251 = arith.constant 9.99999974E-6 : f32
    %589 = vector.broadcast %cst_251 : f32 to vector<1x1x32xf32>
    %590 = arith.addf %588, %589 : vector<1x1x32xf32>
    %591 = math.rsqrt %590 : vector<1x1x32xf32>
    %c0_252 = arith.constant 0 : index
    %c0_253 = arith.constant 0 : index
    %592 = vector.load %arg57[%c0_252, %c0_253] : memref<1x32xf32, #tpu.memory_space<vmem>>, vector<1x32xf32>
    %593 = vector.shape_cast %592 : vector<1x32xf32> to vector<1x1x32xf32>
    %594 = arith.mulf %591, %593 : vector<1x1x32xf32>
    %c0_254 = arith.constant 0 : index
    %c0_255 = arith.constant 0 : index
    %595 = vector.load %arg56[%c0_254, %c0_255] : memref<1x32xf32, #tpu.memory_space<vmem>>, vector<1x32xf32>
    %596 = vector.shape_cast %595 : vector<1x32xf32> to vector<1x1x32xf32>
    %597 = arith.mulf %582, %594 : vector<1x1x32xf32>
    %598 = arith.subf %596, %597 : vector<1x1x32xf32>
    %599 = vector.broadcast %594 : vector<1x1x32xf32> to vector<2x32x32xf32>
    %600 = arith.mulf %575, %599 : vector<2x32x32xf32>
    %601 = vector.shape_cast %554 : vector<2x32xf32> to vector<2x1x32xf32>
    %602 = vector.broadcast %598 : vector<1x1x32xf32> to vector<2x1x32xf32>
    %603 = arith.addf %602, %601 : vector<2x1x32xf32>
    %604 = vector.broadcast %603 : vector<2x1x32xf32> to vector<2x32x32xf32>
    %605 = arith.addf %600, %604 : vector<2x32x32xf32>
    %cst_256 = arith.constant 0.000000e+00 : f32
    %606 = vector.broadcast %cst_256 : f32 to vector<2x32x32xf32>
    %607 = arith.maximumf %605, %606 : vector<2x32x32xf32>
    %cst_257 = arith.constant 0.000000e+00 : f32
    %608 = vector.broadcast %cst_257 : f32 to vector<2x1x32xf32>
    %609 = vector.extract_strided_slice %607 {offsets = [0, 0, 0], sizes = [2, 31, 32], strides = [1, 1, 1]} : vector<2x32x32xf32> to vector<2x31x32xf32>
    %610 = tpu.concatenate %608, %609 in 1 : vector<2x1x32xf32>, vector<2x31x32xf32> -> vector<2x32x32xf32>
    %611 = vector.extract_strided_slice %607 {offsets = [0, 1, 0], sizes = [2, 31, 32], strides = [1, 1, 1]} : vector<2x32x32xf32> to vector<2x31x32xf32>
    %612 = tpu.concatenate %611, %608 in 1 : vector<2x31x32xf32>, vector<2x1x32xf32> -> vector<2x32x32xf32>
    %613 = tpu.concatenate %610, %607, %612 in 2 : vector<2x32x32xf32>, vector<2x32x32xf32>, vector<2x32x32xf32> -> vector<2x32x96xf32>
    %c0_258 = arith.constant 0 : index
    %c0_259 = arith.constant 0 : index
    %614 = vector.load %arg62[%c0_258, %c0_259] : memref<96x32xf32, #tpu.memory_space<vmem>>, vector<96x32xf32>
    %615 = vector.shape_cast %613 : vector<2x32x96xf32> to vector<64x96xf32>
    %cst_260 = arith.constant dense<0.000000e+00> : vector<64x32xf32>
    %616 = tpu.matmul %615, %614, %cst_260 {dimension_numbers = #tpu.dot_dimension_numbers<[1], [0], [0], [1], [0, 0, 1, 1], [], []>} : vector<64x96xf32>, vector<96x32xf32>, vector<64x32xf32> -> vector<64x32xf32>
    %617 = vector.shape_cast %616 : vector<64x32xf32> to vector<2x32x32xf32>
    %cst_261 = arith.constant dense<0.000000e+00> : vector<32xf32>
    %618 = vector.multi_reduction <add>, %617, %cst_261 [0, 1] : vector<2x32x32xf32> to vector<32xf32>
    %619 = vector.shape_cast %618 : vector<32xf32> to vector<1x1x32xf32>
    %620 = arith.mulf %617, %617 : vector<2x32x32xf32>
    %cst_262 = arith.constant dense<0.000000e+00> : vector<32xf32>
    %621 = vector.multi_reduction <add>, %620, %cst_262 [0, 1] : vector<2x32x32xf32> to vector<32xf32>
    %622 = vector.shape_cast %621 : vector<32xf32> to vector<1x1x32xf32>
    %cst_263 = arith.constant 1.562500e-02 : f32
    %623 = vector.broadcast %cst_263 : f32 to vector<1x1x32xf32>
    %624 = arith.mulf %619, %623 : vector<1x1x32xf32>
    %cst_264 = arith.constant 1.562500e-02 : f32
    %625 = vector.broadcast %cst_264 : f32 to vector<1x1x32xf32>
    %626 = arith.mulf %622, %625 : vector<1x1x32xf32>
    %627 = arith.mulf %624, %624 : vector<1x1x32xf32>
    %628 = arith.subf %626, %627 : vector<1x1x32xf32>
    %cst_265 = arith.constant 0.000000e+00 : f32
    %629 = vector.broadcast %cst_265 : f32 to vector<1x1x32xf32>
    %630 = arith.maximumf %628, %629 : vector<1x1x32xf32>
    %cst_266 = arith.constant 9.99999974E-6 : f32
    %631 = vector.broadcast %cst_266 : f32 to vector<1x1x32xf32>
    %632 = arith.addf %630, %631 : vector<1x1x32xf32>
    %633 = math.rsqrt %632 : vector<1x1x32xf32>
    %c0_267 = arith.constant 0 : index
    %c0_268 = arith.constant 0 : index
    %634 = vector.load %arg59[%c0_267, %c0_268] : memref<1x32xf32, #tpu.memory_space<vmem>>, vector<1x32xf32>
    %635 = vector.shape_cast %634 : vector<1x32xf32> to vector<1x1x32xf32>
    %636 = arith.mulf %633, %635 : vector<1x1x32xf32>
    %c0_269 = arith.constant 0 : index
    %c0_270 = arith.constant 0 : index
    %637 = vector.load %arg58[%c0_269, %c0_270] : memref<1x32xf32, #tpu.memory_space<vmem>>, vector<1x32xf32>
    %638 = vector.shape_cast %637 : vector<1x32xf32> to vector<1x1x32xf32>
    %639 = arith.mulf %624, %636 : vector<1x1x32xf32>
    %640 = arith.subf %638, %639 : vector<1x1x32xf32>
    %641 = vector.broadcast %636 : vector<1x1x32xf32> to vector<2x32x32xf32>
    %642 = arith.mulf %617, %641 : vector<2x32x32xf32>
    %643 = vector.broadcast %640 : vector<1x1x32xf32> to vector<2x32x32xf32>
    %644 = arith.addf %642, %643 : vector<2x32x32xf32>
    %cst_271 = arith.constant 0.000000e+00 : f32
    %645 = vector.broadcast %cst_271 : f32 to vector<2x32x32xf32>
    %646 = arith.maximumf %644, %645 : vector<2x32x32xf32>
    %c0_272 = arith.constant 0 : index
    %c0_273 = arith.constant 0 : index
    %647 = vector.load %arg63[%c0_272, %c0_273] : memref<1x32xf32, #tpu.memory_space<vmem>>, vector<1x32xf32>
    %648 = vector.shape_cast %647 : vector<1x32xf32> to vector<1x1x32xf32>
    %c0_274 = arith.constant 0 : index
    %c0_275 = arith.constant 0 : index
    %649 = vector.load %arg64[%c0_274, %c0_275] : memref<32x32xf32, #tpu.memory_space<vmem>>, vector<32x32xf32>
    %650 = vector.shape_cast %547 : vector<2x32x32xf32> to vector<64x32xf32>
    %cst_276 = arith.constant dense<0.000000e+00> : vector<64x32xf32>
    %651 = tpu.matmul %650, %649, %cst_276 {dimension_numbers = #tpu.dot_dimension_numbers<[1], [0], [0], [1], [0, 0, 1, 1], [], []>} : vector<64x32xf32>, vector<32x32xf32>, vector<64x32xf32> -> vector<64x32xf32>
    %652 = vector.shape_cast %651 : vector<64x32xf32> to vector<2x32x32xf32>
    %653 = vector.broadcast %648 : vector<1x1x32xf32> to vector<2x32x32xf32>
    %654 = arith.addf %653, %652 : vector<2x32x32xf32>
    %c0_277 = arith.constant 0 : index
    %c0_278 = arith.constant 0 : index
    %655 = vector.load %arg65[%c0_277, %c0_278] : memref<32x32xf32, #tpu.memory_space<vmem>>, vector<32x32xf32>
    %656 = vector.shape_cast %119 : vector<2x32x32xf32> to vector<64x32xf32>
    %cst_279 = arith.constant dense<0.000000e+00> : vector<64x32xf32>
    %657 = tpu.matmul %656, %655, %cst_279 {dimension_numbers = #tpu.dot_dimension_numbers<[1], [0], [0], [1], [0, 0, 1, 1], [], []>} : vector<64x32xf32>, vector<32x32xf32>, vector<64x32xf32> -> vector<64x32xf32>
    %658 = vector.shape_cast %657 : vector<64x32xf32> to vector<2x32x32xf32>
    %659 = arith.addf %654, %658 : vector<2x32x32xf32>
    %660 = arith.addf %646, %659 : vector<2x32x32xf32>
    %c0_280 = arith.constant 0 : index
    %c0_281 = arith.constant 0 : index
    %661 = vector.load %arg39[%c0_280, %c0_281] : memref<1x32xf32, #tpu.memory_space<vmem>>, vector<1x32xf32>
    %662 = vector.shape_cast %661 : vector<1x32xf32> to vector<1x1x32xf32>
    %663 = vector.broadcast %662 : vector<1x1x32xf32> to vector<2x32x32xf32>
    %664 = arith.mulf %660, %663 : vector<2x32x32xf32>
    %cst_282 = arith.constant dense<0.000000e+00> : vector<2x32xf32>
    %665 = vector.multi_reduction <add>, %664, %cst_282 [2] : vector<2x32x32xf32> to vector<2x32xf32>
    %c0_283 = arith.constant 0 : index
    %c0_284 = arith.constant 0 : index
    %666 = vector.load %arg38[%c0_283, %c0_284] : memref<1x1xf32, #tpu.memory_space<vmem>>, vector<1x1xf32>
    %667 = vector.broadcast %666 : vector<1x1xf32> to vector<2x32xf32>
    %668 = arith.addf %665, %667 : vector<2x32xf32>
    %c0_285 = arith.constant 0 : index
    %c0_286 = arith.constant 0 : index
    %669 = vector.load %arg72[%c0_285, %c0_286] : memref<2x32xf32, #tpu.memory_space<vmem>>, vector<2x32xf32>
    tpu.vector_store %arg72[%c0_285, %c0_286], %668 {strides = array<i32>} : memref<2x32xf32, #tpu.memory_space<vmem>>, vector<2x32xf32>,
    return
  }
}

</mosaic_0001>

<llo_original>
// kernel: diffusion_forward.1
$region0: #{diffusion_forward.1}
  #allocation0 [shape = 'u32[]', space=smem, size = 0x4, offset = 0x4, fixed_abs, tag = 'smem constant byte address 0x4 - core index']
  #allocation1 [shape = 'u32[144,128]{1,0:T(1,128)}', space=vmem, size = 0x12000, scoped, tag = 'internal scratch']
  #allocation2 [shape = 'f32[1,1]{1,0:T(1,128)S(1)}', space=vmem, size = 0x200, scoped, tag = 'scoped memory for diffusion_forward.1']
  %s0 = inlined_call_operand.smem [shape: u32[73], index: -1, kind: input, shape index: {}]
  %s1 = sld [smem:[%s0]]
  %s2 = scalar_lea.smem %s0, 1
  %s3 = sld [smem:[%s2]]
  %s4 = scalar_lea.smem %s0, 2
  %s5 = sld [smem:[%s4]]
  %s6 = scalar_lea.smem %s0, 3
  %s7 = sld [smem:[%s6]]
  %s8 = scalar_lea.smem %s0, 4
  %s9 = sld [smem:[%s8]]
  %s10 = scalar_lea.smem %s0, 5
  %s11 = sld [smem:[%s10]]
  %s12 = scalar_lea.smem %s0, 6
  %s13 = sld [smem:[%s12]]
  %s14 = scalar_lea.smem %s0, 7
  %s15 = sld [smem:[%s14]]
  %s16 = scalar_lea.smem %s0, 8
  %s17 = sld [smem:[%s16]]
  %s18 = scalar_lea.smem %s0, 9
  %s19 = sld [smem:[%s18]]
  %s20 = scalar_lea.smem %s0, 10
  %s21 = sld [smem:[%s20]]
  %s22 = scalar_lea.smem %s0, 11
  %s23 = sld [smem:[%s22]]
  %s24 = scalar_lea.smem %s0, 12
  %s25 = sld [smem:[%s24]]
  %s26 = scalar_lea.smem %s0, 13
  %s27 = sld [smem:[%s26]]
  %s28 = scalar_lea.smem %s0, 14
  %s29 = sld [smem:[%s28]]
  %s30 = scalar_lea.smem %s0, 15
  %s31 = sld [smem:[%s30]]
  %s32 = scalar_lea.smem %s0, 16
  %s33 = sld [smem:[%s32]]
  %s34 = scalar_lea.smem %s0, 17
  %s35 = sld [smem:[%s34]]
  %s36 = scalar_lea.smem %s0, 18
  %s37 = sld [smem:[%s36]]
  %s38 = scalar_lea.smem %s0, 19
  %s39 = sld [smem:[%s38]]
  %s40 = scalar_lea.smem %s0, 20
  %s41 = sld [smem:[%s40]]
  %s42 = scalar_lea.smem %s0, 21
  %s43 = sld [smem:[%s42]]
  %s44 = scalar_lea.smem %s0, 22
  %s45 = sld [smem:[%s44]]
  %s46 = scalar_lea.smem %s0, 23
  %s47 = sld [smem:[%s46]]
  %s48 = scalar_lea.smem %s0, 24
  %s49 = sld [smem:[%s48]]
  %s50 = scalar_lea.smem %s0, 25
  %s51 = sld [smem:[%s50]]
  %s52 = scalar_lea.smem %s0, 26
  %s53 = sld [smem:[%s52]]
  %s54 = scalar_lea.smem %s0, 27
  %s55 = sld [smem:[%s54]]
  %s56 = scalar_lea.smem %s0, 28
  %s57 = sld [smem:[%s56]]
  %s58 = scalar_lea.smem %s0, 29
  %s59 = sld [smem:[%s58]]
  %s60 = scalar_lea.smem %s0, 30
  %s61 = sld [smem:[%s60]]
  %s62 = scalar_lea.smem %s0, 31
  %s63 = sld [smem:[%s62]]
  %s64 = scalar_lea.smem %s0, 32
  %s65 = sld [smem:[%s64]]
  %s66 = scalar_lea.smem %s0, 33
  %s67 = sld [smem:[%s66]]
  %s68 = scalar_lea.smem %s0, 34
  %s69 = sld [smem:[%s68]]
  %s70 = scalar_lea.smem %s0, 35
  %s71 = sld [smem:[%s70]]
  %s72 = scalar_lea.smem %s0, 36
  %s73 = sld [smem:[%s72]]
  %s74 = scalar_lea.smem %s0, 37
  %s75 = sld [smem:[%s74]]
  %s76 = scalar_lea.smem %s0, 38
  %s77 = sld [smem:[%s76]]
  %s78 = scalar_lea.smem %s0, 39
  %s79 = sld [smem:[%s78]]
  %s80 = scalar_lea.smem %s0, 40
  %s81 = sld [smem:[%s80]]
  %s82 = scalar_lea.smem %s0, 41
  %s83 = sld [smem:[%s82]]
  %s84 = scalar_lea.smem %s0, 42
  %s85 = sld [smem:[%s84]]
  %s86 = scalar_lea.smem %s0, 43
  %s87 = sld [smem:[%s86]]
  %s88 = scalar_lea.smem %s0, 44
  %s89 = sld [smem:[%s88]]
  %s90 = scalar_lea.smem %s0, 45
  %s91 = sld [smem:[%s90]]
  %s92 = scalar_lea.smem %s0, 46
  %s93 = sld [smem:[%s92]]
  %s94 = scalar_lea.smem %s0, 47
  %s95 = sld [smem:[%s94]]
  %s96 = scalar_lea.smem %s0, 48
  %s97 = sld [smem:[%s96]]
  %s98 = scalar_lea.smem %s0, 49
  %s99 = sld [smem:[%s98]]
  %s100 = scalar_lea.smem %s0, 50
  %s101 = sld [smem:[%s100]]
  %s102 = scalar_lea.smem %s0, 51
  %s103 = sld [smem:[%s102]]
  %s104 = scalar_lea.smem %s0, 52
  %s105 = sld [smem:[%s104]]
  %s106 = scalar_lea.smem %s0, 53
  %s107 = sld [smem:[%s106]]
  %s108 = scalar_lea.smem %s0, 54
  %s109 = sld [smem:[%s108]]
  %s110 = scalar_lea.smem %s0, 55
  %s111 = sld [smem:[%s110]]
  %s112 = scalar_lea.smem %s0, 56
  %s113 = sld [smem:[%s112]]
  %s114 = scalar_lea.smem %s0, 57
  %s115 = sld [smem:[%s114]]
  %s116 = scalar_lea.smem %s0, 58
  %s117 = sld [smem:[%s116]]
  %s118 = scalar_lea.smem %s0, 59
  %s119 = sld [smem:[%s118]]
  %s120 = scalar_lea.smem %s0, 60
  %s121 = sld [smem:[%s120]]
  %s122 = scalar_lea.smem %s0, 61
  %s123 = sld [smem:[%s122]]
  %s124 = scalar_lea.smem %s0, 62
  %s125 = sld [smem:[%s124]]
  %s126 = scalar_lea.smem %s0, 63
  %s127 = sld [smem:[%s126]]
  %s128 = scalar_lea.smem %s0, 64
  %s129 = sld [smem:[%s128]]
  %s130 = scalar_lea.smem %s0, 65
  %s131 = sld [smem:[%s130]]
  %s132 = scalar_lea.smem %s0, 66
  %s133 = sld [smem:[%s132]]
  %s134 = scalar_lea.smem %s0, 67
  %s135 = sld [smem:[%s134]]
  %s136 = scalar_lea.smem %s0, 68
  %s137 = sld [smem:[%s136]]
  %s138 = scalar_lea.smem %s0, 69
  %s139 = sld [smem:[%s138]]
  %s140 = scalar_lea.smem %s0, 70
  %s141 = sld [smem:[%s140]]
  %s142 = scalar_lea.smem %s0, 71
  %s143 = sld [smem:[%s142]]
  %s144 = scalar_lea.smem %s0, 72
  %s145 = sld [smem:[%s144]]
  %s146 = sld [smem:[#allocation0]]
  $region362: #{diffusion_forward.1} parent=0
    _
  %s148 = ssub.s32 1, %s146
  %s149 = scalar_select 0, %s148, %s146
  %v150 = vstv %s77
  %151 = vst [vmem:[#allocation2] sm:$0x1] %v150
  $region1: #{diffusion_forward.1} parent=0
    #allocation3 [shape = 'u8[512]{0}', space=vmem, size = 0x400, scoped, tag = 'input window, operand 39, single buffered']
    #allocation4 [shape = 's32[1]{0}', space=sflag, size = 0x4, scoped, tag = 'scoped memory for diffusion_forward.1']
    #allocation5 [shape = 's32[1]{0}', space=sflag, size = 0x4, scoped, tag = 'scoped memory for diffusion_forward.1']
    #allocation6 [shape = 'u8[512]{0}', space=vmem, size = 0x400, scoped, tag = 'input window, operand 40, single buffered']
    #allocation7 [shape = 's32[1]{0}', space=sflag, size = 0x4, scoped, tag = 'scoped memory for diffusion_forward.1']
    #allocation8 [shape = 'u8[512]{0}', space=vmem, size = 0x400, scoped, tag = 'input window, operand 41, single buffered']
    #allocation9 [shape = 'u8[512]{0}', space=vmem, size = 0x400, scoped, tag = 'input window, operand 42, single buffered']
    #allocation10 [shape = 's32[1]{0}', space=sflag, size = 0x4, scoped, tag = 'scoped memory for diffusion_forward.1']
    #allocation11 [shape = 'u8[512]{0}', space=vmem, size = 0x400, scoped, tag = 'input window, operand 44, single buffered']
    #allocation12 [shape = 'u8[512]{0}', space=vmem, size = 0x400, scoped, tag = 'input window, operand 45, single buffered']
    #allocation13 [shape = 's32[1]{0}', space=sflag, size = 0x4, scoped, tag = 'scoped memory for diffusion_forward.1']
    #allocation14 [shape = 'u8[512]{0}', space=vmem, size = 0x400, scoped, tag = 'input window, operand 46, single buffered']
    #allocation15 [shape = 'u8[512]{0}', space=vmem, size = 0x400, scoped, tag = 'input window, operand 47, single buffered']
    #allocation16 [shape = 's32[1]{0}', space=sflag, size = 0x4, scoped, tag = 'scoped memory for diffusion_forward.1']
    #allocation17 [shape = 'u8[512]{0}', space=vmem, size = 0x400, scoped, tag = 'input window, operand 51, single buffered']
    #allocation18 [shape = 'u8[512]{0}', space=vmem, size = 0x400, scoped, tag = 'input window, operand 54, single buffered']
    #allocation19 [shape = 's32[1]{0}', space=sflag, size = 0x4, scoped, tag = 'scoped memory for diffusion_forward.1']
    #allocation20 [shape = 'u8[512]{0}', space=vmem, size = 0x400, scoped, tag = 'input window, operand 56, single buffered']
    #allocation21 [shape = 'u8[512]{0}', space=vmem, size = 0x400, scoped, tag = 'input window, operand 57, single buffered']
    #allocation22 [shape = 's32[1]{0}', space=sflag, size = 0x4, scoped, tag = 'scoped memory for diffusion_forward.1']
    #allocation23 [shape = 'u8[512]{0}', space=vmem, size = 0x400, scoped, tag = 'input window, operand 58, single buffered']
    #allocation24 [shape = 'u8[512]{0}', space=vmem, size = 0x400, scoped, tag = 'input window, operand 59, single buffered']
    #allocation25 [shape = 's32[1]{0}', space=sflag, size = 0x4, scoped, tag = 'scoped memory for diffusion_forward.1']
    #allocation26 [shape = 'u8[512]{0}', space=vmem, size = 0x400, scoped, tag = 'input window, operand 63, single buffered']
    #allocation27 [shape = 'u8[512]{0}', space=vmem, size = 0x400, scoped, tag = 'input window, operand 66, single buffered']
    #allocation28 [shape = 's32[1]{0}', space=sflag, size = 0x4, scoped, tag = 'scoped memory for diffusion_forward.1']
    #allocation29 [shape = 'u8[1024]{0}', space=vmem, size = 0x400, scoped, tag = 'output window, operand 0, single buffered']
    %152 = vsyncpa [#allocation4], 0
    %153 = vsyncpa [#allocation7], 0
    %154 = vsyncpa [#allocation10], 0
    %155 = vsyncpa [#allocation13], 0
    %156 = vsyncpa [#allocation16], 0
    %157 = vsyncpa [#allocation19], 0
    %158 = vsyncpa [#allocation22], 0
    %159 = vsyncpa [#allocation25], 0
    %160 = vsyncpa [#allocation28], 0
    %161 = vsyncpa [#allocation5], 0
    // Predicated region
    $region2: #{diffusion_forward.1} parent=1 // pred_check
      _
    $region3: #{diffusion_forward.1} parent=1 // pred_check_branch
      %163 = sbr.rel (0) target = $region5
    $region4: #{diffusion_forward.1} parent=1 // pred_region
      _
    $region5: #{diffusion_forward.1} parent=1 // pred_fallthru
      _
    // Predicated region
    $region6: #{diffusion_forward.1} parent=1 // pred_check
      _
    $region7: #{diffusion_forward.1} parent=1 // pred_check_branch
      %165 = sbr.rel (0) target = $region9
    $region8: #{diffusion_forward.1} parent=1 // pred_region
      _
    $region9: #{diffusion_forward.1} parent=1 // pred_fallthru
      _
    // Predicated region
    $region10: #{diffusion_forward.1} parent=1 // pred_check
      _
    $region11: #{diffusion_forward.1} parent=1 // pred_check_branch
      %167 = sbr.rel (0) target = $region13
    $region12: #{diffusion_forward.1} parent=1 // pred_region
      _
    $region13: #{diffusion_forward.1} parent=1 // pred_fallthru
      _
    // Predicated region
    $region14: #{diffusion_forward.1} parent=1 // pred_check
      _
    $region15: #{diffusion_forward.1} parent=1 // pred_check_branch
      %169 = sbr.rel (0) target = $region17
    $region16: #{diffusion_forward.1} parent=1 // pred_region
      _
    $region17: #{diffusion_forward.1} parent=1 // pred_fallthru
      _
    // Predicated region
    $region18: #{diffusion_forward.1} parent=1 // pred_check
      _
    $region19: #{diffusion_forward.1} parent=1 // pred_check_branch
      %171 = sbr.rel (0) target = $region21
    $region20: #{diffusion_forward.1} parent=1 // pred_region
      _
    $region21: #{diffusion_forward.1} parent=1 // pred_fallthru
      _
    // Predicated region
    $region22: #{diffusion_forward.1} parent=1 // pred_check
      _
    $region23: #{diffusion_forward.1} parent=1 // pred_check_branch
      %173 = sbr.rel (0) target = $region25
    $region24: #{diffusion_forward.1} parent=1 // pred_region
      _
    $region25: #{diffusion_forward.1} parent=1 // pred_fallthru
      _
    // Predicated region
    $region26: #{diffusion_forward.1} parent=1 // pred_check
      _
    $region27: #{diffusion_forward.1} parent=1 // pred_check_branch
      %175 = sbr.rel (0) target = $region29
    $region28: #{diffusion_forward.1} parent=1 // pred_region
      _
    $region29: #{diffusion_forward.1} parent=1 // pred_fallthru
      _
    // Predicated region
    $region30: #{diffusion_forward.1} parent=1 // pred_check
      _
    $region31: #{diffusion_forward.1} parent=1 // pred_check_branch
      %177 = sbr.rel (0) target = $region33
    $region32: #{diffusion_forward.1} parent=1 // pred_region
      _
    $region33: #{diffusion_forward.1} parent=1 // pred_fallthru
      _
    // Predicated region
    $region34: #{diffusion_forward.1} parent=1 // pred_check
      _
    $region35: #{diffusion_forward.1} parent=1 // pred_check_branch
      %179 = sbr.rel (0) target = $region37
    $region36: #{diffusion_forward.1} parent=1 // pred_region
      _
    $region37: #{diffusion_forward.1} parent=1 // pred_fallthru
      _
    // Predicated region
    $region38: #{diffusion_forward.1} parent=1 // pred_check
      _
    $region39: #{diffusion_forward.1} parent=1 // pred_check_branch
      %181 = sbr.rel (0) target = $region41
    $region40: #{diffusion_forward.1} parent=1 // pred_region
      _
    $region41: #{diffusion_forward.1} parent=1 // pred_fallthru
      _
    // Predicated region
    $region42: #{diffusion_forward.1} parent=1 // pred_check
      _
    $region43: #{diffusion_forward.1} parent=1 // pred_check_branch
      %183 = sbr.rel (0) target = $region45
    $region44: #{diffusion_forward.1} parent=1 // pred_region
      _
    $region45: #{diffusion_forward.1} parent=1 // pred_fallthru
      _
    // Predicated region
    $region46: #{diffusion_forward.1} parent=1 // pred_check
      _
    $region47: #{diffusion_forward.1} parent=1 // pred_check_branch
      %185 = sbr.rel (0) target = $region49
    $region48: #{diffusion_forward.1} parent=1 // pred_region
      _
    $region49: #{diffusion_forward.1} parent=1 // pred_fallthru
      _
    // Predicated region
    $region50: #{diffusion_forward.1} parent=1 // pred_check
      _
    $region51: #{diffusion_forward.1} parent=1 // pred_check_branch
      %187 = sbr.rel (0) target = $region53
    $region52: #{diffusion_forward.1} parent=1 // pred_region
      _
    $region53: #{diffusion_forward.1} parent=1 // pred_fallthru
      _
    // Predicated region
    $region54: #{diffusion_forward.1} parent=1 // pred_check
      _
    $region55: #{diffusion_forward.1} parent=1 // pred_check_branch
      %189 = sbr.rel (0) target = $region57
    $region56: #{diffusion_forward.1} parent=1 // pred_region
      _
    $region57: #{diffusion_forward.1} parent=1 // pred_fallthru
      _
    // Predicated region
    $region58: #{diffusion_forward.1} parent=1 // pred_check
      _
    $region59: #{diffusion_forward.1} parent=1 // pred_check_branch
      %191 = sbr.rel (0) target = $region61
    $region60: #{diffusion_forward.1} parent=1 // pred_region
      _
    $region61: #{diffusion_forward.1} parent=1 // pred_fallthru
      _
    // Predicated region
    $region62: #{diffusion_forward.1} parent=1 // pred_check
      _
    $region63: #{diffusion_forward.1} parent=1 // pred_check_branch
      %193 = sbr.rel (0) target = $region65
    $region64: #{diffusion_forward.1} parent=1 // pred_region
      _
    $region65: #{diffusion_forward.1} parent=1 // pred_fallthru
      _
    // Predicated region
    $region66: #{diffusion_forward.1} parent=1 // pred_check
      _
    $region67: #{diffusion_forward.1} parent=1 // pred_check_branch
      %195 = sbr.rel (0) target = $region69
    $region68: #{diffusion_forward.1} parent=1 // pred_region
      _
    $region69: #{diffusion_forward.1} parent=1 // pred_fallthru
      _
    // Predicated region
    $region70: #{diffusion_forward.1} parent=1 // pred_check
      _
    $region71: #{diffusion_forward.1} parent=1 // pred_check_branch
      %197 = sbr.rel (0) target = $region73
    $region72: #{diffusion_forward.1} parent=1 // pred_region
      _
    $region73: #{diffusion_forward.1} parent=1 // pred_fallthru
      _
    // Predicated region
    $region74: #{diffusion_forward.1} parent=1 // pred_check
      _
    $region75: #{diffusion_forward.1} parent=1 // pred_check_branch
      %199 = sbr.rel (0) target = $region77
    $region76: #{diffusion_forward.1} parent=1 // pred_region
      _
    $region77: #{diffusion_forward.1} parent=1 // pred_fallthru
      _
    // Predicated region
    $region78: #{diffusion_forward.1} parent=1 // pred_check
      _
    $region79: #{diffusion_forward.1} parent=1 // pred_check_branch
      %201 = sbr.rel (0) target = $region81
    $region80: #{diffusion_forward.1} parent=1 // pred_region
      _
    $region81: #{diffusion_forward.1} parent=1 // pred_fallthru
      _
    // Predicated region
    $region82: #{diffusion_forward.1} parent=1 // pred_check
      _
    $region83: #{diffusion_forward.1} parent=1 // pred_check_branch
      %203 = sbr.rel (0) target = $region85
    $region84: #{diffusion_forward.1} parent=1 // pred_region
      _
    $region85: #{diffusion_forward.1} parent=1 // pred_fallthru
      _
    // Predicated region
    $region86: #{diffusion_forward.1} parent=1 // pred_check
      _
    $region87: #{diffusion_forward.1} parent=1 // pred_check_branch
      %205 = sbr.rel (0) target = $region89
    $region88: #{diffusion_forward.1} parent=1 // pred_region
      _
    $region89: #{diffusion_forward.1} parent=1 // pred_fallthru
      _
    // Predicated region
    $region90: #{diffusion_forward.1} parent=1 // pred_check
      _
    $region91: #{diffusion_forward.1} parent=1 // pred_check_branch
      %207 = sbr.rel (0) target = $region93
    $region92: #{diffusion_forward.1} parent=1 // pred_region
      _
    $region93: #{diffusion_forward.1} parent=1 // pred_fallthru
      _
    // Predicated region
    $region94: #{diffusion_forward.1} parent=1 // pred_check
      _
    $region95: #{diffusion_forward.1} parent=1 // pred_check_branch
      %209 = sbr.rel (0) target = $region97
    $region96: #{diffusion_forward.1} parent=1 // pred_region
      _
    $region97: #{diffusion_forward.1} parent=1 // pred_fallthru
      _
    // Predicated region
    $region98: #{diffusion_forward.1} parent=1 // pred_check
      _
    $region99: #{diffusion_forward.1} parent=1 // pred_check_branch
      %211 = sbr.rel (0) target = $region101
    $region100: #{diffusion_forward.1} parent=1 // pred_region
      _
    $region101: #{diffusion_forward.1} parent=1 // pred_fallthru
      _
    // Predicated region
    $region102: #{diffusion_forward.1} parent=1 // pred_check
      _
    $region103: #{diffusion_forward.1} parent=1 // pred_check_branch
      %213 = sbr.rel (0) target = $region105
    $region104: #{diffusion_forward.1} parent=1 // pred_region
      _
    $region105: #{diffusion_forward.1} parent=1 // pred_fallthru
      _
    // Predicated region
    $region106: #{diffusion_forward.1} parent=1 // pred_check
      _
    $region107: #{diffusion_forward.1} parent=1 // pred_check_branch
      %215 = sbr.rel (0) target = $region109
    $region108: #{diffusion_forward.1} parent=1 // pred_region
      _
    $region109: #{diffusion_forward.1} parent=1 // pred_fallthru
      _
    // Predicated region
    $region110: #{diffusion_forward.1} parent=1 // pred_check
      _
    $region111: #{diffusion_forward.1} parent=1 // pred_check_branch
      %217 = sbr.rel (0) target = $region113
    $region112: #{diffusion_forward.1} parent=1 // pred_region
      _
    $region113: #{diffusion_forward.1} parent=1 // pred_fallthru
      _
    // Predicated region
    $region114: #{diffusion_forward.1} parent=1 // pred_check
      _
    $region115: #{diffusion_forward.1} parent=1 // pred_check_branch
      %219 = sbr.rel (0) target = $region117
    $region116: #{diffusion_forward.1} parent=1 // pred_region
      _
    $region117: #{diffusion_forward.1} parent=1 // pred_fallthru
      _
    // Predicated region
    $region118: #{diffusion_forward.1} parent=1 // pred_check
      _
    $region119: #{diffusion_forward.1} parent=1 // pred_check_branch
      %221 = sbr.rel (0) target = $region121
    $region120: #{diffusion_forward.1} parent=1 // pred_region
      _
    $region121: #{diffusion_forward.1} parent=1 // pred_fallthru
      _
    // Predicated region
    $region122: #{diffusion_forward.1} parent=1 // pred_check
      _
    $region123: #{diffusion_forward.1} parent=1 // pred_check_branch
      %223 = sbr.rel (0) target = $region125
    $region124: #{diffusion_forward.1} parent=1 // pred_region
      _
    $region125: #{diffusion_forward.1} parent=1 // pred_fallthru
      _
    // Predicated region
    $region126: #{diffusion_forward.1} parent=1 // pred_check
      _
    $region127: #{diffusion_forward.1} parent=1 // pred_check_branch
      %225 = sbr.rel (0) target = $region129
    $region128: #{diffusion_forward.1} parent=1 // pred_region
      _
    $region129: #{diffusion_forward.1} parent=1 // pred_fallthru
      _
    // Predicated region
    $region130: #{diffusion_forward.1} parent=1 // pred_check
      _
    $region131: #{diffusion_forward.1} parent=1 // pred_check_branch
      %227 = sbr.rel (0) target = $region133
    $region132: #{diffusion_forward.1} parent=1 // pred_region
      _
    $region133: #{diffusion_forward.1} parent=1 // pred_fallthru
      _
    // Predicated region
    $region134: #{diffusion_forward.1} parent=1 // pred_check
      _
    $region135: #{diffusion_forward.1} parent=1 // pred_check_branch
      %229 = sbr.rel (0) target = $region137
    $region136: #{diffusion_forward.1} parent=1 // pred_region
      _
    $region137: #{diffusion_forward.1} parent=1 // pred_fallthru
      _
    // Predicated region
    $region138: #{diffusion_forward.1} parent=1 // pred_check
      _
    $region139: #{diffusion_forward.1} parent=1 // pred_check_branch
      %231 = sbr.rel (0) target = $region141
    $region140: #{diffusion_forward.1} parent=1 // pred_region
      _
    $region141: #{diffusion_forward.1} parent=1 // pred_fallthru
      _
    // Predicated region
    $region142: #{diffusion_forward.1} parent=1 // pred_check
      _
    $region143: #{diffusion_forward.1} parent=1 // pred_check_branch
      %233 = sbr.rel (0) target = $region145
    $region144: #{diffusion_forward.1} parent=1 // pred_region
      _
    $region145: #{diffusion_forward.1} parent=1 // pred_fallthru
      _
    // Predicated region
    $region146: #{diffusion_forward.1} parent=1 // pred_check
      _
    $region147: #{diffusion_forward.1} parent=1 // pred_check_branch
      %235 = sbr.rel (0) target = $region149
    $region148: #{diffusion_forward.1} parent=1 // pred_region
      _
    $region149: #{diffusion_forward.1} parent=1 // pred_fallthru
      _
    // Predicated region
    $region150: #{diffusion_forward.1} parent=1 // pred_check
      _
    $region151: #{diffusion_forward.1} parent=1 // pred_check_branch
      %237 = sbr.rel (0) target = $region153
    $region152: #{diffusion_forward.1} parent=1 // pred_region
      _
    $region153: #{diffusion_forward.1} parent=1 // pred_fallthru
      _
    // Predicated region
    $region154: #{diffusion_forward.1} parent=1 // pred_check
      _
    $region155: #{diffusion_forward.1} parent=1 // pred_check_branch
      %239 = sbr.rel (0) target = $region157
    $region156: #{diffusion_forward.1} parent=1 // pred_region
      _
    $region157: #{diffusion_forward.1} parent=1 // pred_fallthru
      _
    // Predicated region
    $region158: #{diffusion_forward.1} parent=1 // pred_check
      _
    $region159: #{diffusion_forward.1} parent=1 // pred_check_branch
      %241 = sbr.rel (0) target = $region161
    $region160: #{diffusion_forward.1} parent=1 // pred_region
      %s243 = ssub.s32 16, 16
      %244 = vsyncadd [#allocation4], %s243
      %s246 = sshll.u32 [#allocation3], 4
      %s247 = int_to_ptr.vmem [resolvable:$true] %s246
      %249 = dma.hbm_to_vmem [thread:$0]  %s79, 16, %s247, [#allocation4]
    $region161: #{diffusion_forward.1} parent=1 // pred_fallthru
      _
    // Predicated region
    $region162: #{diffusion_forward.1} parent=1 // pred_check
      _
    $region163: #{diffusion_forward.1} parent=1 // pred_check_branch
      %251 = sbr.rel (0) target = $region165
    $region164: #{diffusion_forward.1} parent=1 // pred_region
      %s253 = ssub.s32 16, 16
      %254 = vsyncadd [#allocation7], %s253
      %s256 = sshll.u32 [#allocation6], 4
      %s257 = int_to_ptr.vmem [resolvable:$true] %s256
      %259 = dma.hbm_to_vmem [thread:$0]  %s81, 16, %s257, [#allocation7]
    $region165: #{diffusion_forward.1} parent=1 // pred_fallthru
      _
    // Predicated region
    $region166: #{diffusion_forward.1} parent=1 // pred_check
      _
    $region167: #{diffusion_forward.1} parent=1 // pred_check_branch
      %261 = sbr.rel (0) target = $region169
    $region168: #{diffusion_forward.1} parent=1 // pred_region
      %s263 = ssub.s32 16, 16
      %264 = vsyncadd [#allocation7], %s263
      %s266 = sshll.u32 [#allocation8], 4
      %s267 = int_to_ptr.vmem [resolvable:$true] %s266
      %269 = dma.hbm_to_vmem [thread:$0]  %s83, 16, %s267, [#allocation7]
    $region169: #{diffusion_forward.1} parent=1 // pred_fallthru
      _
    // Predicated region
    $region170: #{diffusion_forward.1} parent=1 // pred_check
      _
    $region171: #{diffusion_forward.1} parent=1 // pred_check_branch
      %271 = sbr.rel (0) target = $region173
    $region172: #{diffusion_forward.1} parent=1 // pred_region
      %s273 = ssub.s32 16, 16
      %274 = vsyncadd [#allocation10], %s273
      %s276 = sshll.u32 [#allocation9], 4
      %s277 = int_to_ptr.vmem [resolvable:$true] %s276
      %279 = dma.hbm_to_vmem [thread:$0]  %s85, 16, %s277, [#allocation10]
    $region173: #{diffusion_forward.1} parent=1 // pred_fallthru
      _
    // Predicated region
    $region174: #{diffusion_forward.1} parent=1 // pred_check
      _
    $region175: #{diffusion_forward.1} parent=1 // pred_check_branch
      %281 = sbr.rel (0) target = $region177
    $region176: #{diffusion_forward.1} parent=1 // pred_region
      _
    $region177: #{diffusion_forward.1} parent=1 // pred_fallthru
      _
    // Predicated region
    $region178: #{diffusion_forward.1} parent=1 // pred_check
      _
    $region179: #{diffusion_forward.1} parent=1 // pred_check_branch
      %283 = sbr.rel (0) target = $region181
    $region180: #{diffusion_forward.1} parent=1 // pred_region
      %s285 = ssub.s32 16, 16
      %286 = vsyncadd [#allocation10], %s285
      %s288 = sshll.u32 [#allocation11], 4
      %s289 = int_to_ptr.vmem [resolvable:$true] %s288
      %291 = dma.hbm_to_vmem [thread:$0]  %s89, 16, %s289, [#allocation10]
    $region181: #{diffusion_forward.1} parent=1 // pred_fallthru
      _
    // Predicated region
    $region182: #{diffusion_forward.1} parent=1 // pred_check
      _
    $region183: #{diffusion_forward.1} parent=1 // pred_check_branch
      %293 = sbr.rel (0) target = $region185
    $region184: #{diffusion_forward.1} parent=1 // pred_region
      %s295 = ssub.s32 16, 16
      %296 = vsyncadd [#allocation13], %s295
      %s298 = sshll.u32 [#allocation12], 4
      %s299 = int_to_ptr.vmem [resolvable:$true] %s298
      %301 = dma.hbm_to_vmem [thread:$0]  %s91, 16, %s299, [#allocation13]
    $region185: #{diffusion_forward.1} parent=1 // pred_fallthru
      _
    // Predicated region
    $region186: #{diffusion_forward.1} parent=1 // pred_check
      _
    $region187: #{diffusion_forward.1} parent=1 // pred_check_branch
      %303 = sbr.rel (0) target = $region189
    $region188: #{diffusion_forward.1} parent=1 // pred_region
      %s305 = ssub.s32 16, 16
      %306 = vsyncadd [#allocation13], %s305
      %s308 = sshll.u32 [#allocation14], 4
      %s309 = int_to_ptr.vmem [resolvable:$true] %s308
      %311 = dma.hbm_to_vmem [thread:$0]  %s93, 16, %s309, [#allocation13]
    $region189: #{diffusion_forward.1} parent=1 // pred_fallthru
      _
    // Predicated region
    $region190: #{diffusion_forward.1} parent=1 // pred_check
      _
    $region191: #{diffusion_forward.1} parent=1 // pred_check_branch
      %313 = sbr.rel (0) target = $region193
    $region192: #{diffusion_forward.1} parent=1 // pred_region
      %s315 = ssub.s32 16, 16
      %316 = vsyncadd [#allocation16], %s315
      %s318 = sshll.u32 [#allocation15], 4
      %s319 = int_to_ptr.vmem [resolvable:$true] %s318
      %321 = dma.hbm_to_vmem [thread:$0]  %s95, 16, %s319, [#allocation16]
    $region193: #{diffusion_forward.1} parent=1 // pred_fallthru
      _
    // Predicated region
    $region194: #{diffusion_forward.1} parent=1 // pred_check
      _
    $region195: #{diffusion_forward.1} parent=1 // pred_check_branch
      %323 = sbr.rel (0) target = $region197
    $region196: #{diffusion_forward.1} parent=1 // pred_region
      _
    $region197: #{diffusion_forward.1} parent=1 // pred_fallthru
      _
    // Predicated region
    $region198: #{diffusion_forward.1} parent=1 // pred_check
      _
    $region199: #{diffusion_forward.1} parent=1 // pred_check_branch
      %325 = sbr.rel (0) target = $region201
    $region200: #{diffusion_forward.1} parent=1 // pred_region
      _
    $region201: #{diffusion_forward.1} parent=1 // pred_fallthru
      _
    // Predicated region
    $region202: #{diffusion_forward.1} parent=1 // pred_check
      _
    $region203: #{diffusion_forward.1} parent=1 // pred_check_branch
      %327 = sbr.rel (0) target = $region205
    $region204: #{diffusion_forward.1} parent=1 // pred_region
      _
    $region205: #{diffusion_forward.1} parent=1 // pred_fallthru
      _
    // Predicated region
    $region206: #{diffusion_forward.1} parent=1 // pred_check
      _
    $region207: #{diffusion_forward.1} parent=1 // pred_check_branch
      %329 = sbr.rel (0) target = $region209
    $region208: #{diffusion_forward.1} parent=1 // pred_region
      %s331 = ssub.s32 16, 16
      %332 = vsyncadd [#allocation16], %s331
      %s334 = sshll.u32 [#allocation17], 4
      %s335 = int_to_ptr.vmem [resolvable:$true] %s334
      %337 = dma.hbm_to_vmem [thread:$0]  %s103, 16, %s335, [#allocation16]
    $region209: #{diffusion_forward.1} parent=1 // pred_fallthru
      _
    // Predicated region
    $region210: #{diffusion_forward.1} parent=1 // pred_check
      _
    $region211: #{diffusion_forward.1} parent=1 // pred_check_branch
      %339 = sbr.rel (0) target = $region213
    $region212: #{diffusion_forward.1} parent=1 // pred_region
      _
    $region213: #{diffusion_forward.1} parent=1 // pred_fallthru
      _
    // Predicated region
    $region214: #{diffusion_forward.1} parent=1 // pred_check
      _
    $region215: #{diffusion_forward.1} parent=1 // pred_check_branch
      %341 = sbr.rel (0) target = $region217
    $region216: #{diffusion_forward.1} parent=1 // pred_region
      _
    $region217: #{diffusion_forward.1} parent=1 // pred_fallthru
      _
    // Predicated region
    $region218: #{diffusion_forward.1} parent=1 // pred_check
      _
    $region219: #{diffusion_forward.1} parent=1 // pred_check_branch
      %343 = sbr.rel (0) target = $region221
    $region220: #{diffusion_forward.1} parent=1 // pred_region
      %s345 = ssub.s32 16, 16
      %346 = vsyncadd [#allocation19], %s345
      %s348 = sshll.u32 [#allocation18], 4
      %s349 = int_to_ptr.vmem [resolvable:$true] %s348
      %351 = dma.hbm_to_vmem [thread:$0]  %s109, 16, %s349, [#allocation19]
    $region221: #{diffusion_forward.1} parent=1 // pred_fallthru
      _
    // Predicated region
    $region222: #{diffusion_forward.1} parent=1 // pred_check
      _
    $region223: #{diffusion_forward.1} parent=1 // pred_check_branch
      %353 = sbr.rel (0) target = $region225
    $region224: #{diffusion_forward.1} parent=1 // pred_region
      _
    $region225: #{diffusion_forward.1} parent=1 // pred_fallthru
      _
    // Predicated region
    $region226: #{diffusion_forward.1} parent=1 // pred_check
      _
    $region227: #{diffusion_forward.1} parent=1 // pred_check_branch
      %355 = sbr.rel (0) target = $region229
    $region228: #{diffusion_forward.1} parent=1 // pred_region
      %s357 = ssub.s32 16, 16
      %358 = vsyncadd [#allocation19], %s357
      %s360 = sshll.u32 [#allocation20], 4
      %s361 = int_to_ptr.vmem [resolvable:$true] %s360
      %363 = dma.hbm_to_vmem [thread:$0]  %s113, 16, %s361, [#allocation19]
    $region229: #{diffusion_forward.1} parent=1 // pred_fallthru
      _
    // Predicated region
    $region230: #{diffusion_forward.1} parent=1 // pred_check
      _
    $region231: #{diffusion_forward.1} parent=1 // pred_check_branch
      %365 = sbr.rel (0) target = $region233
    $region232: #{diffusion_forward.1} parent=1 // pred_region
      %s367 = ssub.s32 16, 16
      %368 = vsyncadd [#allocation22], %s367
      %s370 = sshll.u32 [#allocation21], 4
      %s371 = int_to_ptr.vmem [resolvable:$true] %s370
      %373 = dma.hbm_to_vmem [thread:$0]  %s115, 16, %s371, [#allocation22]
    $region233: #{diffusion_forward.1} parent=1 // pred_fallthru
      _
    // Predicated region
    $region234: #{diffusion_forward.1} parent=1 // pred_check
      _
    $region235: #{diffusion_forward.1} parent=1 // pred_check_branch
      %375 = sbr.rel (0) target = $region237
    $region236: #{diffusion_forward.1} parent=1 // pred_region
      %s377 = ssub.s32 16, 16
      %378 = vsyncadd [#allocation22], %s377
      %s380 = sshll.u32 [#allocation23], 4
      %s381 = int_to_ptr.vmem [resolvable:$true] %s380
      %383 = dma.hbm_to_vmem [thread:$0]  %s117, 16, %s381, [#allocation22]
    $region237: #{diffusion_forward.1} parent=1 // pred_fallthru
      _
    // Predicated region
    $region238: #{diffusion_forward.1} parent=1 // pred_check
      _
    $region239: #{diffusion_forward.1} parent=1 // pred_check_branch
      %385 = sbr.rel (0) target = $region241
    $region240: #{diffusion_forward.1} parent=1 // pred_region
      %s387 = ssub.s32 16, 16
      %388 = vsyncadd [#allocation25], %s387
      %s390 = sshll.u32 [#allocation24], 4
      %s391 = int_to_ptr.vmem [resolvable:$true] %s390
      %393 = dma.hbm_to_vmem [thread:$0]  %s119, 16, %s391, [#allocation25]
    $region241: #{diffusion_forward.1} parent=1 // pred_fallthru
      _
    // Predicated region
    $region242: #{diffusion_forward.1} parent=1 // pred_check
      _
    $region243: #{diffusion_forward.1} parent=1 // pred_check_branch
      %395 = sbr.rel (0) target = $region245
    $region244: #{diffusion_forward.1} parent=1 // pred_region
      _
    $region245: #{diffusion_forward.1} parent=1 // pred_fallthru
      _
    // Predicated region
    $region246: #{diffusion_forward.1} parent=1 // pred_check
      _
    $region247: #{diffusion_forward.1} parent=1 // pred_check_branch
      %397 = sbr.rel (0) target = $region249
    $region248: #{diffusion_forward.1} parent=1 // pred_region
      _
    $region249: #{diffusion_forward.1} parent=1 // pred_fallthru
      _
    // Predicated region
    $region250: #{diffusion_forward.1} parent=1 // pred_check
      _
    $region251: #{diffusion_forward.1} parent=1 // pred_check_branch
      %399 = sbr.rel (0) target = $region253
    $region252: #{diffusion_forward.1} parent=1 // pred_region
      _
    $region253: #{diffusion_forward.1} parent=1 // pred_fallthru
      _
    // Predicated region
    $region254: #{diffusion_forward.1} parent=1 // pred_check
      _
    $region255: #{diffusion_forward.1} parent=1 // pred_check_branch
      %401 = sbr.rel (0) target = $region257
    $region256: #{diffusion_forward.1} parent=1 // pred_region
      %s403 = ssub.s32 16, 16
      %404 = vsyncadd [#allocation25], %s403
      %s406 = sshll.u32 [#allocation26], 4
      %s407 = int_to_ptr.vmem [resolvable:$true] %s406
      %409 = dma.hbm_to_vmem [thread:$0]  %s127, 16, %s407, [#allocation25]
    $region257: #{diffusion_forward.1} parent=1 // pred_fallthru
      _
    // Predicated region
    $region258: #{diffusion_forward.1} parent=1 // pred_check
      _
    $region259: #{diffusion_forward.1} parent=1 // pred_check_branch
      %411 = sbr.rel (0) target = $region261
    $region260: #{diffusion_forward.1} parent=1 // pred_region
      _
    $region261: #{diffusion_forward.1} parent=1 // pred_fallthru
      _
    // Predicated region
    $region262: #{diffusion_forward.1} parent=1 // pred_check
      _
    $region263: #{diffusion_forward.1} parent=1 // pred_check_branch
      %413 = sbr.rel (0) target = $region265
    $region264: #{diffusion_forward.1} parent=1 // pred_region
      _
    $region265: #{diffusion_forward.1} parent=1 // pred_fallthru
      _
    // Predicated region
    $region266: #{diffusion_forward.1} parent=1 // pred_check
      _
    $region267: #{diffusion_forward.1} parent=1 // pred_check_branch
      %415 = sbr.rel (0) target = $region269
    $region268: #{diffusion_forward.1} parent=1 // pred_region
      %s417 = ssub.s32 16, 16
      %418 = vsyncadd [#allocation28], %s417
      %s420 = sshll.u32 [#allocation27], 4
      %s421 = int_to_ptr.vmem [resolvable:$true] %s420
      %423 = dma.hbm_to_vmem [thread:$0]  %s133, 16, %s421, [#allocation28]
    $region269: #{diffusion_forward.1} parent=1 // pred_fallthru
      _
    // Predicated region
    $region270: #{diffusion_forward.1} parent=1 // pred_check
      _
    $region271: #{diffusion_forward.1} parent=1 // pred_check_branch
      %425 = sbr.rel (0) target = $region273
    $region272: #{diffusion_forward.1} parent=1 // pred_region
      _
    $region273: #{diffusion_forward.1} parent=1 // pred_fallthru
      _
    // Predicated region
    $region274: #{diffusion_forward.1} parent=1 // pred_check
      _
    $region275: #{diffusion_forward.1} parent=1 // pred_check_branch
      %427 = sbr.rel (0) target = $region277
    $region276: #{diffusion_forward.1} parent=1 // pred_region
      _
    $region277: #{diffusion_forward.1} parent=1 // pred_fallthru
      _
    // Predicated region
    $region278: #{diffusion_forward.1} parent=1 // pred_check
      _
    $region279: #{diffusion_forward.1} parent=1 // pred_check_branch
      %429 = sbr.rel (0) target = $region281
    $region280: #{diffusion_forward.1} parent=1 // pred_region
      _
    $region281: #{diffusion_forward.1} parent=1 // pred_fallthru
      _
    // Predicated region
    $region282: #{diffusion_forward.1} parent=1 // pred_check
      _
    $region283: #{diffusion_forward.1} parent=1 // pred_check_branch
      %431 = sbr.rel (0) target = $region285
    $region284: #{diffusion_forward.1} parent=1 // pred_region
      _
    $region285: #{diffusion_forward.1} parent=1 // pred_fallthru
      _
    // Predicated region
    $region286: #{diffusion_forward.1} parent=1 // pred_check
      _
    $region287: #{diffusion_forward.1} parent=1 // pred_check_branch
      %433 = sbr.rel (0) target = $region289
    $region288: #{diffusion_forward.1} parent=1 // pred_region
      _
    $region289: #{diffusion_forward.1} parent=1 // pred_fallthru
      _
    // Predicated region
    $region290: #{diffusion_forward.1} parent=1 // pred_check
      _
    $region291: #{diffusion_forward.1} parent=1 // pred_check_branch
      %435 = sbr.rel (0) target = $region293
    $region292: #{diffusion_forward.1} parent=1 // pred_region
      %436 = dma.done [#allocation4], 16
    $region293: #{diffusion_forward.1} parent=1 // pred_fallthru
      _
    // Predicated region
    $region294: #{diffusion_forward.1} parent=1 // pred_check
      _
    $region295: #{diffusion_forward.1} parent=1 // pred_check_branch
      %438 = sbr.rel (0) target = $region297
    $region296: #{diffusion_forward.1} parent=1 // pred_region
      %439 = dma.done [#allocation7], 16
    $region297: #{diffusion_forward.1} parent=1 // pred_fallthru
      _
    // Predicated region
    $region298: #{diffusion_forward.1} parent=1 // pred_check
      _
    $region299: #{diffusion_forward.1} parent=1 // pred_check_branch
      %441 = sbr.rel (0) target = $region301
    $region300: #{diffusion_forward.1} parent=1 // pred_region
      %442 = dma.done [#allocation7], 16
    $region301: #{diffusion_forward.1} parent=1 // pred_fallthru
      _
    // Predicated region
    $region302: #{diffusion_forward.1} parent=1 // pred_check
      _
    $region303: #{diffusion_forward.1} parent=1 // pred_check_branch
      %444 = sbr.rel (0) target = $region305
    $region304: #{diffusion_forward.1} parent=1 // pred_region
      %445 = dma.done [#allocation10], 16
    $region305: #{diffusion_forward.1} parent=1 // pred_fallthru
      _
    // Predicated region
    $region306: #{diffusion_forward.1} parent=1 // pred_check
      _
    $region307: #{diffusion_forward.1} parent=1 // pred_check_branch
      %447 = sbr.rel (0) target = $region309
    $region308: #{diffusion_forward.1} parent=1 // pred_region
      %448 = dma.done [#allocation10], 16
    $region309: #{diffusion_forward.1} parent=1 // pred_fallthru
      _
    // Predicated region
    $region310: #{diffusion_forward.1} parent=1 // pred_check
      _
    $region311: #{diffusion_forward.1} parent=1 // pred_check_branch
      %450 = sbr.rel (0) target = $region313
    $region312: #{diffusion_forward.1} parent=1 // pred_region
      %451 = dma.done [#allocation13], 16
    $region313: #{diffusion_forward.1} parent=1 // pred_fallthru
      _
    // Predicated region
    $region314: #{diffusion_forward.1} parent=1 // pred_check
      _
    $region315: #{diffusion_forward.1} parent=1 // pred_check_branch
      %453 = sbr.rel (0) target = $region317
    $region316: #{diffusion_forward.1} parent=1 // pred_region
      %454 = dma.done [#allocation13], 16
    $region317: #{diffusion_forward.1} parent=1 // pred_fallthru
      _
    // Predicated region
    $region318: #{diffusion_forward.1} parent=1 // pred_check
      _
    $region319: #{diffusion_forward.1} parent=1 // pred_check_branch
      %456 = sbr.rel (0) target = $region321
    $region320: #{diffusion_forward.1} parent=1 // pred_region
      %457 = dma.done [#allocation16], 16
    $region321: #{diffusion_forward.1} parent=1 // pred_fallthru
      _
    // Predicated region
    $region322: #{diffusion_forward.1} parent=1 // pred_check
      _
    $region323: #{diffusion_forward.1} parent=1 // pred_check_branch
      %459 = sbr.rel (0) target = $region325
    $region324: #{diffusion_forward.1} parent=1 // pred_region
      %460 = dma.done [#allocation16], 16
    $region325: #{diffusion_forward.1} parent=1 // pred_fallthru
      _
    // Predicated region
    $region326: #{diffusion_forward.1} parent=1 // pred_check
      _
    $region327: #{diffusion_forward.1} parent=1 // pred_check_branch
      %462 = sbr.rel (0) target = $region329
    $region328: #{diffusion_forward.1} parent=1 // pred_region
      %463 = dma.done [#allocation19], 16
    $region329: #{diffusion_forward.1} parent=1 // pred_fallthru
      _
    // Predicated region
    $region330: #{diffusion_forward.1} parent=1 // pred_check
      _
    $region331: #{diffusion_forward.1} parent=1 // pred_check_branch
      %465 = sbr.rel (0) target = $region333
    $region332: #{diffusion_forward.1} parent=1 // pred_region
      %466 = dma.done [#allocation19], 16
    $region333: #{diffusion_forward.1} parent=1 // pred_fallthru
      _
    // Predicated region
    $region334: #{diffusion_forward.1} parent=1 // pred_check
      _
    $region335: #{diffusion_forward.1} parent=1 // pred_check_branch
      %468 = sbr.rel (0) target = $region337
    $region336: #{diffusion_forward.1} parent=1 // pred_region
      %469 = dma.done [#allocation22], 16
    $region337: #{diffusion_forward.1} parent=1 // pred_fallthru
      _
    // Predicated region
    $region338: #{diffusion_forward.1} parent=1 // pred_check
      _
    $region339: #{diffusion_forward.1} parent=1 // pred_check_branch
      %471 = sbr.rel (0) target = $region341
    $region340: #{diffusion_forward.1} parent=1 // pred_region
      %472 = dma.done [#allocation22], 16
    $region341: #{diffusion_forward.1} parent=1 // pred_fallthru
      _
    // Predicated region
    $region342: #{diffusion_forward.1} parent=1 // pred_check
      _
    $region343: #{diffusion_forward.1} parent=1 // pred_check_branch
      %474 = sbr.rel (0) target = $region345
    $region344: #{diffusion_forward.1} parent=1 // pred_region
      %475 = dma.done [#allocation25], 16
    $region345: #{diffusion_forward.1} parent=1 // pred_fallthru
      _
    // Predicated region
    $region346: #{diffusion_forward.1} parent=1 // pred_check
      _
    $region347: #{diffusion_forward.1} parent=1 // pred_check_branch
      %477 = sbr.rel (0) target = $region349
    $region348: #{diffusion_forward.1} parent=1 // pred_region
      %478 = dma.done [#allocation25], 16
    $region349: #{diffusion_forward.1} parent=1 // pred_fallthru
      _
    // Predicated region
    $region350: #{diffusion_forward.1} parent=1 // pred_check
      _
    $region351: #{diffusion_forward.1} parent=1 // pred_check_branch
      %480 = sbr.rel (0) target = $region353
    $region352: #{diffusion_forward.1} parent=1 // pred_region
      %481 = dma.done [#allocation28], 16
    $region353: #{diffusion_forward.1} parent=1 // pred_fallthru
      _
    %v482 = vld [vmem:[%s3] sm:$0x3]
    %v483 = vld [vmem:[#allocation9] sm:$0x1]
    %485 = vset.pattern.permute.xlu0 0
    %486 = vperm.xlu0 %485, %v482
    %v487 = vpop.permute.xlu0 %486
    %v490 = vlaneseq
    %v491 = vshrl.u32 %v490, 7
    %v492 = vsub.s32 0, %v491
    %v493 = vrot.slane %v483, %v492
    %v495 = vmul.f32 %v487, %v493
    %v496 = vld [vmem:[#allocation6] sm:$0x1]
    %v498 = vlaneseq
    %v499 = vshrl.u32 %v498, 7
    %v500 = vsub.s32 0, %v499
    %v501 = vrot.slane %v496, %v500
    %v503 = vadd.f32 %v495, %v501
    %v504 = vsub.f32 0.0, %v503
    %v505 = vmul.f32 %v504, 1.442695
    %v506 = vpow.pop %v505
    %v507 = vadd.f32 %v506, 1.0
    %v508 = vrcp.pop %v507
    %v509 = vmul.f32 1.0, %v508
    %v510 = vmul.f32 %v503, %v509
    %v511 = vld [vmem:[%s87] sm:$0xff]
    %v512 = vld [vmem:[%s87 + $0x8] sm:$0xff]
    %v513 = vld [vmem:[%s87 + $0x10] sm:$0xff]
    %v514 = vld [vmem:[%s87 + $0x18] sm:$0xff]
    %v515 = vld [vmem:[#allocation8] sm:$0x1]
    %v517 = vlaneseq
    %v518 = vshrl.u32 %v517, 7
    %v519 = vsub.s32 0, %v518
    %v520 = vrot.slane %v515, %v519
    %vm522 = vcmask 261120
    %v524 = vsel %vm522, %v510, 0
    %526 = vmatprep.subr.mxu0 0.0
    %527 = vmatpush1.msra.mxu0 %v511
    %528 = vmatprep.subr.mxu0 0.0
    %529 = vmatpush1.msra.mxu0 %v512
    %530 = vmatprep.subr.mxu0 0.0
    %531 = vmatpush1.msra.mxu0 %v513
    %532 = vmatprep.subr.mxu0 0.0
    %533 = vmatpush1.msra.mxu0 %v514
    %534 = vmatprep.subr.mxu0 0.0
    %535 = vmatpush1.msra.mxu0 0.0
    %536 = vmatprep.subr.mxu0 0.0
    %537 = vmatpush1.msra.mxu0 0.0
    %538 = vmatprep.subr.mxu0 0.0
    %539 = vmatpush1.msra.mxu0 0.0
    %540 = vmatprep.subr.mxu0 0.0
    %541 = vmatpush1.msra.mxu0 0.0
    %542 = vmatprep.subr.mxu0 0.0
    %543 = vmatpush1.msra.mxu0 0.0
    %544 = vmatprep.subr.mxu0 0.0
    %545 = vmatpush1.msra.mxu0 0.0
    %546 = vmatprep.subr.mxu0 0.0
    %547 = vmatpush1.msra.mxu0 0.0
    %548 = vmatprep.subr.mxu0 0.0
    %549 = vmatpush1.msra.mxu0 0.0
    %550 = vmatprep.subr.mxu0 0.0
    %551 = vmatpush1.msra.mxu0 0.0
    %552 = vmatprep.subr.mxu0 0.0
    %553 = vmatpush1.msra.mxu0 0.0
    %554 = vmatprep.subr.mxu0 0.0
    %555 = vmatpush1.msra.mxu0 0.0
    %556 = vmatprep.subr.mxu0 0.0
    %557 = vmatpush1.msra.mxu0 0.0
    %558 = vmatprep.subr.mxu0 0.0
    %559 = vmatpush1.msra.mxu0 0.0
    %560 = vmatprep.subr.mxu0 0.0
    %561 = vmatpush1.msra.mxu0 0.0
    %562 = vmatprep.subr.mxu0 0.0
    %563 = vmatpush1.msra.mxu0 0.0
    %564 = vmatprep.subr.mxu0 0.0
    %565 = vmatpush1.msra.mxu0 0.0
    %566 = vmatprep.subr.mxu0 0.0
    %567 = vmatpush1.msra.mxu0 0.0
    %568 = vmatprep.subr.mxu0 0.0
    %569 = vmatpush1.msra.mxu0 0.0
    %570 = vmatprep.subr.mxu0 0.0
    %571 = vmatpush1.msra.mxu0 0.0
    %572 = vmatprep.subr.mxu0 0.0
    %573 = vmatpush1.msra.mxu0 0.0
    %574 = vmatprep.subr.mxu0 0.0
    %575 = vmatpush1.msra.mxu0 0.0
    %576 = vmatprep.subr.mxu0 0.0
    %577 = vmatpush1.msra.mxu0 0.0
    %578 = vmatprep.subr.mxu0 0.0
    %579 = vmatpush1.msra.mxu0 0.0
    %580 = vmatprep.subr.mxu0 0.0
    %581 = vmatpush1.msra.mxu0 0.0
    %582 = vmatprep.subr.mxu0 0.0
    %583 = vmatpush1.msra.mxu0 0.0
    %584 = vmatprep.subr.mxu0 0.0
    %585 = vmatpush1.msra.mxu0 0.0
    %586 = vmatprep.subr.mxu0 0.0
    %587 = vmatpush1.msra.mxu0 0.0
    %588 = vmatprep.subr.mxu0 0.0
    %589 = vmatpush1.msra.mxu0 0.0
    %590 = vmatprep.mubr.f32.mxu0 0.0
    %591 = vmatmul.mubr.f32.gmra.mrb[0].mxu0 %v524
    %v592 = vpop.f32.mrb[0].mxu0
    %v593 = vadd.f32 %v520, %v592
    %v594 = vpop.f32.mrb[0].mxu0
    %595 = vdwg.mxu0
    %v596 = vld [vmem:[%s1] sm:$0xff]
    %v597 = vld [vmem:[%s1 + $0x8] sm:$0xff]
    %v598 = vld [vmem:[%s1 + $0x10] sm:$0xff]
    %v599 = vld [vmem:[%s1 + $0x18] sm:$0xff]
    %v600 = vld [vmem:[%s1 + $0x20] sm:$0xff]
    %v601 = vld [vmem:[%s1 + $0x28] sm:$0xff]
    %v602 = vld [vmem:[%s1 + $0x30] sm:$0xff]
    %v603 = vld [vmem:[%s1 + $0x38] sm:$0xff]
    %v604 = vld [vmem:[%s43] sm:$0x1]
    %606 = vset.pattern.permute.xlu0 0
    %607 = vperm.xlu0 %606, %v596
    %v608 = vpop.permute.xlu0 %607
    %611 = vset.pattern.permute.xlu0 0
    %612 = vperm.xlu0 %611, %v597
    %v613 = vpop.permute.xlu0 %612
    %616 = vset.pattern.permute.xlu0 0
    %617 = vperm.xlu0 %616, %v598
    %v618 = vpop.permute.xlu0 %617
    %621 = vset.pattern.permute.xlu0 0
    %622 = vperm.xlu0 %621, %v599
    %v623 = vpop.permute.xlu0 %622
    %626 = vset.pattern.permute.xlu0 0
    %627 = vperm.xlu0 %626, %v600
    %v628 = vpop.permute.xlu0 %627
    %631 = vset.pattern.permute.xlu0 0
    %632 = vperm.xlu0 %631, %v601
    %v633 = vpop.permute.xlu0 %632
    %636 = vset.pattern.permute.xlu0 0
    %637 = vperm.xlu0 %636, %v602
    %v638 = vpop.permute.xlu0 %637
    %641 = vset.pattern.permute.xlu0 0
    %642 = vperm.xlu0 %641, %v603
    %v643 = vpop.permute.xlu0 %642
    %v646 = vlaneseq
    %v647 = vshrl.u32 %v646, 7
    %v648 = vsub.s32 0, %v647
    %v649 = vrot.slane %v604, %v648
    %v651 = vmul.f32 %v608, %v649
    %v652 = vmul.f32 %v613, %v649
    %v653 = vmul.f32 %v618, %v649
    %v654 = vmul.f32 %v623, %v649
    %v655 = vmul.f32 %v628, %v649
    %v656 = vmul.f32 %v633, %v649
    %v657 = vmul.f32 %v638, %v649
    %v658 = vmul.f32 %v643, %v649
    %v659 = vld [vmem:[%s41] sm:$0x1]
    %v661 = vlaneseq
    %v662 = vshrl.u32 %v661, 7
    %v663 = vsub.s32 0, %v662
    %v664 = vrot.slane %v659, %v663
    %v666 = vadd.f32 %v651, %v664
    %v667 = vadd.f32 %v652, %v664
    %v668 = vadd.f32 %v653, %v664
    %v669 = vadd.f32 %v654, %v664
    %v670 = vadd.f32 %v655, %v664
    %v671 = vadd.f32 %v656, %v664
    %v672 = vadd.f32 %v657, %v664
    %v673 = vadd.f32 %v658, %v664
    %v674 = vld [vmem:[%s19] sm:$0xff]
    %v675 = vld [vmem:[%s19 + $0x8] sm:$0xff]
    %v676 = vld [vmem:[%s19 + $0x10] sm:$0xff]
    %v677 = vld [vmem:[%s19 + $0x18] sm:$0xff]
    %v678 = vld [vmem:[%s17] sm:$0x1]
    %v680 = vlaneseq
    %v681 = vshrl.u32 %v680, 7
    %v682 = vsub.s32 0, %v681
    %v683 = vrot.slane %v678, %v682
    %v686 = vsel %vm522, %v593, 0
    %688 = vmatprep.subr.mxu0 0.0
    %689 = vmatpush1.msra.mxu0 %v674
    %690 = vmatprep.subr.mxu0 0.0
    %691 = vmatpush1.msra.mxu0 %v675
    %692 = vmatprep.subr.mxu0 0.0
    %693 = vmatpush1.msra.mxu0 %v676
    %694 = vmatprep.subr.mxu0 0.0
    %695 = vmatpush1.msra.mxu0 %v677
    %696 = vmatprep.subr.mxu0 0.0
    %697 = vmatpush1.msra.mxu0 0.0
    %698 = vmatprep.subr.mxu0 0.0
    %699 = vmatpush1.msra.mxu0 0.0
    %700 = vmatprep.subr.mxu0 0.0
    %701 = vmatpush1.msra.mxu0 0.0
    %702 = vmatprep.subr.mxu0 0.0
    %703 = vmatpush1.msra.mxu0 0.0
    %704 = vmatprep.subr.mxu0 0.0
    %705 = vmatpush1.msra.mxu0 0.0
    %706 = vmatprep.subr.mxu0 0.0
    %707 = vmatpush1.msra.mxu0 0.0
    %708 = vmatprep.subr.mxu0 0.0
    %709 = vmatpush1.msra.mxu0 0.0
    %710 = vmatprep.subr.mxu0 0.0
    %711 = vmatpush1.msra.mxu0 0.0
    %712 = vmatprep.subr.mxu0 0.0
    %713 = vmatpush1.msra.mxu0 0.0
    %714 = vmatprep.subr.mxu0 0.0
    %715 = vmatpush1.msra.mxu0 0.0
    %716 = vmatprep.subr.mxu0 0.0
    %717 = vmatpush1.msra.mxu0 0.0
    %718 = vmatprep.subr.mxu0 0.0
    %719 = vmatpush1.msra.mxu0 0.0
    %720 = vmatprep.subr.mxu0 0.0
    %721 = vmatpush1.msra.mxu0 0.0
    %722 = vmatprep.subr.mxu0 0.0
    %723 = vmatpush1.msra.mxu0 0.0
    %724 = vmatprep.subr.mxu0 0.0
    %725 = vmatpush1.msra.mxu0 0.0
    %726 = vmatprep.subr.mxu0 0.0
    %727 = vmatpush1.msra.mxu0 0.0
    %728 = vmatprep.subr.mxu0 0.0
    %729 = vmatpush1.msra.mxu0 0.0
    %730 = vmatprep.subr.mxu0 0.0
    %731 = vmatpush1.msra.mxu0 0.0
    %732 = vmatprep.subr.mxu0 0.0
    %733 = vmatpush1.msra.mxu0 0.0
    %734 = vmatprep.subr.mxu0 0.0
    %735 = vmatpush1.msra.mxu0 0.0
    %736 = vmatprep.subr.mxu0 0.0
    %737 = vmatpush1.msra.mxu0 0.0
    %738 = vmatprep.subr.mxu0 0.0
    %739 = vmatpush1.msra.mxu0 0.0
    %740 = vmatprep.subr.mxu0 0.0
    %741 = vmatpush1.msra.mxu0 0.0
    %742 = vmatprep.subr.mxu0 0.0
    %743 = vmatpush1.msra.mxu0 0.0
    %744 = vmatprep.subr.mxu0 0.0
    %745 = vmatpush1.msra.mxu0 0.0
    %746 = vmatprep.subr.mxu0 0.0
    %747 = vmatpush1.msra.mxu0 0.0
    %748 = vmatprep.subr.mxu0 0.0
    %749 = vmatpush1.msra.mxu0 0.0
    %750 = vmatprep.subr.mxu0 0.0
    %751 = vmatpush1.msra.mxu0 0.0
    %752 = vmatprep.mubr.f32.mxu0 0.0
    %753 = vmatmul.mubr.f32.gmra.mrb[0].mxu0 %v686
    %v754 = vpop.f32.mrb[0].mxu0
    %v755 = vadd.f32 %v683, %v754
    %v756 = vpop.f32.mrb[0].mxu0
    %757 = vdwg.mxu0
    %v758 = vmax.f32 %v755, 0.0
    %vm767 = vcmask 1040384
    %v768 = vrot.slane %v666, 7
    %v769 = vrot.slane %v667, 7
    %v770 = vsel %vm767, %v768, %v769
    %v771 = vrot.slane %v668, 7
    %v772 = vsel %vm767, %v769, %v771
    %v773 = vrot.slane %v669, 7
    %v774 = vsel %vm767, %v771, %v773
    %v775 = vrot.slane %v670, 7
    %v776 = vrot.slane %v671, 7
    %v777 = vsel %vm767, %v775, %v776
    %v778 = vrot.slane %v672, 7
    %v779 = vsel %vm767, %v776, %v778
    %v780 = vrot.slane %v673, 7
    %v781 = vsel %vm767, %v778, %v780
    %v790 = vsel %vm767, 0.0, %v768
    %v791 = vsel %vm767, 0.0, %v775
    %vm792 = vcmask 1046528
    %v793 = vrot.slane %v666, 1
    %v794 = vrot.slane %v667, 1
    %v795 = vsel %vm792, %v793, %v794
    %v796 = vrot.slane %v668, 1
    %v797 = vsel %vm792, %v794, %v796
    %v798 = vrot.slane %v669, 1
    %v799 = vsel %vm792, %v796, %v798
    %v800 = vrot.slane %v670, 1
    %v801 = vrot.slane %v671, 1
    %v802 = vsel %vm792, %v800, %v801
    %v803 = vrot.slane %v672, 1
    %v804 = vsel %vm792, %v801, %v803
    %v805 = vrot.slane %v673, 1
    %v806 = vsel %vm792, %v803, %v805
    %v809 = vsel %vm792, %v798, 0.0
    %v810 = vsel %vm792, %v805, 0.0
    %811 = vrot.lane.b32.xlu0 %v666, 32
    %v812 = vpop.permute.xlu0 %811
    %813 = vrot.lane.b32.xlu0 %v667, 32
    %v814 = vpop.permute.xlu0 %813
    %815 = vrot.lane.b32.xlu0 %v668, 32
    %v816 = vpop.permute.xlu0 %815
    %817 = vrot.lane.b32.xlu0 %v669, 32
    %v818 = vpop.permute.xlu0 %817
    %819 = vrot.lane.b32.xlu0 %v670, 32
    %v820 = vpop.permute.xlu0 %819
    %821 = vrot.lane.b32.xlu0 %v671, 32
    %v822 = vpop.permute.xlu0 %821
    %823 = vrot.lane.b32.xlu0 %v672, 32
    %v824 = vpop.permute.xlu0 %823
    %825 = vrot.lane.b32.xlu0 %v673, 32
    %v826 = vpop.permute.xlu0 %825
    %837 = vrot.lane.b32.xlu0 %v795, 64
    %v838 = vpop.permute.xlu0 %837
    %839 = vrot.lane.b32.xlu0 %v797, 64
    %v840 = vpop.permute.xlu0 %839
    %841 = vrot.lane.b32.xlu0 %v799, 64
    %v842 = vpop.permute.xlu0 %841
    %843 = vrot.lane.b32.xlu0 %v809, 64
    %v844 = vpop.permute.xlu0 %843
    %845 = vrot.lane.b32.xlu0 %v802, 64
    %v846 = vpop.permute.xlu0 %845
    %847 = vrot.lane.b32.xlu0 %v804, 64
    %v848 = vpop.permute.xlu0 %847
    %849 = vrot.lane.b32.xlu0 %v806, 64
    %v850 = vpop.permute.xlu0 %849
    %851 = vrot.lane.b32.xlu0 %v810, 64
    %v852 = vpop.permute.xlu0 %851
    %v861 = vsel %vm522, %v790, %v812
    %v862 = vsel %vm522, %v770, %v814
    %v863 = vsel %vm522, %v772, %v816
    %v864 = vsel %vm522, %v774, %v818
    %v865 = vsel %vm522, %v791, %v820
    %v866 = vsel %vm522, %v777, %v822
    %v867 = vsel %vm522, %v779, %v824
    %v868 = vsel %vm522, %v781, %v826
    %vm869 = vcmask 523264
    %v870 = vsel %vm869, %v861, %v838
    %v871 = vsel %vm869, %v862, %v840
    %v872 = vsel %vm869, %v863, %v842
    %v873 = vsel %vm869, %v864, %v844
    %v874 = vsel %vm869, %v865, %v846
    %v875 = vsel %vm869, %v866, %v848
    %v876 = vsel %vm869, %v867, %v850
    %v877 = vsel %vm869, %v868, %v852
    %v878 = vld [vmem:[%s13] sm:$0xff]
    %v879 = vld [vmem:[%s13 + $0x8] sm:$0xff]
    %v880 = vld [vmem:[%s13 + $0x10] sm:$0xff]
    %v881 = vld [vmem:[%s13 + $0x18] sm:$0xff]
    %v882 = vld [vmem:[%s13 + $0x20] sm:$0xff]
    %v883 = vld [vmem:[%s13 + $0x28] sm:$0xff]
    %v884 = vld [vmem:[%s13 + $0x30] sm:$0xff]
    %v885 = vld [vmem:[%s13 + $0x38] sm:$0xff]
    %v886 = vld [vmem:[%s13 + $0x40] sm:$0xff]
    %v887 = vld [vmem:[%s13 + $0x48] sm:$0xff]
    %v888 = vld [vmem:[%s13 + $0x50] sm:$0xff]
    %v889 = vld [vmem:[%s13 + $0x58] sm:$0xff]
    %vm890 = vcmask 785408
    %v892 = vsel %vm890, %v870, 0
    %v895 = vsel %vm890, %v871, 0
    %v898 = vsel %vm890, %v872, 0
    %v901 = vsel %vm890, %v873, 0
    %v904 = vsel %vm890, %v874, 0
    %v907 = vsel %vm890, %v875, 0
    %v910 = vsel %vm890, %v876, 0
    %v913 = vsel %vm890, %v877, 0
    %915 = vmatprep.subr.mxu0 0.0
    %916 = vmatpush1.msra.mxu0 %v878
    %917 = vmatprep.subr.mxu0 0.0
    %918 = vmatpush1.msra.mxu0 %v879
    %919 = vmatprep.subr.mxu0 0.0
    %920 = vmatpush1.msra.mxu0 %v880
    %921 = vmatprep.subr.mxu0 0.0
    %922 = vmatpush1.msra.mxu0 %v881
    %923 = vmatprep.subr.mxu0 0.0
    %924 = vmatpush1.msra.mxu0 %v882
    %925 = vmatprep.subr.mxu0 0.0
    %926 = vmatpush1.msra.mxu0 %v883
    %927 = vmatprep.subr.mxu0 0.0
    %928 = vmatpush1.msra.mxu0 %v884
    %929 = vmatprep.subr.mxu0 0.0
    %930 = vmatpush1.msra.mxu0 %v885
    %931 = vmatprep.subr.mxu0 0.0
    %932 = vmatpush1.msra.mxu0 %v886
    %933 = vmatprep.subr.mxu0 0.0
    %934 = vmatpush1.msra.mxu0 %v887
    %935 = vmatprep.subr.mxu0 0.0
    %936 = vmatpush1.msra.mxu0 %v888
    %937 = vmatprep.subr.mxu0 0.0
    %938 = vmatpush1.msra.mxu0 %v889
    %939 = vmatprep.subr.mxu0 0.0
    %940 = vmatpush1.msra.mxu0 0.0
    %941 = vmatprep.subr.mxu0 0.0
    %942 = vmatpush1.msra.mxu0 0.0
    %943 = vmatprep.subr.mxu0 0.0
    %944 = vmatpush1.msra.mxu0 0.0
    %945 = vmatprep.subr.mxu0 0.0
    %946 = vmatpush1.msra.mxu0 0.0
    %947 = vmatprep.subr.mxu0 0.0
    %948 = vmatpush1.msra.mxu0 0.0
    %949 = vmatprep.subr.mxu0 0.0
    %950 = vmatpush1.msra.mxu0 0.0
    %951 = vmatprep.subr.mxu0 0.0
    %952 = vmatpush1.msra.mxu0 0.0
    %953 = vmatprep.subr.mxu0 0.0
    %954 = vmatpush1.msra.mxu0 0.0
    %955 = vmatprep.subr.mxu0 0.0
    %956 = vmatpush1.msra.mxu0 0.0
    %957 = vmatprep.subr.mxu0 0.0
    %958 = vmatpush1.msra.mxu0 0.0
    %959 = vmatprep.subr.mxu0 0.0
    %960 = vmatpush1.msra.mxu0 0.0
    %961 = vmatprep.subr.mxu0 0.0
    %962 = vmatpush1.msra.mxu0 0.0
    %963 = vmatprep.subr.mxu0 0.0
    %964 = vmatpush1.msra.mxu0 0.0
    %965 = vmatprep.subr.mxu0 0.0
    %966 = vmatpush1.msra.mxu0 0.0
    %967 = vmatprep.subr.mxu0 0.0
    %968 = vmatpush1.msra.mxu0 0.0
    %969 = vmatprep.subr.mxu0 0.0
    %970 = vmatpush1.msra.mxu0 0.0
    %971 = vmatprep.subr.mxu0 0.0
    %972 = vmatpush1.msra.mxu0 0.0
    %973 = vmatprep.subr.mxu0 0.0
    %974 = vmatpush1.msra.mxu0 0.0
    %975 = vmatprep.subr.mxu0 0.0
    %976 = vmatpush1.msra.mxu0 0.0
    %977 = vmatprep.subr.mxu0 0.0
    %978 = vmatpush1.msra.mxu0 0.0
    %979 = vmatprep.mubr.f32.mxu0 0.0
    %980 = vmatmul.mubr.f32.gmra.mrb[0].mxu0 %v892
    %v981 = vpop.f32.mrb[0].mxu0
    %v982 = vadd.f32 0.0, %v981
    %v983 = vpop.f32.mrb[0].mxu0
    %984 = vmatprep.mubr.f32.mxu0 0.0
    %985 = vmatmul.mubr.f32.gmra.mrb[0].mxu0 %v895
    %v986 = vpop.f32.mrb[0].mxu0
    %v987 = vadd.f32 0.0, %v986
    %v988 = vpop.f32.mrb[0].mxu0
    %989 = vmatprep.mubr.f32.mxu0 0.0
    %990 = vmatmul.mubr.f32.gmra.mrb[0].mxu0 %v898
    %v991 = vpop.f32.mrb[0].mxu0
    %v992 = vadd.f32 0.0, %v991
    %v993 = vpop.f32.mrb[0].mxu0
    %994 = vmatprep.mubr.f32.mxu0 0.0
    %995 = vmatmul.mubr.f32.gmra.mrb[0].mxu0 %v901
    %v996 = vpop.f32.mrb[0].mxu0
    %v997 = vadd.f32 0.0, %v996
    %v998 = vpop.f32.mrb[0].mxu0
    %999 = vmatprep.mubr.f32.mxu0 0.0
    %1000 = vmatmul.mubr.f32.gmra.mrb[0].mxu0 %v904
    %v1001 = vpop.f32.mrb[0].mxu0
    %v1002 = vadd.f32 0.0, %v1001
    %v1003 = vpop.f32.mrb[0].mxu0
    %1004 = vmatprep.mubr.f32.mxu0 0.0
    %1005 = vmatmul.mubr.f32.gmra.mrb[0].mxu0 %v907
    %v1006 = vpop.f32.mrb[0].mxu0
    %v1007 = vadd.f32 0.0, %v1006
    %v1008 = vpop.f32.mrb[0].mxu0
    %1009 = vmatprep.mubr.f32.mxu0 0.0
    %1010 = vmatmul.mubr.f32.gmra.mrb[0].mxu0 %v910
    %v1011 = vpop.f32.mrb[0].mxu0
    %v1012 = vadd.f32 0.0, %v1011
    %v1013 = vpop.f32.mrb[0].mxu0
    %1014 = vmatprep.mubr.f32.mxu0 0.0
    %1015 = vmatmul.mubr.f32.gmra.mrb[0].mxu0 %v913
    %v1016 = vpop.f32.mrb[0].mxu0
    %v1017 = vadd.f32 0.0, %v1016
    %v1018 = vpop.f32.mrb[0].mxu0
    %1019 = vdwg.mxu0
    %v1020 = vsel %vm522, %v982, 0.0
    %v1021 = vsel %vm522, %v987, 0.0
    %v1022 = vadd.f32 %v1020, %v1021
    %v1023 = vsel %vm522, %v992, 0.0
    %v1024 = vadd.f32 %v1022, %v1023
    %v1025 = vsel %vm522, %v997, 0.0
    %v1026 = vadd.f32 %v1024, %v1025
    %v1027 = vsel %vm522, %v1002, 0.0
    %v1028 = vadd.f32 %v1026, %v1027
    %v1029 = vsel %vm522, %v1007, 0.0
    %v1030 = vadd.f32 %v1028, %v1029
    %v1031 = vsel %vm522, %v1012, 0.0
    %v1032 = vadd.f32 %v1030, %v1031
    %v1033 = vsel %vm522, %v1017, 0.0
    %v1034 = vadd.f32 %v1032, %v1033
    %v1035 = vrot.slane %v1034, 4
    %v1036 = vadd.f32 %v1034, %v1035
    %v1037 = vrot.slane %v1036, 2
    %v1038 = vadd.f32 %v1036, %v1037
    %v1039 = vrot.slane %v1038, 1
    %v1040 = vadd.f32 %v1038, %v1039
    %v1041 = vmul.f32 %v982, %v982
    %v1042 = vmul.f32 %v987, %v987
    %v1043 = vmul.f32 %v992, %v992
    %v1044 = vmul.f32 %v997, %v997
    %v1045 = vmul.f32 %v1002, %v1002
    %v1046 = vmul.f32 %v1007, %v1007
    %v1047 = vmul.f32 %v1012, %v1012
    %v1048 = vmul.f32 %v1017, %v1017
    %v1049 = vsel %vm522, %v1041, 0.0
    %v1050 = vsel %vm522, %v1042, 0.0
    %v1051 = vadd.f32 %v1049, %v1050
    %v1052 = vsel %vm522, %v1043, 0.0
    %v1053 = vadd.f32 %v1051, %v1052
    %v1054 = vsel %vm522, %v1044, 0.0
    %v1055 = vadd.f32 %v1053, %v1054
    %v1056 = vsel %vm522, %v1045, 0.0
    %v1057 = vadd.f32 %v1055, %v1056
    %v1058 = vsel %vm522, %v1046, 0.0
    %v1059 = vadd.f32 %v1057, %v1058
    %v1060 = vsel %vm522, %v1047, 0.0
    %v1061 = vadd.f32 %v1059, %v1060
    %v1062 = vsel %vm522, %v1048, 0.0
    %v1063 = vadd.f32 %v1061, %v1062
    %v1064 = vrot.slane %v1063, 4
    %v1065 = vadd.f32 %v1063, %v1064
    %v1066 = vrot.slane %v1065, 2
    %v1067 = vadd.f32 %v1065, %v1066
    %v1068 = vrot.slane %v1067, 1
    %v1069 = vadd.f32 %v1067, %v1068
    %v1070 = vmul.f32 %v1040, 0.015625
    %v1071 = vmul.f32 %v1069, 0.015625
    %v1072 = vmul.f32 %v1070, %v1070
    %v1073 = vsub.f32 %v1071, %v1072
    %v1074 = vmax.f32 %v1073, 0.0
    %v1075 = vadd.f32 %v1074, 1e-05
    %v1076 = vrsqrt.pop %v1075
    %v1077 = vld [vmem:[%s7] sm:$0x1]
    %v1078 = vmul.f32 %v1076, %v1077
    %v1079 = vld [vmem:[%s5] sm:$0x1]
    %v1080 = vmul.f32 %v1070, %v1078
    %v1081 = vsub.f32 %v1079, %v1080
    %v1082 = vlaneseq
    %v1083 = vshrl.u32 %v1082, 7
    %v1084 = vsub.s32 0, %v1083
    %v1085 = vrot.slane %v1078, %v1084
    %v1086 = vmul.f32 %v982, %v1085
    %v1087 = vmul.f32 %v987, %v1085
    %v1088 = vmul.f32 %v992, %v1085
    %v1089 = vmul.f32 %v997, %v1085
    %v1090 = vmul.f32 %v1002, %v1085
    %v1091 = vmul.f32 %v1007, %v1085
    %v1092 = vmul.f32 %v1012, %v1085
    %v1093 = vmul.f32 %v1017, %v1085
    %v1096 = vunpack.c.l.s4 1966171168
    %v1097 = vunpack.c.0.s8 %v1096
    %v1098 = vlaneseq
    %v1099 = vshrl.u32 %v1098, 7
    %v1100 = vsub.s32 %v1097, %v1099
    %v1101 = vrot.slane %v758, %v1100
    %v1102 = vcombine.high %v1101, %v1101
    %v1104 = vunpack.c.l.s4 1966171168
    %v1105 = vunpack.c.0.s8 %v1104
    %v1106 = vlaneseq
    %v1107 = vshrl.u32 %v1106, 7
    %v1108 = vsub.s32 %v1105, %v1107
    %v1109 = vrot.slane %v1101, %v1108
    %v1111 = vunpack.c.l.s4 1966171168
    %v1112 = vunpack.c.0.s8 %v1111
    %v1113 = vlaneseq
    %v1114 = vshrl.u32 %v1113, 7
    %v1115 = vsub.s32 %v1112, %v1114
    %v1116 = vrot.slane %v1102, %v1115
    %v1119 = vadd.f32 %v1081, %v1109
    %v1120 = vadd.f32 %v1081, %v1116
    %v1123 = vlaneseq
    %v1124 = vshrl.u32 %v1123, 7
    %v1125 = vsub.s32 0, %v1124
    %v1126 = vrot.slane %v1119, %v1125
    %v1127 = vlaneseq
    %v1128 = vshrl.u32 %v1127, 7
    %v1129 = vsub.s32 0, %v1128
    %v1130 = vrot.slane %v1120, %v1129
    %v1133 = vadd.f32 %v1086, %v1126
    %v1134 = vadd.f32 %v1087, %v1126
    %v1135 = vadd.f32 %v1088, %v1126
    %v1136 = vadd.f32 %v1089, %v1126
    %v1137 = vadd.f32 %v1090, %v1130
    %v1138 = vadd.f32 %v1091, %v1130
    %v1139 = vadd.f32 %v1092, %v1130
    %v1140 = vadd.f32 %v1093, %v1130
    %v1141 = vmax.f32 %v1133, 0.0
    %v1142 = vmax.f32 %v1134, 0.0
    %v1143 = vmax.f32 %v1135, 0.0
    %v1144 = vmax.f32 %v1136, 0.0
    %v1145 = vmax.f32 %v1137, 0.0
    %v1146 = vmax.f32 %v1138, 0.0
    %v1147 = vmax.f32 %v1139, 0.0
    %v1148 = vmax.f32 %v1140, 0.0
    %v1157 = vrot.slane %v1141, 7
    %v1158 = vrot.slane %v1142, 7
    %v1159 = vsel %vm767, %v1157, %v1158
    %v1160 = vrot.slane %v1143, 7
    %v1161 = vsel %vm767, %v1158, %v1160
    %v1162 = vrot.slane %v1144, 7
    %v1163 = vsel %vm767, %v1160, %v1162
    %v1164 = vrot.slane %v1145, 7
    %v1165 = vrot.slane %v1146, 7
    %v1166 = vsel %vm767, %v1164, %v1165
    %v1167 = vrot.slane %v1147, 7
    %v1168 = vsel %vm767, %v1165, %v1167
    %v1169 = vrot.slane %v1148, 7
    %v1170 = vsel %vm767, %v1167, %v1169
    %v1179 = vsel %vm767, 0.0, %v1157
    %v1180 = vsel %vm767, 0.0, %v1164
    %v1181 = vrot.slane %v1141, 1
    %v1182 = vrot.slane %v1142, 1
    %v1183 = vsel %vm792, %v1181, %v1182
    %v1184 = vrot.slane %v1143, 1
    %v1185 = vsel %vm792, %v1182, %v1184
    %v1186 = vrot.slane %v1144, 1
    %v1187 = vsel %vm792, %v1184, %v1186
    %v1188 = vrot.slane %v1145, 1
    %v1189 = vrot.slane %v1146, 1
    %v1190 = vsel %vm792, %v1188, %v1189
    %v1191 = vrot.slane %v1147, 1
    %v1192 = vsel %vm792, %v1189, %v1191
    %v1193 = vrot.slane %v1148, 1
    %v1194 = vsel %vm792, %v1191, %v1193
    %v1197 = vsel %vm792, %v1186, 0.0
    %v1198 = vsel %vm792, %v1193, 0.0
    %1199 = vrot.lane.b32.xlu0 %v1141, 32
    %v1200 = vpop.permute.xlu0 %1199
    %1201 = vrot.lane.b32.xlu0 %v1142, 32
    %v1202 = vpop.permute.xlu0 %1201
    %1203 = vrot.lane.b32.xlu0 %v1143, 32
    %v1204 = vpop.permute.xlu0 %1203
    %1205 = vrot.lane.b32.xlu0 %v1144, 32
    %v1206 = vpop.permute.xlu0 %1205
    %1207 = vrot.lane.b32.xlu0 %v1145, 32
    %v1208 = vpop.permute.xlu0 %1207
    %1209 = vrot.lane.b32.xlu0 %v1146, 32
    %v1210 = vpop.permute.xlu0 %1209
    %1211 = vrot.lane.b32.xlu0 %v1147, 32
    %v1212 = vpop.permute.xlu0 %1211
    %1213 = vrot.lane.b32.xlu0 %v1148, 32
    %v1214 = vpop.permute.xlu0 %1213
    %1225 = vrot.lane.b32.xlu0 %v1183, 64
    %v1226 = vpop.permute.xlu0 %1225
    %1227 = vrot.lane.b32.xlu0 %v1185, 64
    %v1228 = vpop.permute.xlu0 %1227
    %1229 = vrot.lane.b32.xlu0 %v1187, 64
    %v1230 = vpop.permute.xlu0 %1229
    %1231 = vrot.lane.b32.xlu0 %v1197, 64
    %v1232 = vpop.permute.xlu0 %1231
    %1233 = vrot.lane.b32.xlu0 %v1190, 64
    %v1234 = vpop.permute.xlu0 %1233
    %1235 = vrot.lane.b32.xlu0 %v1192, 64
    %v1236 = vpop.permute.xlu0 %1235
    %1237 = vrot.lane.b32.xlu0 %v1194, 64
    %v1238 = vpop.permute.xlu0 %1237
    %1239 = vrot.lane.b32.xlu0 %v1198, 64
    %v1240 = vpop.permute.xlu0 %1239
    %v1249 = vsel %vm522, %v1179, %v1200
    %v1250 = vsel %vm522, %v1159, %v1202
    %v1251 = vsel %vm522, %v1161, %v1204
    %v1252 = vsel %vm522, %v1163, %v1206
    %v1253 = vsel %vm522, %v1180, %v1208
    %v1254 = vsel %vm522, %v1166, %v1210
    %v1255 = vsel %vm522, %v1168, %v1212
    %v1256 = vsel %vm522, %v1170, %v1214
    %v1257 = vsel %vm869, %v1249, %v1226
    %v1258 = vsel %vm869, %v1250, %v1228
    %v1259 = vsel %vm869, %v1251, %v1230
    %v1260 = vsel %vm869, %v1252, %v1232
    %v1261 = vsel %vm869, %v1253, %v1234
    %v1262 = vsel %vm869, %v1254, %v1236
    %v1263 = vsel %vm869, %v1255, %v1238
    %v1264 = vsel %vm869, %v1256, %v1240
    %v1265 = vld [vmem:[%s15] sm:$0xff]
    %v1266 = vld [vmem:[%s15 + $0x8] sm:$0xff]
    %v1267 = vld [vmem:[%s15 + $0x10] sm:$0xff]
    %v1268 = vld [vmem:[%s15 + $0x18] sm:$0xff]
    %v1269 = vld [vmem:[%s15 + $0x20] sm:$0xff]
    %v1270 = vld [vmem:[%s15 + $0x28] sm:$0xff]
    %v1271 = vld [vmem:[%s15 + $0x30] sm:$0xff]
    %v1272 = vld [vmem:[%s15 + $0x38] sm:$0xff]
    %v1273 = vld [vmem:[%s15 + $0x40] sm:$0xff]
    %v1274 = vld [vmem:[%s15 + $0x48] sm:$0xff]
    %v1275 = vld [vmem:[%s15 + $0x50] sm:$0xff]
    %v1276 = vld [vmem:[%s15 + $0x58] sm:$0xff]
    %v1278 = vsel %vm890, %v1257, 0
    %v1281 = vsel %vm890, %v1258, 0
    %v1284 = vsel %vm890, %v1259, 0
    %v1287 = vsel %vm890, %v1260, 0
    %v1290 = vsel %vm890, %v1261, 0
    %v1293 = vsel %vm890, %v1262, 0
    %v1296 = vsel %vm890, %v1263, 0
    %v1299 = vsel %vm890, %v1264, 0
    %1301 = vmatprep.subr.mxu0 0.0
    %1302 = vmatpush1.msra.mxu0 %v1265
    %1303 = vmatprep.subr.mxu0 0.0
    %1304 = vmatpush1.msra.mxu0 %v1266
    %1305 = vmatprep.subr.mxu0 0.0
    %1306 = vmatpush1.msra.mxu0 %v1267
    %1307 = vmatprep.subr.mxu0 0.0
    %1308 = vmatpush1.msra.mxu0 %v1268
    %1309 = vmatprep.subr.mxu0 0.0
    %1310 = vmatpush1.msra.mxu0 %v1269
    %1311 = vmatprep.subr.mxu0 0.0
    %1312 = vmatpush1.msra.mxu0 %v1270
    %1313 = vmatprep.subr.mxu0 0.0
    %1314 = vmatpush1.msra.mxu0 %v1271
    %1315 = vmatprep.subr.mxu0 0.0
    %1316 = vmatpush1.msra.mxu0 %v1272
    %1317 = vmatprep.subr.mxu0 0.0
    %1318 = vmatpush1.msra.mxu0 %v1273
    %1319 = vmatprep.subr.mxu0 0.0
    %1320 = vmatpush1.msra.mxu0 %v1274
    %1321 = vmatprep.subr.mxu0 0.0
    %1322 = vmatpush1.msra.mxu0 %v1275
    %1323 = vmatprep.subr.mxu0 0.0
    %1324 = vmatpush1.msra.mxu0 %v1276
    %1325 = vmatprep.subr.mxu0 0.0
    %1326 = vmatpush1.msra.mxu0 0.0
    %1327 = vmatprep.subr.mxu0 0.0
    %1328 = vmatpush1.msra.mxu0 0.0
    %1329 = vmatprep.subr.mxu0 0.0
    %1330 = vmatpush1.msra.mxu0 0.0
    %1331 = vmatprep.subr.mxu0 0.0
    %1332 = vmatpush1.msra.mxu0 0.0
    %1333 = vmatprep.subr.mxu0 0.0
    %1334 = vmatpush1.msra.mxu0 0.0
    %1335 = vmatprep.subr.mxu0 0.0
    %1336 = vmatpush1.msra.mxu0 0.0
    %1337 = vmatprep.subr.mxu0 0.0
    %1338 = vmatpush1.msra.mxu0 0.0
    %1339 = vmatprep.subr.mxu0 0.0
    %1340 = vmatpush1.msra.mxu0 0.0
    %1341 = vmatprep.subr.mxu0 0.0
    %1342 = vmatpush1.msra.mxu0 0.0
    %1343 = vmatprep.subr.mxu0 0.0
    %1344 = vmatpush1.msra.mxu0 0.0
    %1345 = vmatprep.subr.mxu0 0.0
    %1346 = vmatpush1.msra.mxu0 0.0
    %1347 = vmatprep.subr.mxu0 0.0
    %1348 = vmatpush1.msra.mxu0 0.0
    %1349 = vmatprep.subr.mxu0 0.0
    %1350 = vmatpush1.msra.mxu0 0.0
    %1351 = vmatprep.subr.mxu0 0.0
    %1352 = vmatpush1.msra.mxu0 0.0
    %1353 = vmatprep.subr.mxu0 0.0
    %1354 = vmatpush1.msra.mxu0 0.0
    %1355 = vmatprep.subr.mxu0 0.0
    %1356 = vmatpush1.msra.mxu0 0.0
    %1357 = vmatprep.subr.mxu0 0.0
    %1358 = vmatpush1.msra.mxu0 0.0
    %1359 = vmatprep.subr.mxu0 0.0
    %1360 = vmatpush1.msra.mxu0 0.0
    %1361 = vmatprep.subr.mxu0 0.0
    %1362 = vmatpush1.msra.mxu0 0.0
    %1363 = vmatprep.subr.mxu0 0.0
    %1364 = vmatpush1.msra.mxu0 0.0
    %1365 = vmatprep.mubr.f32.mxu0 0.0
    %1366 = vmatmul.mubr.f32.gmra.mrb[0].mxu0 %v1278
    %v1367 = vpop.f32.mrb[0].mxu0
    %v1368 = vadd.f32 0.0, %v1367
    %v1369 = vpop.f32.mrb[0].mxu0
    %1370 = vmatprep.mubr.f32.mxu0 0.0
    %1371 = vmatmul.mubr.f32.gmra.mrb[0].mxu0 %v1281
    %v1372 = vpop.f32.mrb[0].mxu0
    %v1373 = vadd.f32 0.0, %v1372
    %v1374 = vpop.f32.mrb[0].mxu0
    %1375 = vmatprep.mubr.f32.mxu0 0.0
    %1376 = vmatmul.mubr.f32.gmra.mrb[0].mxu0 %v1284
    %v1377 = vpop.f32.mrb[0].mxu0
    %v1378 = vadd.f32 0.0, %v1377
    %v1379 = vpop.f32.mrb[0].mxu0
    %1380 = vmatprep.mubr.f32.mxu0 0.0
    %1381 = vmatmul.mubr.f32.gmra.mrb[0].mxu0 %v1287
    %v1382 = vpop.f32.mrb[0].mxu0
    %v1383 = vadd.f32 0.0, %v1382
    %v1384 = vpop.f32.mrb[0].mxu0
    %1385 = vmatprep.mubr.f32.mxu0 0.0
    %1386 = vmatmul.mubr.f32.gmra.mrb[0].mxu0 %v1290
    %v1387 = vpop.f32.mrb[0].mxu0
    %v1388 = vadd.f32 0.0, %v1387
    %v1389 = vpop.f32.mrb[0].mxu0
    %1390 = vmatprep.mubr.f32.mxu0 0.0
    %1391 = vmatmul.mubr.f32.gmra.mrb[0].mxu0 %v1293
    %v1392 = vpop.f32.mrb[0].mxu0
    %v1393 = vadd.f32 0.0, %v1392
    %v1394 = vpop.f32.mrb[0].mxu0
    %1395 = vmatprep.mubr.f32.mxu0 0.0
    %1396 = vmatmul.mubr.f32.gmra.mrb[0].mxu0 %v1296
    %v1397 = vpop.f32.mrb[0].mxu0
    %v1398 = vadd.f32 0.0, %v1397
    %v1399 = vpop.f32.mrb[0].mxu0
    %1400 = vmatprep.mubr.f32.mxu0 0.0
    %1401 = vmatmul.mubr.f32.gmra.mrb[0].mxu0 %v1299
    %v1402 = vpop.f32.mrb[0].mxu0
    %v1403 = vadd.f32 0.0, %v1402
    %v1404 = vpop.f32.mrb[0].mxu0
    %1405 = vdwg.mxu0
    %v1406 = vsel %vm522, %v1368, 0.0
    %v1407 = vsel %vm522, %v1373, 0.0
    %v1408 = vadd.f32 %v1406, %v1407
    %v1409 = vsel %vm522, %v1378, 0.0
    %v1410 = vadd.f32 %v1408, %v1409
    %v1411 = vsel %vm522, %v1383, 0.0
    %v1412 = vadd.f32 %v1410, %v1411
    %v1413 = vsel %vm522, %v1388, 0.0
    %v1414 = vadd.f32 %v1412, %v1413
    %v1415 = vsel %vm522, %v1393, 0.0
    %v1416 = vadd.f32 %v1414, %v1415
    %v1417 = vsel %vm522, %v1398, 0.0
    %v1418 = vadd.f32 %v1416, %v1417
    %v1419 = vsel %vm522, %v1403, 0.0
    %v1420 = vadd.f32 %v1418, %v1419
    %v1421 = vrot.slane %v1420, 4
    %v1422 = vadd.f32 %v1420, %v1421
    %v1423 = vrot.slane %v1422, 2
    %v1424 = vadd.f32 %v1422, %v1423
    %v1425 = vrot.slane %v1424, 1
    %v1426 = vadd.f32 %v1424, %v1425
    %v1427 = vmul.f32 %v1368, %v1368
    %v1428 = vmul.f32 %v1373, %v1373
    %v1429 = vmul.f32 %v1378, %v1378
    %v1430 = vmul.f32 %v1383, %v1383
    %v1431 = vmul.f32 %v1388, %v1388
    %v1432 = vmul.f32 %v1393, %v1393
    %v1433 = vmul.f32 %v1398, %v1398
    %v1434 = vmul.f32 %v1403, %v1403
    %v1435 = vsel %vm522, %v1427, 0.0
    %v1436 = vsel %vm522, %v1428, 0.0
    %v1437 = vadd.f32 %v1435, %v1436
    %v1438 = vsel %vm522, %v1429, 0.0
    %v1439 = vadd.f32 %v1437, %v1438
    %v1440 = vsel %vm522, %v1430, 0.0
    %v1441 = vadd.f32 %v1439, %v1440
    %v1442 = vsel %vm522, %v1431, 0.0
    %v1443 = vadd.f32 %v1441, %v1442
    %v1444 = vsel %vm522, %v1432, 0.0
    %v1445 = vadd.f32 %v1443, %v1444
    %v1446 = vsel %vm522, %v1433, 0.0
    %v1447 = vadd.f32 %v1445, %v1446
    %v1448 = vsel %vm522, %v1434, 0.0
    %v1449 = vadd.f32 %v1447, %v1448
    %v1450 = vrot.slane %v1449, 4
    %v1451 = vadd.f32 %v1449, %v1450
    %v1452 = vrot.slane %v1451, 2
    %v1453 = vadd.f32 %v1451, %v1452
    %v1454 = vrot.slane %v1453, 1
    %v1455 = vadd.f32 %v1453, %v1454
    %v1456 = vmul.f32 %v1426, 0.015625
    %v1457 = vmul.f32 %v1455, 0.015625
    %v1458 = vmul.f32 %v1456, %v1456
    %v1459 = vsub.f32 %v1457, %v1458
    %v1460 = vmax.f32 %v1459, 0.0
    %v1461 = vadd.f32 %v1460, 1e-05
    %v1462 = vrsqrt.pop %v1461
    %v1463 = vld [vmem:[%s11] sm:$0x1]
    %v1464 = vmul.f32 %v1462, %v1463
    %v1465 = vld [vmem:[%s9] sm:$0x1]
    %v1466 = vmul.f32 %v1456, %v1464
    %v1467 = vsub.f32 %v1465, %v1466
    %v1468 = vlaneseq
    %v1469 = vshrl.u32 %v1468, 7
    %v1470 = vsub.s32 0, %v1469
    %v1471 = vrot.slane %v1464, %v1470
    %v1472 = vmul.f32 %v1368, %v1471
    %v1473 = vmul.f32 %v1373, %v1471
    %v1474 = vmul.f32 %v1378, %v1471
    %v1475 = vmul.f32 %v1383, %v1471
    %v1476 = vmul.f32 %v1388, %v1471
    %v1477 = vmul.f32 %v1393, %v1471
    %v1478 = vmul.f32 %v1398, %v1471
    %v1479 = vmul.f32 %v1403, %v1471
    %v1481 = vlaneseq
    %v1482 = vshrl.u32 %v1481, 7
    %v1483 = vsub.s32 0, %v1482
    %v1484 = vrot.slane %v1467, %v1483
    %v1486 = vadd.f32 %v1472, %v1484
    %v1487 = vadd.f32 %v1473, %v1484
    %v1488 = vadd.f32 %v1474, %v1484
    %v1489 = vadd.f32 %v1475, %v1484
    %v1490 = vadd.f32 %v1476, %v1484
    %v1491 = vadd.f32 %v1477, %v1484
    %v1492 = vadd.f32 %v1478, %v1484
    %v1493 = vadd.f32 %v1479, %v1484
    %v1494 = vmax.f32 %v1486, 0.0
    %v1495 = vmax.f32 %v1487, 0.0
    %v1496 = vmax.f32 %v1488, 0.0
    %v1497 = vmax.f32 %v1489, 0.0
    %v1498 = vmax.f32 %v1490, 0.0
    %v1499 = vmax.f32 %v1491, 0.0
    %v1500 = vmax.f32 %v1492, 0.0
    %v1501 = vmax.f32 %v1493, 0.0
    %v1502 = vadd.f32 %v1494, %v666
    %v1503 = vadd.f32 %v1495, %v667
    %v1504 = vadd.f32 %v1496, %v668
    %v1505 = vadd.f32 %v1497, %v669
    %v1506 = vadd.f32 %v1498, %v670
    %v1507 = vadd.f32 %v1499, %v671
    %v1508 = vadd.f32 %v1500, %v672
    %v1509 = vadd.f32 %v1501, %v673
    %v1510 = vld [vmem:[%s137] sm:$0xff]
    %v1511 = vld [vmem:[%s137 + $0x8] sm:$0xff]
    %v1513 = vsel %vm522, %v1510, 0
    %v1516 = vsel %vm522, %v1511, 0
    %1518 = vmatprep.subr.mxu0 0.0
    %1519 = vmatpush1.msra.mxu0 %v1502
    %1520 = vmatprep.subr.mxu0 0.0
    %1521 = vmatpush1.msra.mxu0 %v1503
    %1522 = vmatprep.subr.mxu0 0.0
    %1523 = vmatpush1.msra.mxu0 %v1504
    %1524 = vmatprep.subr.mxu0 0.0
    %1525 = vmatpush1.msra.mxu0 %v1505
    %1526 = vmatprep.subr.mxu0 0.0
    %1527 = vmatpush1.msra.mxu0 0.0
    %1528 = vmatprep.subr.mxu0 0.0
    %1529 = vmatpush1.msra.mxu0 0.0
    %1530 = vmatprep.subr.mxu0 0.0
    %1531 = vmatpush1.msra.mxu0 0.0
    %1532 = vmatprep.subr.mxu0 0.0
    %1533 = vmatpush1.msra.mxu0 0.0
    %1534 = vmatprep.subr.mxu0 0.0
    %1535 = vmatpush1.msra.mxu0 0.0
    %1536 = vmatprep.subr.mxu0 0.0
    %1537 = vmatpush1.msra.mxu0 0.0
    %1538 = vmatprep.subr.mxu0 0.0
    %1539 = vmatpush1.msra.mxu0 0.0
    %1540 = vmatprep.subr.mxu0 0.0
    %1541 = vmatpush1.msra.mxu0 0.0
    %1542 = vmatprep.subr.mxu0 0.0
    %1543 = vmatpush1.msra.mxu0 0.0
    %1544 = vmatprep.subr.mxu0 0.0
    %1545 = vmatpush1.msra.mxu0 0.0
    %1546 = vmatprep.subr.mxu0 0.0
    %1547 = vmatpush1.msra.mxu0 0.0
    %1548 = vmatprep.subr.mxu0 0.0
    %1549 = vmatpush1.msra.mxu0 0.0
    %1550 = vmatprep.subr.mxu0 0.0
    %1551 = vmatpush1.msra.mxu0 0.0
    %1552 = vmatprep.subr.mxu0 0.0
    %1553 = vmatpush1.msra.mxu0 0.0
    %1554 = vmatprep.subr.mxu0 0.0
    %1555 = vmatpush1.msra.mxu0 0.0
    %1556 = vmatprep.subr.mxu0 0.0
    %1557 = vmatpush1.msra.mxu0 0.0
    %1558 = vmatprep.subr.mxu0 0.0
    %1559 = vmatpush1.msra.mxu0 0.0
    %1560 = vmatprep.subr.mxu0 0.0
    %1561 = vmatpush1.msra.mxu0 0.0
    %1562 = vmatprep.subr.mxu0 0.0
    %1563 = vmatpush1.msra.mxu0 0.0
    %1564 = vmatprep.subr.mxu0 0.0
    %1565 = vmatpush1.msra.mxu0 0.0
    %1566 = vmatprep.subr.mxu0 0.0
    %1567 = vmatpush1.msra.mxu0 0.0
    %1568 = vmatprep.subr.mxu0 0.0
    %1569 = vmatpush1.msra.mxu0 0.0
    %1570 = vmatprep.subr.mxu0 0.0
    %1571 = vmatpush1.msra.mxu0 0.0
    %1572 = vmatprep.subr.mxu0 0.0
    %1573 = vmatpush1.msra.mxu0 0.0
    %1574 = vmatprep.subr.mxu0 0.0
    %1575 = vmatpush1.msra.mxu0 0.0
    %1576 = vmatprep.subr.mxu0 0.0
    %1577 = vmatpush1.msra.mxu0 0.0
    %1578 = vmatprep.subr.mxu0 0.0
    %1579 = vmatpush1.msra.mxu0 0.0
    %1580 = vmatprep.subr.mxu0 0.0
    %1581 = vmatpush1.msra.mxu0 0.0
    %1582 = vmatprep.mubr.f32.mxu0 0.0
    %1583 = vmatmul.mubr.f32.gmra.mrb[0].mxu0 %v1513
    %v1584 = vpop.f32.mrb[0].mxu0
    %v1585 = vadd.f32 0.0, %v1584
    %v1586 = vpop.f32.mrb[0].mxu0
    %1587 = vmatprep.mubr.f32.mxu0 0.0
    %1588 = vmatmul.mubr.f32.gmra.mrb[0].mxu0 %v1516
    %v1589 = vpop.f32.mrb[0].mxu0
    %v1590 = vadd.f32 0.0, %v1589
    %v1591 = vpop.f32.mrb[0].mxu0
    %1592 = vdwg.mxu0
    %1593 = vmatprep.subr.mxu0 0.0
    %1594 = vmatpush1.msra.mxu0 %v1506
    %1595 = vmatprep.subr.mxu0 0.0
    %1596 = vmatpush1.msra.mxu0 %v1507
    %1597 = vmatprep.subr.mxu0 0.0
    %1598 = vmatpush1.msra.mxu0 %v1508
    %1599 = vmatprep.subr.mxu0 0.0
    %1600 = vmatpush1.msra.mxu0 %v1509
    %1601 = vmatprep.subr.mxu0 0.0
    %1602 = vmatpush1.msra.mxu0 0.0
    %1603 = vmatprep.subr.mxu0 0.0
    %1604 = vmatpush1.msra.mxu0 0.0
    %1605 = vmatprep.subr.mxu0 0.0
    %1606 = vmatpush1.msra.mxu0 0.0
    %1607 = vmatprep.subr.mxu0 0.0
    %1608 = vmatpush1.msra.mxu0 0.0
    %1609 = vmatprep.subr.mxu0 0.0
    %1610 = vmatpush1.msra.mxu0 0.0
    %1611 = vmatprep.subr.mxu0 0.0
    %1612 = vmatpush1.msra.mxu0 0.0
    %1613 = vmatprep.subr.mxu0 0.0
    %1614 = vmatpush1.msra.mxu0 0.0
    %1615 = vmatprep.subr.mxu0 0.0
    %1616 = vmatpush1.msra.mxu0 0.0
    %1617 = vmatprep.subr.mxu0 0.0
    %1618 = vmatpush1.msra.mxu0 0.0
    %1619 = vmatprep.subr.mxu0 0.0
    %1620 = vmatpush1.msra.mxu0 0.0
    %1621 = vmatprep.subr.mxu0 0.0
    %1622 = vmatpush1.msra.mxu0 0.0
    %1623 = vmatprep.subr.mxu0 0.0
    %1624 = vmatpush1.msra.mxu0 0.0
    %1625 = vmatprep.subr.mxu0 0.0
    %1626 = vmatpush1.msra.mxu0 0.0
    %1627 = vmatprep.subr.mxu0 0.0
    %1628 = vmatpush1.msra.mxu0 0.0
    %1629 = vmatprep.subr.mxu0 0.0
    %1630 = vmatpush1.msra.mxu0 0.0
    %1631 = vmatprep.subr.mxu0 0.0
    %1632 = vmatpush1.msra.mxu0 0.0
    %1633 = vmatprep.subr.mxu0 0.0
    %1634 = vmatpush1.msra.mxu0 0.0
    %1635 = vmatprep.subr.mxu0 0.0
    %1636 = vmatpush1.msra.mxu0 0.0
    %1637 = vmatprep.subr.mxu0 0.0
    %1638 = vmatpush1.msra.mxu0 0.0
    %1639 = vmatprep.subr.mxu0 0.0
    %1640 = vmatpush1.msra.mxu0 0.0
    %1641 = vmatprep.subr.mxu0 0.0
    %1642 = vmatpush1.msra.mxu0 0.0
    %1643 = vmatprep.subr.mxu0 0.0
    %1644 = vmatpush1.msra.mxu0 0.0
    %1645 = vmatprep.subr.mxu0 0.0
    %1646 = vmatpush1.msra.mxu0 0.0
    %1647 = vmatprep.subr.mxu0 0.0
    %1648 = vmatpush1.msra.mxu0 0.0
    %1649 = vmatprep.subr.mxu0 0.0
    %1650 = vmatpush1.msra.mxu0 0.0
    %1651 = vmatprep.subr.mxu0 0.0
    %1652 = vmatpush1.msra.mxu0 0.0
    %1653 = vmatprep.subr.mxu0 0.0
    %1654 = vmatpush1.msra.mxu0 0.0
    %1655 = vmatprep.subr.mxu0 0.0
    %1656 = vmatpush1.msra.mxu0 0.0
    %1657 = vmatprep.mubr.f32.mxu0 0.0
    %1658 = vmatmul.mubr.f32.gmra.mrb[0].mxu0 %v1513
    %v1659 = vpop.f32.mrb[0].mxu0
    %v1660 = vadd.f32 0.0, %v1659
    %v1661 = vpop.f32.mrb[0].mxu0
    %1662 = vmatprep.mubr.f32.mxu0 0.0
    %1663 = vmatmul.mubr.f32.gmra.mrb[0].mxu0 %v1516
    %v1664 = vpop.f32.mrb[0].mxu0
    %v1665 = vadd.f32 0.0, %v1664
    %v1666 = vpop.f32.mrb[0].mxu0
    %1667 = vdwg.mxu0
    %v1668 = vld [vmem:[%s39] sm:$0xff]
    %v1669 = vld [vmem:[%s39 + $0x8] sm:$0xff]
    %v1670 = vld [vmem:[%s39 + $0x10] sm:$0xff]
    %v1671 = vld [vmem:[%s39 + $0x18] sm:$0xff]
    %v1672 = vld [vmem:[%s37] sm:$0x1]
    %v1674 = vlaneseq
    %v1675 = vshrl.u32 %v1674, 7
    %v1676 = vsub.s32 0, %v1675
    %v1677 = vrot.slane %v1672, %v1676
    %1679 = vmatprep.subr.mxu0 0.0
    %1680 = vmatpush1.msra.mxu0 %v1668
    %1681 = vmatprep.subr.mxu0 0.0
    %1682 = vmatpush1.msra.mxu0 %v1669
    %1683 = vmatprep.subr.mxu0 0.0
    %1684 = vmatpush1.msra.mxu0 %v1670
    %1685 = vmatprep.subr.mxu0 0.0
    %1686 = vmatpush1.msra.mxu0 %v1671
    %1687 = vmatprep.subr.mxu0 0.0
    %1688 = vmatpush1.msra.mxu0 0.0
    %1689 = vmatprep.subr.mxu0 0.0
    %1690 = vmatpush1.msra.mxu0 0.0
    %1691 = vmatprep.subr.mxu0 0.0
    %1692 = vmatpush1.msra.mxu0 0.0
    %1693 = vmatprep.subr.mxu0 0.0
    %1694 = vmatpush1.msra.mxu0 0.0
    %1695 = vmatprep.subr.mxu0 0.0
    %1696 = vmatpush1.msra.mxu0 0.0
    %1697 = vmatprep.subr.mxu0 0.0
    %1698 = vmatpush1.msra.mxu0 0.0
    %1699 = vmatprep.subr.mxu0 0.0
    %1700 = vmatpush1.msra.mxu0 0.0
    %1701 = vmatprep.subr.mxu0 0.0
    %1702 = vmatpush1.msra.mxu0 0.0
    %1703 = vmatprep.subr.mxu0 0.0
    %1704 = vmatpush1.msra.mxu0 0.0
    %1705 = vmatprep.subr.mxu0 0.0
    %1706 = vmatpush1.msra.mxu0 0.0
    %1707 = vmatprep.subr.mxu0 0.0
    %1708 = vmatpush1.msra.mxu0 0.0
    %1709 = vmatprep.subr.mxu0 0.0
    %1710 = vmatpush1.msra.mxu0 0.0
    %1711 = vmatprep.subr.mxu0 0.0
    %1712 = vmatpush1.msra.mxu0 0.0
    %1713 = vmatprep.subr.mxu0 0.0
    %1714 = vmatpush1.msra.mxu0 0.0
    %1715 = vmatprep.subr.mxu0 0.0
    %1716 = vmatpush1.msra.mxu0 0.0
    %1717 = vmatprep.subr.mxu0 0.0
    %1718 = vmatpush1.msra.mxu0 0.0
    %1719 = vmatprep.subr.mxu0 0.0
    %1720 = vmatpush1.msra.mxu0 0.0
    %1721 = vmatprep.subr.mxu0 0.0
    %1722 = vmatpush1.msra.mxu0 0.0
    %1723 = vmatprep.subr.mxu0 0.0
    %1724 = vmatpush1.msra.mxu0 0.0
    %1725 = vmatprep.subr.mxu0 0.0
    %1726 = vmatpush1.msra.mxu0 0.0
    %1727 = vmatprep.subr.mxu0 0.0
    %1728 = vmatpush1.msra.mxu0 0.0
    %1729 = vmatprep.subr.mxu0 0.0
    %1730 = vmatpush1.msra.mxu0 0.0
    %1731 = vmatprep.subr.mxu0 0.0
    %1732 = vmatpush1.msra.mxu0 0.0
    %1733 = vmatprep.subr.mxu0 0.0
    %1734 = vmatpush1.msra.mxu0 0.0
    %1735 = vmatprep.subr.mxu0 0.0
    %1736 = vmatpush1.msra.mxu0 0.0
    %1737 = vmatprep.subr.mxu0 0.0
    %1738 = vmatpush1.msra.mxu0 0.0
    %1739 = vmatprep.subr.mxu0 0.0
    %1740 = vmatpush1.msra.mxu0 0.0
    %1741 = vmatprep.subr.mxu0 0.0
    %1742 = vmatpush1.msra.mxu0 0.0
    %1743 = vmatprep.mubr.f32.mxu0 0.0
    %1744 = vmatmul.mubr.f32.gmra.mrb[0].mxu0 %v686
    %v1745 = vpop.f32.mrb[0].mxu0
    %v1746 = vadd.f32 %v1677, %v1745
    %v1747 = vpop.f32.mrb[0].mxu0
    %1748 = vdwg.mxu0
    %v1749 = vmax.f32 %v1746, 0.0
    %v1754 = vrot.slane %v1585, 7
    %v1755 = vrot.slane %v1590, 7
    %v1756 = vsel %vm767, %v1754, %v1755
    %v1757 = vrot.slane %v1660, 7
    %v1758 = vrot.slane %v1665, 7
    %v1759 = vsel %vm767, %v1757, %v1758
    %v1764 = vsel %vm767, 0.0, %v1754
    %v1765 = vsel %vm767, 0.0, %v1757
    %v1766 = vrot.slane %v1585, 1
    %v1767 = vrot.slane %v1590, 1
    %v1768 = vsel %vm792, %v1766, %v1767
    %v1769 = vrot.slane %v1660, 1
    %v1770 = vrot.slane %v1665, 1
    %v1771 = vsel %vm792, %v1769, %v1770
    %v1774 = vsel %vm792, %v1767, 0.0
    %v1775 = vsel %vm792, %v1770, 0.0
    %1776 = vrot.lane.b32.xlu0 %v1585, 32
    %v1777 = vpop.permute.xlu0 %1776
    %1778 = vrot.lane.b32.xlu0 %v1590, 32
    %v1779 = vpop.permute.xlu0 %1778
    %1780 = vrot.lane.b32.xlu0 %v1660, 32
    %v1781 = vpop.permute.xlu0 %1780
    %1782 = vrot.lane.b32.xlu0 %v1665, 32
    %v1783 = vpop.permute.xlu0 %1782
    %1790 = vrot.lane.b32.xlu0 %v1768, 64
    %v1791 = vpop.permute.xlu0 %1790
    %1792 = vrot.lane.b32.xlu0 %v1774, 64
    %v1793 = vpop.permute.xlu0 %1792
    %1794 = vrot.lane.b32.xlu0 %v1771, 64
    %v1795 = vpop.permute.xlu0 %1794
    %1796 = vrot.lane.b32.xlu0 %v1775, 64
    %v1797 = vpop.permute.xlu0 %1796
    %v1802 = vsel %vm522, %v1764, %v1777
    %v1803 = vsel %vm522, %v1756, %v1779
    %v1804 = vsel %vm522, %v1765, %v1781
    %v1805 = vsel %vm522, %v1759, %v1783
    %v1806 = vsel %vm869, %v1802, %v1791
    %v1807 = vsel %vm869, %v1803, %v1793
    %v1808 = vsel %vm869, %v1804, %v1795
    %v1809 = vsel %vm869, %v1805, %v1797
    %v1810 = vld [vmem:[%s29] sm:$0xff]
    %v1811 = vld [vmem:[%s29 + $0x8] sm:$0xff]
    %v1812 = vld [vmem:[%s29 + $0x10] sm:$0xff]
    %v1813 = vld [vmem:[%s29 + $0x18] sm:$0xff]
    %v1814 = vld [vmem:[%s29 + $0x20] sm:$0xff]
    %v1815 = vld [vmem:[%s29 + $0x28] sm:$0xff]
    %v1816 = vld [vmem:[%s29 + $0x30] sm:$0xff]
    %v1817 = vld [vmem:[%s29 + $0x38] sm:$0xff]
    %v1818 = vld [vmem:[%s29 + $0x40] sm:$0xff]
    %v1819 = vld [vmem:[%s29 + $0x48] sm:$0xff]
    %v1820 = vld [vmem:[%s29 + $0x50] sm:$0xff]
    %v1821 = vld [vmem:[%s29 + $0x58] sm:$0xff]
    %v1823 = vsel %vm890, %v1806, 0
    %v1826 = vsel %vm890, %v1807, 0
    %v1829 = vsel %vm890, %v1808, 0
    %v1832 = vsel %vm890, %v1809, 0
    %1834 = vmatprep.subr.mxu0 0.0
    %1835 = vmatpush1.msra.mxu0 %v1810
    %1836 = vmatprep.subr.mxu0 0.0
    %1837 = vmatpush1.msra.mxu0 %v1811
    %1838 = vmatprep.subr.mxu0 0.0
    %1839 = vmatpush1.msra.mxu0 %v1812
    %1840 = vmatprep.subr.mxu0 0.0
    %1841 = vmatpush1.msra.mxu0 %v1813
    %1842 = vmatprep.subr.mxu0 0.0
    %1843 = vmatpush1.msra.mxu0 %v1814
    %1844 = vmatprep.subr.mxu0 0.0
    %1845 = vmatpush1.msra.mxu0 %v1815
    %1846 = vmatprep.subr.mxu0 0.0
    %1847 = vmatpush1.msra.mxu0 %v1816
    %1848 = vmatprep.subr.mxu0 0.0
    %1849 = vmatpush1.msra.mxu0 %v1817
    %1850 = vmatprep.subr.mxu0 0.0
    %1851 = vmatpush1.msra.mxu0 %v1818
    %1852 = vmatprep.subr.mxu0 0.0
    %1853 = vmatpush1.msra.mxu0 %v1819
    %1854 = vmatprep.subr.mxu0 0.0
    %1855 = vmatpush1.msra.mxu0 %v1820
    %1856 = vmatprep.subr.mxu0 0.0
    %1857 = vmatpush1.msra.mxu0 %v1821
    %1858 = vmatprep.subr.mxu0 0.0
    %1859 = vmatpush1.msra.mxu0 0.0
    %1860 = vmatprep.subr.mxu0 0.0
    %1861 = vmatpush1.msra.mxu0 0.0
    %1862 = vmatprep.subr.mxu0 0.0
    %1863 = vmatpush1.msra.mxu0 0.0
    %1864 = vmatprep.subr.mxu0 0.0
    %1865 = vmatpush1.msra.mxu0 0.0
    %1866 = vmatprep.subr.mxu0 0.0
    %1867 = vmatpush1.msra.mxu0 0.0
    %1868 = vmatprep.subr.mxu0 0.0
    %1869 = vmatpush1.msra.mxu0 0.0
    %1870 = vmatprep.subr.mxu0 0.0
    %1871 = vmatpush1.msra.mxu0 0.0
    %1872 = vmatprep.subr.mxu0 0.0
    %1873 = vmatpush1.msra.mxu0 0.0
    %1874 = vmatprep.subr.mxu0 0.0
    %1875 = vmatpush1.msra.mxu0 0.0
    %1876 = vmatprep.subr.mxu0 0.0
    %1877 = vmatpush1.msra.mxu0 0.0
    %1878 = vmatprep.subr.mxu0 0.0
    %1879 = vmatpush1.msra.mxu0 0.0
    %1880 = vmatprep.subr.mxu0 0.0
    %1881 = vmatpush1.msra.mxu0 0.0
    %1882 = vmatprep.subr.mxu0 0.0
    %1883 = vmatpush1.msra.mxu0 0.0
    %1884 = vmatprep.subr.mxu0 0.0
    %1885 = vmatpush1.msra.mxu0 0.0
    %1886 = vmatprep.subr.mxu0 0.0
    %1887 = vmatpush1.msra.mxu0 0.0
    %1888 = vmatprep.subr.mxu0 0.0
    %1889 = vmatpush1.msra.mxu0 0.0
    %1890 = vmatprep.subr.mxu0 0.0
    %1891 = vmatpush1.msra.mxu0 0.0
    %1892 = vmatprep.subr.mxu0 0.0
    %1893 = vmatpush1.msra.mxu0 0.0
    %1894 = vmatprep.subr.mxu0 0.0
    %1895 = vmatpush1.msra.mxu0 0.0
    %1896 = vmatprep.subr.mxu0 0.0
    %1897 = vmatpush1.msra.mxu0 0.0
    %1898 = vmatprep.mubr.f32.mxu0 0.0
    %1899 = vmatmul.mubr.f32.gmra.mrb[0].mxu0 %v1823
    %v1900 = vpop.f32.mrb[0].mxu0
    %v1901 = vadd.f32 0.0, %v1900
    %v1902 = vpop.f32.mrb[0].mxu0
    %1903 = vmatprep.mubr.f32.mxu0 0.0
    %1904 = vmatmul.mubr.f32.gmra.mrb[0].mxu0 %v1826
    %v1905 = vpop.f32.mrb[0].mxu0
    %v1906 = vadd.f32 0.0, %v1905
    %v1907 = vpop.f32.mrb[0].mxu0
    %1908 = vmatprep.mubr.f32.mxu0 0.0
    %1909 = vmatmul.mubr.f32.gmra.mrb[0].mxu0 %v1829
    %v1910 = vpop.f32.mrb[0].mxu0
    %v1911 = vadd.f32 0.0, %v1910
    %v1912 = vpop.f32.mrb[0].mxu0
    %1913 = vmatprep.mubr.f32.mxu0 0.0
    %1914 = vmatmul.mubr.f32.gmra.mrb[0].mxu0 %v1832
    %v1915 = vpop.f32.mrb[0].mxu0
    %v1916 = vadd.f32 0.0, %v1915
    %v1917 = vpop.f32.mrb[0].mxu0
    %1918 = vdwg.mxu0
    %v1919 = vsel %vm869, %v1901, 0.0
    %v1920 = vsel %vm869, %v1906, 0.0
    %v1921 = vadd.f32 %v1919, %v1920
    %v1922 = vsel %vm869, %v1911, 0.0
    %v1923 = vadd.f32 %v1921, %v1922
    %v1924 = vsel %vm869, %v1916, 0.0
    %v1925 = vadd.f32 %v1923, %v1924
    %v1926 = vrot.slane %v1925, 4
    %v1927 = vadd.f32 %v1925, %v1926
    %v1928 = vrot.slane %v1927, 2
    %v1929 = vadd.f32 %v1927, %v1928
    %v1930 = vrot.slane %v1929, 1
    %v1931 = vadd.f32 %v1929, %v1930
    %v1932 = vmul.f32 %v1901, %v1901
    %v1933 = vmul.f32 %v1906, %v1906
    %v1934 = vmul.f32 %v1911, %v1911
    %v1935 = vmul.f32 %v1916, %v1916
    %v1936 = vsel %vm869, %v1932, 0.0
    %v1937 = vsel %vm869, %v1933, 0.0
    %v1938 = vadd.f32 %v1936, %v1937
    %v1939 = vsel %vm869, %v1934, 0.0
    %v1940 = vadd.f32 %v1938, %v1939
    %v1941 = vsel %vm869, %v1935, 0.0
    %v1942 = vadd.f32 %v1940, %v1941
    %v1943 = vrot.slane %v1942, 4
    %v1944 = vadd.f32 %v1942, %v1943
    %v1945 = vrot.slane %v1944, 2
    %v1946 = vadd.f32 %v1944, %v1945
    %v1947 = vrot.slane %v1946, 1
    %v1948 = vadd.f32 %v1946, %v1947
    %v1949 = vmul.f32 %v1931, 0.03125
    %v1950 = vmul.f32 %v1948, 0.03125
    %v1951 = vmul.f32 %v1949, %v1949
    %v1952 = vsub.f32 %v1950, %v1951
    %v1953 = vmax.f32 %v1952, 0.0
    %v1954 = vadd.f32 %v1953, 1e-05
    %v1955 = vrsqrt.pop %v1954
    %v1956 = vld [vmem:[%s23] sm:$0x1]
    %v1957 = vmul.f32 %v1955, %v1956
    %v1958 = vld [vmem:[%s21] sm:$0x1]
    %v1959 = vmul.f32 %v1949, %v1957
    %v1960 = vsub.f32 %v1958, %v1959
    %v1961 = vlaneseq
    %v1962 = vshrl.u32 %v1961, 7
    %v1963 = vsub.s32 0, %v1962
    %v1964 = vrot.slane %v1957, %v1963
    %v1965 = vmul.f32 %v1901, %v1964
    %v1966 = vmul.f32 %v1906, %v1964
    %v1967 = vmul.f32 %v1911, %v1964
    %v1968 = vmul.f32 %v1916, %v1964
    %v1971 = vunpack.c.l.s4 1966171168
    %v1972 = vunpack.c.0.s8 %v1971
    %v1973 = vlaneseq
    %v1974 = vshrl.u32 %v1973, 7
    %v1975 = vsub.s32 %v1972, %v1974
    %v1976 = vrot.slane %v1749, %v1975
    %v1977 = vcombine.high %v1976, %v1976
    %v1979 = vunpack.c.l.s4 1966171168
    %v1980 = vunpack.c.0.s8 %v1979
    %v1981 = vlaneseq
    %v1982 = vshrl.u32 %v1981, 7
    %v1983 = vsub.s32 %v1980, %v1982
    %v1984 = vrot.slane %v1976, %v1983
    %v1986 = vunpack.c.l.s4 1966171168
    %v1987 = vunpack.c.0.s8 %v1986
    %v1988 = vlaneseq
    %v1989 = vshrl.u32 %v1988, 7
    %v1990 = vsub.s32 %v1987, %v1989
    %v1991 = vrot.slane %v1977, %v1990
    %v1994 = vadd.f32 %v1960, %v1984
    %v1995 = vadd.f32 %v1960, %v1991
    %v1998 = vlaneseq
    %v1999 = vshrl.u32 %v1998, 7
    %v2000 = vsub.s32 0, %v1999
    %v2001 = vrot.slane %v1994, %v2000
    %v2002 = vlaneseq
    %v2003 = vshrl.u32 %v2002, 7
    %v2004 = vsub.s32 0, %v2003
    %v2005 = vrot.slane %v1995, %v2004
    %v2008 = vadd.f32 %v1965, %v2001
    %v2009 = vadd.f32 %v1966, %v2001
    %v2010 = vadd.f32 %v1967, %v2005
    %v2011 = vadd.f32 %v1968, %v2005
    %v2012 = vmax.f32 %v2008, 0.0
    %v2013 = vmax.f32 %v2009, 0.0
    %v2014 = vmax.f32 %v2010, 0.0
    %v2015 = vmax.f32 %v2011, 0.0
    %v2020 = vrot.slane %v2012, 7
    %v2021 = vrot.slane %v2013, 7
    %v2022 = vsel %vm767, %v2020, %v2021
    %v2023 = vrot.slane %v2014, 7
    %v2024 = vrot.slane %v2015, 7
    %v2025 = vsel %vm767, %v2023, %v2024
    %v2030 = vsel %vm767, 0.0, %v2020
    %v2031 = vsel %vm767, 0.0, %v2023
    %v2032 = vrot.slane %v2012, 1
    %v2033 = vrot.slane %v2013, 1
    %v2034 = vsel %vm792, %v2032, %v2033
    %v2035 = vrot.slane %v2014, 1
    %v2036 = vrot.slane %v2015, 1
    %v2037 = vsel %vm792, %v2035, %v2036
    %v2040 = vsel %vm792, %v2033, 0.0
    %v2041 = vsel %vm792, %v2036, 0.0
    %2042 = vrot.lane.b32.xlu0 %v2012, 64
    %v2043 = vpop.permute.xlu0 %2042
    %2044 = vrot.lane.b32.xlu0 %v2013, 64
    %v2045 = vpop.permute.xlu0 %2044
    %2046 = vrot.lane.b32.xlu0 %v2014, 64
    %v2047 = vpop.permute.xlu0 %2046
    %2048 = vrot.lane.b32.xlu0 %v2015, 64
    %v2049 = vpop.permute.xlu0 %2048
    %v2054 = vsel %vm869, %v2030, %v2043
    %v2055 = vsel %vm869, %v2022, %v2045
    %v2056 = vsel %vm869, %v2031, %v2047
    %v2057 = vsel %vm869, %v2025, %v2049
    %v2058 = vld [vmem:[%s31] sm:$0xff]
    %v2059 = vld [vmem:[%s31 + $0x8] sm:$0xff]
    %v2060 = vld [vmem:[%s31 + $0x10] sm:$0xff]
    %v2061 = vld [vmem:[%s31 + $0x18] sm:$0xff]
    %v2062 = vld [vmem:[%s31 + $0x20] sm:$0xff]
    %v2063 = vld [vmem:[%s31 + $0x28] sm:$0xff]
    %v2064 = vld [vmem:[%s31 + $0x30] sm:$0xff]
    %v2065 = vld [vmem:[%s31 + $0x38] sm:$0xff]
    %v2066 = vld [vmem:[%s31 + $0x40] sm:$0xff]
    %v2067 = vld [vmem:[%s31 + $0x48] sm:$0xff]
    %v2068 = vld [vmem:[%s31 + $0x50] sm:$0xff]
    %v2069 = vld [vmem:[%s31 + $0x58] sm:$0xff]
    %v2070 = vld [vmem:[%s31 + $0x60] sm:$0xff]
    %v2071 = vld [vmem:[%s31 + $0x68] sm:$0xff]
    %v2072 = vld [vmem:[%s31 + $0x70] sm:$0xff]
    %v2073 = vld [vmem:[%s31 + $0x78] sm:$0xff]
    %v2074 = vld [vmem:[%s31 + $0x80] sm:$0xff]
    %v2075 = vld [vmem:[%s31 + $0x88] sm:$0xff]
    %v2076 = vld [vmem:[%s31 + $0x90] sm:$0xff]
    %v2077 = vld [vmem:[%s31 + $0x98] sm:$0xff]
    %v2078 = vld [vmem:[%s31 + $0xa0] sm:$0xff]
    %v2079 = vld [vmem:[%s31 + $0xa8] sm:$0xff]
    %v2080 = vld [vmem:[%s31 + $0xb0] sm:$0xff]
    %v2081 = vld [vmem:[%s31 + $0xb8] sm:$0xff]
    %v2082 = vsel %vm869, %v2034, 0
    %v2085 = vsel %vm869, %v2040, 0
    %v2087 = vsel %vm869, %v2037, 0
    %v2090 = vsel %vm869, %v2041, 0
    %2092 = vmatprep.subr.mxu0 0.0
    %2093 = vmatpush1.msra.mxu0 %v2058
    %2094 = vmatprep.subr.mxu0 0.0
    %2095 = vmatpush1.msra.mxu0 %v2059
    %2096 = vmatprep.subr.mxu0 0.0
    %2097 = vmatpush1.msra.mxu0 %v2060
    %2098 = vmatprep.subr.mxu0 0.0
    %2099 = vmatpush1.msra.mxu0 %v2061
    %2100 = vmatprep.subr.mxu0 0.0
    %2101 = vmatpush1.msra.mxu0 %v2062
    %2102 = vmatprep.subr.mxu0 0.0
    %2103 = vmatpush1.msra.mxu0 %v2063
    %2104 = vmatprep.subr.mxu0 0.0
    %2105 = vmatpush1.msra.mxu0 %v2064
    %2106 = vmatprep.subr.mxu0 0.0
    %2107 = vmatpush1.msra.mxu0 %v2065
    %2108 = vmatprep.subr.mxu0 0.0
    %2109 = vmatpush1.msra.mxu0 %v2066
    %2110 = vmatprep.subr.mxu0 0.0
    %2111 = vmatpush1.msra.mxu0 %v2067
    %2112 = vmatprep.subr.mxu0 0.0
    %2113 = vmatpush1.msra.mxu0 %v2068
    %2114 = vmatprep.subr.mxu0 0.0
    %2115 = vmatpush1.msra.mxu0 %v2069
    %2116 = vmatprep.subr.mxu0 0.0
    %2117 = vmatpush1.msra.mxu0 %v2070
    %2118 = vmatprep.subr.mxu0 0.0
    %2119 = vmatpush1.msra.mxu0 %v2071
    %2120 = vmatprep.subr.mxu0 0.0
    %2121 = vmatpush1.msra.mxu0 %v2072
    %2122 = vmatprep.subr.mxu0 0.0
    %2123 = vmatpush1.msra.mxu0 %v2073
    %2124 = vmatprep.subr.mxu0 0.0
    %2125 = vmatpush1.msra.mxu0 %v2074
    %2126 = vmatprep.subr.mxu0 0.0
    %2127 = vmatpush1.msra.mxu0 %v2075
    %2128 = vmatprep.subr.mxu0 0.0
    %2129 = vmatpush1.msra.mxu0 %v2076
    %2130 = vmatprep.subr.mxu0 0.0
    %2131 = vmatpush1.msra.mxu0 %v2077
    %2132 = vmatprep.subr.mxu0 0.0
    %2133 = vmatpush1.msra.mxu0 %v2078
    %2134 = vmatprep.subr.mxu0 0.0
    %2135 = vmatpush1.msra.mxu0 %v2079
    %2136 = vmatprep.subr.mxu0 0.0
    %2137 = vmatpush1.msra.mxu0 %v2080
    %2138 = vmatprep.subr.mxu0 0.0
    %2139 = vmatpush1.msra.mxu0 %v2081
    %2140 = vmatprep.subr.mxu0 0.0
    %2141 = vmatpush1.msra.mxu0 0.0
    %2142 = vmatprep.subr.mxu0 0.0
    %2143 = vmatpush1.msra.mxu0 0.0
    %2144 = vmatprep.subr.mxu0 0.0
    %2145 = vmatpush1.msra.mxu0 0.0
    %2146 = vmatprep.subr.mxu0 0.0
    %2147 = vmatpush1.msra.mxu0 0.0
    %2148 = vmatprep.subr.mxu0 0.0
    %2149 = vmatpush1.msra.mxu0 0.0
    %2150 = vmatprep.subr.mxu0 0.0
    %2151 = vmatpush1.msra.mxu0 0.0
    %2152 = vmatprep.subr.mxu0 0.0
    %2153 = vmatpush1.msra.mxu0 0.0
    %2154 = vmatprep.subr.mxu0 0.0
    %2155 = vmatpush1.msra.mxu0 0.0
    %2156 = vmatprep.mubr.f32.mxu0 %v2082
    %2157 = vmatmul.mubr.f32.gmra.mrb[0].mxu0 %v2054
    %v2158 = vpop.f32.mrb[0].mxu0
    %v2159 = vadd.f32 0.0, %v2158
    %v2160 = vpop.f32.mrb[0].mxu0
    %2161 = vmatprep.mubr.f32.mxu0 %v2085
    %2162 = vmatmul.mubr.f32.gmra.mrb[0].mxu0 %v2055
    %v2163 = vpop.f32.mrb[0].mxu0
    %v2164 = vadd.f32 0.0, %v2163
    %v2165 = vpop.f32.mrb[0].mxu0
    %2166 = vmatprep.mubr.f32.mxu0 %v2087
    %2167 = vmatmul.mubr.f32.gmra.mrb[0].mxu0 %v2056
    %v2168 = vpop.f32.mrb[0].mxu0
    %v2169 = vadd.f32 0.0, %v2168
    %v2170 = vpop.f32.mrb[0].mxu0
    %2171 = vmatprep.mubr.f32.mxu0 %v2090
    %2172 = vmatmul.mubr.f32.gmra.mrb[0].mxu0 %v2057
    %v2173 = vpop.f32.mrb[0].mxu0
    %v2174 = vadd.f32 0.0, %v2173
    %v2175 = vpop.f32.mrb[0].mxu0
    %2176 = vdwg.mxu0
    %v2177 = vsel %vm869, %v2159, 0.0
    %v2178 = vsel %vm869, %v2164, 0.0
    %v2179 = vadd.f32 %v2177, %v2178
    %v2180 = vsel %vm869, %v2169, 0.0
    %v2181 = vadd.f32 %v2179, %v2180
    %v2182 = vsel %vm869, %v2174, 0.0
    %v2183 = vadd.f32 %v2181, %v2182
    %v2184 = vrot.slane %v2183, 4
    %v2185 = vadd.f32 %v2183, %v2184
    %v2186 = vrot.slane %v2185, 2
    %v2187 = vadd.f32 %v2185, %v2186
    %v2188 = vrot.slane %v2187, 1
    %v2189 = vadd.f32 %v2187, %v2188
    %v2190 = vmul.f32 %v2159, %v2159
    %v2191 = vmul.f32 %v2164, %v2164
    %v2192 = vmul.f32 %v2169, %v2169
    %v2193 = vmul.f32 %v2174, %v2174
    %v2194 = vsel %vm869, %v2190, 0.0
    %v2195 = vsel %vm869, %v2191, 0.0
    %v2196 = vadd.f32 %v2194, %v2195
    %v2197 = vsel %vm869, %v2192, 0.0
    %v2198 = vadd.f32 %v2196, %v2197
    %v2199 = vsel %vm869, %v2193, 0.0
    %v2200 = vadd.f32 %v2198, %v2199
    %v2201 = vrot.slane %v2200, 4
    %v2202 = vadd.f32 %v2200, %v2201
    %v2203 = vrot.slane %v2202, 2
    %v2204 = vadd.f32 %v2202, %v2203
    %v2205 = vrot.slane %v2204, 1
    %v2206 = vadd.f32 %v2204, %v2205
    %v2207 = vmul.f32 %v2189, 0.03125
    %v2208 = vmul.f32 %v2206, 0.03125
    %v2209 = vmul.f32 %v2207, %v2207
    %v2210 = vsub.f32 %v2208, %v2209
    %v2211 = vmax.f32 %v2210, 0.0
    %v2212 = vadd.f32 %v2211, 1e-05
    %v2213 = vrsqrt.pop %v2212
    %v2214 = vld [vmem:[%s27] sm:$0x1]
    %v2215 = vmul.f32 %v2213, %v2214
    %v2216 = vld [vmem:[%s25] sm:$0x1]
    %v2217 = vmul.f32 %v2207, %v2215
    %v2218 = vsub.f32 %v2216, %v2217
    %v2219 = vlaneseq
    %v2220 = vshrl.u32 %v2219, 7
    %v2221 = vsub.s32 0, %v2220
    %v2222 = vrot.slane %v2215, %v2221
    %v2223 = vmul.f32 %v2159, %v2222
    %v2224 = vmul.f32 %v2164, %v2222
    %v2225 = vmul.f32 %v2169, %v2222
    %v2226 = vmul.f32 %v2174, %v2222
    %v2228 = vlaneseq
    %v2229 = vshrl.u32 %v2228, 7
    %v2230 = vsub.s32 0, %v2229
    %v2231 = vrot.slane %v2218, %v2230
    %v2233 = vadd.f32 %v2223, %v2231
    %v2234 = vadd.f32 %v2224, %v2231
    %v2235 = vadd.f32 %v2225, %v2231
    %v2236 = vadd.f32 %v2226, %v2231
    %v2237 = vmax.f32 %v2233, 0.0
    %v2238 = vmax.f32 %v2234, 0.0
    %v2239 = vmax.f32 %v2235, 0.0
    %v2240 = vmax.f32 %v2236, 0.0
    %v2241 = vld [vmem:[%s33] sm:$0x1]
    %v2242 = vld [vmem:[%s35] sm:$0xff]
    %v2243 = vld [vmem:[%s35 + $0x8] sm:$0xff]
    %v2244 = vld [vmem:[%s35 + $0x10] sm:$0xff]
    %v2245 = vld [vmem:[%s35 + $0x18] sm:$0xff]
    %v2246 = vsel %vm522, %v1585, 0
    %v2248 = vsel %vm522, %v1590, 0
    %v2250 = vsel %vm522, %v1660, 0
    %v2252 = vsel %vm522, %v1665, 0
    %2254 = vmatprep.subr.mxu0 0.0
    %2255 = vmatpush1.msra.mxu0 %v2242
    %2256 = vmatprep.subr.mxu0 0.0
    %2257 = vmatpush1.msra.mxu0 %v2243
    %2258 = vmatprep.subr.mxu0 0.0
    %2259 = vmatpush1.msra.mxu0 %v2244
    %2260 = vmatprep.subr.mxu0 0.0
    %2261 = vmatpush1.msra.mxu0 %v2245
    %2262 = vmatprep.subr.mxu0 0.0
    %2263 = vmatpush1.msra.mxu0 0.0
    %2264 = vmatprep.subr.mxu0 0.0
    %2265 = vmatpush1.msra.mxu0 0.0
    %2266 = vmatprep.subr.mxu0 0.0
    %2267 = vmatpush1.msra.mxu0 0.0
    %2268 = vmatprep.subr.mxu0 0.0
    %2269 = vmatpush1.msra.mxu0 0.0
    %2270 = vmatprep.subr.mxu0 0.0
    %2271 = vmatpush1.msra.mxu0 0.0
    %2272 = vmatprep.subr.mxu0 0.0
    %2273 = vmatpush1.msra.mxu0 0.0
    %2274 = vmatprep.subr.mxu0 0.0
    %2275 = vmatpush1.msra.mxu0 0.0
    %2276 = vmatprep.subr.mxu0 0.0
    %2277 = vmatpush1.msra.mxu0 0.0
    %2278 = vmatprep.subr.mxu0 0.0
    %2279 = vmatpush1.msra.mxu0 0.0
    %2280 = vmatprep.subr.mxu0 0.0
    %2281 = vmatpush1.msra.mxu0 0.0
    %2282 = vmatprep.subr.mxu0 0.0
    %2283 = vmatpush1.msra.mxu0 0.0
    %2284 = vmatprep.subr.mxu0 0.0
    %2285 = vmatpush1.msra.mxu0 0.0
    %2286 = vmatprep.subr.mxu0 0.0
    %2287 = vmatpush1.msra.mxu0 0.0
    %2288 = vmatprep.subr.mxu0 0.0
    %2289 = vmatpush1.msra.mxu0 0.0
    %2290 = vmatprep.subr.mxu0 0.0
    %2291 = vmatpush1.msra.mxu0 0.0
    %2292 = vmatprep.subr.mxu0 0.0
    %2293 = vmatpush1.msra.mxu0 0.0
    %2294 = vmatprep.subr.mxu0 0.0
    %2295 = vmatpush1.msra.mxu0 0.0
    %2296 = vmatprep.subr.mxu0 0.0
    %2297 = vmatpush1.msra.mxu0 0.0
    %2298 = vmatprep.subr.mxu0 0.0
    %2299 = vmatpush1.msra.mxu0 0.0
    %2300 = vmatprep.subr.mxu0 0.0
    %2301 = vmatpush1.msra.mxu0 0.0
    %2302 = vmatprep.subr.mxu0 0.0
    %2303 = vmatpush1.msra.mxu0 0.0
    %2304 = vmatprep.subr.mxu0 0.0
    %2305 = vmatpush1.msra.mxu0 0.0
    %2306 = vmatprep.subr.mxu0 0.0
    %2307 = vmatpush1.msra.mxu0 0.0
    %2308 = vmatprep.subr.mxu0 0.0
    %2309 = vmatpush1.msra.mxu0 0.0
    %2310 = vmatprep.subr.mxu0 0.0
    %2311 = vmatpush1.msra.mxu0 0.0
    %2312 = vmatprep.subr.mxu0 0.0
    %2313 = vmatpush1.msra.mxu0 0.0
    %2314 = vmatprep.subr.mxu0 0.0
    %2315 = vmatpush1.msra.mxu0 0.0
    %2316 = vmatprep.subr.mxu0 0.0
    %2317 = vmatpush1.msra.mxu0 0.0
    %2318 = vmatprep.mubr.f32.mxu0 0.0
    %2319 = vmatmul.mubr.f32.gmra.mrb[0].mxu0 %v2246
    %v2320 = vpop.f32.mrb[0].mxu0
    %v2321 = vadd.f32 0.0, %v2320
    %v2322 = vpop.f32.mrb[0].mxu0
    %2323 = vmatprep.mubr.f32.mxu0 0.0
    %2324 = vmatmul.mubr.f32.gmra.mrb[0].mxu0 %v2248
    %v2325 = vpop.f32.mrb[0].mxu0
    %v2326 = vadd.f32 0.0, %v2325
    %v2327 = vpop.f32.mrb[0].mxu0
    %2328 = vmatprep.mubr.f32.mxu0 0.0
    %2329 = vmatmul.mubr.f32.gmra.mrb[0].mxu0 %v2250
    %v2330 = vpop.f32.mrb[0].mxu0
    %v2331 = vadd.f32 0.0, %v2330
    %v2332 = vpop.f32.mrb[0].mxu0
    %2333 = vmatprep.mubr.f32.mxu0 0.0
    %2334 = vmatmul.mubr.f32.gmra.mrb[0].mxu0 %v2252
    %v2335 = vpop.f32.mrb[0].mxu0
    %v2336 = vadd.f32 0.0, %v2335
    %v2337 = vpop.f32.mrb[0].mxu0
    %2338 = vdwg.mxu0
    %v2340 = vlaneseq
    %v2341 = vshrl.u32 %v2340, 7
    %v2342 = vsub.s32 0, %v2341
    %v2343 = vrot.slane %v2241, %v2342
    %v2345 = vadd.f32 %v2343, %v2321
    %v2346 = vadd.f32 %v2343, %v2326
    %v2347 = vadd.f32 %v2343, %v2331
    %v2348 = vadd.f32 %v2343, %v2336
    %v2349 = vadd.f32 %v2237, %v2345
    %v2350 = vadd.f32 %v2238, %v2346
    %v2351 = vadd.f32 %v2239, %v2347
    %v2352 = vadd.f32 %v2240, %v2348
    %v2353 = vld [vmem:[%s139] sm:$0xff]
    %vm2354 = vcmask 130048
    %v2356 = vsel %vm2354, %v2353, 0
    %2358 = vmatprep.subr.mxu0 0.0
    %2359 = vmatpush1.msra.mxu0 %v2349
    %2360 = vmatprep.subr.mxu0 0.0
    %2361 = vmatpush1.msra.mxu0 %v2350
    %2362 = vmatprep.subr.mxu0 0.0
    %2363 = vmatpush1.msra.mxu0 0.0
    %2364 = vmatprep.subr.mxu0 0.0
    %2365 = vmatpush1.msra.mxu0 0.0
    %2366 = vmatprep.subr.mxu0 0.0
    %2367 = vmatpush1.msra.mxu0 0.0
    %2368 = vmatprep.subr.mxu0 0.0
    %2369 = vmatpush1.msra.mxu0 0.0
    %2370 = vmatprep.subr.mxu0 0.0
    %2371 = vmatpush1.msra.mxu0 0.0
    %2372 = vmatprep.subr.mxu0 0.0
    %2373 = vmatpush1.msra.mxu0 0.0
    %2374 = vmatprep.subr.mxu0 0.0
    %2375 = vmatpush1.msra.mxu0 0.0
    %2376 = vmatprep.subr.mxu0 0.0
    %2377 = vmatpush1.msra.mxu0 0.0
    %2378 = vmatprep.subr.mxu0 0.0
    %2379 = vmatpush1.msra.mxu0 0.0
    %2380 = vmatprep.subr.mxu0 0.0
    %2381 = vmatpush1.msra.mxu0 0.0
    %2382 = vmatprep.subr.mxu0 0.0
    %2383 = vmatpush1.msra.mxu0 0.0
    %2384 = vmatprep.subr.mxu0 0.0
    %2385 = vmatpush1.msra.mxu0 0.0
    %2386 = vmatprep.subr.mxu0 0.0
    %2387 = vmatpush1.msra.mxu0 0.0
    %2388 = vmatprep.subr.mxu0 0.0
    %2389 = vmatpush1.msra.mxu0 0.0
    %2390 = vmatprep.subr.mxu0 0.0
    %2391 = vmatpush1.msra.mxu0 0.0
    %2392 = vmatprep.subr.mxu0 0.0
    %2393 = vmatpush1.msra.mxu0 0.0
    %2394 = vmatprep.subr.mxu0 0.0
    %2395 = vmatpush1.msra.mxu0 0.0
    %2396 = vmatprep.subr.mxu0 0.0
    %2397 = vmatpush1.msra.mxu0 0.0
    %2398 = vmatprep.subr.mxu0 0.0
    %2399 = vmatpush1.msra.mxu0 0.0
    %2400 = vmatprep.subr.mxu0 0.0
    %2401 = vmatpush1.msra.mxu0 0.0
    %2402 = vmatprep.subr.mxu0 0.0
    %2403 = vmatpush1.msra.mxu0 0.0
    %2404 = vmatprep.subr.mxu0 0.0
    %2405 = vmatpush1.msra.mxu0 0.0
    %2406 = vmatprep.subr.mxu0 0.0
    %2407 = vmatpush1.msra.mxu0 0.0
    %2408 = vmatprep.subr.mxu0 0.0
    %2409 = vmatpush1.msra.mxu0 0.0
    %2410 = vmatprep.subr.mxu0 0.0
    %2411 = vmatpush1.msra.mxu0 0.0
    %2412 = vmatprep.subr.mxu0 0.0
    %2413 = vmatpush1.msra.mxu0 0.0
    %2414 = vmatprep.subr.mxu0 0.0
    %2415 = vmatpush1.msra.mxu0 0.0
    %2416 = vmatprep.subr.mxu0 0.0
    %2417 = vmatpush1.msra.mxu0 0.0
    %2418 = vmatprep.subr.mxu0 0.0
    %2419 = vmatpush1.msra.mxu0 0.0
    %2420 = vmatprep.subr.mxu0 0.0
    %2421 = vmatpush1.msra.mxu0 0.0
    %2422 = vmatprep.mubr.f32.mxu0 0.0
    %2423 = vmatmul.mubr.f32.gmra.mrb[0].mxu0 %v2356
    %v2424 = vpop.f32.mrb[0].mxu0
    %v2425 = vadd.f32 0.0, %v2424
    %v2426 = vpop.f32.mrb[0].mxu0
    %2427 = vdwg.mxu0
    %2428 = vmatprep.subr.mxu0 0.0
    %2429 = vmatpush1.msra.mxu0 %v2351
    %2430 = vmatprep.subr.mxu0 0.0
    %2431 = vmatpush1.msra.mxu0 %v2352
    %2432 = vmatprep.subr.mxu0 0.0
    %2433 = vmatpush1.msra.mxu0 0.0
    %2434 = vmatprep.subr.mxu0 0.0
    %2435 = vmatpush1.msra.mxu0 0.0
    %2436 = vmatprep.subr.mxu0 0.0
    %2437 = vmatpush1.msra.mxu0 0.0
    %2438 = vmatprep.subr.mxu0 0.0
    %2439 = vmatpush1.msra.mxu0 0.0
    %2440 = vmatprep.subr.mxu0 0.0
    %2441 = vmatpush1.msra.mxu0 0.0
    %2442 = vmatprep.subr.mxu0 0.0
    %2443 = vmatpush1.msra.mxu0 0.0
    %2444 = vmatprep.subr.mxu0 0.0
    %2445 = vmatpush1.msra.mxu0 0.0
    %2446 = vmatprep.subr.mxu0 0.0
    %2447 = vmatpush1.msra.mxu0 0.0
    %2448 = vmatprep.subr.mxu0 0.0
    %2449 = vmatpush1.msra.mxu0 0.0
    %2450 = vmatprep.subr.mxu0 0.0
    %2451 = vmatpush1.msra.mxu0 0.0
    %2452 = vmatprep.subr.mxu0 0.0
    %2453 = vmatpush1.msra.mxu0 0.0
    %2454 = vmatprep.subr.mxu0 0.0
    %2455 = vmatpush1.msra.mxu0 0.0
    %2456 = vmatprep.subr.mxu0 0.0
    %2457 = vmatpush1.msra.mxu0 0.0
    %2458 = vmatprep.subr.mxu0 0.0
    %2459 = vmatpush1.msra.mxu0 0.0
    %2460 = vmatprep.subr.mxu0 0.0
    %2461 = vmatpush1.msra.mxu0 0.0
    %2462 = vmatprep.subr.mxu0 0.0
    %2463 = vmatpush1.msra.mxu0 0.0
    %2464 = vmatprep.subr.mxu0 0.0
    %2465 = vmatpush1.msra.mxu0 0.0
    %2466 = vmatprep.subr.mxu0 0.0
    %2467 = vmatpush1.msra.mxu0 0.0
    %2468 = vmatprep.subr.mxu0 0.0
    %2469 = vmatpush1.msra.mxu0 0.0
    %2470 = vmatprep.subr.mxu0 0.0
    %2471 = vmatpush1.msra.mxu0 0.0
    %2472 = vmatprep.subr.mxu0 0.0
    %2473 = vmatpush1.msra.mxu0 0.0
    %2474 = vmatprep.subr.mxu0 0.0
    %2475 = vmatpush1.msra.mxu0 0.0
    %2476 = vmatprep.subr.mxu0 0.0
    %2477 = vmatpush1.msra.mxu0 0.0
    %2478 = vmatprep.subr.mxu0 0.0
    %2479 = vmatpush1.msra.mxu0 0.0
    %2480 = vmatprep.subr.mxu0 0.0
    %2481 = vmatpush1.msra.mxu0 0.0
    %2482 = vmatprep.subr.mxu0 0.0
    %2483 = vmatpush1.msra.mxu0 0.0
    %2484 = vmatprep.subr.mxu0 0.0
    %2485 = vmatpush1.msra.mxu0 0.0
    %2486 = vmatprep.subr.mxu0 0.0
    %2487 = vmatpush1.msra.mxu0 0.0
    %2488 = vmatprep.subr.mxu0 0.0
    %2489 = vmatpush1.msra.mxu0 0.0
    %2490 = vmatprep.subr.mxu0 0.0
    %2491 = vmatpush1.msra.mxu0 0.0
    %2492 = vmatprep.mubr.f32.mxu0 0.0
    %2493 = vmatmul.mubr.f32.gmra.mrb[0].mxu0 %v2356
    %v2494 = vpop.f32.mrb[0].mxu0
    %v2495 = vadd.f32 0.0, %v2494
    %v2496 = vpop.f32.mrb[0].mxu0
    %2497 = vdwg.mxu0
    %v2498 = vld [vmem:[%s59] sm:$0xff]
    %v2499 = vld [vmem:[%s59 + $0x8] sm:$0xff]
    %v2500 = vld [vmem:[%s59 + $0x10] sm:$0xff]
    %v2501 = vld [vmem:[%s59 + $0x18] sm:$0xff]
    %v2502 = vld [vmem:[%s57] sm:$0x1]
    %v2504 = vlaneseq
    %v2505 = vshrl.u32 %v2504, 7
    %v2506 = vsub.s32 0, %v2505
    %v2507 = vrot.slane %v2502, %v2506
    %2509 = vmatprep.subr.mxu0 0.0
    %2510 = vmatpush1.msra.mxu0 %v2498
    %2511 = vmatprep.subr.mxu0 0.0
    %2512 = vmatpush1.msra.mxu0 %v2499
    %2513 = vmatprep.subr.mxu0 0.0
    %2514 = vmatpush1.msra.mxu0 %v2500
    %2515 = vmatprep.subr.mxu0 0.0
    %2516 = vmatpush1.msra.mxu0 %v2501
    %2517 = vmatprep.subr.mxu0 0.0
    %2518 = vmatpush1.msra.mxu0 0.0
    %2519 = vmatprep.subr.mxu0 0.0
    %2520 = vmatpush1.msra.mxu0 0.0
    %2521 = vmatprep.subr.mxu0 0.0
    %2522 = vmatpush1.msra.mxu0 0.0
    %2523 = vmatprep.subr.mxu0 0.0
    %2524 = vmatpush1.msra.mxu0 0.0
    %2525 = vmatprep.subr.mxu0 0.0
    %2526 = vmatpush1.msra.mxu0 0.0
    %2527 = vmatprep.subr.mxu0 0.0
    %2528 = vmatpush1.msra.mxu0 0.0
    %2529 = vmatprep.subr.mxu0 0.0
    %2530 = vmatpush1.msra.mxu0 0.0
    %2531 = vmatprep.subr.mxu0 0.0
    %2532 = vmatpush1.msra.mxu0 0.0
    %2533 = vmatprep.subr.mxu0 0.0
    %2534 = vmatpush1.msra.mxu0 0.0
    %2535 = vmatprep.subr.mxu0 0.0
    %2536 = vmatpush1.msra.mxu0 0.0
    %2537 = vmatprep.subr.mxu0 0.0
    %2538 = vmatpush1.msra.mxu0 0.0
    %2539 = vmatprep.subr.mxu0 0.0
    %2540 = vmatpush1.msra.mxu0 0.0
    %2541 = vmatprep.subr.mxu0 0.0
    %2542 = vmatpush1.msra.mxu0 0.0
    %2543 = vmatprep.subr.mxu0 0.0
    %2544 = vmatpush1.msra.mxu0 0.0
    %2545 = vmatprep.subr.mxu0 0.0
    %2546 = vmatpush1.msra.mxu0 0.0
    %2547 = vmatprep.subr.mxu0 0.0
    %2548 = vmatpush1.msra.mxu0 0.0
    %2549 = vmatprep.subr.mxu0 0.0
    %2550 = vmatpush1.msra.mxu0 0.0
    %2551 = vmatprep.subr.mxu0 0.0
    %2552 = vmatpush1.msra.mxu0 0.0
    %2553 = vmatprep.subr.mxu0 0.0
    %2554 = vmatpush1.msra.mxu0 0.0
    %2555 = vmatprep.subr.mxu0 0.0
    %2556 = vmatpush1.msra.mxu0 0.0
    %2557 = vmatprep.subr.mxu0 0.0
    %2558 = vmatpush1.msra.mxu0 0.0
    %2559 = vmatprep.subr.mxu0 0.0
    %2560 = vmatpush1.msra.mxu0 0.0
    %2561 = vmatprep.subr.mxu0 0.0
    %2562 = vmatpush1.msra.mxu0 0.0
    %2563 = vmatprep.subr.mxu0 0.0
    %2564 = vmatpush1.msra.mxu0 0.0
    %2565 = vmatprep.subr.mxu0 0.0
    %2566 = vmatpush1.msra.mxu0 0.0
    %2567 = vmatprep.subr.mxu0 0.0
    %2568 = vmatpush1.msra.mxu0 0.0
    %2569 = vmatprep.subr.mxu0 0.0
    %2570 = vmatpush1.msra.mxu0 0.0
    %2571 = vmatprep.subr.mxu0 0.0
    %2572 = vmatpush1.msra.mxu0 0.0
    %2573 = vmatprep.mubr.f32.mxu0 0.0
    %2574 = vmatmul.mubr.f32.gmra.mrb[0].mxu0 %v686
    %v2575 = vpop.f32.mrb[0].mxu0
    %v2576 = vadd.f32 %v2507, %v2575
    %v2577 = vpop.f32.mrb[0].mxu0
    %2578 = vdwg.mxu0
    %v2579 = vmax.f32 %v2576, 0.0
    %v2582 = vrot.slane %v2425, 7
    %v2583 = vrot.slane %v2495, 7
    %v2586 = vsel %vm767, 0.0, %v2582
    %v2587 = vsel %vm767, 0.0, %v2583
    %v2588 = vrot.slane %v2425, 1
    %v2589 = vrot.slane %v2495, 1
    %v2592 = vsel %vm792, %v2588, 0.0
    %v2593 = vsel %vm792, %v2589, 0.0
    %2594 = vrot.lane.b32.xlu0 %v2425, 64
    %v2595 = vpop.permute.xlu0 %2594
    %2596 = vrot.lane.b32.xlu0 %v2495, 64
    %v2597 = vpop.permute.xlu0 %2596
    %v2600 = vsel %vm869, %v2586, %v2595
    %v2601 = vsel %vm869, %v2587, %v2597
    %v2602 = vld [vmem:[%s53] sm:$0xff]
    %v2603 = vld [vmem:[%s53 + $0x8] sm:$0xff]
    %v2604 = vld [vmem:[%s53 + $0x10] sm:$0xff]
    %v2605 = vld [vmem:[%s53 + $0x18] sm:$0xff]
    %v2606 = vld [vmem:[%s53 + $0x20] sm:$0xff]
    %v2607 = vld [vmem:[%s53 + $0x28] sm:$0xff]
    %v2608 = vld [vmem:[%s53 + $0x30] sm:$0xff]
    %v2609 = vld [vmem:[%s53 + $0x38] sm:$0xff]
    %v2610 = vld [vmem:[%s53 + $0x40] sm:$0xff]
    %v2611 = vld [vmem:[%s53 + $0x48] sm:$0xff]
    %v2612 = vld [vmem:[%s53 + $0x50] sm:$0xff]
    %v2613 = vld [vmem:[%s53 + $0x58] sm:$0xff]
    %v2614 = vld [vmem:[%s53 + $0x60] sm:$0xff]
    %v2615 = vld [vmem:[%s53 + $0x68] sm:$0xff]
    %v2616 = vld [vmem:[%s53 + $0x70] sm:$0xff]
    %v2617 = vld [vmem:[%s53 + $0x78] sm:$0xff]
    %v2618 = vld [vmem:[%s53 + $0x80] sm:$0xff]
    %v2619 = vld [vmem:[%s53 + $0x88] sm:$0xff]
    %v2620 = vld [vmem:[%s53 + $0x90] sm:$0xff]
    %v2621 = vld [vmem:[%s53 + $0x98] sm:$0xff]
    %v2622 = vld [vmem:[%s53 + $0xa0] sm:$0xff]
    %v2623 = vld [vmem:[%s53 + $0xa8] sm:$0xff]
    %v2624 = vld [vmem:[%s53 + $0xb0] sm:$0xff]
    %v2625 = vld [vmem:[%s53 + $0xb8] sm:$0xff]
    %v2627 = vsel %vm869, %v2592, 0
    %v2630 = vsel %vm869, %v2593, 0
    %2632 = vmatprep.subr.mxu0 0.0
    %2633 = vmatpush1.msra.mxu0 %v2602
    %2634 = vmatprep.subr.mxu0 0.0
    %2635 = vmatpush1.msra.mxu0 %v2603
    %2636 = vmatprep.subr.mxu0 0.0
    %2637 = vmatpush1.msra.mxu0 %v2604
    %2638 = vmatprep.subr.mxu0 0.0
    %2639 = vmatpush1.msra.mxu0 %v2605
    %2640 = vmatprep.subr.mxu0 0.0
    %2641 = vmatpush1.msra.mxu0 %v2606
    %2642 = vmatprep.subr.mxu0 0.0
    %2643 = vmatpush1.msra.mxu0 %v2607
    %2644 = vmatprep.subr.mxu0 0.0
    %2645 = vmatpush1.msra.mxu0 %v2608
    %2646 = vmatprep.subr.mxu0 0.0
    %2647 = vmatpush1.msra.mxu0 %v2609
    %2648 = vmatprep.subr.mxu0 0.0
    %2649 = vmatpush1.msra.mxu0 %v2610
    %2650 = vmatprep.subr.mxu0 0.0
    %2651 = vmatpush1.msra.mxu0 %v2611
    %2652 = vmatprep.subr.mxu0 0.0
    %2653 = vmatpush1.msra.mxu0 %v2612
    %2654 = vmatprep.subr.mxu0 0.0
    %2655 = vmatpush1.msra.mxu0 %v2613
    %2656 = vmatprep.subr.mxu0 0.0
    %2657 = vmatpush1.msra.mxu0 %v2614
    %2658 = vmatprep.subr.mxu0 0.0
    %2659 = vmatpush1.msra.mxu0 %v2615
    %2660 = vmatprep.subr.mxu0 0.0
    %2661 = vmatpush1.msra.mxu0 %v2616
    %2662 = vmatprep.subr.mxu0 0.0
    %2663 = vmatpush1.msra.mxu0 %v2617
    %2664 = vmatprep.subr.mxu0 0.0
    %2665 = vmatpush1.msra.mxu0 %v2618
    %2666 = vmatprep.subr.mxu0 0.0
    %2667 = vmatpush1.msra.mxu0 %v2619
    %2668 = vmatprep.subr.mxu0 0.0
    %2669 = vmatpush1.msra.mxu0 %v2620
    %2670 = vmatprep.subr.mxu0 0.0
    %2671 = vmatpush1.msra.mxu0 %v2621
    %2672 = vmatprep.subr.mxu0 0.0
    %2673 = vmatpush1.msra.mxu0 %v2622
    %2674 = vmatprep.subr.mxu0 0.0
    %2675 = vmatpush1.msra.mxu0 %v2623
    %2676 = vmatprep.subr.mxu0 0.0
    %2677 = vmatpush1.msra.mxu0 %v2624
    %2678 = vmatprep.subr.mxu0 0.0
    %2679 = vmatpush1.msra.mxu0 %v2625
    %2680 = vmatprep.subr.mxu0 0.0
    %2681 = vmatpush1.msra.mxu0 0.0
    %2682 = vmatprep.subr.mxu0 0.0
    %2683 = vmatpush1.msra.mxu0 0.0
    %2684 = vmatprep.subr.mxu0 0.0
    %2685 = vmatpush1.msra.mxu0 0.0
    %2686 = vmatprep.subr.mxu0 0.0
    %2687 = vmatpush1.msra.mxu0 0.0
    %2688 = vmatprep.subr.mxu0 0.0
    %2689 = vmatpush1.msra.mxu0 0.0
    %2690 = vmatprep.subr.mxu0 0.0
    %2691 = vmatpush1.msra.mxu0 0.0
    %2692 = vmatprep.subr.mxu0 0.0
    %2693 = vmatpush1.msra.mxu0 0.0
    %2694 = vmatprep.subr.mxu0 0.0
    %2695 = vmatpush1.msra.mxu0 0.0
    %2696 = vmatprep.mubr.f32.mxu0 %v2627
    %2697 = vmatmul.mubr.f32.gmra.mrb[0].mxu0 %v2600
    %v2698 = vpop.f32.mrb[0].mxu0
    %v2699 = vadd.f32 0.0, %v2698
    %v2700 = vpop.f32.mrb[0].mxu0
    %2701 = vmatprep.mubr.f32.mxu0 %v2630
    %2702 = vmatmul.mubr.f32.gmra.mrb[0].mxu0 %v2601
    %v2703 = vpop.f32.mrb[0].mxu0
    %v2704 = vadd.f32 0.0, %v2703
    %v2705 = vpop.f32.mrb[0].mxu0
    %2706 = vdwg.mxu0
    %v2707 = vsel %vm869, %v2699, 0.0
    %v2708 = vsel %vm869, %v2704, 0.0
    %v2709 = vadd.f32 %v2707, %v2708
    %v2710 = vrot.slane %v2709, 4
    %v2711 = vadd.f32 %v2709, %v2710
    %v2712 = vrot.slane %v2711, 2
    %v2713 = vadd.f32 %v2711, %v2712
    %v2714 = vrot.slane %v2713, 1
    %v2715 = vadd.f32 %v2713, %v2714
    %v2716 = vmul.f32 %v2699, %v2699
    %v2717 = vmul.f32 %v2704, %v2704
    %v2718 = vsel %vm869, %v2716, 0.0
    %v2719 = vsel %vm869, %v2717, 0.0
    %v2720 = vadd.f32 %v2718, %v2719
    %v2721 = vrot.slane %v2720, 4
    %v2722 = vadd.f32 %v2720, %v2721
    %v2723 = vrot.slane %v2722, 2
    %v2724 = vadd.f32 %v2722, %v2723
    %v2725 = vrot.slane %v2724, 1
    %v2726 = vadd.f32 %v2724, %v2725
    %v2727 = vmul.f32 %v2715, 0.0625
    %v2728 = vmul.f32 %v2726, 0.0625
    %v2729 = vmul.f32 %v2727, %v2727
    %v2730 = vsub.f32 %v2728, %v2729
    %v2731 = vmax.f32 %v2730, 0.0
    %v2732 = vadd.f32 %v2731, 1e-05
    %v2733 = vrsqrt.pop %v2732
    %v2734 = vld [vmem:[%s47] sm:$0x1]
    %v2735 = vmul.f32 %v2733, %v2734
    %v2736 = vld [vmem:[%s45] sm:$0x1]
    %v2737 = vmul.f32 %v2727, %v2735
    %v2738 = vsub.f32 %v2736, %v2737
    %v2739 = vlaneseq
    %v2740 = vshrl.u32 %v2739, 7
    %v2741 = vsub.s32 0, %v2740
    %v2742 = vrot.slane %v2735, %v2741
    %v2743 = vmul.f32 %v2699, %v2742
    %v2744 = vmul.f32 %v2704, %v2742
    %v2747 = vunpack.c.l.s4 1966171168
    %v2748 = vunpack.c.0.s8 %v2747
    %v2749 = vlaneseq
    %v2750 = vshrl.u32 %v2749, 7
    %v2751 = vsub.s32 %v2748, %v2750
    %v2752 = vrot.slane %v2579, %v2751
    %v2753 = vcombine.high %v2752, %v2752
    %v2755 = vunpack.c.l.s4 1966171168
    %v2756 = vunpack.c.0.s8 %v2755
    %v2757 = vlaneseq
    %v2758 = vshrl.u32 %v2757, 7
    %v2759 = vsub.s32 %v2756, %v2758
    %v2760 = vrot.slane %v2752, %v2759
    %v2762 = vunpack.c.l.s4 1966171168
    %v2763 = vunpack.c.0.s8 %v2762
    %v2764 = vlaneseq
    %v2765 = vshrl.u32 %v2764, 7
    %v2766 = vsub.s32 %v2763, %v2765
    %v2767 = vrot.slane %v2753, %v2766
    %v2770 = vadd.f32 %v2738, %v2760
    %v2771 = vadd.f32 %v2738, %v2767
    %v2774 = vlaneseq
    %v2775 = vshrl.u32 %v2774, 7
    %v2776 = vsub.s32 0, %v2775
    %v2777 = vrot.slane %v2770, %v2776
    %v2778 = vlaneseq
    %v2779 = vshrl.u32 %v2778, 7
    %v2780 = vsub.s32 0, %v2779
    %v2781 = vrot.slane %v2771, %v2780
    %v2784 = vadd.f32 %v2743, %v2777
    %v2785 = vadd.f32 %v2744, %v2781
    %v2786 = vmax.f32 %v2784, 0.0
    %v2787 = vmax.f32 %v2785, 0.0
    %v2790 = vrot.slane %v2786, 7
    %v2791 = vrot.slane %v2787, 7
    %v2794 = vsel %vm767, 0.0, %v2790
    %v2795 = vsel %vm767, 0.0, %v2791
    %v2796 = vrot.slane %v2786, 1
    %v2797 = vrot.slane %v2787, 1
    %v2800 = vsel %vm792, %v2796, 0.0
    %v2801 = vsel %vm792, %v2797, 0.0
    %2802 = vrot.lane.b32.xlu0 %v2786, 64
    %v2803 = vpop.permute.xlu0 %2802
    %2804 = vrot.lane.b32.xlu0 %v2787, 64
    %v2805 = vpop.permute.xlu0 %2804
    %v2808 = vsel %vm869, %v2794, %v2803
    %v2809 = vsel %vm869, %v2795, %v2805
    %v2810 = vld [vmem:[%s55] sm:$0xff]
    %v2811 = vld [vmem:[%s55 + $0x8] sm:$0xff]
    %v2812 = vld [vmem:[%s55 + $0x10] sm:$0xff]
    %v2813 = vld [vmem:[%s55 + $0x18] sm:$0xff]
    %v2814 = vld [vmem:[%s55 + $0x20] sm:$0xff]
    %v2815 = vld [vmem:[%s55 + $0x28] sm:$0xff]
    %v2816 = vld [vmem:[%s55 + $0x30] sm:$0xff]
    %v2817 = vld [vmem:[%s55 + $0x38] sm:$0xff]
    %v2818 = vld [vmem:[%s55 + $0x40] sm:$0xff]
    %v2819 = vld [vmem:[%s55 + $0x48] sm:$0xff]
    %v2820 = vld [vmem:[%s55 + $0x50] sm:$0xff]
    %v2821 = vld [vmem:[%s55 + $0x58] sm:$0xff]
    %v2822 = vld [vmem:[%s55 + $0x60] sm:$0xff]
    %v2823 = vld [vmem:[%s55 + $0x68] sm:$0xff]
    %v2824 = vld [vmem:[%s55 + $0x70] sm:$0xff]
    %v2825 = vld [vmem:[%s55 + $0x78] sm:$0xff]
    %v2826 = vld [vmem:[%s55 + $0x80] sm:$0xff]
    %v2827 = vld [vmem:[%s55 + $0x88] sm:$0xff]
    %v2828 = vld [vmem:[%s55 + $0x90] sm:$0xff]
    %v2829 = vld [vmem:[%s55 + $0x98] sm:$0xff]
    %v2830 = vld [vmem:[%s55 + $0xa0] sm:$0xff]
    %v2831 = vld [vmem:[%s55 + $0xa8] sm:$0xff]
    %v2832 = vld [vmem:[%s55 + $0xb0] sm:$0xff]
    %v2833 = vld [vmem:[%s55 + $0xb8] sm:$0xff]
    %v2835 = vsel %vm869, %v2800, 0
    %v2838 = vsel %vm869, %v2801, 0
    %2840 = vmatprep.subr.mxu0 0.0
    %2841 = vmatpush1.msra.mxu0 %v2810
    %2842 = vmatprep.subr.mxu0 0.0
    %2843 = vmatpush1.msra.mxu0 %v2811
    %2844 = vmatprep.subr.mxu0 0.0
    %2845 = vmatpush1.msra.mxu0 %v2812
    %2846 = vmatprep.subr.mxu0 0.0
    %2847 = vmatpush1.msra.mxu0 %v2813
    %2848 = vmatprep.subr.mxu0 0.0
    %2849 = vmatpush1.msra.mxu0 %v2814
    %2850 = vmatprep.subr.mxu0 0.0
    %2851 = vmatpush1.msra.mxu0 %v2815
    %2852 = vmatprep.subr.mxu0 0.0
    %2853 = vmatpush1.msra.mxu0 %v2816
    %2854 = vmatprep.subr.mxu0 0.0
    %2855 = vmatpush1.msra.mxu0 %v2817
    %2856 = vmatprep.subr.mxu0 0.0
    %2857 = vmatpush1.msra.mxu0 %v2818
    %2858 = vmatprep.subr.mxu0 0.0
    %2859 = vmatpush1.msra.mxu0 %v2819
    %2860 = vmatprep.subr.mxu0 0.0
    %2861 = vmatpush1.msra.mxu0 %v2820
    %2862 = vmatprep.subr.mxu0 0.0
    %2863 = vmatpush1.msra.mxu0 %v2821
    %2864 = vmatprep.subr.mxu0 0.0
    %2865 = vmatpush1.msra.mxu0 %v2822
    %2866 = vmatprep.subr.mxu0 0.0
    %2867 = vmatpush1.msra.mxu0 %v2823
    %2868 = vmatprep.subr.mxu0 0.0
    %2869 = vmatpush1.msra.mxu0 %v2824
    %2870 = vmatprep.subr.mxu0 0.0
    %2871 = vmatpush1.msra.mxu0 %v2825
    %2872 = vmatprep.subr.mxu0 0.0
    %2873 = vmatpush1.msra.mxu0 %v2826
    %2874 = vmatprep.subr.mxu0 0.0
    %2875 = vmatpush1.msra.mxu0 %v2827
    %2876 = vmatprep.subr.mxu0 0.0
    %2877 = vmatpush1.msra.mxu0 %v2828
    %2878 = vmatprep.subr.mxu0 0.0
    %2879 = vmatpush1.msra.mxu0 %v2829
    %2880 = vmatprep.subr.mxu0 0.0
    %2881 = vmatpush1.msra.mxu0 %v2830
    %2882 = vmatprep.subr.mxu0 0.0
    %2883 = vmatpush1.msra.mxu0 %v2831
    %2884 = vmatprep.subr.mxu0 0.0
    %2885 = vmatpush1.msra.mxu0 %v2832
    %2886 = vmatprep.subr.mxu0 0.0
    %2887 = vmatpush1.msra.mxu0 %v2833
    %2888 = vmatprep.subr.mxu0 0.0
    %2889 = vmatpush1.msra.mxu0 0.0
    %2890 = vmatprep.subr.mxu0 0.0
    %2891 = vmatpush1.msra.mxu0 0.0
    %2892 = vmatprep.subr.mxu0 0.0
    %2893 = vmatpush1.msra.mxu0 0.0
    %2894 = vmatprep.subr.mxu0 0.0
    %2895 = vmatpush1.msra.mxu0 0.0
    %2896 = vmatprep.subr.mxu0 0.0
    %2897 = vmatpush1.msra.mxu0 0.0
    %2898 = vmatprep.subr.mxu0 0.0
    %2899 = vmatpush1.msra.mxu0 0.0
    %2900 = vmatprep.subr.mxu0 0.0
    %2901 = vmatpush1.msra.mxu0 0.0
    %2902 = vmatprep.subr.mxu0 0.0
    %2903 = vmatpush1.msra.mxu0 0.0
    %2904 = vmatprep.mubr.f32.mxu0 %v2835
    %2905 = vmatmul.mubr.f32.gmra.mrb[0].mxu0 %v2808
    %v2906 = vpop.f32.mrb[0].mxu0
    %v2907 = vadd.f32 0.0, %v2906
    %v2908 = vpop.f32.mrb[0].mxu0
    %2909 = vmatprep.mubr.f32.mxu0 %v2838
    %2910 = vmatmul.mubr.f32.gmra.mrb[0].mxu0 %v2809
    %v2911 = vpop.f32.mrb[0].mxu0
    %v2912 = vadd.f32 0.0, %v2911
    %v2913 = vpop.f32.mrb[0].mxu0
    %2914 = vdwg.mxu0
    %v2915 = vsel %vm869, %v2907, 0.0
    %v2916 = vsel %vm869, %v2912, 0.0
    %v2917 = vadd.f32 %v2915, %v2916
    %v2918 = vrot.slane %v2917, 4
    %v2919 = vadd.f32 %v2917, %v2918
    %v2920 = vrot.slane %v2919, 2
    %v2921 = vadd.f32 %v2919, %v2920
    %v2922 = vrot.slane %v2921, 1
    %v2923 = vadd.f32 %v2921, %v2922
    %v2924 = vmul.f32 %v2907, %v2907
    %v2925 = vmul.f32 %v2912, %v2912
    %v2926 = vsel %vm869, %v2924, 0.0
    %v2927 = vsel %vm869, %v2925, 0.0
    %v2928 = vadd.f32 %v2926, %v2927
    %v2929 = vrot.slane %v2928, 4
    %v2930 = vadd.f32 %v2928, %v2929
    %v2931 = vrot.slane %v2930, 2
    %v2932 = vadd.f32 %v2930, %v2931
    %v2933 = vrot.slane %v2932, 1
    %v2934 = vadd.f32 %v2932, %v2933
    %v2935 = vmul.f32 %v2923, 0.0625
    %v2936 = vmul.f32 %v2934, 0.0625
    %v2937 = vmul.f32 %v2935, %v2935
    %v2938 = vsub.f32 %v2936, %v2937
    %v2939 = vmax.f32 %v2938, 0.0
    %v2940 = vadd.f32 %v2939, 1e-05
    %v2941 = vrsqrt.pop %v2940
    %v2942 = vld [vmem:[%s51] sm:$0x1]
    %v2943 = vmul.f32 %v2941, %v2942
    %v2944 = vld [vmem:[%s49] sm:$0x1]
    %v2945 = vmul.f32 %v2935, %v2943
    %v2946 = vsub.f32 %v2944, %v2945
    %v2947 = vlaneseq
    %v2948 = vshrl.u32 %v2947, 7
    %v2949 = vsub.s32 0, %v2948
    %v2950 = vrot.slane %v2943, %v2949
    %v2951 = vmul.f32 %v2907, %v2950
    %v2952 = vmul.f32 %v2912, %v2950
    %v2954 = vlaneseq
    %v2955 = vshrl.u32 %v2954, 7
    %v2956 = vsub.s32 0, %v2955
    %v2957 = vrot.slane %v2946, %v2956
    %v2959 = vadd.f32 %v2951, %v2957
    %v2960 = vadd.f32 %v2952, %v2957
    %v2961 = vmax.f32 %v2959, 0.0
    %v2962 = vmax.f32 %v2960, 0.0
    %v2963 = vadd.f32 %v2961, %v2425
    %v2964 = vadd.f32 %v2962, %v2495
    %v2965 = vld [vmem:[%s75] sm:$0xff]
    %v2966 = vld [vmem:[%s75 + $0x8] sm:$0xff]
    %v2967 = vld [vmem:[%s75 + $0x10] sm:$0xff]
    %v2968 = vld [vmem:[%s75 + $0x18] sm:$0xff]
    %v2969 = vld [vmem:[%s73] sm:$0x1]
    %v2971 = vlaneseq
    %v2972 = vshrl.u32 %v2971, 7
    %v2973 = vsub.s32 0, %v2972
    %v2974 = vrot.slane %v2969, %v2973
    %2976 = vmatprep.subr.mxu0 0.0
    %2977 = vmatpush1.msra.mxu0 %v2965
    %2978 = vmatprep.subr.mxu0 0.0
    %2979 = vmatpush1.msra.mxu0 %v2966
    %2980 = vmatprep.subr.mxu0 0.0
    %2981 = vmatpush1.msra.mxu0 %v2967
    %2982 = vmatprep.subr.mxu0 0.0
    %2983 = vmatpush1.msra.mxu0 %v2968
    %2984 = vmatprep.subr.mxu0 0.0
    %2985 = vmatpush1.msra.mxu0 0.0
    %2986 = vmatprep.subr.mxu0 0.0
    %2987 = vmatpush1.msra.mxu0 0.0
    %2988 = vmatprep.subr.mxu0 0.0
    %2989 = vmatpush1.msra.mxu0 0.0
    %2990 = vmatprep.subr.mxu0 0.0
    %2991 = vmatpush1.msra.mxu0 0.0
    %2992 = vmatprep.subr.mxu0 0.0
    %2993 = vmatpush1.msra.mxu0 0.0
    %2994 = vmatprep.subr.mxu0 0.0
    %2995 = vmatpush1.msra.mxu0 0.0
    %2996 = vmatprep.subr.mxu0 0.0
    %2997 = vmatpush1.msra.mxu0 0.0
    %2998 = vmatprep.subr.mxu0 0.0
    %2999 = vmatpush1.msra.mxu0 0.0
    %3000 = vmatprep.subr.mxu0 0.0
    %3001 = vmatpush1.msra.mxu0 0.0
    %3002 = vmatprep.subr.mxu0 0.0
    %3003 = vmatpush1.msra.mxu0 0.0
    %3004 = vmatprep.subr.mxu0 0.0
    %3005 = vmatpush1.msra.mxu0 0.0
    %3006 = vmatprep.subr.mxu0 0.0
    %3007 = vmatpush1.msra.mxu0 0.0
    %3008 = vmatprep.subr.mxu0 0.0
    %3009 = vmatpush1.msra.mxu0 0.0
    %3010 = vmatprep.subr.mxu0 0.0
    %3011 = vmatpush1.msra.mxu0 0.0
    %3012 = vmatprep.subr.mxu0 0.0
    %3013 = vmatpush1.msra.mxu0 0.0
    %3014 = vmatprep.subr.mxu0 0.0
    %3015 = vmatpush1.msra.mxu0 0.0
    %3016 = vmatprep.subr.mxu0 0.0
    %3017 = vmatpush1.msra.mxu0 0.0
    %3018 = vmatprep.subr.mxu0 0.0
    %3019 = vmatpush1.msra.mxu0 0.0
    %3020 = vmatprep.subr.mxu0 0.0
    %3021 = vmatpush1.msra.mxu0 0.0
    %3022 = vmatprep.subr.mxu0 0.0
    %3023 = vmatpush1.msra.mxu0 0.0
    %3024 = vmatprep.subr.mxu0 0.0
    %3025 = vmatpush1.msra.mxu0 0.0
    %3026 = vmatprep.subr.mxu0 0.0
    %3027 = vmatpush1.msra.mxu0 0.0
    %3028 = vmatprep.subr.mxu0 0.0
    %3029 = vmatpush1.msra.mxu0 0.0
    %3030 = vmatprep.subr.mxu0 0.0
    %3031 = vmatpush1.msra.mxu0 0.0
    %3032 = vmatprep.subr.mxu0 0.0
    %3033 = vmatpush1.msra.mxu0 0.0
    %3034 = vmatprep.subr.mxu0 0.0
    %3035 = vmatpush1.msra.mxu0 0.0
    %3036 = vmatprep.subr.mxu0 0.0
    %3037 = vmatpush1.msra.mxu0 0.0
    %3038 = vmatprep.subr.mxu0 0.0
    %3039 = vmatpush1.msra.mxu0 0.0
    %3040 = vmatprep.mubr.f32.mxu0 0.0
    %3041 = vmatmul.mubr.f32.gmra.mrb[0].mxu0 %v686
    %v3042 = vpop.f32.mrb[0].mxu0
    %v3043 = vadd.f32 %v2974, %v3042
    %v3044 = vpop.f32.mrb[0].mxu0
    %3045 = vdwg.mxu0
    %v3046 = vmax.f32 %v3043, 0.0
    %v3049 = vrot.slane %v2963, 7
    %v3050 = vrot.slane %v2964, 7
    %v3053 = vsel %vm767, 0.0, %v3049
    %v3054 = vsel %vm767, 0.0, %v3050
    %v3055 = vrot.slane %v2963, 1
    %v3056 = vrot.slane %v2964, 1
    %v3059 = vsel %vm792, %v3055, 0.0
    %v3060 = vsel %vm792, %v3056, 0.0
    %3061 = vrot.lane.b32.xlu0 %v2963, 64
    %v3062 = vpop.permute.xlu0 %3061
    %3063 = vrot.lane.b32.xlu0 %v2964, 64
    %v3064 = vpop.permute.xlu0 %3063
    %v3067 = vsel %vm869, %v3053, %v3062
    %v3068 = vsel %vm869, %v3054, %v3064
    %v3069 = vld [vmem:[%s69] sm:$0xff]
    %v3070 = vld [vmem:[%s69 + $0x8] sm:$0xff]
    %v3071 = vld [vmem:[%s69 + $0x10] sm:$0xff]
    %v3072 = vld [vmem:[%s69 + $0x18] sm:$0xff]
    %v3073 = vld [vmem:[%s69 + $0x20] sm:$0xff]
    %v3074 = vld [vmem:[%s69 + $0x28] sm:$0xff]
    %v3075 = vld [vmem:[%s69 + $0x30] sm:$0xff]
    %v3076 = vld [vmem:[%s69 + $0x38] sm:$0xff]
    %v3077 = vld [vmem:[%s69 + $0x40] sm:$0xff]
    %v3078 = vld [vmem:[%s69 + $0x48] sm:$0xff]
    %v3079 = vld [vmem:[%s69 + $0x50] sm:$0xff]
    %v3080 = vld [vmem:[%s69 + $0x58] sm:$0xff]
    %v3081 = vld [vmem:[%s69 + $0x60] sm:$0xff]
    %v3082 = vld [vmem:[%s69 + $0x68] sm:$0xff]
    %v3083 = vld [vmem:[%s69 + $0x70] sm:$0xff]
    %v3084 = vld [vmem:[%s69 + $0x78] sm:$0xff]
    %v3085 = vld [vmem:[%s69 + $0x80] sm:$0xff]
    %v3086 = vld [vmem:[%s69 + $0x88] sm:$0xff]
    %v3087 = vld [vmem:[%s69 + $0x90] sm:$0xff]
    %v3088 = vld [vmem:[%s69 + $0x98] sm:$0xff]
    %v3089 = vld [vmem:[%s69 + $0xa0] sm:$0xff]
    %v3090 = vld [vmem:[%s69 + $0xa8] sm:$0xff]
    %v3091 = vld [vmem:[%s69 + $0xb0] sm:$0xff]
    %v3092 = vld [vmem:[%s69 + $0xb8] sm:$0xff]
    %v3094 = vsel %vm869, %v3059, 0
    %v3097 = vsel %vm869, %v3060, 0
    %3099 = vmatprep.subr.mxu0 0.0
    %3100 = vmatpush1.msra.mxu0 %v3069
    %3101 = vmatprep.subr.mxu0 0.0
    %3102 = vmatpush1.msra.mxu0 %v3070
    %3103 = vmatprep.subr.mxu0 0.0
    %3104 = vmatpush1.msra.mxu0 %v3071
    %3105 = vmatprep.subr.mxu0 0.0
    %3106 = vmatpush1.msra.mxu0 %v3072
    %3107 = vmatprep.subr.mxu0 0.0
    %3108 = vmatpush1.msra.mxu0 %v3073
    %3109 = vmatprep.subr.mxu0 0.0
    %3110 = vmatpush1.msra.mxu0 %v3074
    %3111 = vmatprep.subr.mxu0 0.0
    %3112 = vmatpush1.msra.mxu0 %v3075
    %3113 = vmatprep.subr.mxu0 0.0
    %3114 = vmatpush1.msra.mxu0 %v3076
    %3115 = vmatprep.subr.mxu0 0.0
    %3116 = vmatpush1.msra.mxu0 %v3077
    %3117 = vmatprep.subr.mxu0 0.0
    %3118 = vmatpush1.msra.mxu0 %v3078
    %3119 = vmatprep.subr.mxu0 0.0
    %3120 = vmatpush1.msra.mxu0 %v3079
    %3121 = vmatprep.subr.mxu0 0.0
    %3122 = vmatpush1.msra.mxu0 %v3080
    %3123 = vmatprep.subr.mxu0 0.0
    %3124 = vmatpush1.msra.mxu0 %v3081
    %3125 = vmatprep.subr.mxu0 0.0
    %3126 = vmatpush1.msra.mxu0 %v3082
    %3127 = vmatprep.subr.mxu0 0.0
    %3128 = vmatpush1.msra.mxu0 %v3083
    %3129 = vmatprep.subr.mxu0 0.0
    %3130 = vmatpush1.msra.mxu0 %v3084
    %3131 = vmatprep.subr.mxu0 0.0
    %3132 = vmatpush1.msra.mxu0 %v3085
    %3133 = vmatprep.subr.mxu0 0.0
    %3134 = vmatpush1.msra.mxu0 %v3086
    %3135 = vmatprep.subr.mxu0 0.0
    %3136 = vmatpush1.msra.mxu0 %v3087
    %3137 = vmatprep.subr.mxu0 0.0
    %3138 = vmatpush1.msra.mxu0 %v3088
    %3139 = vmatprep.subr.mxu0 0.0
    %3140 = vmatpush1.msra.mxu0 %v3089
    %3141 = vmatprep.subr.mxu0 0.0
    %3142 = vmatpush1.msra.mxu0 %v3090
    %3143 = vmatprep.subr.mxu0 0.0
    %3144 = vmatpush1.msra.mxu0 %v3091
    %3145 = vmatprep.subr.mxu0 0.0
    %3146 = vmatpush1.msra.mxu0 %v3092
    %3147 = vmatprep.subr.mxu0 0.0
    %3148 = vmatpush1.msra.mxu0 0.0
    %3149 = vmatprep.subr.mxu0 0.0
    %3150 = vmatpush1.msra.mxu0 0.0
    %3151 = vmatprep.subr.mxu0 0.0
    %3152 = vmatpush1.msra.mxu0 0.0
    %3153 = vmatprep.subr.mxu0 0.0
    %3154 = vmatpush1.msra.mxu0 0.0
    %3155 = vmatprep.subr.mxu0 0.0
    %3156 = vmatpush1.msra.mxu0 0.0
    %3157 = vmatprep.subr.mxu0 0.0
    %3158 = vmatpush1.msra.mxu0 0.0
    %3159 = vmatprep.subr.mxu0 0.0
    %3160 = vmatpush1.msra.mxu0 0.0
    %3161 = vmatprep.subr.mxu0 0.0
    %3162 = vmatpush1.msra.mxu0 0.0
    %3163 = vmatprep.mubr.f32.mxu0 %v3094
    %3164 = vmatmul.mubr.f32.gmra.mrb[0].mxu0 %v3067
    %v3165 = vpop.f32.mrb[0].mxu0
    %v3166 = vadd.f32 0.0, %v3165
    %v3167 = vpop.f32.mrb[0].mxu0
    %3168 = vmatprep.mubr.f32.mxu0 %v3097
    %3169 = vmatmul.mubr.f32.gmra.mrb[0].mxu0 %v3068
    %v3170 = vpop.f32.mrb[0].mxu0
    %v3171 = vadd.f32 0.0, %v3170
    %v3172 = vpop.f32.mrb[0].mxu0
    %3173 = vdwg.mxu0
    %v3174 = vsel %vm869, %v3166, 0.0
    %v3175 = vsel %vm869, %v3171, 0.0
    %v3176 = vadd.f32 %v3174, %v3175
    %v3177 = vrot.slane %v3176, 4
    %v3178 = vadd.f32 %v3176, %v3177
    %v3179 = vrot.slane %v3178, 2
    %v3180 = vadd.f32 %v3178, %v3179
    %v3181 = vrot.slane %v3180, 1
    %v3182 = vadd.f32 %v3180, %v3181
    %v3183 = vmul.f32 %v3166, %v3166
    %v3184 = vmul.f32 %v3171, %v3171
    %v3185 = vsel %vm869, %v3183, 0.0
    %v3186 = vsel %vm869, %v3184, 0.0
    %v3187 = vadd.f32 %v3185, %v3186
    %v3188 = vrot.slane %v3187, 4
    %v3189 = vadd.f32 %v3187, %v3188
    %v3190 = vrot.slane %v3189, 2
    %v3191 = vadd.f32 %v3189, %v3190
    %v3192 = vrot.slane %v3191, 1
    %v3193 = vadd.f32 %v3191, %v3192
    %v3194 = vmul.f32 %v3182, 0.0625
    %v3195 = vmul.f32 %v3193, 0.0625
    %v3196 = vmul.f32 %v3194, %v3194
    %v3197 = vsub.f32 %v3195, %v3196
    %v3198 = vmax.f32 %v3197, 0.0
    %v3199 = vadd.f32 %v3198, 1e-05
    %v3200 = vrsqrt.pop %v3199
    %v3201 = vld [vmem:[%s63] sm:$0x1]
    %v3202 = vmul.f32 %v3200, %v3201
    %v3203 = vld [vmem:[%s61] sm:$0x1]
    %v3204 = vmul.f32 %v3194, %v3202
    %v3205 = vsub.f32 %v3203, %v3204
    %v3206 = vlaneseq
    %v3207 = vshrl.u32 %v3206, 7
    %v3208 = vsub.s32 0, %v3207
    %v3209 = vrot.slane %v3202, %v3208
    %v3210 = vmul.f32 %v3166, %v3209
    %v3211 = vmul.f32 %v3171, %v3209
    %v3214 = vunpack.c.l.s4 1966171168
    %v3215 = vunpack.c.0.s8 %v3214
    %v3216 = vlaneseq
    %v3217 = vshrl.u32 %v3216, 7
    %v3218 = vsub.s32 %v3215, %v3217
    %v3219 = vrot.slane %v3046, %v3218
    %v3220 = vcombine.high %v3219, %v3219
    %v3222 = vunpack.c.l.s4 1966171168
    %v3223 = vunpack.c.0.s8 %v3222
    %v3224 = vlaneseq
    %v3225 = vshrl.u32 %v3224, 7
    %v3226 = vsub.s32 %v3223, %v3225
    %v3227 = vrot.slane %v3219, %v3226
    %v3229 = vunpack.c.l.s4 1966171168
    %v3230 = vunpack.c.0.s8 %v3229
    %v3231 = vlaneseq
    %v3232 = vshrl.u32 %v3231, 7
    %v3233 = vsub.s32 %v3230, %v3232
    %v3234 = vrot.slane %v3220, %v3233
    %v3237 = vadd.f32 %v3205, %v3227
    %v3238 = vadd.f32 %v3205, %v3234
    %v3241 = vlaneseq
    %v3242 = vshrl.u32 %v3241, 7
    %v3243 = vsub.s32 0, %v3242
    %v3244 = vrot.slane %v3237, %v3243
    %v3245 = vlaneseq
    %v3246 = vshrl.u32 %v3245, 7
    %v3247 = vsub.s32 0, %v3246
    %v3248 = vrot.slane %v3238, %v3247
    %v3251 = vadd.f32 %v3210, %v3244
    %v3252 = vadd.f32 %v3211, %v3248
    %v3253 = vmax.f32 %v3251, 0.0
    %v3254 = vmax.f32 %v3252, 0.0
    %v3257 = vrot.slane %v3253, 7
    %v3258 = vrot.slane %v3254, 7
    %v3261 = vsel %vm767, 0.0, %v3257
    %v3262 = vsel %vm767, 0.0, %v3258
    %v3263 = vrot.slane %v3253, 1
    %v3264 = vrot.slane %v3254, 1
    %v3267 = vsel %vm792, %v3263, 0.0
    %v3268 = vsel %vm792, %v3264, 0.0
    %3269 = vrot.lane.b32.xlu0 %v3253, 64
    %v3270 = vpop.permute.xlu0 %3269
    %3271 = vrot.lane.b32.xlu0 %v3254, 64
    %v3272 = vpop.permute.xlu0 %3271
    %v3275 = vsel %vm869, %v3261, %v3270
    %v3276 = vsel %vm869, %v3262, %v3272
    %v3277 = vld [vmem:[%s71] sm:$0xff]
    %v3278 = vld [vmem:[%s71 + $0x8] sm:$0xff]
    %v3279 = vld [vmem:[%s71 + $0x10] sm:$0xff]
    %v3280 = vld [vmem:[%s71 + $0x18] sm:$0xff]
    %v3281 = vld [vmem:[%s71 + $0x20] sm:$0xff]
    %v3282 = vld [vmem:[%s71 + $0x28] sm:$0xff]
    %v3283 = vld [vmem:[%s71 + $0x30] sm:$0xff]
    %v3284 = vld [vmem:[%s71 + $0x38] sm:$0xff]
    %v3285 = vld [vmem:[%s71 + $0x40] sm:$0xff]
    %v3286 = vld [vmem:[%s71 + $0x48] sm:$0xff]
    %v3287 = vld [vmem:[%s71 + $0x50] sm:$0xff]
    %v3288 = vld [vmem:[%s71 + $0x58] sm:$0xff]
    %v3289 = vld [vmem:[%s71 + $0x60] sm:$0xff]
    %v3290 = vld [vmem:[%s71 + $0x68] sm:$0xff]
    %v3291 = vld [vmem:[%s71 + $0x70] sm:$0xff]
    %v3292 = vld [vmem:[%s71 + $0x78] sm:$0xff]
    %v3293 = vld [vmem:[%s71 + $0x80] sm:$0xff]
    %v3294 = vld [vmem:[%s71 + $0x88] sm:$0xff]
    %v3295 = vld [vmem:[%s71 + $0x90] sm:$0xff]
    %v3296 = vld [vmem:[%s71 + $0x98] sm:$0xff]
    %v3297 = vld [vmem:[%s71 + $0xa0] sm:$0xff]
    %v3298 = vld [vmem:[%s71 + $0xa8] sm:$0xff]
    %v3299 = vld [vmem:[%s71 + $0xb0] sm:$0xff]
    %v3300 = vld [vmem:[%s71 + $0xb8] sm:$0xff]
    %v3302 = vsel %vm869, %v3267, 0
    %v3305 = vsel %vm869, %v3268, 0
    %3307 = vmatprep.subr.mxu0 0.0
    %3308 = vmatpush1.msra.mxu0 %v3277
    %3309 = vmatprep.subr.mxu0 0.0
    %3310 = vmatpush1.msra.mxu0 %v3278
    %3311 = vmatprep.subr.mxu0 0.0
    %3312 = vmatpush1.msra.mxu0 %v3279
    %3313 = vmatprep.subr.mxu0 0.0
    %3314 = vmatpush1.msra.mxu0 %v3280
    %3315 = vmatprep.subr.mxu0 0.0
    %3316 = vmatpush1.msra.mxu0 %v3281
    %3317 = vmatprep.subr.mxu0 0.0
    %3318 = vmatpush1.msra.mxu0 %v3282
    %3319 = vmatprep.subr.mxu0 0.0
    %3320 = vmatpush1.msra.mxu0 %v3283
    %3321 = vmatprep.subr.mxu0 0.0
    %3322 = vmatpush1.msra.mxu0 %v3284
    %3323 = vmatprep.subr.mxu0 0.0
    %3324 = vmatpush1.msra.mxu0 %v3285
    %3325 = vmatprep.subr.mxu0 0.0
    %3326 = vmatpush1.msra.mxu0 %v3286
    %3327 = vmatprep.subr.mxu0 0.0
    %3328 = vmatpush1.msra.mxu0 %v3287
    %3329 = vmatprep.subr.mxu0 0.0
    %3330 = vmatpush1.msra.mxu0 %v3288
    %3331 = vmatprep.subr.mxu0 0.0
    %3332 = vmatpush1.msra.mxu0 %v3289
    %3333 = vmatprep.subr.mxu0 0.0
    %3334 = vmatpush1.msra.mxu0 %v3290
    %3335 = vmatprep.subr.mxu0 0.0
    %3336 = vmatpush1.msra.mxu0 %v3291
    %3337 = vmatprep.subr.mxu0 0.0
    %3338 = vmatpush1.msra.mxu0 %v3292
    %3339 = vmatprep.subr.mxu0 0.0
    %3340 = vmatpush1.msra.mxu0 %v3293
    %3341 = vmatprep.subr.mxu0 0.0
    %3342 = vmatpush1.msra.mxu0 %v3294
    %3343 = vmatprep.subr.mxu0 0.0
    %3344 = vmatpush1.msra.mxu0 %v3295
    %3345 = vmatprep.subr.mxu0 0.0
    %3346 = vmatpush1.msra.mxu0 %v3296
    %3347 = vmatprep.subr.mxu0 0.0
    %3348 = vmatpush1.msra.mxu0 %v3297
    %3349 = vmatprep.subr.mxu0 0.0
    %3350 = vmatpush1.msra.mxu0 %v3298
    %3351 = vmatprep.subr.mxu0 0.0
    %3352 = vmatpush1.msra.mxu0 %v3299
    %3353 = vmatprep.subr.mxu0 0.0
    %3354 = vmatpush1.msra.mxu0 %v3300
    %3355 = vmatprep.subr.mxu0 0.0
    %3356 = vmatpush1.msra.mxu0 0.0
    %3357 = vmatprep.subr.mxu0 0.0
    %3358 = vmatpush1.msra.mxu0 0.0
    %3359 = vmatprep.subr.mxu0 0.0
    %3360 = vmatpush1.msra.mxu0 0.0
    %3361 = vmatprep.subr.mxu0 0.0
    %3362 = vmatpush1.msra.mxu0 0.0
    %3363 = vmatprep.subr.mxu0 0.0
    %3364 = vmatpush1.msra.mxu0 0.0
    %3365 = vmatprep.subr.mxu0 0.0
    %3366 = vmatpush1.msra.mxu0 0.0
    %3367 = vmatprep.subr.mxu0 0.0
    %3368 = vmatpush1.msra.mxu0 0.0
    %3369 = vmatprep.subr.mxu0 0.0
    %3370 = vmatpush1.msra.mxu0 0.0
    %3371 = vmatprep.mubr.f32.mxu0 %v3302
    %3372 = vmatmul.mubr.f32.gmra.mrb[0].mxu0 %v3275
    %v3373 = vpop.f32.mrb[0].mxu0
    %v3374 = vadd.f32 0.0, %v3373
    %v3375 = vpop.f32.mrb[0].mxu0
    %3376 = vmatprep.mubr.f32.mxu0 %v3305
    %3377 = vmatmul.mubr.f32.gmra.mrb[0].mxu0 %v3276
    %v3378 = vpop.f32.mrb[0].mxu0
    %v3379 = vadd.f32 0.0, %v3378
    %v3380 = vpop.f32.mrb[0].mxu0
    %3381 = vdwg.mxu0
    %v3382 = vsel %vm869, %v3374, 0.0
    %v3383 = vsel %vm869, %v3379, 0.0
    %v3384 = vadd.f32 %v3382, %v3383
    %v3385 = vrot.slane %v3384, 4
    %v3386 = vadd.f32 %v3384, %v3385
    %v3387 = vrot.slane %v3386, 2
    %v3388 = vadd.f32 %v3386, %v3387
    %v3389 = vrot.slane %v3388, 1
    %v3390 = vadd.f32 %v3388, %v3389
    %v3391 = vmul.f32 %v3374, %v3374
    %v3392 = vmul.f32 %v3379, %v3379
    %v3393 = vsel %vm869, %v3391, 0.0
    %v3394 = vsel %vm869, %v3392, 0.0
    %v3395 = vadd.f32 %v3393, %v3394
    %v3396 = vrot.slane %v3395, 4
    %v3397 = vadd.f32 %v3395, %v3396
    %v3398 = vrot.slane %v3397, 2
    %v3399 = vadd.f32 %v3397, %v3398
    %v3400 = vrot.slane %v3399, 1
    %v3401 = vadd.f32 %v3399, %v3400
    %v3402 = vmul.f32 %v3390, 0.0625
    %v3403 = vmul.f32 %v3401, 0.0625
    %v3404 = vmul.f32 %v3402, %v3402
    %v3405 = vsub.f32 %v3403, %v3404
    %v3406 = vmax.f32 %v3405, 0.0
    %v3407 = vadd.f32 %v3406, 1e-05
    %v3408 = vrsqrt.pop %v3407
    %v3409 = vld [vmem:[%s67] sm:$0x1]
    %v3410 = vmul.f32 %v3408, %v3409
    %v3411 = vld [vmem:[%s65] sm:$0x1]
    %v3412 = vmul.f32 %v3402, %v3410
    %v3413 = vsub.f32 %v3411, %v3412
    %v3414 = vlaneseq
    %v3415 = vshrl.u32 %v3414, 7
    %v3416 = vsub.s32 0, %v3415
    %v3417 = vrot.slane %v3410, %v3416
    %v3418 = vmul.f32 %v3374, %v3417
    %v3419 = vmul.f32 %v3379, %v3417
    %v3421 = vlaneseq
    %v3422 = vshrl.u32 %v3421, 7
    %v3423 = vsub.s32 0, %v3422
    %v3424 = vrot.slane %v3413, %v3423
    %v3426 = vadd.f32 %v3418, %v3424
    %v3427 = vadd.f32 %v3419, %v3424
    %v3428 = vmax.f32 %v3426, 0.0
    %v3429 = vmax.f32 %v3427, 0.0
    %v3430 = vadd.f32 %v3428, %v2963
    %v3431 = vadd.f32 %v3429, %v2964
    %v3432 = vld [vmem:[%s143] sm:$0xff]
    %v3433 = vld [vmem:[%s143 + $0x8] sm:$0xff]
    %vm3434 = vcmask 64512
    %v3436 = vsel %vm3434, %v3432, 0
    %v3439 = vsel %vm3434, %v3433, 0
    %3441 = vmatprep.subr.mxu0 0.0
    %3442 = vmatpush1.msra.mxu0 %v3430
    %3443 = vmatprep.subr.mxu0 0.0
    %3444 = vmatpush1.msra.mxu0 0.0
    %3445 = vmatprep.subr.mxu0 0.0
    %3446 = vmatpush1.msra.mxu0 0.0
    %3447 = vmatprep.subr.mxu0 0.0
    %3448 = vmatpush1.msra.mxu0 0.0
    %3449 = vmatprep.subr.mxu0 0.0
    %3450 = vmatpush1.msra.mxu0 0.0
    %3451 = vmatprep.subr.mxu0 0.0
    %3452 = vmatpush1.msra.mxu0 0.0
    %3453 = vmatprep.subr.mxu0 0.0
    %3454 = vmatpush1.msra.mxu0 0.0
    %3455 = vmatprep.subr.mxu0 0.0
    %3456 = vmatpush1.msra.mxu0 0.0
    %3457 = vmatprep.subr.mxu0 0.0
    %3458 = vmatpush1.msra.mxu0 0.0
    %3459 = vmatprep.subr.mxu0 0.0
    %3460 = vmatpush1.msra.mxu0 0.0
    %3461 = vmatprep.subr.mxu0 0.0
    %3462 = vmatpush1.msra.mxu0 0.0
    %3463 = vmatprep.subr.mxu0 0.0
    %3464 = vmatpush1.msra.mxu0 0.0
    %3465 = vmatprep.subr.mxu0 0.0
    %3466 = vmatpush1.msra.mxu0 0.0
    %3467 = vmatprep.subr.mxu0 0.0
    %3468 = vmatpush1.msra.mxu0 0.0
    %3469 = vmatprep.subr.mxu0 0.0
    %3470 = vmatpush1.msra.mxu0 0.0
    %3471 = vmatprep.subr.mxu0 0.0
    %3472 = vmatpush1.msra.mxu0 0.0
    %3473 = vmatprep.subr.mxu0 0.0
    %3474 = vmatpush1.msra.mxu0 0.0
    %3475 = vmatprep.subr.mxu0 0.0
    %3476 = vmatpush1.msra.mxu0 0.0
    %3477 = vmatprep.subr.mxu0 0.0
    %3478 = vmatpush1.msra.mxu0 0.0
    %3479 = vmatprep.subr.mxu0 0.0
    %3480 = vmatpush1.msra.mxu0 0.0
    %3481 = vmatprep.subr.mxu0 0.0
    %3482 = vmatpush1.msra.mxu0 0.0
    %3483 = vmatprep.subr.mxu0 0.0
    %3484 = vmatpush1.msra.mxu0 0.0
    %3485 = vmatprep.subr.mxu0 0.0
    %3486 = vmatpush1.msra.mxu0 0.0
    %3487 = vmatprep.subr.mxu0 0.0
    %3488 = vmatpush1.msra.mxu0 0.0
    %3489 = vmatprep.subr.mxu0 0.0
    %3490 = vmatpush1.msra.mxu0 0.0
    %3491 = vmatprep.subr.mxu0 0.0
    %3492 = vmatpush1.msra.mxu0 0.0
    %3493 = vmatprep.subr.mxu0 0.0
    %3494 = vmatpush1.msra.mxu0 0.0
    %3495 = vmatprep.subr.mxu0 0.0
    %3496 = vmatpush1.msra.mxu0 0.0
    %3497 = vmatprep.subr.mxu0 0.0
    %3498 = vmatpush1.msra.mxu0 0.0
    %3499 = vmatprep.subr.mxu0 0.0
    %3500 = vmatpush1.msra.mxu0 0.0
    %3501 = vmatprep.subr.mxu0 0.0
    %3502 = vmatpush1.msra.mxu0 0.0
    %3503 = vmatprep.subr.mxu0 0.0
    %3504 = vmatpush1.msra.mxu0 0.0
    %3505 = vmatprep.mubr.f32.mxu0 0.0
    %3506 = vmatmul.mubr.f32.gmra.mrb[0].mxu0 %v3436
    %v3507 = vpop.f32.mrb[0].mxu0
    %v3508 = vadd.f32 0.0, %v3507
    %v3509 = vpop.f32.mrb[0].mxu0
    %3510 = vmatprep.mubr.f32.mxu0 0.0
    %3511 = vmatmul.mubr.f32.gmra.mrb[0].mxu0 %v3439
    %v3512 = vpop.f32.mrb[0].mxu0
    %v3513 = vadd.f32 0.0, %v3512
    %v3514 = vpop.f32.mrb[0].mxu0
    %3515 = vdwg.mxu0
    %3516 = vmatprep.subr.mxu0 0.0
    %3517 = vmatpush1.msra.mxu0 %v3431
    %3518 = vmatprep.subr.mxu0 0.0
    %3519 = vmatpush1.msra.mxu0 0.0
    %3520 = vmatprep.subr.mxu0 0.0
    %3521 = vmatpush1.msra.mxu0 0.0
    %3522 = vmatprep.subr.mxu0 0.0
    %3523 = vmatpush1.msra.mxu0 0.0
    %3524 = vmatprep.subr.mxu0 0.0
    %3525 = vmatpush1.msra.mxu0 0.0
    %3526 = vmatprep.subr.mxu0 0.0
    %3527 = vmatpush1.msra.mxu0 0.0
    %3528 = vmatprep.subr.mxu0 0.0
    %3529 = vmatpush1.msra.mxu0 0.0
    %3530 = vmatprep.subr.mxu0 0.0
    %3531 = vmatpush1.msra.mxu0 0.0
    %3532 = vmatprep.subr.mxu0 0.0
    %3533 = vmatpush1.msra.mxu0 0.0
    %3534 = vmatprep.subr.mxu0 0.0
    %3535 = vmatpush1.msra.mxu0 0.0
    %3536 = vmatprep.subr.mxu0 0.0
    %3537 = vmatpush1.msra.mxu0 0.0
    %3538 = vmatprep.subr.mxu0 0.0
    %3539 = vmatpush1.msra.mxu0 0.0
    %3540 = vmatprep.subr.mxu0 0.0
    %3541 = vmatpush1.msra.mxu0 0.0
    %3542 = vmatprep.subr.mxu0 0.0
    %3543 = vmatpush1.msra.mxu0 0.0
    %3544 = vmatprep.subr.mxu0 0.0
    %3545 = vmatpush1.msra.mxu0 0.0
    %3546 = vmatprep.subr.mxu0 0.0
    %3547 = vmatpush1.msra.mxu0 0.0
    %3548 = vmatprep.subr.mxu0 0.0
    %3549 = vmatpush1.msra.mxu0 0.0
    %3550 = vmatprep.subr.mxu0 0.0
    %3551 = vmatpush1.msra.mxu0 0.0
    %3552 = vmatprep.subr.mxu0 0.0
    %3553 = vmatpush1.msra.mxu0 0.0
    %3554 = vmatprep.subr.mxu0 0.0
    %3555 = vmatpush1.msra.mxu0 0.0
    %3556 = vmatprep.subr.mxu0 0.0
    %3557 = vmatpush1.msra.mxu0 0.0
    %3558 = vmatprep.subr.mxu0 0.0
    %3559 = vmatpush1.msra.mxu0 0.0
    %3560 = vmatprep.subr.mxu0 0.0
    %3561 = vmatpush1.msra.mxu0 0.0
    %3562 = vmatprep.subr.mxu0 0.0
    %3563 = vmatpush1.msra.mxu0 0.0
    %3564 = vmatprep.subr.mxu0 0.0
    %3565 = vmatpush1.msra.mxu0 0.0
    %3566 = vmatprep.subr.mxu0 0.0
    %3567 = vmatpush1.msra.mxu0 0.0
    %3568 = vmatprep.subr.mxu0 0.0
    %3569 = vmatpush1.msra.mxu0 0.0
    %3570 = vmatprep.subr.mxu0 0.0
    %3571 = vmatpush1.msra.mxu0 0.0
    %3572 = vmatprep.subr.mxu0 0.0
    %3573 = vmatpush1.msra.mxu0 0.0
    %3574 = vmatprep.subr.mxu0 0.0
    %3575 = vmatpush1.msra.mxu0 0.0
    %3576 = vmatprep.subr.mxu0 0.0
    %3577 = vmatpush1.msra.mxu0 0.0
    %3578 = vmatprep.subr.mxu0 0.0
    %3579 = vmatpush1.msra.mxu0 0.0
    %3580 = vmatprep.mubr.f32.mxu0 0.0
    %3581 = vmatmul.mubr.f32.gmra.mrb[0].mxu0 %v3436
    %v3582 = vpop.f32.mrb[0].mxu0
    %v3583 = vadd.f32 0.0, %v3582
    %v3584 = vpop.f32.mrb[0].mxu0
    %3585 = vmatprep.mubr.f32.mxu0 0.0
    %3586 = vmatmul.mubr.f32.gmra.mrb[0].mxu0 %v3439
    %v3587 = vpop.f32.mrb[0].mxu0
    %v3588 = vadd.f32 0.0, %v3587
    %v3589 = vpop.f32.mrb[0].mxu0
    %3590 = vdwg.mxu0
    %v3591 = vld [vmem:[%s111] sm:$0xff]
    %v3592 = vld [vmem:[%s111 + $0x8] sm:$0xff]
    %v3593 = vld [vmem:[%s111 + $0x10] sm:$0xff]
    %v3594 = vld [vmem:[%s111 + $0x18] sm:$0xff]
    %v3595 = vld [vmem:[#allocation18] sm:$0x1]
    %v3597 = vlaneseq
    %v3598 = vshrl.u32 %v3597, 7
    %v3599 = vsub.s32 0, %v3598
    %v3600 = vrot.slane %v3595, %v3599
    %3602 = vmatprep.subr.mxu0 0.0
    %3603 = vmatpush1.msra.mxu0 %v3591
    %3604 = vmatprep.subr.mxu0 0.0
    %3605 = vmatpush1.msra.mxu0 %v3592
    %3606 = vmatprep.subr.mxu0 0.0
    %3607 = vmatpush1.msra.mxu0 %v3593
    %3608 = vmatprep.subr.mxu0 0.0
    %3609 = vmatpush1.msra.mxu0 %v3594
    %3610 = vmatprep.subr.mxu0 0.0
    %3611 = vmatpush1.msra.mxu0 0.0
    %3612 = vmatprep.subr.mxu0 0.0
    %3613 = vmatpush1.msra.mxu0 0.0
    %3614 = vmatprep.subr.mxu0 0.0
    %3615 = vmatpush1.msra.mxu0 0.0
    %3616 = vmatprep.subr.mxu0 0.0
    %3617 = vmatpush1.msra.mxu0 0.0
    %3618 = vmatprep.subr.mxu0 0.0
    %3619 = vmatpush1.msra.mxu0 0.0
    %3620 = vmatprep.subr.mxu0 0.0
    %3621 = vmatpush1.msra.mxu0 0.0
    %3622 = vmatprep.subr.mxu0 0.0
    %3623 = vmatpush1.msra.mxu0 0.0
    %3624 = vmatprep.subr.mxu0 0.0
    %3625 = vmatpush1.msra.mxu0 0.0
    %3626 = vmatprep.subr.mxu0 0.0
    %3627 = vmatpush1.msra.mxu0 0.0
    %3628 = vmatprep.subr.mxu0 0.0
    %3629 = vmatpush1.msra.mxu0 0.0
    %3630 = vmatprep.subr.mxu0 0.0
    %3631 = vmatpush1.msra.mxu0 0.0
    %3632 = vmatprep.subr.mxu0 0.0
    %3633 = vmatpush1.msra.mxu0 0.0
    %3634 = vmatprep.subr.mxu0 0.0
    %3635 = vmatpush1.msra.mxu0 0.0
    %3636 = vmatprep.subr.mxu0 0.0
    %3637 = vmatpush1.msra.mxu0 0.0
    %3638 = vmatprep.subr.mxu0 0.0
    %3639 = vmatpush1.msra.mxu0 0.0
    %3640 = vmatprep.subr.mxu0 0.0
    %3641 = vmatpush1.msra.mxu0 0.0
    %3642 = vmatprep.subr.mxu0 0.0
    %3643 = vmatpush1.msra.mxu0 0.0
    %3644 = vmatprep.subr.mxu0 0.0
    %3645 = vmatpush1.msra.mxu0 0.0
    %3646 = vmatprep.subr.mxu0 0.0
    %3647 = vmatpush1.msra.mxu0 0.0
    %3648 = vmatprep.subr.mxu0 0.0
    %3649 = vmatpush1.msra.mxu0 0.0
    %3650 = vmatprep.subr.mxu0 0.0
    %3651 = vmatpush1.msra.mxu0 0.0
    %3652 = vmatprep.subr.mxu0 0.0
    %3653 = vmatpush1.msra.mxu0 0.0
    %3654 = vmatprep.subr.mxu0 0.0
    %3655 = vmatpush1.msra.mxu0 0.0
    %3656 = vmatprep.subr.mxu0 0.0
    %3657 = vmatpush1.msra.mxu0 0.0
    %3658 = vmatprep.subr.mxu0 0.0
    %3659 = vmatpush1.msra.mxu0 0.0
    %3660 = vmatprep.subr.mxu0 0.0
    %3661 = vmatpush1.msra.mxu0 0.0
    %3662 = vmatprep.subr.mxu0 0.0
    %3663 = vmatpush1.msra.mxu0 0.0
    %3664 = vmatprep.subr.mxu0 0.0
    %3665 = vmatpush1.msra.mxu0 0.0
    %3666 = vmatprep.mubr.f32.mxu0 0.0
    %3667 = vmatmul.mubr.f32.gmra.mrb[0].mxu0 %v686
    %v3668 = vpop.f32.mrb[0].mxu0
    %v3669 = vadd.f32 %v3600, %v3668
    %v3670 = vpop.f32.mrb[0].mxu0
    %3671 = vdwg.mxu0
    %v3672 = vmax.f32 %v3669, 0.0
    %v3677 = vrot.slane %v3508, 7
    %v3678 = vrot.slane %v3513, 7
    %v3679 = vsel %vm767, %v3677, %v3678
    %v3680 = vrot.slane %v3583, 7
    %v3681 = vrot.slane %v3588, 7
    %v3682 = vsel %vm767, %v3680, %v3681
    %v3687 = vsel %vm767, 0.0, %v3677
    %v3688 = vsel %vm767, 0.0, %v3680
    %v3689 = vrot.slane %v3508, 1
    %v3690 = vrot.slane %v3513, 1
    %v3691 = vsel %vm792, %v3689, %v3690
    %v3692 = vrot.slane %v3583, 1
    %v3693 = vrot.slane %v3588, 1
    %v3694 = vsel %vm792, %v3692, %v3693
    %v3697 = vsel %vm792, %v3690, 0.0
    %v3698 = vsel %vm792, %v3693, 0.0
    %3699 = vrot.lane.b32.xlu0 %v3508, 64
    %v3700 = vpop.permute.xlu0 %3699
    %3701 = vrot.lane.b32.xlu0 %v3513, 64
    %v3702 = vpop.permute.xlu0 %3701
    %3703 = vrot.lane.b32.xlu0 %v3583, 64
    %v3704 = vpop.permute.xlu0 %3703
    %3705 = vrot.lane.b32.xlu0 %v3588, 64
    %v3706 = vpop.permute.xlu0 %3705
    %v3711 = vsel %vm869, %v3687, %v3700
    %v3712 = vsel %vm869, %v3679, %v3702
    %v3713 = vsel %vm869, %v3688, %v3704
    %v3714 = vsel %vm869, %v3682, %v3706
    %v3715 = vld [vmem:[%s97] sm:$0xff]
    %v3716 = vld [vmem:[%s97 + $0x8] sm:$0xff]
    %v3717 = vld [vmem:[%s97 + $0x10] sm:$0xff]
    %v3718 = vld [vmem:[%s97 + $0x18] sm:$0xff]
    %v3719 = vld [vmem:[%s97 + $0x20] sm:$0xff]
    %v3720 = vld [vmem:[%s97 + $0x28] sm:$0xff]
    %v3721 = vld [vmem:[%s97 + $0x30] sm:$0xff]
    %v3722 = vld [vmem:[%s97 + $0x38] sm:$0xff]
    %v3723 = vld [vmem:[%s97 + $0x40] sm:$0xff]
    %v3724 = vld [vmem:[%s97 + $0x48] sm:$0xff]
    %v3725 = vld [vmem:[%s97 + $0x50] sm:$0xff]
    %v3726 = vld [vmem:[%s97 + $0x58] sm:$0xff]
    %v3727 = vld [vmem:[%s97 + $0x60] sm:$0xff]
    %v3728 = vld [vmem:[%s97 + $0x68] sm:$0xff]
    %v3729 = vld [vmem:[%s97 + $0x70] sm:$0xff]
    %v3730 = vld [vmem:[%s97 + $0x78] sm:$0xff]
    %v3731 = vld [vmem:[%s97 + $0x80] sm:$0xff]
    %v3732 = vld [vmem:[%s97 + $0x88] sm:$0xff]
    %v3733 = vld [vmem:[%s97 + $0x90] sm:$0xff]
    %v3734 = vld [vmem:[%s97 + $0x98] sm:$0xff]
    %v3735 = vld [vmem:[%s97 + $0xa0] sm:$0xff]
    %v3736 = vld [vmem:[%s97 + $0xa8] sm:$0xff]
    %v3737 = vld [vmem:[%s97 + $0xb0] sm:$0xff]
    %v3738 = vld [vmem:[%s97 + $0xb8] sm:$0xff]
    %v3739 = vsel %vm869, %v3691, 0
    %v3742 = vsel %vm869, %v3697, 0
    %v3744 = vsel %vm869, %v3694, 0
    %v3747 = vsel %vm869, %v3698, 0
    %3749 = vmatprep.subr.mxu0 0.0
    %3750 = vmatpush1.msra.mxu0 %v3715
    %3751 = vmatprep.subr.mxu0 0.0
    %3752 = vmatpush1.msra.mxu0 %v3716
    %3753 = vmatprep.subr.mxu0 0.0
    %3754 = vmatpush1.msra.mxu0 %v3717
    %3755 = vmatprep.subr.mxu0 0.0
    %3756 = vmatpush1.msra.mxu0 %v3718
    %3757 = vmatprep.subr.mxu0 0.0
    %3758 = vmatpush1.msra.mxu0 %v3719
    %3759 = vmatprep.subr.mxu0 0.0
    %3760 = vmatpush1.msra.mxu0 %v3720
    %3761 = vmatprep.subr.mxu0 0.0
    %3762 = vmatpush1.msra.mxu0 %v3721
    %3763 = vmatprep.subr.mxu0 0.0
    %3764 = vmatpush1.msra.mxu0 %v3722
    %3765 = vmatprep.subr.mxu0 0.0
    %3766 = vmatpush1.msra.mxu0 %v3723
    %3767 = vmatprep.subr.mxu0 0.0
    %3768 = vmatpush1.msra.mxu0 %v3724
    %3769 = vmatprep.subr.mxu0 0.0
    %3770 = vmatpush1.msra.mxu0 %v3725
    %3771 = vmatprep.subr.mxu0 0.0
    %3772 = vmatpush1.msra.mxu0 %v3726
    %3773 = vmatprep.subr.mxu0 0.0
    %3774 = vmatpush1.msra.mxu0 %v3727
    %3775 = vmatprep.subr.mxu0 0.0
    %3776 = vmatpush1.msra.mxu0 %v3728
    %3777 = vmatprep.subr.mxu0 0.0
    %3778 = vmatpush1.msra.mxu0 %v3729
    %3779 = vmatprep.subr.mxu0 0.0
    %3780 = vmatpush1.msra.mxu0 %v3730
    %3781 = vmatprep.subr.mxu0 0.0
    %3782 = vmatpush1.msra.mxu0 %v3731
    %3783 = vmatprep.subr.mxu0 0.0
    %3784 = vmatpush1.msra.mxu0 %v3732
    %3785 = vmatprep.subr.mxu0 0.0
    %3786 = vmatpush1.msra.mxu0 %v3733
    %3787 = vmatprep.subr.mxu0 0.0
    %3788 = vmatpush1.msra.mxu0 %v3734
    %3789 = vmatprep.subr.mxu0 0.0
    %3790 = vmatpush1.msra.mxu0 %v3735
    %3791 = vmatprep.subr.mxu0 0.0
    %3792 = vmatpush1.msra.mxu0 %v3736
    %3793 = vmatprep.subr.mxu0 0.0
    %3794 = vmatpush1.msra.mxu0 %v3737
    %3795 = vmatprep.subr.mxu0 0.0
    %3796 = vmatpush1.msra.mxu0 %v3738
    %3797 = vmatprep.subr.mxu0 0.0
    %3798 = vmatpush1.msra.mxu0 0.0
    %3799 = vmatprep.subr.mxu0 0.0
    %3800 = vmatpush1.msra.mxu0 0.0
    %3801 = vmatprep.subr.mxu0 0.0
    %3802 = vmatpush1.msra.mxu0 0.0
    %3803 = vmatprep.subr.mxu0 0.0
    %3804 = vmatpush1.msra.mxu0 0.0
    %3805 = vmatprep.subr.mxu0 0.0
    %3806 = vmatpush1.msra.mxu0 0.0
    %3807 = vmatprep.subr.mxu0 0.0
    %3808 = vmatpush1.msra.mxu0 0.0
    %3809 = vmatprep.subr.mxu0 0.0
    %3810 = vmatpush1.msra.mxu0 0.0
    %3811 = vmatprep.subr.mxu0 0.0
    %3812 = vmatpush1.msra.mxu0 0.0
    %3813 = vmatprep.mubr.f32.mxu0 %v3739
    %3814 = vmatmul.mubr.f32.gmra.mrb[0].mxu0 %v3711
    %v3815 = vpop.f32.mrb[0].mxu0
    %v3816 = vadd.f32 0.0, %v3815
    %v3817 = vpop.f32.mrb[0].mxu0
    %3818 = vmatprep.mubr.f32.mxu0 %v3742
    %3819 = vmatmul.mubr.f32.gmra.mrb[0].mxu0 %v3712
    %v3820 = vpop.f32.mrb[0].mxu0
    %v3821 = vadd.f32 0.0, %v3820
    %v3822 = vpop.f32.mrb[0].mxu0
    %3823 = vmatprep.mubr.f32.mxu0 %v3744
    %3824 = vmatmul.mubr.f32.gmra.mrb[0].mxu0 %v3713
    %v3825 = vpop.f32.mrb[0].mxu0
    %v3826 = vadd.f32 0.0, %v3825
    %v3827 = vpop.f32.mrb[0].mxu0
    %3828 = vmatprep.mubr.f32.mxu0 %v3747
    %3829 = vmatmul.mubr.f32.gmra.mrb[0].mxu0 %v3714
    %v3830 = vpop.f32.mrb[0].mxu0
    %v3831 = vadd.f32 0.0, %v3830
    %v3832 = vpop.f32.mrb[0].mxu0
    %3833 = vdwg.mxu0
    %v3838 = vrot.slane %v2349, 7
    %v3839 = vrot.slane %v2350, 7
    %v3840 = vsel %vm767, %v3838, %v3839
    %v3841 = vrot.slane %v2351, 7
    %v3842 = vrot.slane %v2352, 7
    %v3843 = vsel %vm767, %v3841, %v3842
    %v3848 = vsel %vm767, 0.0, %v3838
    %v3849 = vsel %vm767, 0.0, %v3841
    %v3850 = vrot.slane %v2349, 1
    %v3851 = vrot.slane %v2350, 1
    %v3852 = vsel %vm792, %v3850, %v3851
    %v3853 = vrot.slane %v2351, 1
    %v3854 = vrot.slane %v2352, 1
    %v3855 = vsel %vm792, %v3853, %v3854
    %v3858 = vsel %vm792, %v3851, 0.0
    %v3859 = vsel %vm792, %v3854, 0.0
    %3860 = vrot.lane.b32.xlu0 %v2349, 64
    %v3861 = vpop.permute.xlu0 %3860
    %3862 = vrot.lane.b32.xlu0 %v2350, 64
    %v3863 = vpop.permute.xlu0 %3862
    %3864 = vrot.lane.b32.xlu0 %v2351, 64
    %v3865 = vpop.permute.xlu0 %3864
    %3866 = vrot.lane.b32.xlu0 %v2352, 64
    %v3867 = vpop.permute.xlu0 %3866
    %v3872 = vsel %vm869, %v3848, %v3861
    %v3873 = vsel %vm869, %v3840, %v3863
    %v3874 = vsel %vm869, %v3849, %v3865
    %v3875 = vsel %vm869, %v3843, %v3867
    %v3876 = vld [vmem:[%s99] sm:$0xff]
    %v3877 = vld [vmem:[%s99 + $0x8] sm:$0xff]
    %v3878 = vld [vmem:[%s99 + $0x10] sm:$0xff]
    %v3879 = vld [vmem:[%s99 + $0x18] sm:$0xff]
    %v3880 = vld [vmem:[%s99 + $0x20] sm:$0xff]
    %v3881 = vld [vmem:[%s99 + $0x28] sm:$0xff]
    %v3882 = vld [vmem:[%s99 + $0x30] sm:$0xff]
    %v3883 = vld [vmem:[%s99 + $0x38] sm:$0xff]
    %v3884 = vld [vmem:[%s99 + $0x40] sm:$0xff]
    %v3885 = vld [vmem:[%s99 + $0x48] sm:$0xff]
    %v3886 = vld [vmem:[%s99 + $0x50] sm:$0xff]
    %v3887 = vld [vmem:[%s99 + $0x58] sm:$0xff]
    %v3888 = vld [vmem:[%s99 + $0x60] sm:$0xff]
    %v3889 = vld [vmem:[%s99 + $0x68] sm:$0xff]
    %v3890 = vld [vmem:[%s99 + $0x70] sm:$0xff]
    %v3891 = vld [vmem:[%s99 + $0x78] sm:$0xff]
    %v3892 = vld [vmem:[%s99 + $0x80] sm:$0xff]
    %v3893 = vld [vmem:[%s99 + $0x88] sm:$0xff]
    %v3894 = vld [vmem:[%s99 + $0x90] sm:$0xff]
    %v3895 = vld [vmem:[%s99 + $0x98] sm:$0xff]
    %v3896 = vld [vmem:[%s99 + $0xa0] sm:$0xff]
    %v3897 = vld [vmem:[%s99 + $0xa8] sm:$0xff]
    %v3898 = vld [vmem:[%s99 + $0xb0] sm:$0xff]
    %v3899 = vld [vmem:[%s99 + $0xb8] sm:$0xff]
    %v3900 = vsel %vm869, %v3852, 0
    %v3903 = vsel %vm869, %v3858, 0
    %v3905 = vsel %vm869, %v3855, 0
    %v3908 = vsel %vm869, %v3859, 0
    %3910 = vmatprep.subr.mxu0 0.0
    %3911 = vmatpush1.msra.mxu0 %v3876
    %3912 = vmatprep.subr.mxu0 0.0
    %3913 = vmatpush1.msra.mxu0 %v3877
    %3914 = vmatprep.subr.mxu0 0.0
    %3915 = vmatpush1.msra.mxu0 %v3878
    %3916 = vmatprep.subr.mxu0 0.0
    %3917 = vmatpush1.msra.mxu0 %v3879
    %3918 = vmatprep.subr.mxu0 0.0
    %3919 = vmatpush1.msra.mxu0 %v3880
    %3920 = vmatprep.subr.mxu0 0.0
    %3921 = vmatpush1.msra.mxu0 %v3881
    %3922 = vmatprep.subr.mxu0 0.0
    %3923 = vmatpush1.msra.mxu0 %v3882
    %3924 = vmatprep.subr.mxu0 0.0
    %3925 = vmatpush1.msra.mxu0 %v3883
    %3926 = vmatprep.subr.mxu0 0.0
    %3927 = vmatpush1.msra.mxu0 %v3884
    %3928 = vmatprep.subr.mxu0 0.0
    %3929 = vmatpush1.msra.mxu0 %v3885
    %3930 = vmatprep.subr.mxu0 0.0
    %3931 = vmatpush1.msra.mxu0 %v3886
    %3932 = vmatprep.subr.mxu0 0.0
    %3933 = vmatpush1.msra.mxu0 %v3887
    %3934 = vmatprep.subr.mxu0 0.0
    %3935 = vmatpush1.msra.mxu0 %v3888
    %3936 = vmatprep.subr.mxu0 0.0
    %3937 = vmatpush1.msra.mxu0 %v3889
    %3938 = vmatprep.subr.mxu0 0.0
    %3939 = vmatpush1.msra.mxu0 %v3890
    %3940 = vmatprep.subr.mxu0 0.0
    %3941 = vmatpush1.msra.mxu0 %v3891
    %3942 = vmatprep.subr.mxu0 0.0
    %3943 = vmatpush1.msra.mxu0 %v3892
    %3944 = vmatprep.subr.mxu0 0.0
    %3945 = vmatpush1.msra.mxu0 %v3893
    %3946 = vmatprep.subr.mxu0 0.0
    %3947 = vmatpush1.msra.mxu0 %v3894
    %3948 = vmatprep.subr.mxu0 0.0
    %3949 = vmatpush1.msra.mxu0 %v3895
    %3950 = vmatprep.subr.mxu0 0.0
    %3951 = vmatpush1.msra.mxu0 %v3896
    %3952 = vmatprep.subr.mxu0 0.0
    %3953 = vmatpush1.msra.mxu0 %v3897
    %3954 = vmatprep.subr.mxu0 0.0
    %3955 = vmatpush1.msra.mxu0 %v3898
    %3956 = vmatprep.subr.mxu0 0.0
    %3957 = vmatpush1.msra.mxu0 %v3899
    %3958 = vmatprep.subr.mxu0 0.0
    %3959 = vmatpush1.msra.mxu0 0.0
    %3960 = vmatprep.subr.mxu0 0.0
    %3961 = vmatpush1.msra.mxu0 0.0
    %3962 = vmatprep.subr.mxu0 0.0
    %3963 = vmatpush1.msra.mxu0 0.0
    %3964 = vmatprep.subr.mxu0 0.0
    %3965 = vmatpush1.msra.mxu0 0.0
    %3966 = vmatprep.subr.mxu0 0.0
    %3967 = vmatpush1.msra.mxu0 0.0
    %3968 = vmatprep.subr.mxu0 0.0
    %3969 = vmatpush1.msra.mxu0 0.0
    %3970 = vmatprep.subr.mxu0 0.0
    %3971 = vmatpush1.msra.mxu0 0.0
    %3972 = vmatprep.subr.mxu0 0.0
    %3973 = vmatpush1.msra.mxu0 0.0
    %3974 = vmatprep.mubr.f32.mxu0 %v3900
    %3975 = vmatmul.mubr.f32.gmra.mrb[0].mxu0 %v3872
    %v3976 = vpop.f32.mrb[0].mxu0
    %v3977 = vadd.f32 0.0, %v3976
    %v3978 = vpop.f32.mrb[0].mxu0
    %3979 = vmatprep.mubr.f32.mxu0 %v3903
    %3980 = vmatmul.mubr.f32.gmra.mrb[0].mxu0 %v3873
    %v3981 = vpop.f32.mrb[0].mxu0
    %v3982 = vadd.f32 0.0, %v3981
    %v3983 = vpop.f32.mrb[0].mxu0
    %3984 = vmatprep.mubr.f32.mxu0 %v3905
    %3985 = vmatmul.mubr.f32.gmra.mrb[0].mxu0 %v3874
    %v3986 = vpop.f32.mrb[0].mxu0
    %v3987 = vadd.f32 0.0, %v3986
    %v3988 = vpop.f32.mrb[0].mxu0
    %3989 = vmatprep.mubr.f32.mxu0 %v3908
    %3990 = vmatmul.mubr.f32.gmra.mrb[0].mxu0 %v3875
    %v3991 = vpop.f32.mrb[0].mxu0
    %v3992 = vadd.f32 0.0, %v3991
    %v3993 = vpop.f32.mrb[0].mxu0
    %3994 = vdwg.mxu0
    %v3995 = vadd.f32 %v3816, %v3977
    %v3996 = vadd.f32 %v3821, %v3982
    %v3997 = vadd.f32 %v3826, %v3987
    %v3998 = vadd.f32 %v3831, %v3992
    %v3999 = vsel %vm522, %v3995, 0.0
    %v4000 = vsel %vm522, %v3996, 0.0
    %v4001 = vadd.f32 %v3999, %v4000
    %v4002 = vsel %vm522, %v3997, 0.0
    %v4003 = vadd.f32 %v4001, %v4002
    %v4004 = vsel %vm522, %v3998, 0.0
    %v4005 = vadd.f32 %v4003, %v4004
    %v4006 = vrot.slane %v4005, 4
    %v4007 = vadd.f32 %v4005, %v4006
    %v4008 = vrot.slane %v4007, 2
    %v4009 = vadd.f32 %v4007, %v4008
    %v4010 = vrot.slane %v4009, 1
    %v4011 = vadd.f32 %v4009, %v4010
    %v4012 = vmul.f32 %v3995, %v3995
    %v4013 = vmul.f32 %v3996, %v3996
    %v4014 = vmul.f32 %v3997, %v3997
    %v4015 = vmul.f32 %v3998, %v3998
    %v4016 = vsel %vm522, %v4012, 0.0
    %v4017 = vsel %vm522, %v4013, 0.0
    %v4018 = vadd.f32 %v4016, %v4017
    %v4019 = vsel %vm522, %v4014, 0.0
    %v4020 = vadd.f32 %v4018, %v4019
    %v4021 = vsel %vm522, %v4015, 0.0
    %v4022 = vadd.f32 %v4020, %v4021
    %v4023 = vrot.slane %v4022, 4
    %v4024 = vadd.f32 %v4022, %v4023
    %v4025 = vrot.slane %v4024, 2
    %v4026 = vadd.f32 %v4024, %v4025
    %v4027 = vrot.slane %v4026, 1
    %v4028 = vadd.f32 %v4026, %v4027
    %v4029 = vmul.f32 %v4011, 0.03125
    %v4030 = vmul.f32 %v4028, 0.03125
    %v4031 = vmul.f32 %v4029, %v4029
    %v4032 = vsub.f32 %v4030, %v4031
    %v4033 = vmax.f32 %v4032, 0.0
    %v4034 = vadd.f32 %v4033, 1e-05
    %v4035 = vrsqrt.pop %v4034
    %v4036 = vld [vmem:[#allocation12] sm:$0x1]
    %v4037 = vmul.f32 %v4035, %v4036
    %v4038 = vld [vmem:[#allocation11] sm:$0x1]
    %v4039 = vmul.f32 %v4029, %v4037
    %v4040 = vsub.f32 %v4038, %v4039
    %v4041 = vlaneseq
    %v4042 = vshrl.u32 %v4041, 7
    %v4043 = vsub.s32 0, %v4042
    %v4044 = vrot.slane %v4037, %v4043
    %v4045 = vmul.f32 %v3995, %v4044
    %v4046 = vmul.f32 %v3996, %v4044
    %v4047 = vmul.f32 %v3997, %v4044
    %v4048 = vmul.f32 %v3998, %v4044
    %v4051 = vunpack.c.l.s4 1966171168
    %v4052 = vunpack.c.0.s8 %v4051
    %v4053 = vlaneseq
    %v4054 = vshrl.u32 %v4053, 7
    %v4055 = vsub.s32 %v4052, %v4054
    %v4056 = vrot.slane %v3672, %v4055
    %v4057 = vcombine.high %v4056, %v4056
    %v4059 = vunpack.c.l.s4 1966171168
    %v4060 = vunpack.c.0.s8 %v4059
    %v4061 = vlaneseq
    %v4062 = vshrl.u32 %v4061, 7
    %v4063 = vsub.s32 %v4060, %v4062
    %v4064 = vrot.slane %v4056, %v4063
    %v4066 = vunpack.c.l.s4 1966171168
    %v4067 = vunpack.c.0.s8 %v4066
    %v4068 = vlaneseq
    %v4069 = vshrl.u32 %v4068, 7
    %v4070 = vsub.s32 %v4067, %v4069
    %v4071 = vrot.slane %v4057, %v4070
    %v4074 = vadd.f32 %v4040, %v4064
    %v4075 = vadd.f32 %v4040, %v4071
    %v4078 = vlaneseq
    %v4079 = vshrl.u32 %v4078, 7
    %v4080 = vsub.s32 0, %v4079
    %v4081 = vrot.slane %v4074, %v4080
    %v4082 = vlaneseq
    %v4083 = vshrl.u32 %v4082, 7
    %v4084 = vsub.s32 0, %v4083
    %v4085 = vrot.slane %v4075, %v4084
    %v4088 = vadd.f32 %v4045, %v4081
    %v4089 = vadd.f32 %v4046, %v4081
    %v4090 = vadd.f32 %v4047, %v4085
    %v4091 = vadd.f32 %v4048, %v4085
    %v4092 = vmax.f32 %v4088, 0.0
    %v4093 = vmax.f32 %v4089, 0.0
    %v4094 = vmax.f32 %v4090, 0.0
    %v4095 = vmax.f32 %v4091, 0.0
    %v4100 = vrot.slane %v4092, 7
    %v4101 = vrot.slane %v4093, 7
    %v4102 = vsel %vm767, %v4100, %v4101
    %v4103 = vrot.slane %v4094, 7
    %v4104 = vrot.slane %v4095, 7
    %v4105 = vsel %vm767, %v4103, %v4104
    %v4110 = vsel %vm767, 0.0, %v4100
    %v4111 = vsel %vm767, 0.0, %v4103
    %v4112 = vrot.slane %v4092, 1
    %v4113 = vrot.slane %v4093, 1
    %v4114 = vsel %vm792, %v4112, %v4113
    %v4115 = vrot.slane %v4094, 1
    %v4116 = vrot.slane %v4095, 1
    %v4117 = vsel %vm792, %v4115, %v4116
    %v4120 = vsel %vm792, %v4113, 0.0
    %v4121 = vsel %vm792, %v4116, 0.0
    %4122 = vrot.lane.b32.xlu0 %v4092, 32
    %v4123 = vpop.permute.xlu0 %4122
    %4124 = vrot.lane.b32.xlu0 %v4093, 32
    %v4125 = vpop.permute.xlu0 %4124
    %4126 = vrot.lane.b32.xlu0 %v4094, 32
    %v4127 = vpop.permute.xlu0 %4126
    %4128 = vrot.lane.b32.xlu0 %v4095, 32
    %v4129 = vpop.permute.xlu0 %4128
    %4136 = vrot.lane.b32.xlu0 %v4114, 64
    %v4137 = vpop.permute.xlu0 %4136
    %4138 = vrot.lane.b32.xlu0 %v4120, 64
    %v4139 = vpop.permute.xlu0 %4138
    %4140 = vrot.lane.b32.xlu0 %v4117, 64
    %v4141 = vpop.permute.xlu0 %4140
    %4142 = vrot.lane.b32.xlu0 %v4121, 64
    %v4143 = vpop.permute.xlu0 %4142
    %v4148 = vsel %vm522, %v4110, %v4123
    %v4149 = vsel %vm522, %v4102, %v4125
    %v4150 = vsel %vm522, %v4111, %v4127
    %v4151 = vsel %vm522, %v4105, %v4129
    %v4152 = vsel %vm869, %v4148, %v4137
    %v4153 = vsel %vm869, %v4149, %v4139
    %v4154 = vsel %vm869, %v4150, %v4141
    %v4155 = vsel %vm869, %v4151, %v4143
    %v4156 = vld [vmem:[%s101] sm:$0xff]
    %v4157 = vld [vmem:[%s101 + $0x8] sm:$0xff]
    %v4158 = vld [vmem:[%s101 + $0x10] sm:$0xff]
    %v4159 = vld [vmem:[%s101 + $0x18] sm:$0xff]
    %v4160 = vld [vmem:[%s101 + $0x20] sm:$0xff]
    %v4161 = vld [vmem:[%s101 + $0x28] sm:$0xff]
    %v4162 = vld [vmem:[%s101 + $0x30] sm:$0xff]
    %v4163 = vld [vmem:[%s101 + $0x38] sm:$0xff]
    %v4164 = vld [vmem:[%s101 + $0x40] sm:$0xff]
    %v4165 = vld [vmem:[%s101 + $0x48] sm:$0xff]
    %v4166 = vld [vmem:[%s101 + $0x50] sm:$0xff]
    %v4167 = vld [vmem:[%s101 + $0x58] sm:$0xff]
    %v4169 = vsel %vm890, %v4152, 0
    %v4172 = vsel %vm890, %v4153, 0
    %v4175 = vsel %vm890, %v4154, 0
    %v4178 = vsel %vm890, %v4155, 0
    %4180 = vmatprep.subr.mxu0 0.0
    %4181 = vmatpush1.msra.mxu0 %v4156
    %4182 = vmatprep.subr.mxu0 0.0
    %4183 = vmatpush1.msra.mxu0 %v4157
    %4184 = vmatprep.subr.mxu0 0.0
    %4185 = vmatpush1.msra.mxu0 %v4158
    %4186 = vmatprep.subr.mxu0 0.0
    %4187 = vmatpush1.msra.mxu0 %v4159
    %4188 = vmatprep.subr.mxu0 0.0
    %4189 = vmatpush1.msra.mxu0 %v4160
    %4190 = vmatprep.subr.mxu0 0.0
    %4191 = vmatpush1.msra.mxu0 %v4161
    %4192 = vmatprep.subr.mxu0 0.0
    %4193 = vmatpush1.msra.mxu0 %v4162
    %4194 = vmatprep.subr.mxu0 0.0
    %4195 = vmatpush1.msra.mxu0 %v4163
    %4196 = vmatprep.subr.mxu0 0.0
    %4197 = vmatpush1.msra.mxu0 %v4164
    %4198 = vmatprep.subr.mxu0 0.0
    %4199 = vmatpush1.msra.mxu0 %v4165
    %4200 = vmatprep.subr.mxu0 0.0
    %4201 = vmatpush1.msra.mxu0 %v4166
    %4202 = vmatprep.subr.mxu0 0.0
    %4203 = vmatpush1.msra.mxu0 %v4167
    %4204 = vmatprep.subr.mxu0 0.0
    %4205 = vmatpush1.msra.mxu0 0.0
    %4206 = vmatprep.subr.mxu0 0.0
    %4207 = vmatpush1.msra.mxu0 0.0
    %4208 = vmatprep.subr.mxu0 0.0
    %4209 = vmatpush1.msra.mxu0 0.0
    %4210 = vmatprep.subr.mxu0 0.0
    %4211 = vmatpush1.msra.mxu0 0.0
    %4212 = vmatprep.subr.mxu0 0.0
    %4213 = vmatpush1.msra.mxu0 0.0
    %4214 = vmatprep.subr.mxu0 0.0
    %4215 = vmatpush1.msra.mxu0 0.0
    %4216 = vmatprep.subr.mxu0 0.0
    %4217 = vmatpush1.msra.mxu0 0.0
    %4218 = vmatprep.subr.mxu0 0.0
    %4219 = vmatpush1.msra.mxu0 0.0
    %4220 = vmatprep.subr.mxu0 0.0
    %4221 = vmatpush1.msra.mxu0 0.0
    %4222 = vmatprep.subr.mxu0 0.0
    %4223 = vmatpush1.msra.mxu0 0.0
    %4224 = vmatprep.subr.mxu0 0.0
    %4225 = vmatpush1.msra.mxu0 0.0
    %4226 = vmatprep.subr.mxu0 0.0
    %4227 = vmatpush1.msra.mxu0 0.0
    %4228 = vmatprep.subr.mxu0 0.0
    %4229 = vmatpush1.msra.mxu0 0.0
    %4230 = vmatprep.subr.mxu0 0.0
    %4231 = vmatpush1.msra.mxu0 0.0
    %4232 = vmatprep.subr.mxu0 0.0
    %4233 = vmatpush1.msra.mxu0 0.0
    %4234 = vmatprep.subr.mxu0 0.0
    %4235 = vmatpush1.msra.mxu0 0.0
    %4236 = vmatprep.subr.mxu0 0.0
    %4237 = vmatpush1.msra.mxu0 0.0
    %4238 = vmatprep.subr.mxu0 0.0
    %4239 = vmatpush1.msra.mxu0 0.0
    %4240 = vmatprep.subr.mxu0 0.0
    %4241 = vmatpush1.msra.mxu0 0.0
    %4242 = vmatprep.subr.mxu0 0.0
    %4243 = vmatpush1.msra.mxu0 0.0
    %4244 = vmatprep.mubr.f32.mxu0 0.0
    %4245 = vmatmul.mubr.f32.gmra.mrb[0].mxu0 %v4169
    %v4246 = vpop.f32.mrb[0].mxu0
    %v4247 = vadd.f32 0.0, %v4246
    %v4248 = vpop.f32.mrb[0].mxu0
    %4249 = vmatprep.mubr.f32.mxu0 0.0
    %4250 = vmatmul.mubr.f32.gmra.mrb[0].mxu0 %v4172
    %v4251 = vpop.f32.mrb[0].mxu0
    %v4252 = vadd.f32 0.0, %v4251
    %v4253 = vpop.f32.mrb[0].mxu0
    %4254 = vmatprep.mubr.f32.mxu0 0.0
    %4255 = vmatmul.mubr.f32.gmra.mrb[0].mxu0 %v4175
    %v4256 = vpop.f32.mrb[0].mxu0
    %v4257 = vadd.f32 0.0, %v4256
    %v4258 = vpop.f32.mrb[0].mxu0
    %4259 = vmatprep.mubr.f32.mxu0 0.0
    %4260 = vmatmul.mubr.f32.gmra.mrb[0].mxu0 %v4178
    %v4261 = vpop.f32.mrb[0].mxu0
    %v4262 = vadd.f32 0.0, %v4261
    %v4263 = vpop.f32.mrb[0].mxu0
    %4264 = vdwg.mxu0
    %v4265 = vsel %vm522, %v4247, 0.0
    %v4266 = vsel %vm522, %v4252, 0.0
    %v4267 = vadd.f32 %v4265, %v4266
    %v4268 = vsel %vm522, %v4257, 0.0
    %v4269 = vadd.f32 %v4267, %v4268
    %v4270 = vsel %vm522, %v4262, 0.0
    %v4271 = vadd.f32 %v4269, %v4270
    %v4272 = vrot.slane %v4271, 4
    %v4273 = vadd.f32 %v4271, %v4272
    %v4274 = vrot.slane %v4273, 2
    %v4275 = vadd.f32 %v4273, %v4274
    %v4276 = vrot.slane %v4275, 1
    %v4277 = vadd.f32 %v4275, %v4276
    %v4278 = vmul.f32 %v4247, %v4247
    %v4279 = vmul.f32 %v4252, %v4252
    %v4280 = vmul.f32 %v4257, %v4257
    %v4281 = vmul.f32 %v4262, %v4262
    %v4282 = vsel %vm522, %v4278, 0.0
    %v4283 = vsel %vm522, %v4279, 0.0
    %v4284 = vadd.f32 %v4282, %v4283
    %v4285 = vsel %vm522, %v4280, 0.0
    %v4286 = vadd.f32 %v4284, %v4285
    %v4287 = vsel %vm522, %v4281, 0.0
    %v4288 = vadd.f32 %v4286, %v4287
    %v4289 = vrot.slane %v4288, 4
    %v4290 = vadd.f32 %v4288, %v4289
    %v4291 = vrot.slane %v4290, 2
    %v4292 = vadd.f32 %v4290, %v4291
    %v4293 = vrot.slane %v4292, 1
    %v4294 = vadd.f32 %v4292, %v4293
    %v4295 = vmul.f32 %v4277, 0.03125
    %v4296 = vmul.f32 %v4294, 0.03125
    %v4297 = vmul.f32 %v4295, %v4295
    %v4298 = vsub.f32 %v4296, %v4297
    %v4299 = vmax.f32 %v4298, 0.0
    %v4300 = vadd.f32 %v4299, 1e-05
    %v4301 = vrsqrt.pop %v4300
    %v4302 = vld [vmem:[#allocation15] sm:$0x1]
    %v4303 = vmul.f32 %v4301, %v4302
    %v4304 = vld [vmem:[#allocation14] sm:$0x1]
    %v4305 = vmul.f32 %v4295, %v4303
    %v4306 = vsub.f32 %v4304, %v4305
    %v4307 = vlaneseq
    %v4308 = vshrl.u32 %v4307, 7
    %v4309 = vsub.s32 0, %v4308
    %v4310 = vrot.slane %v4303, %v4309
    %v4311 = vmul.f32 %v4247, %v4310
    %v4312 = vmul.f32 %v4252, %v4310
    %v4313 = vmul.f32 %v4257, %v4310
    %v4314 = vmul.f32 %v4262, %v4310
    %v4316 = vlaneseq
    %v4317 = vshrl.u32 %v4316, 7
    %v4318 = vsub.s32 0, %v4317
    %v4319 = vrot.slane %v4306, %v4318
    %v4321 = vadd.f32 %v4311, %v4319
    %v4322 = vadd.f32 %v4312, %v4319
    %v4323 = vadd.f32 %v4313, %v4319
    %v4324 = vadd.f32 %v4314, %v4319
    %v4325 = vmax.f32 %v4321, 0.0
    %v4326 = vmax.f32 %v4322, 0.0
    %v4327 = vmax.f32 %v4323, 0.0
    %v4328 = vmax.f32 %v4324, 0.0
    %v4329 = vld [vmem:[#allocation17] sm:$0x1]
    %v4330 = vld [vmem:[%s105] sm:$0xff]
    %v4331 = vld [vmem:[%s105 + $0x8] sm:$0xff]
    %v4332 = vld [vmem:[%s105 + $0x10] sm:$0xff]
    %v4333 = vld [vmem:[%s105 + $0x18] sm:$0xff]
    %v4334 = vld [vmem:[%s105 + $0x20] sm:$0xff]
    %v4335 = vld [vmem:[%s105 + $0x28] sm:$0xff]
    %v4336 = vld [vmem:[%s105 + $0x30] sm:$0xff]
    %v4337 = vld [vmem:[%s105 + $0x38] sm:$0xff]
    %v4338 = vsel %vm869, %v3508, 0
    %v4340 = vsel %vm869, %v3513, 0
    %v4342 = vsel %vm869, %v3583, 0
    %v4344 = vsel %vm869, %v3588, 0
    %4346 = vmatprep.subr.mxu0 0.0
    %4347 = vmatpush1.msra.mxu0 %v4330
    %4348 = vmatprep.subr.mxu0 0.0
    %4349 = vmatpush1.msra.mxu0 %v4331
    %4350 = vmatprep.subr.mxu0 0.0
    %4351 = vmatpush1.msra.mxu0 %v4332
    %4352 = vmatprep.subr.mxu0 0.0
    %4353 = vmatpush1.msra.mxu0 %v4333
    %4354 = vmatprep.subr.mxu0 0.0
    %4355 = vmatpush1.msra.mxu0 %v4334
    %4356 = vmatprep.subr.mxu0 0.0
    %4357 = vmatpush1.msra.mxu0 %v4335
    %4358 = vmatprep.subr.mxu0 0.0
    %4359 = vmatpush1.msra.mxu0 %v4336
    %4360 = vmatprep.subr.mxu0 0.0
    %4361 = vmatpush1.msra.mxu0 %v4337
    %4362 = vmatprep.subr.mxu0 0.0
    %4363 = vmatpush1.msra.mxu0 0.0
    %4364 = vmatprep.subr.mxu0 0.0
    %4365 = vmatpush1.msra.mxu0 0.0
    %4366 = vmatprep.subr.mxu0 0.0
    %4367 = vmatpush1.msra.mxu0 0.0
    %4368 = vmatprep.subr.mxu0 0.0
    %4369 = vmatpush1.msra.mxu0 0.0
    %4370 = vmatprep.subr.mxu0 0.0
    %4371 = vmatpush1.msra.mxu0 0.0
    %4372 = vmatprep.subr.mxu0 0.0
    %4373 = vmatpush1.msra.mxu0 0.0
    %4374 = vmatprep.subr.mxu0 0.0
    %4375 = vmatpush1.msra.mxu0 0.0
    %4376 = vmatprep.subr.mxu0 0.0
    %4377 = vmatpush1.msra.mxu0 0.0
    %4378 = vmatprep.subr.mxu0 0.0
    %4379 = vmatpush1.msra.mxu0 0.0
    %4380 = vmatprep.subr.mxu0 0.0
    %4381 = vmatpush1.msra.mxu0 0.0
    %4382 = vmatprep.subr.mxu0 0.0
    %4383 = vmatpush1.msra.mxu0 0.0
    %4384 = vmatprep.subr.mxu0 0.0
    %4385 = vmatpush1.msra.mxu0 0.0
    %4386 = vmatprep.subr.mxu0 0.0
    %4387 = vmatpush1.msra.mxu0 0.0
    %4388 = vmatprep.subr.mxu0 0.0
    %4389 = vmatpush1.msra.mxu0 0.0
    %4390 = vmatprep.subr.mxu0 0.0
    %4391 = vmatpush1.msra.mxu0 0.0
    %4392 = vmatprep.subr.mxu0 0.0
    %4393 = vmatpush1.msra.mxu0 0.0
    %4394 = vmatprep.subr.mxu0 0.0
    %4395 = vmatpush1.msra.mxu0 0.0
    %4396 = vmatprep.subr.mxu0 0.0
    %4397 = vmatpush1.msra.mxu0 0.0
    %4398 = vmatprep.subr.mxu0 0.0
    %4399 = vmatpush1.msra.mxu0 0.0
    %4400 = vmatprep.subr.mxu0 0.0
    %4401 = vmatpush1.msra.mxu0 0.0
    %4402 = vmatprep.subr.mxu0 0.0
    %4403 = vmatpush1.msra.mxu0 0.0
    %4404 = vmatprep.subr.mxu0 0.0
    %4405 = vmatpush1.msra.mxu0 0.0
    %4406 = vmatprep.subr.mxu0 0.0
    %4407 = vmatpush1.msra.mxu0 0.0
    %4408 = vmatprep.subr.mxu0 0.0
    %4409 = vmatpush1.msra.mxu0 0.0
    %4410 = vmatprep.mubr.f32.mxu0 0.0
    %4411 = vmatmul.mubr.f32.gmra.mrb[0].mxu0 %v4338
    %v4412 = vpop.f32.mrb[0].mxu0
    %v4413 = vadd.f32 0.0, %v4412
    %v4414 = vpop.f32.mrb[0].mxu0
    %4415 = vmatprep.mubr.f32.mxu0 0.0
    %4416 = vmatmul.mubr.f32.gmra.mrb[0].mxu0 %v4340
    %v4417 = vpop.f32.mrb[0].mxu0
    %v4418 = vadd.f32 0.0, %v4417
    %v4419 = vpop.f32.mrb[0].mxu0
    %4420 = vmatprep.mubr.f32.mxu0 0.0
    %4421 = vmatmul.mubr.f32.gmra.mrb[0].mxu0 %v4342
    %v4422 = vpop.f32.mrb[0].mxu0
    %v4423 = vadd.f32 0.0, %v4422
    %v4424 = vpop.f32.mrb[0].mxu0
    %4425 = vmatprep.mubr.f32.mxu0 0.0
    %4426 = vmatmul.mubr.f32.gmra.mrb[0].mxu0 %v4344
    %v4427 = vpop.f32.mrb[0].mxu0
    %v4428 = vadd.f32 0.0, %v4427
    %v4429 = vpop.f32.mrb[0].mxu0
    %4430 = vdwg.mxu0
    %v4432 = vlaneseq
    %v4433 = vshrl.u32 %v4432, 7
    %v4434 = vsub.s32 0, %v4433
    %v4435 = vrot.slane %v4329, %v4434
    %v4437 = vadd.f32 %v4435, %v4413
    %v4438 = vadd.f32 %v4435, %v4418
    %v4439 = vadd.f32 %v4435, %v4423
    %v4440 = vadd.f32 %v4435, %v4428
    %v4441 = vld [vmem:[%s107] sm:$0xff]
    %v4442 = vld [vmem:[%s107 + $0x8] sm:$0xff]
    %v4443 = vld [vmem:[%s107 + $0x10] sm:$0xff]
    %v4444 = vld [vmem:[%s107 + $0x18] sm:$0xff]
    %v4445 = vld [vmem:[%s107 + $0x20] sm:$0xff]
    %v4446 = vld [vmem:[%s107 + $0x28] sm:$0xff]
    %v4447 = vld [vmem:[%s107 + $0x30] sm:$0xff]
    %v4448 = vld [vmem:[%s107 + $0x38] sm:$0xff]
    %v4449 = vsel %vm869, %v2349, 0
    %v4451 = vsel %vm869, %v2350, 0
    %v4453 = vsel %vm869, %v2351, 0
    %v4455 = vsel %vm869, %v2352, 0
    %4457 = vmatprep.subr.mxu0 0.0
    %4458 = vmatpush1.msra.mxu0 %v4441
    %4459 = vmatprep.subr.mxu0 0.0
    %4460 = vmatpush1.msra.mxu0 %v4442
    %4461 = vmatprep.subr.mxu0 0.0
    %4462 = vmatpush1.msra.mxu0 %v4443
    %4463 = vmatprep.subr.mxu0 0.0
    %4464 = vmatpush1.msra.mxu0 %v4444
    %4465 = vmatprep.subr.mxu0 0.0
    %4466 = vmatpush1.msra.mxu0 %v4445
    %4467 = vmatprep.subr.mxu0 0.0
    %4468 = vmatpush1.msra.mxu0 %v4446
    %4469 = vmatprep.subr.mxu0 0.0
    %4470 = vmatpush1.msra.mxu0 %v4447
    %4471 = vmatprep.subr.mxu0 0.0
    %4472 = vmatpush1.msra.mxu0 %v4448
    %4473 = vmatprep.subr.mxu0 0.0
    %4474 = vmatpush1.msra.mxu0 0.0
    %4475 = vmatprep.subr.mxu0 0.0
    %4476 = vmatpush1.msra.mxu0 0.0
    %4477 = vmatprep.subr.mxu0 0.0
    %4478 = vmatpush1.msra.mxu0 0.0
    %4479 = vmatprep.subr.mxu0 0.0
    %4480 = vmatpush1.msra.mxu0 0.0
    %4481 = vmatprep.subr.mxu0 0.0
    %4482 = vmatpush1.msra.mxu0 0.0
    %4483 = vmatprep.subr.mxu0 0.0
    %4484 = vmatpush1.msra.mxu0 0.0
    %4485 = vmatprep.subr.mxu0 0.0
    %4486 = vmatpush1.msra.mxu0 0.0
    %4487 = vmatprep.subr.mxu0 0.0
    %4488 = vmatpush1.msra.mxu0 0.0
    %4489 = vmatprep.subr.mxu0 0.0
    %4490 = vmatpush1.msra.mxu0 0.0
    %4491 = vmatprep.subr.mxu0 0.0
    %4492 = vmatpush1.msra.mxu0 0.0
    %4493 = vmatprep.subr.mxu0 0.0
    %4494 = vmatpush1.msra.mxu0 0.0
    %4495 = vmatprep.subr.mxu0 0.0
    %4496 = vmatpush1.msra.mxu0 0.0
    %4497 = vmatprep.subr.mxu0 0.0
    %4498 = vmatpush1.msra.mxu0 0.0
    %4499 = vmatprep.subr.mxu0 0.0
    %4500 = vmatpush1.msra.mxu0 0.0
    %4501 = vmatprep.subr.mxu0 0.0
    %4502 = vmatpush1.msra.mxu0 0.0
    %4503 = vmatprep.subr.mxu0 0.0
    %4504 = vmatpush1.msra.mxu0 0.0
    %4505 = vmatprep.subr.mxu0 0.0
    %4506 = vmatpush1.msra.mxu0 0.0
    %4507 = vmatprep.subr.mxu0 0.0
    %4508 = vmatpush1.msra.mxu0 0.0
    %4509 = vmatprep.subr.mxu0 0.0
    %4510 = vmatpush1.msra.mxu0 0.0
    %4511 = vmatprep.subr.mxu0 0.0
    %4512 = vmatpush1.msra.mxu0 0.0
    %4513 = vmatprep.subr.mxu0 0.0
    %4514 = vmatpush1.msra.mxu0 0.0
    %4515 = vmatprep.subr.mxu0 0.0
    %4516 = vmatpush1.msra.mxu0 0.0
    %4517 = vmatprep.subr.mxu0 0.0
    %4518 = vmatpush1.msra.mxu0 0.0
    %4519 = vmatprep.subr.mxu0 0.0
    %4520 = vmatpush1.msra.mxu0 0.0
    %4521 = vmatprep.mubr.f32.mxu0 0.0
    %4522 = vmatmul.mubr.f32.gmra.mrb[0].mxu0 %v4449
    %v4523 = vpop.f32.mrb[0].mxu0
    %v4524 = vadd.f32 0.0, %v4523
    %v4525 = vpop.f32.mrb[0].mxu0
    %4526 = vmatprep.mubr.f32.mxu0 0.0
    %4527 = vmatmul.mubr.f32.gmra.mrb[0].mxu0 %v4451
    %v4528 = vpop.f32.mrb[0].mxu0
    %v4529 = vadd.f32 0.0, %v4528
    %v4530 = vpop.f32.mrb[0].mxu0
    %4531 = vmatprep.mubr.f32.mxu0 0.0
    %4532 = vmatmul.mubr.f32.gmra.mrb[0].mxu0 %v4453
    %v4533 = vpop.f32.mrb[0].mxu0
    %v4534 = vadd.f32 0.0, %v4533
    %v4535 = vpop.f32.mrb[0].mxu0
    %4536 = vmatprep.mubr.f32.mxu0 0.0
    %4537 = vmatmul.mubr.f32.gmra.mrb[0].mxu0 %v4455
    %v4538 = vpop.f32.mrb[0].mxu0
    %v4539 = vadd.f32 0.0, %v4538
    %v4540 = vpop.f32.mrb[0].mxu0
    %4541 = vdwg.mxu0
    %v4542 = vadd.f32 %v4437, %v4524
    %v4543 = vadd.f32 %v4438, %v4529
    %v4544 = vadd.f32 %v4439, %v4534
    %v4545 = vadd.f32 %v4440, %v4539
    %v4546 = vadd.f32 %v4325, %v4542
    %v4547 = vadd.f32 %v4326, %v4543
    %v4548 = vadd.f32 %v4327, %v4544
    %v4549 = vadd.f32 %v4328, %v4545
    %v4550 = vld [vmem:[%s141] sm:$0xff]
    %v4551 = vld [vmem:[%s141 + $0x8] sm:$0xff]
    %v4552 = vld [vmem:[%s141 + $0x10] sm:$0xff]
    %v4553 = vld [vmem:[%s141 + $0x18] sm:$0xff]
    %v4555 = vsel %vm2354, %v4550, 0
    %v4558 = vsel %vm2354, %v4551, 0
    %v4561 = vsel %vm2354, %v4552, 0
    %v4564 = vsel %vm2354, %v4553, 0
    %4566 = vmatprep.subr.mxu0 0.0
    %4567 = vmatpush1.msra.mxu0 %v4546
    %4568 = vmatprep.subr.mxu0 0.0
    %4569 = vmatpush1.msra.mxu0 %v4547
    %4570 = vmatprep.subr.mxu0 0.0
    %4571 = vmatpush1.msra.mxu0 0.0
    %4572 = vmatprep.subr.mxu0 0.0
    %4573 = vmatpush1.msra.mxu0 0.0
    %4574 = vmatprep.subr.mxu0 0.0
    %4575 = vmatpush1.msra.mxu0 0.0
    %4576 = vmatprep.subr.mxu0 0.0
    %4577 = vmatpush1.msra.mxu0 0.0
    %4578 = vmatprep.subr.mxu0 0.0
    %4579 = vmatpush1.msra.mxu0 0.0
    %4580 = vmatprep.subr.mxu0 0.0
    %4581 = vmatpush1.msra.mxu0 0.0
    %4582 = vmatprep.subr.mxu0 0.0
    %4583 = vmatpush1.msra.mxu0 0.0
    %4584 = vmatprep.subr.mxu0 0.0
    %4585 = vmatpush1.msra.mxu0 0.0
    %4586 = vmatprep.subr.mxu0 0.0
    %4587 = vmatpush1.msra.mxu0 0.0
    %4588 = vmatprep.subr.mxu0 0.0
    %4589 = vmatpush1.msra.mxu0 0.0
    %4590 = vmatprep.subr.mxu0 0.0
    %4591 = vmatpush1.msra.mxu0 0.0
    %4592 = vmatprep.subr.mxu0 0.0
    %4593 = vmatpush1.msra.mxu0 0.0
    %4594 = vmatprep.subr.mxu0 0.0
    %4595 = vmatpush1.msra.mxu0 0.0
    %4596 = vmatprep.subr.mxu0 0.0
    %4597 = vmatpush1.msra.mxu0 0.0
    %4598 = vmatprep.subr.mxu0 0.0
    %4599 = vmatpush1.msra.mxu0 0.0
    %4600 = vmatprep.subr.mxu0 0.0
    %4601 = vmatpush1.msra.mxu0 0.0
    %4602 = vmatprep.subr.mxu0 0.0
    %4603 = vmatpush1.msra.mxu0 0.0
    %4604 = vmatprep.subr.mxu0 0.0
    %4605 = vmatpush1.msra.mxu0 0.0
    %4606 = vmatprep.subr.mxu0 0.0
    %4607 = vmatpush1.msra.mxu0 0.0
    %4608 = vmatprep.subr.mxu0 0.0
    %4609 = vmatpush1.msra.mxu0 0.0
    %4610 = vmatprep.subr.mxu0 0.0
    %4611 = vmatpush1.msra.mxu0 0.0
    %4612 = vmatprep.subr.mxu0 0.0
    %4613 = vmatpush1.msra.mxu0 0.0
    %4614 = vmatprep.subr.mxu0 0.0
    %4615 = vmatpush1.msra.mxu0 0.0
    %4616 = vmatprep.subr.mxu0 0.0
    %4617 = vmatpush1.msra.mxu0 0.0
    %4618 = vmatprep.subr.mxu0 0.0
    %4619 = vmatpush1.msra.mxu0 0.0
    %4620 = vmatprep.subr.mxu0 0.0
    %4621 = vmatpush1.msra.mxu0 0.0
    %4622 = vmatprep.subr.mxu0 0.0
    %4623 = vmatpush1.msra.mxu0 0.0
    %4624 = vmatprep.subr.mxu0 0.0
    %4625 = vmatpush1.msra.mxu0 0.0
    %4626 = vmatprep.subr.mxu0 0.0
    %4627 = vmatpush1.msra.mxu0 0.0
    %4628 = vmatprep.subr.mxu0 0.0
    %4629 = vmatpush1.msra.mxu0 0.0
    %4630 = vmatprep.mubr.f32.mxu0 0.0
    %4631 = vmatmul.mubr.f32.gmra.mrb[0].mxu0 %v4555
    %v4632 = vpop.f32.mrb[0].mxu0
    %v4633 = vadd.f32 0.0, %v4632
    %v4634 = vpop.f32.mrb[0].mxu0
    %4635 = vmatprep.mubr.f32.mxu0 0.0
    %4636 = vmatmul.mubr.f32.gmra.mrb[0].mxu0 %v4558
    %v4637 = vpop.f32.mrb[0].mxu0
    %v4638 = vadd.f32 0.0, %v4637
    %v4639 = vpop.f32.mrb[0].mxu0
    %4640 = vmatprep.mubr.f32.mxu0 0.0
    %4641 = vmatmul.mubr.f32.gmra.mrb[0].mxu0 %v4561
    %v4642 = vpop.f32.mrb[0].mxu0
    %v4643 = vadd.f32 0.0, %v4642
    %v4644 = vpop.f32.mrb[0].mxu0
    %4645 = vmatprep.mubr.f32.mxu0 0.0
    %4646 = vmatmul.mubr.f32.gmra.mrb[0].mxu0 %v4564
    %v4647 = vpop.f32.mrb[0].mxu0
    %v4648 = vadd.f32 0.0, %v4647
    %v4649 = vpop.f32.mrb[0].mxu0
    %4650 = vdwg.mxu0
    %4651 = vmatprep.subr.mxu0 0.0
    %4652 = vmatpush1.msra.mxu0 %v4548
    %4653 = vmatprep.subr.mxu0 0.0
    %4654 = vmatpush1.msra.mxu0 %v4549
    %4655 = vmatprep.subr.mxu0 0.0
    %4656 = vmatpush1.msra.mxu0 0.0
    %4657 = vmatprep.subr.mxu0 0.0
    %4658 = vmatpush1.msra.mxu0 0.0
    %4659 = vmatprep.subr.mxu0 0.0
    %4660 = vmatpush1.msra.mxu0 0.0
    %4661 = vmatprep.subr.mxu0 0.0
    %4662 = vmatpush1.msra.mxu0 0.0
    %4663 = vmatprep.subr.mxu0 0.0
    %4664 = vmatpush1.msra.mxu0 0.0
    %4665 = vmatprep.subr.mxu0 0.0
    %4666 = vmatpush1.msra.mxu0 0.0
    %4667 = vmatprep.subr.mxu0 0.0
    %4668 = vmatpush1.msra.mxu0 0.0
    %4669 = vmatprep.subr.mxu0 0.0
    %4670 = vmatpush1.msra.mxu0 0.0
    %4671 = vmatprep.subr.mxu0 0.0
    %4672 = vmatpush1.msra.mxu0 0.0
    %4673 = vmatprep.subr.mxu0 0.0
    %4674 = vmatpush1.msra.mxu0 0.0
    %4675 = vmatprep.subr.mxu0 0.0
    %4676 = vmatpush1.msra.mxu0 0.0
    %4677 = vmatprep.subr.mxu0 0.0
    %4678 = vmatpush1.msra.mxu0 0.0
    %4679 = vmatprep.subr.mxu0 0.0
    %4680 = vmatpush1.msra.mxu0 0.0
    %4681 = vmatprep.subr.mxu0 0.0
    %4682 = vmatpush1.msra.mxu0 0.0
    %4683 = vmatprep.subr.mxu0 0.0
    %4684 = vmatpush1.msra.mxu0 0.0
    %4685 = vmatprep.subr.mxu0 0.0
    %4686 = vmatpush1.msra.mxu0 0.0
    %4687 = vmatprep.subr.mxu0 0.0
    %4688 = vmatpush1.msra.mxu0 0.0
    %4689 = vmatprep.subr.mxu0 0.0
    %4690 = vmatpush1.msra.mxu0 0.0
    %4691 = vmatprep.subr.mxu0 0.0
    %4692 = vmatpush1.msra.mxu0 0.0
    %4693 = vmatprep.subr.mxu0 0.0
    %4694 = vmatpush1.msra.mxu0 0.0
    %4695 = vmatprep.subr.mxu0 0.0
    %4696 = vmatpush1.msra.mxu0 0.0
    %4697 = vmatprep.subr.mxu0 0.0
    %4698 = vmatpush1.msra.mxu0 0.0
    %4699 = vmatprep.subr.mxu0 0.0
    %4700 = vmatpush1.msra.mxu0 0.0
    %4701 = vmatprep.subr.mxu0 0.0
    %4702 = vmatpush1.msra.mxu0 0.0
    %4703 = vmatprep.subr.mxu0 0.0
    %4704 = vmatpush1.msra.mxu0 0.0
    %4705 = vmatprep.subr.mxu0 0.0
    %4706 = vmatpush1.msra.mxu0 0.0
    %4707 = vmatprep.subr.mxu0 0.0
    %4708 = vmatpush1.msra.mxu0 0.0
    %4709 = vmatprep.subr.mxu0 0.0
    %4710 = vmatpush1.msra.mxu0 0.0
    %4711 = vmatprep.subr.mxu0 0.0
    %4712 = vmatpush1.msra.mxu0 0.0
    %4713 = vmatprep.subr.mxu0 0.0
    %4714 = vmatpush1.msra.mxu0 0.0
    %4715 = vmatprep.mubr.f32.mxu0 0.0
    %4716 = vmatmul.mubr.f32.gmra.mrb[0].mxu0 %v4555
    %v4717 = vpop.f32.mrb[0].mxu0
    %v4718 = vadd.f32 0.0, %v4717
    %v4719 = vpop.f32.mrb[0].mxu0
    %4720 = vmatprep.mubr.f32.mxu0 0.0
    %4721 = vmatmul.mubr.f32.gmra.mrb[0].mxu0 %v4558
    %v4722 = vpop.f32.mrb[0].mxu0
    %v4723 = vadd.f32 0.0, %v4722
    %v4724 = vpop.f32.mrb[0].mxu0
    %4725 = vmatprep.mubr.f32.mxu0 0.0
    %4726 = vmatmul.mubr.f32.gmra.mrb[0].mxu0 %v4561
    %v4727 = vpop.f32.mrb[0].mxu0
    %v4728 = vadd.f32 0.0, %v4727
    %v4729 = vpop.f32.mrb[0].mxu0
    %4730 = vmatprep.mubr.f32.mxu0 0.0
    %4731 = vmatmul.mubr.f32.gmra.mrb[0].mxu0 %v4564
    %v4732 = vpop.f32.mrb[0].mxu0
    %v4733 = vadd.f32 0.0, %v4732
    %v4734 = vpop.f32.mrb[0].mxu0
    %4735 = vdwg.mxu0
    %v4736 = vld [vmem:[%s135] sm:$0xff]
    %v4737 = vld [vmem:[%s135 + $0x8] sm:$0xff]
    %v4738 = vld [vmem:[%s135 + $0x10] sm:$0xff]
    %v4739 = vld [vmem:[%s135 + $0x18] sm:$0xff]
    %v4740 = vld [vmem:[#allocation27] sm:$0x1]
    %v4742 = vlaneseq
    %v4743 = vshrl.u32 %v4742, 7
    %v4744 = vsub.s32 0, %v4743
    %v4745 = vrot.slane %v4740, %v4744
    %4747 = vmatprep.subr.mxu0 0.0
    %4748 = vmatpush1.msra.mxu0 %v4736
    %4749 = vmatprep.subr.mxu0 0.0
    %4750 = vmatpush1.msra.mxu0 %v4737
    %4751 = vmatprep.subr.mxu0 0.0
    %4752 = vmatpush1.msra.mxu0 %v4738
    %4753 = vmatprep.subr.mxu0 0.0
    %4754 = vmatpush1.msra.mxu0 %v4739
    %4755 = vmatprep.subr.mxu0 0.0
    %4756 = vmatpush1.msra.mxu0 0.0
    %4757 = vmatprep.subr.mxu0 0.0
    %4758 = vmatpush1.msra.mxu0 0.0
    %4759 = vmatprep.subr.mxu0 0.0
    %4760 = vmatpush1.msra.mxu0 0.0
    %4761 = vmatprep.subr.mxu0 0.0
    %4762 = vmatpush1.msra.mxu0 0.0
    %4763 = vmatprep.subr.mxu0 0.0
    %4764 = vmatpush1.msra.mxu0 0.0
    %4765 = vmatprep.subr.mxu0 0.0
    %4766 = vmatpush1.msra.mxu0 0.0
    %4767 = vmatprep.subr.mxu0 0.0
    %4768 = vmatpush1.msra.mxu0 0.0
    %4769 = vmatprep.subr.mxu0 0.0
    %4770 = vmatpush1.msra.mxu0 0.0
    %4771 = vmatprep.subr.mxu0 0.0
    %4772 = vmatpush1.msra.mxu0 0.0
    %4773 = vmatprep.subr.mxu0 0.0
    %4774 = vmatpush1.msra.mxu0 0.0
    %4775 = vmatprep.subr.mxu0 0.0
    %4776 = vmatpush1.msra.mxu0 0.0
    %4777 = vmatprep.subr.mxu0 0.0
    %4778 = vmatpush1.msra.mxu0 0.0
    %4779 = vmatprep.subr.mxu0 0.0
    %4780 = vmatpush1.msra.mxu0 0.0
    %4781 = vmatprep.subr.mxu0 0.0
    %4782 = vmatpush1.msra.mxu0 0.0
    %4783 = vmatprep.subr.mxu0 0.0
    %4784 = vmatpush1.msra.mxu0 0.0
    %4785 = vmatprep.subr.mxu0 0.0
    %4786 = vmatpush1.msra.mxu0 0.0
    %4787 = vmatprep.subr.mxu0 0.0
    %4788 = vmatpush1.msra.mxu0 0.0
    %4789 = vmatprep.subr.mxu0 0.0
    %4790 = vmatpush1.msra.mxu0 0.0
    %4791 = vmatprep.subr.mxu0 0.0
    %4792 = vmatpush1.msra.mxu0 0.0
    %4793 = vmatprep.subr.mxu0 0.0
    %4794 = vmatpush1.msra.mxu0 0.0
    %4795 = vmatprep.subr.mxu0 0.0
    %4796 = vmatpush1.msra.mxu0 0.0
    %4797 = vmatprep.subr.mxu0 0.0
    %4798 = vmatpush1.msra.mxu0 0.0
    %4799 = vmatprep.subr.mxu0 0.0
    %4800 = vmatpush1.msra.mxu0 0.0
    %4801 = vmatprep.subr.mxu0 0.0
    %4802 = vmatpush1.msra.mxu0 0.0
    %4803 = vmatprep.subr.mxu0 0.0
    %4804 = vmatpush1.msra.mxu0 0.0
    %4805 = vmatprep.subr.mxu0 0.0
    %4806 = vmatpush1.msra.mxu0 0.0
    %4807 = vmatprep.subr.mxu0 0.0
    %4808 = vmatpush1.msra.mxu0 0.0
    %4809 = vmatprep.subr.mxu0 0.0
    %4810 = vmatpush1.msra.mxu0 0.0
    %4811 = vmatprep.mubr.f32.mxu0 0.0
    %4812 = vmatmul.mubr.f32.gmra.mrb[0].mxu0 %v686
    %v4813 = vpop.f32.mrb[0].mxu0
    %v4814 = vadd.f32 %v4745, %v4813
    %v4815 = vpop.f32.mrb[0].mxu0
    %4816 = vdwg.mxu0
    %v4817 = vmax.f32 %v4814, 0.0
    %v4826 = vrot.slane %v4633, 7
    %v4827 = vrot.slane %v4638, 7
    %v4828 = vsel %vm767, %v4826, %v4827
    %v4829 = vrot.slane %v4643, 7
    %v4830 = vsel %vm767, %v4827, %v4829
    %v4831 = vrot.slane %v4648, 7
    %v4832 = vsel %vm767, %v4829, %v4831
    %v4833 = vrot.slane %v4718, 7
    %v4834 = vrot.slane %v4723, 7
    %v4835 = vsel %vm767, %v4833, %v4834
    %v4836 = vrot.slane %v4728, 7
    %v4837 = vsel %vm767, %v4834, %v4836
    %v4838 = vrot.slane %v4733, 7
    %v4839 = vsel %vm767, %v4836, %v4838
    %v4848 = vsel %vm767, 0.0, %v4826
    %v4849 = vsel %vm767, 0.0, %v4833
    %v4850 = vrot.slane %v4633, 1
    %v4851 = vrot.slane %v4638, 1
    %v4852 = vsel %vm792, %v4850, %v4851
    %v4853 = vrot.slane %v4643, 1
    %v4854 = vsel %vm792, %v4851, %v4853
    %v4855 = vrot.slane %v4648, 1
    %v4856 = vsel %vm792, %v4853, %v4855
    %v4857 = vrot.slane %v4718, 1
    %v4858 = vrot.slane %v4723, 1
    %v4859 = vsel %vm792, %v4857, %v4858
    %v4860 = vrot.slane %v4728, 1
    %v4861 = vsel %vm792, %v4858, %v4860
    %v4862 = vrot.slane %v4733, 1
    %v4863 = vsel %vm792, %v4860, %v4862
    %v4866 = vsel %vm792, %v4855, 0.0
    %v4867 = vsel %vm792, %v4862, 0.0
    %4868 = vrot.lane.b32.xlu0 %v4633, 32
    %v4869 = vpop.permute.xlu0 %4868
    %4870 = vrot.lane.b32.xlu0 %v4638, 32
    %v4871 = vpop.permute.xlu0 %4870
    %4872 = vrot.lane.b32.xlu0 %v4643, 32
    %v4873 = vpop.permute.xlu0 %4872
    %4874 = vrot.lane.b32.xlu0 %v4648, 32
    %v4875 = vpop.permute.xlu0 %4874
    %4876 = vrot.lane.b32.xlu0 %v4718, 32
    %v4877 = vpop.permute.xlu0 %4876
    %4878 = vrot.lane.b32.xlu0 %v4723, 32
    %v4879 = vpop.permute.xlu0 %4878
    %4880 = vrot.lane.b32.xlu0 %v4728, 32
    %v4881 = vpop.permute.xlu0 %4880
    %4882 = vrot.lane.b32.xlu0 %v4733, 32
    %v4883 = vpop.permute.xlu0 %4882
    %4894 = vrot.lane.b32.xlu0 %v4852, 64
    %v4895 = vpop.permute.xlu0 %4894
    %4896 = vrot.lane.b32.xlu0 %v4854, 64
    %v4897 = vpop.permute.xlu0 %4896
    %4898 = vrot.lane.b32.xlu0 %v4856, 64
    %v4899 = vpop.permute.xlu0 %4898
    %4900 = vrot.lane.b32.xlu0 %v4866, 64
    %v4901 = vpop.permute.xlu0 %4900
    %4902 = vrot.lane.b32.xlu0 %v4859, 64
    %v4903 = vpop.permute.xlu0 %4902
    %4904 = vrot.lane.b32.xlu0 %v4861, 64
    %v4905 = vpop.permute.xlu0 %4904
    %4906 = vrot.lane.b32.xlu0 %v4863, 64
    %v4907 = vpop.permute.xlu0 %4906
    %4908 = vrot.lane.b32.xlu0 %v4867, 64
    %v4909 = vpop.permute.xlu0 %4908
    %v4918 = vsel %vm522, %v4848, %v4869
    %v4919 = vsel %vm522, %v4828, %v4871
    %v4920 = vsel %vm522, %v4830, %v4873
    %v4921 = vsel %vm522, %v4832, %v4875
    %v4922 = vsel %vm522, %v4849, %v4877
    %v4923 = vsel %vm522, %v4835, %v4879
    %v4924 = vsel %vm522, %v4837, %v4881
    %v4925 = vsel %vm522, %v4839, %v4883
    %v4926 = vsel %vm869, %v4918, %v4895
    %v4927 = vsel %vm869, %v4919, %v4897
    %v4928 = vsel %vm869, %v4920, %v4899
    %v4929 = vsel %vm869, %v4921, %v4901
    %v4930 = vsel %vm869, %v4922, %v4903
    %v4931 = vsel %vm869, %v4923, %v4905
    %v4932 = vsel %vm869, %v4924, %v4907
    %v4933 = vsel %vm869, %v4925, %v4909
    %v4934 = vld [vmem:[%s121] sm:$0xff]
    %v4935 = vld [vmem:[%s121 + $0x8] sm:$0xff]
    %v4936 = vld [vmem:[%s121 + $0x10] sm:$0xff]
    %v4937 = vld [vmem:[%s121 + $0x18] sm:$0xff]
    %v4938 = vld [vmem:[%s121 + $0x20] sm:$0xff]
    %v4939 = vld [vmem:[%s121 + $0x28] sm:$0xff]
    %v4940 = vld [vmem:[%s121 + $0x30] sm:$0xff]
    %v4941 = vld [vmem:[%s121 + $0x38] sm:$0xff]
    %v4942 = vld [vmem:[%s121 + $0x40] sm:$0xff]
    %v4943 = vld [vmem:[%s121 + $0x48] sm:$0xff]
    %v4944 = vld [vmem:[%s121 + $0x50] sm:$0xff]
    %v4945 = vld [vmem:[%s121 + $0x58] sm:$0xff]
    %v4947 = vsel %vm890, %v4926, 0
    %v4950 = vsel %vm890, %v4927, 0
    %v4953 = vsel %vm890, %v4928, 0
    %v4956 = vsel %vm890, %v4929, 0
    %v4959 = vsel %vm890, %v4930, 0
    %v4962 = vsel %vm890, %v4931, 0
    %v4965 = vsel %vm890, %v4932, 0
    %v4968 = vsel %vm890, %v4933, 0
    %4970 = vmatprep.subr.mxu0 0.0
    %4971 = vmatpush1.msra.mxu0 %v4934
    %4972 = vmatprep.subr.mxu0 0.0
    %4973 = vmatpush1.msra.mxu0 %v4935
    %4974 = vmatprep.subr.mxu0 0.0
    %4975 = vmatpush1.msra.mxu0 %v4936
    %4976 = vmatprep.subr.mxu0 0.0
    %4977 = vmatpush1.msra.mxu0 %v4937
    %4978 = vmatprep.subr.mxu0 0.0
    %4979 = vmatpush1.msra.mxu0 %v4938
    %4980 = vmatprep.subr.mxu0 0.0
    %4981 = vmatpush1.msra.mxu0 %v4939
    %4982 = vmatprep.subr.mxu0 0.0
    %4983 = vmatpush1.msra.mxu0 %v4940
    %4984 = vmatprep.subr.mxu0 0.0
    %4985 = vmatpush1.msra.mxu0 %v4941
    %4986 = vmatprep.subr.mxu0 0.0
    %4987 = vmatpush1.msra.mxu0 %v4942
    %4988 = vmatprep.subr.mxu0 0.0
    %4989 = vmatpush1.msra.mxu0 %v4943
    %4990 = vmatprep.subr.mxu0 0.0
    %4991 = vmatpush1.msra.mxu0 %v4944
    %4992 = vmatprep.subr.mxu0 0.0
    %4993 = vmatpush1.msra.mxu0 %v4945
    %4994 = vmatprep.subr.mxu0 0.0
    %4995 = vmatpush1.msra.mxu0 0.0
    %4996 = vmatprep.subr.mxu0 0.0
    %4997 = vmatpush1.msra.mxu0 0.0
    %4998 = vmatprep.subr.mxu0 0.0
    %4999 = vmatpush1.msra.mxu0 0.0
    %5000 = vmatprep.subr.mxu0 0.0
    %5001 = vmatpush1.msra.mxu0 0.0
    %5002 = vmatprep.subr.mxu0 0.0
    %5003 = vmatpush1.msra.mxu0 0.0
    %5004 = vmatprep.subr.mxu0 0.0
    %5005 = vmatpush1.msra.mxu0 0.0
    %5006 = vmatprep.subr.mxu0 0.0
    %5007 = vmatpush1.msra.mxu0 0.0
    %5008 = vmatprep.subr.mxu0 0.0
    %5009 = vmatpush1.msra.mxu0 0.0
    %5010 = vmatprep.subr.mxu0 0.0
    %5011 = vmatpush1.msra.mxu0 0.0
    %5012 = vmatprep.subr.mxu0 0.0
    %5013 = vmatpush1.msra.mxu0 0.0
    %5014 = vmatprep.subr.mxu0 0.0
    %5015 = vmatpush1.msra.mxu0 0.0
    %5016 = vmatprep.subr.mxu0 0.0
    %5017 = vmatpush1.msra.mxu0 0.0
    %5018 = vmatprep.subr.mxu0 0.0
    %5019 = vmatpush1.msra.mxu0 0.0
    %5020 = vmatprep.subr.mxu0 0.0
    %5021 = vmatpush1.msra.mxu0 0.0
    %5022 = vmatprep.subr.mxu0 0.0
    %5023 = vmatpush1.msra.mxu0 0.0
    %5024 = vmatprep.subr.mxu0 0.0
    %5025 = vmatpush1.msra.mxu0 0.0
    %5026 = vmatprep.subr.mxu0 0.0
    %5027 = vmatpush1.msra.mxu0 0.0
    %5028 = vmatprep.subr.mxu0 0.0
    %5029 = vmatpush1.msra.mxu0 0.0
    %5030 = vmatprep.subr.mxu0 0.0
    %5031 = vmatpush1.msra.mxu0 0.0
    %5032 = vmatprep.subr.mxu0 0.0
    %5033 = vmatpush1.msra.mxu0 0.0
    %5034 = vmatprep.mubr.f32.mxu0 0.0
    %5035 = vmatmul.mubr.f32.gmra.mrb[0].mxu0 %v4947
    %v5036 = vpop.f32.mrb[0].mxu0
    %v5037 = vadd.f32 0.0, %v5036
    %v5038 = vpop.f32.mrb[0].mxu0
    %5039 = vmatprep.mubr.f32.mxu0 0.0
    %5040 = vmatmul.mubr.f32.gmra.mrb[0].mxu0 %v4950
    %v5041 = vpop.f32.mrb[0].mxu0
    %v5042 = vadd.f32 0.0, %v5041
    %v5043 = vpop.f32.mrb[0].mxu0
    %5044 = vmatprep.mubr.f32.mxu0 0.0
    %5045 = vmatmul.mubr.f32.gmra.mrb[0].mxu0 %v4953
    %v5046 = vpop.f32.mrb[0].mxu0
    %v5047 = vadd.f32 0.0, %v5046
    %v5048 = vpop.f32.mrb[0].mxu0
    %5049 = vmatprep.mubr.f32.mxu0 0.0
    %5050 = vmatmul.mubr.f32.gmra.mrb[0].mxu0 %v4956
    %v5051 = vpop.f32.mrb[0].mxu0
    %v5052 = vadd.f32 0.0, %v5051
    %v5053 = vpop.f32.mrb[0].mxu0
    %5054 = vmatprep.mubr.f32.mxu0 0.0
    %5055 = vmatmul.mubr.f32.gmra.mrb[0].mxu0 %v4959
    %v5056 = vpop.f32.mrb[0].mxu0
    %v5057 = vadd.f32 0.0, %v5056
    %v5058 = vpop.f32.mrb[0].mxu0
    %5059 = vmatprep.mubr.f32.mxu0 0.0
    %5060 = vmatmul.mubr.f32.gmra.mrb[0].mxu0 %v4962
    %v5061 = vpop.f32.mrb[0].mxu0
    %v5062 = vadd.f32 0.0, %v5061
    %v5063 = vpop.f32.mrb[0].mxu0
    %5064 = vmatprep.mubr.f32.mxu0 0.0
    %5065 = vmatmul.mubr.f32.gmra.mrb[0].mxu0 %v4965
    %v5066 = vpop.f32.mrb[0].mxu0
    %v5067 = vadd.f32 0.0, %v5066
    %v5068 = vpop.f32.mrb[0].mxu0
    %5069 = vmatprep.mubr.f32.mxu0 0.0
    %5070 = vmatmul.mubr.f32.gmra.mrb[0].mxu0 %v4968
    %v5071 = vpop.f32.mrb[0].mxu0
    %v5072 = vadd.f32 0.0, %v5071
    %v5073 = vpop.f32.mrb[0].mxu0
    %5074 = vdwg.mxu0
    %v5083 = vrot.slane %v1502, 7
    %v5084 = vrot.slane %v1503, 7
    %v5085 = vsel %vm767, %v5083, %v5084
    %v5086 = vrot.slane %v1504, 7
    %v5087 = vsel %vm767, %v5084, %v5086
    %v5088 = vrot.slane %v1505, 7
    %v5089 = vsel %vm767, %v5086, %v5088
    %v5090 = vrot.slane %v1506, 7
    %v5091 = vrot.slane %v1507, 7
    %v5092 = vsel %vm767, %v5090, %v5091
    %v5093 = vrot.slane %v1508, 7
    %v5094 = vsel %vm767, %v5091, %v5093
    %v5095 = vrot.slane %v1509, 7
    %v5096 = vsel %vm767, %v5093, %v5095
    %v5105 = vsel %vm767, 0.0, %v5083
    %v5106 = vsel %vm767, 0.0, %v5090
    %v5107 = vrot.slane %v1502, 1
    %v5108 = vrot.slane %v1503, 1
    %v5109 = vsel %vm792, %v5107, %v5108
    %v5110 = vrot.slane %v1504, 1
    %v5111 = vsel %vm792, %v5108, %v5110
    %v5112 = vrot.slane %v1505, 1
    %v5113 = vsel %vm792, %v5110, %v5112
    %v5114 = vrot.slane %v1506, 1
    %v5115 = vrot.slane %v1507, 1
    %v5116 = vsel %vm792, %v5114, %v5115
    %v5117 = vrot.slane %v1508, 1
    %v5118 = vsel %vm792, %v5115, %v5117
    %v5119 = vrot.slane %v1509, 1
    %v5120 = vsel %vm792, %v5117, %v5119
    %v5123 = vsel %vm792, %v5112, 0.0
    %v5124 = vsel %vm792, %v5119, 0.0
    %5125 = vrot.lane.b32.xlu0 %v1502, 32
    %v5126 = vpop.permute.xlu0 %5125
    %5127 = vrot.lane.b32.xlu0 %v1503, 32
    %v5128 = vpop.permute.xlu0 %5127
    %5129 = vrot.lane.b32.xlu0 %v1504, 32
    %v5130 = vpop.permute.xlu0 %5129
    %5131 = vrot.lane.b32.xlu0 %v1505, 32
    %v5132 = vpop.permute.xlu0 %5131
    %5133 = vrot.lane.b32.xlu0 %v1506, 32
    %v5134 = vpop.permute.xlu0 %5133
    %5135 = vrot.lane.b32.xlu0 %v1507, 32
    %v5136 = vpop.permute.xlu0 %5135
    %5137 = vrot.lane.b32.xlu0 %v1508, 32
    %v5138 = vpop.permute.xlu0 %5137
    %5139 = vrot.lane.b32.xlu0 %v1509, 32
    %v5140 = vpop.permute.xlu0 %5139
    %5151 = vrot.lane.b32.xlu0 %v5109, 64
    %v5152 = vpop.permute.xlu0 %5151
    %5153 = vrot.lane.b32.xlu0 %v5111, 64
    %v5154 = vpop.permute.xlu0 %5153
    %5155 = vrot.lane.b32.xlu0 %v5113, 64
    %v5156 = vpop.permute.xlu0 %5155
    %5157 = vrot.lane.b32.xlu0 %v5123, 64
    %v5158 = vpop.permute.xlu0 %5157
    %5159 = vrot.lane.b32.xlu0 %v5116, 64
    %v5160 = vpop.permute.xlu0 %5159
    %5161 = vrot.lane.b32.xlu0 %v5118, 64
    %v5162 = vpop.permute.xlu0 %5161
    %5163 = vrot.lane.b32.xlu0 %v5120, 64
    %v5164 = vpop.permute.xlu0 %5163
    %5165 = vrot.lane.b32.xlu0 %v5124, 64
    %v5166 = vpop.permute.xlu0 %5165
    %v5175 = vsel %vm522, %v5105, %v5126
    %v5176 = vsel %vm522, %v5085, %v5128
    %v5177 = vsel %vm522, %v5087, %v5130
    %v5178 = vsel %vm522, %v5089, %v5132
    %v5179 = vsel %vm522, %v5106, %v5134
    %v5180 = vsel %vm522, %v5092, %v5136
    %v5181 = vsel %vm522, %v5094, %v5138
    %v5182 = vsel %vm522, %v5096, %v5140
    %v5183 = vsel %vm869, %v5175, %v5152
    %v5184 = vsel %vm869, %v5176, %v5154
    %v5185 = vsel %vm869, %v5177, %v5156
    %v5186 = vsel %vm869, %v5178, %v5158
    %v5187 = vsel %vm869, %v5179, %v5160
    %v5188 = vsel %vm869, %v5180, %v5162
    %v5189 = vsel %vm869, %v5181, %v5164
    %v5190 = vsel %vm869, %v5182, %v5166
    %v5191 = vld [vmem:[%s123] sm:$0xff]
    %v5192 = vld [vmem:[%s123 + $0x8] sm:$0xff]
    %v5193 = vld [vmem:[%s123 + $0x10] sm:$0xff]
    %v5194 = vld [vmem:[%s123 + $0x18] sm:$0xff]
    %v5195 = vld [vmem:[%s123 + $0x20] sm:$0xff]
    %v5196 = vld [vmem:[%s123 + $0x28] sm:$0xff]
    %v5197 = vld [vmem:[%s123 + $0x30] sm:$0xff]
    %v5198 = vld [vmem:[%s123 + $0x38] sm:$0xff]
    %v5199 = vld [vmem:[%s123 + $0x40] sm:$0xff]
    %v5200 = vld [vmem:[%s123 + $0x48] sm:$0xff]
    %v5201 = vld [vmem:[%s123 + $0x50] sm:$0xff]
    %v5202 = vld [vmem:[%s123 + $0x58] sm:$0xff]
    %v5204 = vsel %vm890, %v5183, 0
    %v5207 = vsel %vm890, %v5184, 0
    %v5210 = vsel %vm890, %v5185, 0
    %v5213 = vsel %vm890, %v5186, 0
    %v5216 = vsel %vm890, %v5187, 0
    %v5219 = vsel %vm890, %v5188, 0
    %v5222 = vsel %vm890, %v5189, 0
    %v5225 = vsel %vm890, %v5190, 0
    %5227 = vmatprep.subr.mxu0 0.0
    %5228 = vmatpush1.msra.mxu0 %v5191
    %5229 = vmatprep.subr.mxu0 0.0
    %5230 = vmatpush1.msra.mxu0 %v5192
    %5231 = vmatprep.subr.mxu0 0.0
    %5232 = vmatpush1.msra.mxu0 %v5193
    %5233 = vmatprep.subr.mxu0 0.0
    %5234 = vmatpush1.msra.mxu0 %v5194
    %5235 = vmatprep.subr.mxu0 0.0
    %5236 = vmatpush1.msra.mxu0 %v5195
    %5237 = vmatprep.subr.mxu0 0.0
    %5238 = vmatpush1.msra.mxu0 %v5196
    %5239 = vmatprep.subr.mxu0 0.0
    %5240 = vmatpush1.msra.mxu0 %v5197
    %5241 = vmatprep.subr.mxu0 0.0
    %5242 = vmatpush1.msra.mxu0 %v5198
    %5243 = vmatprep.subr.mxu0 0.0
    %5244 = vmatpush1.msra.mxu0 %v5199
    %5245 = vmatprep.subr.mxu0 0.0
    %5246 = vmatpush1.msra.mxu0 %v5200
    %5247 = vmatprep.subr.mxu0 0.0
    %5248 = vmatpush1.msra.mxu0 %v5201
    %5249 = vmatprep.subr.mxu0 0.0
    %5250 = vmatpush1.msra.mxu0 %v5202
    %5251 = vmatprep.subr.mxu0 0.0
    %5252 = vmatpush1.msra.mxu0 0.0
    %5253 = vmatprep.subr.mxu0 0.0
    %5254 = vmatpush1.msra.mxu0 0.0
    %5255 = vmatprep.subr.mxu0 0.0
    %5256 = vmatpush1.msra.mxu0 0.0
    %5257 = vmatprep.subr.mxu0 0.0
    %5258 = vmatpush1.msra.mxu0 0.0
    %5259 = vmatprep.subr.mxu0 0.0
    %5260 = vmatpush1.msra.mxu0 0.0
    %5261 = vmatprep.subr.mxu0 0.0
    %5262 = vmatpush1.msra.mxu0 0.0
    %5263 = vmatprep.subr.mxu0 0.0
    %5264 = vmatpush1.msra.mxu0 0.0
    %5265 = vmatprep.subr.mxu0 0.0
    %5266 = vmatpush1.msra.mxu0 0.0
    %5267 = vmatprep.subr.mxu0 0.0
    %5268 = vmatpush1.msra.mxu0 0.0
    %5269 = vmatprep.subr.mxu0 0.0
    %5270 = vmatpush1.msra.mxu0 0.0
    %5271 = vmatprep.subr.mxu0 0.0
    %5272 = vmatpush1.msra.mxu0 0.0
    %5273 = vmatprep.subr.mxu0 0.0
    %5274 = vmatpush1.msra.mxu0 0.0
    %5275 = vmatprep.subr.mxu0 0.0
    %5276 = vmatpush1.msra.mxu0 0.0
    %5277 = vmatprep.subr.mxu0 0.0
    %5278 = vmatpush1.msra.mxu0 0.0
    %5279 = vmatprep.subr.mxu0 0.0
    %5280 = vmatpush1.msra.mxu0 0.0
    %5281 = vmatprep.subr.mxu0 0.0
    %5282 = vmatpush1.msra.mxu0 0.0
    %5283 = vmatprep.subr.mxu0 0.0
    %5284 = vmatpush1.msra.mxu0 0.0
    %5285 = vmatprep.subr.mxu0 0.0
    %5286 = vmatpush1.msra.mxu0 0.0
    %5287 = vmatprep.subr.mxu0 0.0
    %5288 = vmatpush1.msra.mxu0 0.0
    %5289 = vmatprep.subr.mxu0 0.0
    %5290 = vmatpush1.msra.mxu0 0.0
    %5291 = vmatprep.mubr.f32.mxu0 0.0
    %5292 = vmatmul.mubr.f32.gmra.mrb[0].mxu0 %v5204
    %v5293 = vpop.f32.mrb[0].mxu0
    %v5294 = vadd.f32 0.0, %v5293
    %v5295 = vpop.f32.mrb[0].mxu0
    %5296 = vmatprep.mubr.f32.mxu0 0.0
    %5297 = vmatmul.mubr.f32.gmra.mrb[0].mxu0 %v5207
    %v5298 = vpop.f32.mrb[0].mxu0
    %v5299 = vadd.f32 0.0, %v5298
    %v5300 = vpop.f32.mrb[0].mxu0
    %5301 = vmatprep.mubr.f32.mxu0 0.0
    %5302 = vmatmul.mubr.f32.gmra.mrb[0].mxu0 %v5210
    %v5303 = vpop.f32.mrb[0].mxu0
    %v5304 = vadd.f32 0.0, %v5303
    %v5305 = vpop.f32.mrb[0].mxu0
    %5306 = vmatprep.mubr.f32.mxu0 0.0
    %5307 = vmatmul.mubr.f32.gmra.mrb[0].mxu0 %v5213
    %v5308 = vpop.f32.mrb[0].mxu0
    %v5309 = vadd.f32 0.0, %v5308
    %v5310 = vpop.f32.mrb[0].mxu0
    %5311 = vmatprep.mubr.f32.mxu0 0.0
    %5312 = vmatmul.mubr.f32.gmra.mrb[0].mxu0 %v5216
    %v5313 = vpop.f32.mrb[0].mxu0
    %v5314 = vadd.f32 0.0, %v5313
    %v5315 = vpop.f32.mrb[0].mxu0
    %5316 = vmatprep.mubr.f32.mxu0 0.0
    %5317 = vmatmul.mubr.f32.gmra.mrb[0].mxu0 %v5219
    %v5318 = vpop.f32.mrb[0].mxu0
    %v5319 = vadd.f32 0.0, %v5318
    %v5320 = vpop.f32.mrb[0].mxu0
    %5321 = vmatprep.mubr.f32.mxu0 0.0
    %5322 = vmatmul.mubr.f32.gmra.mrb[0].mxu0 %v5222
    %v5323 = vpop.f32.mrb[0].mxu0
    %v5324 = vadd.f32 0.0, %v5323
    %v5325 = vpop.f32.mrb[0].mxu0
    %5326 = vmatprep.mubr.f32.mxu0 0.0
    %5327 = vmatmul.mubr.f32.gmra.mrb[0].mxu0 %v5225
    %v5328 = vpop.f32.mrb[0].mxu0
    %v5329 = vadd.f32 0.0, %v5328
    %v5330 = vpop.f32.mrb[0].mxu0
    %5331 = vdwg.mxu0
    %v5332 = vadd.f32 %v5037, %v5294
    %v5333 = vadd.f32 %v5042, %v5299
    %v5334 = vadd.f32 %v5047, %v5304
    %v5335 = vadd.f32 %v5052, %v5309
    %v5336 = vadd.f32 %v5057, %v5314
    %v5337 = vadd.f32 %v5062, %v5319
    %v5338 = vadd.f32 %v5067, %v5324
    %v5339 = vadd.f32 %v5072, %v5329
    %v5340 = vsel %vm522, %v5332, 0.0
    %v5341 = vsel %vm522, %v5333, 0.0
    %v5342 = vadd.f32 %v5340, %v5341
    %v5343 = vsel %vm522, %v5334, 0.0
    %v5344 = vadd.f32 %v5342, %v5343
    %v5345 = vsel %vm522, %v5335, 0.0
    %v5346 = vadd.f32 %v5344, %v5345
    %v5347 = vsel %vm522, %v5336, 0.0
    %v5348 = vadd.f32 %v5346, %v5347
    %v5349 = vsel %vm522, %v5337, 0.0
    %v5350 = vadd.f32 %v5348, %v5349
    %v5351 = vsel %vm522, %v5338, 0.0
    %v5352 = vadd.f32 %v5350, %v5351
    %v5353 = vsel %vm522, %v5339, 0.0
    %v5354 = vadd.f32 %v5352, %v5353
    %v5355 = vrot.slane %v5354, 4
    %v5356 = vadd.f32 %v5354, %v5355
    %v5357 = vrot.slane %v5356, 2
    %v5358 = vadd.f32 %v5356, %v5357
    %v5359 = vrot.slane %v5358, 1
    %v5360 = vadd.f32 %v5358, %v5359
    %v5361 = vmul.f32 %v5332, %v5332
    %v5362 = vmul.f32 %v5333, %v5333
    %v5363 = vmul.f32 %v5334, %v5334
    %v5364 = vmul.f32 %v5335, %v5335
    %v5365 = vmul.f32 %v5336, %v5336
    %v5366 = vmul.f32 %v5337, %v5337
    %v5367 = vmul.f32 %v5338, %v5338
    %v5368 = vmul.f32 %v5339, %v5339
    %v5369 = vsel %vm522, %v5361, 0.0
    %v5370 = vsel %vm522, %v5362, 0.0
    %v5371 = vadd.f32 %v5369, %v5370
    %v5372 = vsel %vm522, %v5363, 0.0
    %v5373 = vadd.f32 %v5371, %v5372
    %v5374 = vsel %vm522, %v5364, 0.0
    %v5375 = vadd.f32 %v5373, %v5374
    %v5376 = vsel %vm522, %v5365, 0.0
    %v5377 = vadd.f32 %v5375, %v5376
    %v5378 = vsel %vm522, %v5366, 0.0
    %v5379 = vadd.f32 %v5377, %v5378
    %v5380 = vsel %vm522, %v5367, 0.0
    %v5381 = vadd.f32 %v5379, %v5380
    %v5382 = vsel %vm522, %v5368, 0.0
    %v5383 = vadd.f32 %v5381, %v5382
    %v5384 = vrot.slane %v5383, 4
    %v5385 = vadd.f32 %v5383, %v5384
    %v5386 = vrot.slane %v5385, 2
    %v5387 = vadd.f32 %v5385, %v5386
    %v5388 = vrot.slane %v5387, 1
    %v5389 = vadd.f32 %v5387, %v5388
    %v5390 = vmul.f32 %v5360, 0.015625
    %v5391 = vmul.f32 %v5389, 0.015625
    %v5392 = vmul.f32 %v5390, %v5390
    %v5393 = vsub.f32 %v5391, %v5392
    %v5394 = vmax.f32 %v5393, 0.0
    %v5395 = vadd.f32 %v5394, 1e-05
    %v5396 = vrsqrt.pop %v5395
    %v5397 = vld [vmem:[#allocation21] sm:$0x1]
    %v5398 = vmul.f32 %v5396, %v5397
    %v5399 = vld [vmem:[#allocation20] sm:$0x1]
    %v5400 = vmul.f32 %v5390, %v5398
    %v5401 = vsub.f32 %v5399, %v5400
    %v5402 = vlaneseq
    %v5403 = vshrl.u32 %v5402, 7
    %v5404 = vsub.s32 0, %v5403
    %v5405 = vrot.slane %v5398, %v5404
    %v5406 = vmul.f32 %v5332, %v5405
    %v5407 = vmul.f32 %v5333, %v5405
    %v5408 = vmul.f32 %v5334, %v5405
    %v5409 = vmul.f32 %v5335, %v5405
    %v5410 = vmul.f32 %v5336, %v5405
    %v5411 = vmul.f32 %v5337, %v5405
    %v5412 = vmul.f32 %v5338, %v5405
    %v5413 = vmul.f32 %v5339, %v5405
    %v5416 = vunpack.c.l.s4 1966171168
    %v5417 = vunpack.c.0.s8 %v5416
    %v5418 = vlaneseq
    %v5419 = vshrl.u32 %v5418, 7
    %v5420 = vsub.s32 %v5417, %v5419
    %v5421 = vrot.slane %v4817, %v5420
    %v5422 = vcombine.high %v5421, %v5421
    %v5424 = vunpack.c.l.s4 1966171168
    %v5425 = vunpack.c.0.s8 %v5424
    %v5426 = vlaneseq
    %v5427 = vshrl.u32 %v5426, 7
    %v5428 = vsub.s32 %v5425, %v5427
    %v5429 = vrot.slane %v5421, %v5428
    %v5431 = vunpack.c.l.s4 1966171168
    %v5432 = vunpack.c.0.s8 %v5431
    %v5433 = vlaneseq
    %v5434 = vshrl.u32 %v5433, 7
    %v5435 = vsub.s32 %v5432, %v5434
    %v5436 = vrot.slane %v5422, %v5435
    %v5439 = vadd.f32 %v5401, %v5429
    %v5440 = vadd.f32 %v5401, %v5436
    %v5443 = vlaneseq
    %v5444 = vshrl.u32 %v5443, 7
    %v5445 = vsub.s32 0, %v5444
    %v5446 = vrot.slane %v5439, %v5445
    %v5447 = vlaneseq
    %v5448 = vshrl.u32 %v5447, 7
    %v5449 = vsub.s32 0, %v5448
    %v5450 = vrot.slane %v5440, %v5449
    %v5453 = vadd.f32 %v5406, %v5446
    %v5454 = vadd.f32 %v5407, %v5446
    %v5455 = vadd.f32 %v5408, %v5446
    %v5456 = vadd.f32 %v5409, %v5446
    %v5457 = vadd.f32 %v5410, %v5450
    %v5458 = vadd.f32 %v5411, %v5450
    %v5459 = vadd.f32 %v5412, %v5450
    %v5460 = vadd.f32 %v5413, %v5450
    %v5461 = vmax.f32 %v5453, 0.0
    %v5462 = vmax.f32 %v5454, 0.0
    %v5463 = vmax.f32 %v5455, 0.0
    %v5464 = vmax.f32 %v5456, 0.0
    %v5465 = vmax.f32 %v5457, 0.0
    %v5466 = vmax.f32 %v5458, 0.0
    %v5467 = vmax.f32 %v5459, 0.0
    %v5468 = vmax.f32 %v5460, 0.0
    %v5477 = vrot.slane %v5461, 7
    %v5478 = vrot.slane %v5462, 7
    %v5479 = vsel %vm767, %v5477, %v5478
    %v5480 = vrot.slane %v5463, 7
    %v5481 = vsel %vm767, %v5478, %v5480
    %v5482 = vrot.slane %v5464, 7
    %v5483 = vsel %vm767, %v5480, %v5482
    %v5484 = vrot.slane %v5465, 7
    %v5485 = vrot.slane %v5466, 7
    %v5486 = vsel %vm767, %v5484, %v5485
    %v5487 = vrot.slane %v5467, 7
    %v5488 = vsel %vm767, %v5485, %v5487
    %v5489 = vrot.slane %v5468, 7
    %v5490 = vsel %vm767, %v5487, %v5489
    %v5499 = vsel %vm767, 0.0, %v5477
    %v5500 = vsel %vm767, 0.0, %v5484
    %v5501 = vrot.slane %v5461, 1
    %v5502 = vrot.slane %v5462, 1
    %v5503 = vsel %vm792, %v5501, %v5502
    %v5504 = vrot.slane %v5463, 1
    %v5505 = vsel %vm792, %v5502, %v5504
    %v5506 = vrot.slane %v5464, 1
    %v5507 = vsel %vm792, %v5504, %v5506
    %v5508 = vrot.slane %v5465, 1
    %v5509 = vrot.slane %v5466, 1
    %v5510 = vsel %vm792, %v5508, %v5509
    %v5511 = vrot.slane %v5467, 1
    %v5512 = vsel %vm792, %v5509, %v5511
    %v5513 = vrot.slane %v5468, 1
    %v5514 = vsel %vm792, %v5511, %v5513
    %v5517 = vsel %vm792, %v5506, 0.0
    %v5518 = vsel %vm792, %v5513, 0.0
    %5519 = vrot.lane.b32.xlu0 %v5461, 32
    %v5520 = vpop.permute.xlu0 %5519
    %5521 = vrot.lane.b32.xlu0 %v5462, 32
    %v5522 = vpop.permute.xlu0 %5521
    %5523 = vrot.lane.b32.xlu0 %v5463, 32
    %v5524 = vpop.permute.xlu0 %5523
    %5525 = vrot.lane.b32.xlu0 %v5464, 32
    %v5526 = vpop.permute.xlu0 %5525
    %5527 = vrot.lane.b32.xlu0 %v5465, 32
    %v5528 = vpop.permute.xlu0 %5527
    %5529 = vrot.lane.b32.xlu0 %v5466, 32
    %v5530 = vpop.permute.xlu0 %5529
    %5531 = vrot.lane.b32.xlu0 %v5467, 32
    %v5532 = vpop.permute.xlu0 %5531
    %5533 = vrot.lane.b32.xlu0 %v5468, 32
    %v5534 = vpop.permute.xlu0 %5533
    %5545 = vrot.lane.b32.xlu0 %v5503, 64
    %v5546 = vpop.permute.xlu0 %5545
    %5547 = vrot.lane.b32.xlu0 %v5505, 64
    %v5548 = vpop.permute.xlu0 %5547
    %5549 = vrot.lane.b32.xlu0 %v5507, 64
    %v5550 = vpop.permute.xlu0 %5549
    %5551 = vrot.lane.b32.xlu0 %v5517, 64
    %v5552 = vpop.permute.xlu0 %5551
    %5553 = vrot.lane.b32.xlu0 %v5510, 64
    %v5554 = vpop.permute.xlu0 %5553
    %5555 = vrot.lane.b32.xlu0 %v5512, 64
    %v5556 = vpop.permute.xlu0 %5555
    %5557 = vrot.lane.b32.xlu0 %v5514, 64
    %v5558 = vpop.permute.xlu0 %5557
    %5559 = vrot.lane.b32.xlu0 %v5518, 64
    %v5560 = vpop.permute.xlu0 %5559
    %v5569 = vsel %vm522, %v5499, %v5520
    %v5570 = vsel %vm522, %v5479, %v5522
    %v5571 = vsel %vm522, %v5481, %v5524
    %v5572 = vsel %vm522, %v5483, %v5526
    %v5573 = vsel %vm522, %v5500, %v5528
    %v5574 = vsel %vm522, %v5486, %v5530
    %v5575 = vsel %vm522, %v5488, %v5532
    %v5576 = vsel %vm522, %v5490, %v5534
    %v5577 = vsel %vm869, %v5569, %v5546
    %v5578 = vsel %vm869, %v5570, %v5548
    %v5579 = vsel %vm869, %v5571, %v5550
    %v5580 = vsel %vm869, %v5572, %v5552
    %v5581 = vsel %vm869, %v5573, %v5554
    %v5582 = vsel %vm869, %v5574, %v5556
    %v5583 = vsel %vm869, %v5575, %v5558
    %v5584 = vsel %vm869, %v5576, %v5560
    %v5585 = vld [vmem:[%s125] sm:$0xff]
    %v5586 = vld [vmem:[%s125 + $0x8] sm:$0xff]
    %v5587 = vld [vmem:[%s125 + $0x10] sm:$0xff]
    %v5588 = vld [vmem:[%s125 + $0x18] sm:$0xff]
    %v5589 = vld [vmem:[%s125 + $0x20] sm:$0xff]
    %v5590 = vld [vmem:[%s125 + $0x28] sm:$0xff]
    %v5591 = vld [vmem:[%s125 + $0x30] sm:$0xff]
    %v5592 = vld [vmem:[%s125 + $0x38] sm:$0xff]
    %v5593 = vld [vmem:[%s125 + $0x40] sm:$0xff]
    %v5594 = vld [vmem:[%s125 + $0x48] sm:$0xff]
    %v5595 = vld [vmem:[%s125 + $0x50] sm:$0xff]
    %v5596 = vld [vmem:[%s125 + $0x58] sm:$0xff]
    %v5598 = vsel %vm890, %v5577, 0
    %v5601 = vsel %vm890, %v5578, 0
    %v5604 = vsel %vm890, %v5579, 0
    %v5607 = vsel %vm890, %v5580, 0
    %v5610 = vsel %vm890, %v5581, 0
    %v5613 = vsel %vm890, %v5582, 0
    %v5616 = vsel %vm890, %v5583, 0
    %v5619 = vsel %vm890, %v5584, 0
    %5621 = vmatprep.subr.mxu0 0.0
    %5622 = vmatpush1.msra.mxu0 %v5585
    %5623 = vmatprep.subr.mxu0 0.0
    %5624 = vmatpush1.msra.mxu0 %v5586
    %5625 = vmatprep.subr.mxu0 0.0
    %5626 = vmatpush1.msra.mxu0 %v5587
    %5627 = vmatprep.subr.mxu0 0.0
    %5628 = vmatpush1.msra.mxu0 %v5588
    %5629 = vmatprep.subr.mxu0 0.0
    %5630 = vmatpush1.msra.mxu0 %v5589
    %5631 = vmatprep.subr.mxu0 0.0
    %5632 = vmatpush1.msra.mxu0 %v5590
    %5633 = vmatprep.subr.mxu0 0.0
    %5634 = vmatpush1.msra.mxu0 %v5591
    %5635 = vmatprep.subr.mxu0 0.0
    %5636 = vmatpush1.msra.mxu0 %v5592
    %5637 = vmatprep.subr.mxu0 0.0
    %5638 = vmatpush1.msra.mxu0 %v5593
    %5639 = vmatprep.subr.mxu0 0.0
    %5640 = vmatpush1.msra.mxu0 %v5594
    %5641 = vmatprep.subr.mxu0 0.0
    %5642 = vmatpush1.msra.mxu0 %v5595
    %5643 = vmatprep.subr.mxu0 0.0
    %5644 = vmatpush1.msra.mxu0 %v5596
    %5645 = vmatprep.subr.mxu0 0.0
    %5646 = vmatpush1.msra.mxu0 0.0
    %5647 = vmatprep.subr.mxu0 0.0
    %5648 = vmatpush1.msra.mxu0 0.0
    %5649 = vmatprep.subr.mxu0 0.0
    %5650 = vmatpush1.msra.mxu0 0.0
    %5651 = vmatprep.subr.mxu0 0.0
    %5652 = vmatpush1.msra.mxu0 0.0
    %5653 = vmatprep.subr.mxu0 0.0
    %5654 = vmatpush1.msra.mxu0 0.0
    %5655 = vmatprep.subr.mxu0 0.0
    %5656 = vmatpush1.msra.mxu0 0.0
    %5657 = vmatprep.subr.mxu0 0.0
    %5658 = vmatpush1.msra.mxu0 0.0
    %5659 = vmatprep.subr.mxu0 0.0
    %5660 = vmatpush1.msra.mxu0 0.0
    %5661 = vmatprep.subr.mxu0 0.0
    %5662 = vmatpush1.msra.mxu0 0.0
    %5663 = vmatprep.subr.mxu0 0.0
    %5664 = vmatpush1.msra.mxu0 0.0
    %5665 = vmatprep.subr.mxu0 0.0
    %5666 = vmatpush1.msra.mxu0 0.0
    %5667 = vmatprep.subr.mxu0 0.0
    %5668 = vmatpush1.msra.mxu0 0.0
    %5669 = vmatprep.subr.mxu0 0.0
    %5670 = vmatpush1.msra.mxu0 0.0
    %5671 = vmatprep.subr.mxu0 0.0
    %5672 = vmatpush1.msra.mxu0 0.0
    %5673 = vmatprep.subr.mxu0 0.0
    %5674 = vmatpush1.msra.mxu0 0.0
    %5675 = vmatprep.subr.mxu0 0.0
    %5676 = vmatpush1.msra.mxu0 0.0
    %5677 = vmatprep.subr.mxu0 0.0
    %5678 = vmatpush1.msra.mxu0 0.0
    %5679 = vmatprep.subr.mxu0 0.0
    %5680 = vmatpush1.msra.mxu0 0.0
    %5681 = vmatprep.subr.mxu0 0.0
    %5682 = vmatpush1.msra.mxu0 0.0
    %5683 = vmatprep.subr.mxu0 0.0
    %5684 = vmatpush1.msra.mxu0 0.0
    %5685 = vmatprep.mubr.f32.mxu0 0.0
    %5686 = vmatmul.mubr.f32.gmra.mrb[0].mxu0 %v5598
    %v5687 = vpop.f32.mrb[0].mxu0
    %v5688 = vadd.f32 0.0, %v5687
    %v5689 = vpop.f32.mrb[0].mxu0
    %5690 = vmatprep.mubr.f32.mxu0 0.0
    %5691 = vmatmul.mubr.f32.gmra.mrb[0].mxu0 %v5601
    %v5692 = vpop.f32.mrb[0].mxu0
    %v5693 = vadd.f32 0.0, %v5692
    %v5694 = vpop.f32.mrb[0].mxu0
    %5695 = vmatprep.mubr.f32.mxu0 0.0
    %5696 = vmatmul.mubr.f32.gmra.mrb[0].mxu0 %v5604
    %v5697 = vpop.f32.mrb[0].mxu0
    %v5698 = vadd.f32 0.0, %v5697
    %v5699 = vpop.f32.mrb[0].mxu0
    %5700 = vmatprep.mubr.f32.mxu0 0.0
    %5701 = vmatmul.mubr.f32.gmra.mrb[0].mxu0 %v5607
    %v5702 = vpop.f32.mrb[0].mxu0
    %v5703 = vadd.f32 0.0, %v5702
    %v5704 = vpop.f32.mrb[0].mxu0
    %5705 = vmatprep.mubr.f32.mxu0 0.0
    %5706 = vmatmul.mubr.f32.gmra.mrb[0].mxu0 %v5610
    %v5707 = vpop.f32.mrb[0].mxu0
    %v5708 = vadd.f32 0.0, %v5707
    %v5709 = vpop.f32.mrb[0].mxu0
    %5710 = vmatprep.mubr.f32.mxu0 0.0
    %5711 = vmatmul.mubr.f32.gmra.mrb[0].mxu0 %v5613
    %v5712 = vpop.f32.mrb[0].mxu0
    %v5713 = vadd.f32 0.0, %v5712
    %v5714 = vpop.f32.mrb[0].mxu0
    %5715 = vmatprep.mubr.f32.mxu0 0.0
    %5716 = vmatmul.mubr.f32.gmra.mrb[0].mxu0 %v5616
    %v5717 = vpop.f32.mrb[0].mxu0
    %v5718 = vadd.f32 0.0, %v5717
    %v5719 = vpop.f32.mrb[0].mxu0
    %5720 = vmatprep.mubr.f32.mxu0 0.0
    %5721 = vmatmul.mubr.f32.gmra.mrb[0].mxu0 %v5619
    %v5722 = vpop.f32.mrb[0].mxu0
    %v5723 = vadd.f32 0.0, %v5722
    %v5724 = vpop.f32.mrb[0].mxu0
    %5725 = vdwg.mxu0
    %v5726 = vsel %vm522, %v5688, 0.0
    %v5727 = vsel %vm522, %v5693, 0.0
    %v5728 = vadd.f32 %v5726, %v5727
    %v5729 = vsel %vm522, %v5698, 0.0
    %v5730 = vadd.f32 %v5728, %v5729
    %v5731 = vsel %vm522, %v5703, 0.0
    %v5732 = vadd.f32 %v5730, %v5731
    %v5733 = vsel %vm522, %v5708, 0.0
    %v5734 = vadd.f32 %v5732, %v5733
    %v5735 = vsel %vm522, %v5713, 0.0
    %v5736 = vadd.f32 %v5734, %v5735
    %v5737 = vsel %vm522, %v5718, 0.0
    %v5738 = vadd.f32 %v5736, %v5737
    %v5739 = vsel %vm522, %v5723, 0.0
    %v5740 = vadd.f32 %v5738, %v5739
    %v5741 = vrot.slane %v5740, 4
    %v5742 = vadd.f32 %v5740, %v5741
    %v5743 = vrot.slane %v5742, 2
    %v5744 = vadd.f32 %v5742, %v5743
    %v5745 = vrot.slane %v5744, 1
    %v5746 = vadd.f32 %v5744, %v5745
    %v5747 = vmul.f32 %v5688, %v5688
    %v5748 = vmul.f32 %v5693, %v5693
    %v5749 = vmul.f32 %v5698, %v5698
    %v5750 = vmul.f32 %v5703, %v5703
    %v5751 = vmul.f32 %v5708, %v5708
    %v5752 = vmul.f32 %v5713, %v5713
    %v5753 = vmul.f32 %v5718, %v5718
    %v5754 = vmul.f32 %v5723, %v5723
    %v5755 = vsel %vm522, %v5747, 0.0
    %v5756 = vsel %vm522, %v5748, 0.0
    %v5757 = vadd.f32 %v5755, %v5756
    %v5758 = vsel %vm522, %v5749, 0.0
    %v5759 = vadd.f32 %v5757, %v5758
    %v5760 = vsel %vm522, %v5750, 0.0
    %v5761 = vadd.f32 %v5759, %v5760
    %v5762 = vsel %vm522, %v5751, 0.0
    %v5763 = vadd.f32 %v5761, %v5762
    %v5764 = vsel %vm522, %v5752, 0.0
    %v5765 = vadd.f32 %v5763, %v5764
    %v5766 = vsel %vm522, %v5753, 0.0
    %v5767 = vadd.f32 %v5765, %v5766
    %v5768 = vsel %vm522, %v5754, 0.0
    %v5769 = vadd.f32 %v5767, %v5768
    %v5770 = vrot.slane %v5769, 4
    %v5771 = vadd.f32 %v5769, %v5770
    %v5772 = vrot.slane %v5771, 2
    %v5773 = vadd.f32 %v5771, %v5772
    %v5774 = vrot.slane %v5773, 1
    %v5775 = vadd.f32 %v5773, %v5774
    %v5776 = vmul.f32 %v5746, 0.015625
    %v5777 = vmul.f32 %v5775, 0.015625
    %v5778 = vmul.f32 %v5776, %v5776
    %v5779 = vsub.f32 %v5777, %v5778
    %v5780 = vmax.f32 %v5779, 0.0
    %v5781 = vadd.f32 %v5780, 1e-05
    %v5782 = vrsqrt.pop %v5781
    %v5783 = vld [vmem:[#allocation24] sm:$0x1]
    %v5784 = vmul.f32 %v5782, %v5783
    %v5785 = vld [vmem:[#allocation23] sm:$0x1]
    %v5786 = vmul.f32 %v5776, %v5784
    %v5787 = vsub.f32 %v5785, %v5786
    %v5788 = vlaneseq
    %v5789 = vshrl.u32 %v5788, 7
    %v5790 = vsub.s32 0, %v5789
    %v5791 = vrot.slane %v5784, %v5790
    %v5792 = vmul.f32 %v5688, %v5791
    %v5793 = vmul.f32 %v5693, %v5791
    %v5794 = vmul.f32 %v5698, %v5791
    %v5795 = vmul.f32 %v5703, %v5791
    %v5796 = vmul.f32 %v5708, %v5791
    %v5797 = vmul.f32 %v5713, %v5791
    %v5798 = vmul.f32 %v5718, %v5791
    %v5799 = vmul.f32 %v5723, %v5791
    %v5801 = vlaneseq
    %v5802 = vshrl.u32 %v5801, 7
    %v5803 = vsub.s32 0, %v5802
    %v5804 = vrot.slane %v5787, %v5803
    %v5806 = vadd.f32 %v5792, %v5804
    %v5807 = vadd.f32 %v5793, %v5804
    %v5808 = vadd.f32 %v5794, %v5804
    %v5809 = vadd.f32 %v5795, %v5804
    %v5810 = vadd.f32 %v5796, %v5804
    %v5811 = vadd.f32 %v5797, %v5804
    %v5812 = vadd.f32 %v5798, %v5804
    %v5813 = vadd.f32 %v5799, %v5804
    %v5814 = vmax.f32 %v5806, 0.0
    %v5815 = vmax.f32 %v5807, 0.0
    %v5816 = vmax.f32 %v5808, 0.0
    %v5817 = vmax.f32 %v5809, 0.0
    %v5818 = vmax.f32 %v5810, 0.0
    %v5819 = vmax.f32 %v5811, 0.0
    %v5820 = vmax.f32 %v5812, 0.0
    %v5821 = vmax.f32 %v5813, 0.0
    %v5822 = vld [vmem:[#allocation26] sm:$0x1]
    %v5823 = vld [vmem:[%s129] sm:$0xff]
    %v5824 = vld [vmem:[%s129 + $0x8] sm:$0xff]
    %v5825 = vld [vmem:[%s129 + $0x10] sm:$0xff]
    %v5826 = vld [vmem:[%s129 + $0x18] sm:$0xff]
    %v5827 = vsel %vm522, %v4633, 0
    %v5829 = vsel %vm522, %v4638, 0
    %v5831 = vsel %vm522, %v4643, 0
    %v5833 = vsel %vm522, %v4648, 0
    %v5835 = vsel %vm522, %v4718, 0
    %v5837 = vsel %vm522, %v4723, 0
    %v5839 = vsel %vm522, %v4728, 0
    %v5841 = vsel %vm522, %v4733, 0
    %5843 = vmatprep.subr.mxu0 0.0
    %5844 = vmatpush1.msra.mxu0 %v5823
    %5845 = vmatprep.subr.mxu0 0.0
    %5846 = vmatpush1.msra.mxu0 %v5824
    %5847 = vmatprep.subr.mxu0 0.0
    %5848 = vmatpush1.msra.mxu0 %v5825
    %5849 = vmatprep.subr.mxu0 0.0
    %5850 = vmatpush1.msra.mxu0 %v5826
    %5851 = vmatprep.subr.mxu0 0.0
    %5852 = vmatpush1.msra.mxu0 0.0
    %5853 = vmatprep.subr.mxu0 0.0
    %5854 = vmatpush1.msra.mxu0 0.0
    %5855 = vmatprep.subr.mxu0 0.0
    %5856 = vmatpush1.msra.mxu0 0.0
    %5857 = vmatprep.subr.mxu0 0.0
    %5858 = vmatpush1.msra.mxu0 0.0
    %5859 = vmatprep.subr.mxu0 0.0
    %5860 = vmatpush1.msra.mxu0 0.0
    %5861 = vmatprep.subr.mxu0 0.0
    %5862 = vmatpush1.msra.mxu0 0.0
    %5863 = vmatprep.subr.mxu0 0.0
    %5864 = vmatpush1.msra.mxu0 0.0
    %5865 = vmatprep.subr.mxu0 0.0
    %5866 = vmatpush1.msra.mxu0 0.0
    %5867 = vmatprep.subr.mxu0 0.0
    %5868 = vmatpush1.msra.mxu0 0.0
    %5869 = vmatprep.subr.mxu0 0.0
    %5870 = vmatpush1.msra.mxu0 0.0
    %5871 = vmatprep.subr.mxu0 0.0
    %5872 = vmatpush1.msra.mxu0 0.0
    %5873 = vmatprep.subr.mxu0 0.0
    %5874 = vmatpush1.msra.mxu0 0.0
    %5875 = vmatprep.subr.mxu0 0.0
    %5876 = vmatpush1.msra.mxu0 0.0
    %5877 = vmatprep.subr.mxu0 0.0
    %5878 = vmatpush1.msra.mxu0 0.0
    %5879 = vmatprep.subr.mxu0 0.0
    %5880 = vmatpush1.msra.mxu0 0.0
    %5881 = vmatprep.subr.mxu0 0.0
    %5882 = vmatpush1.msra.mxu0 0.0
    %5883 = vmatprep.subr.mxu0 0.0
    %5884 = vmatpush1.msra.mxu0 0.0
    %5885 = vmatprep.subr.mxu0 0.0
    %5886 = vmatpush1.msra.mxu0 0.0
    %5887 = vmatprep.subr.mxu0 0.0
    %5888 = vmatpush1.msra.mxu0 0.0
    %5889 = vmatprep.subr.mxu0 0.0
    %5890 = vmatpush1.msra.mxu0 0.0
    %5891 = vmatprep.subr.mxu0 0.0
    %5892 = vmatpush1.msra.mxu0 0.0
    %5893 = vmatprep.subr.mxu0 0.0
    %5894 = vmatpush1.msra.mxu0 0.0
    %5895 = vmatprep.subr.mxu0 0.0
    %5896 = vmatpush1.msra.mxu0 0.0
    %5897 = vmatprep.subr.mxu0 0.0
    %5898 = vmatpush1.msra.mxu0 0.0
    %5899 = vmatprep.subr.mxu0 0.0
    %5900 = vmatpush1.msra.mxu0 0.0
    %5901 = vmatprep.subr.mxu0 0.0
    %5902 = vmatpush1.msra.mxu0 0.0
    %5903 = vmatprep.subr.mxu0 0.0
    %5904 = vmatpush1.msra.mxu0 0.0
    %5905 = vmatprep.subr.mxu0 0.0
    %5906 = vmatpush1.msra.mxu0 0.0
    %5907 = vmatprep.mubr.f32.mxu0 0.0
    %5908 = vmatmul.mubr.f32.gmra.mrb[0].mxu0 %v5827
    %v5909 = vpop.f32.mrb[0].mxu0
    %v5910 = vadd.f32 0.0, %v5909
    %v5911 = vpop.f32.mrb[0].mxu0
    %5912 = vmatprep.mubr.f32.mxu0 0.0
    %5913 = vmatmul.mubr.f32.gmra.mrb[0].mxu0 %v5829
    %v5914 = vpop.f32.mrb[0].mxu0
    %v5915 = vadd.f32 0.0, %v5914
    %v5916 = vpop.f32.mrb[0].mxu0
    %5917 = vmatprep.mubr.f32.mxu0 0.0
    %5918 = vmatmul.mubr.f32.gmra.mrb[0].mxu0 %v5831
    %v5919 = vpop.f32.mrb[0].mxu0
    %v5920 = vadd.f32 0.0, %v5919
    %v5921 = vpop.f32.mrb[0].mxu0
    %5922 = vmatprep.mubr.f32.mxu0 0.0
    %5923 = vmatmul.mubr.f32.gmra.mrb[0].mxu0 %v5833
    %v5924 = vpop.f32.mrb[0].mxu0
    %v5925 = vadd.f32 0.0, %v5924
    %v5926 = vpop.f32.mrb[0].mxu0
    %5927 = vmatprep.mubr.f32.mxu0 0.0
    %5928 = vmatmul.mubr.f32.gmra.mrb[0].mxu0 %v5835
    %v5929 = vpop.f32.mrb[0].mxu0
    %v5930 = vadd.f32 0.0, %v5929
    %v5931 = vpop.f32.mrb[0].mxu0
    %5932 = vmatprep.mubr.f32.mxu0 0.0
    %5933 = vmatmul.mubr.f32.gmra.mrb[0].mxu0 %v5837
    %v5934 = vpop.f32.mrb[0].mxu0
    %v5935 = vadd.f32 0.0, %v5934
    %v5936 = vpop.f32.mrb[0].mxu0
    %5937 = vmatprep.mubr.f32.mxu0 0.0
    %5938 = vmatmul.mubr.f32.gmra.mrb[0].mxu0 %v5839
    %v5939 = vpop.f32.mrb[0].mxu0
    %v5940 = vadd.f32 0.0, %v5939
    %v5941 = vpop.f32.mrb[0].mxu0
    %5942 = vmatprep.mubr.f32.mxu0 0.0
    %5943 = vmatmul.mubr.f32.gmra.mrb[0].mxu0 %v5841
    %v5944 = vpop.f32.mrb[0].mxu0
    %v5945 = vadd.f32 0.0, %v5944
    %v5946 = vpop.f32.mrb[0].mxu0
    %5947 = vdwg.mxu0
    %v5949 = vlaneseq
    %v5950 = vshrl.u32 %v5949, 7
    %v5951 = vsub.s32 0, %v5950
    %v5952 = vrot.slane %v5822, %v5951
    %v5954 = vadd.f32 %v5952, %v5910
    %v5955 = vadd.f32 %v5952, %v5915
    %v5956 = vadd.f32 %v5952, %v5920
    %v5957 = vadd.f32 %v5952, %v5925
    %v5958 = vadd.f32 %v5952, %v5930
    %v5959 = vadd.f32 %v5952, %v5935
    %v5960 = vadd.f32 %v5952, %v5940
    %v5961 = vadd.f32 %v5952, %v5945
    %v5962 = vld [vmem:[%s131] sm:$0xff]
    %v5963 = vld [vmem:[%s131 + $0x8] sm:$0xff]
    %v5964 = vld [vmem:[%s131 + $0x10] sm:$0xff]
    %v5965 = vld [vmem:[%s131 + $0x18] sm:$0xff]
    %v5966 = vsel %vm522, %v1502, 0
    %v5968 = vsel %vm522, %v1503, 0
    %v5970 = vsel %vm522, %v1504, 0
    %v5972 = vsel %vm522, %v1505, 0
    %v5974 = vsel %vm522, %v1506, 0
    %v5976 = vsel %vm522, %v1507, 0
    %v5978 = vsel %vm522, %v1508, 0
    %v5980 = vsel %vm522, %v1509, 0
    %5982 = vmatprep.subr.mxu0 0.0
    %5983 = vmatpush1.msra.mxu0 %v5962
    %5984 = vmatprep.subr.mxu0 0.0
    %5985 = vmatpush1.msra.mxu0 %v5963
    %5986 = vmatprep.subr.mxu0 0.0
    %5987 = vmatpush1.msra.mxu0 %v5964
    %5988 = vmatprep.subr.mxu0 0.0
    %5989 = vmatpush1.msra.mxu0 %v5965
    %5990 = vmatprep.subr.mxu0 0.0
    %5991 = vmatpush1.msra.mxu0 0.0
    %5992 = vmatprep.subr.mxu0 0.0
    %5993 = vmatpush1.msra.mxu0 0.0
    %5994 = vmatprep.subr.mxu0 0.0
    %5995 = vmatpush1.msra.mxu0 0.0
    %5996 = vmatprep.subr.mxu0 0.0
    %5997 = vmatpush1.msra.mxu0 0.0
    %5998 = vmatprep.subr.mxu0 0.0
    %5999 = vmatpush1.msra.mxu0 0.0
    %6000 = vmatprep.subr.mxu0 0.0
    %6001 = vmatpush1.msra.mxu0 0.0
    %6002 = vmatprep.subr.mxu0 0.0
    %6003 = vmatpush1.msra.mxu0 0.0
    %6004 = vmatprep.subr.mxu0 0.0
    %6005 = vmatpush1.msra.mxu0 0.0
    %6006 = vmatprep.subr.mxu0 0.0
    %6007 = vmatpush1.msra.mxu0 0.0
    %6008 = vmatprep.subr.mxu0 0.0
    %6009 = vmatpush1.msra.mxu0 0.0
    %6010 = vmatprep.subr.mxu0 0.0
    %6011 = vmatpush1.msra.mxu0 0.0
    %6012 = vmatprep.subr.mxu0 0.0
    %6013 = vmatpush1.msra.mxu0 0.0
    %6014 = vmatprep.subr.mxu0 0.0
    %6015 = vmatpush1.msra.mxu0 0.0
    %6016 = vmatprep.subr.mxu0 0.0
    %6017 = vmatpush1.msra.mxu0 0.0
    %6018 = vmatprep.subr.mxu0 0.0
    %6019 = vmatpush1.msra.mxu0 0.0
    %6020 = vmatprep.subr.mxu0 0.0
    %6021 = vmatpush1.msra.mxu0 0.0
    %6022 = vmatprep.subr.mxu0 0.0
    %6023 = vmatpush1.msra.mxu0 0.0
    %6024 = vmatprep.subr.mxu0 0.0
    %6025 = vmatpush1.msra.mxu0 0.0
    %6026 = vmatprep.subr.mxu0 0.0
    %6027 = vmatpush1.msra.mxu0 0.0
    %6028 = vmatprep.subr.mxu0 0.0
    %6029 = vmatpush1.msra.mxu0 0.0
    %6030 = vmatprep.subr.mxu0 0.0
    %6031 = vmatpush1.msra.mxu0 0.0
    %6032 = vmatprep.subr.mxu0 0.0
    %6033 = vmatpush1.msra.mxu0 0.0
    %6034 = vmatprep.subr.mxu0 0.0
    %6035 = vmatpush1.msra.mxu0 0.0
    %6036 = vmatprep.subr.mxu0 0.0
    %6037 = vmatpush1.msra.mxu0 0.0
    %6038 = vmatprep.subr.mxu0 0.0
    %6039 = vmatpush1.msra.mxu0 0.0
    %6040 = vmatprep.subr.mxu0 0.0
    %6041 = vmatpush1.msra.mxu0 0.0
    %6042 = vmatprep.subr.mxu0 0.0
    %6043 = vmatpush1.msra.mxu0 0.0
    %6044 = vmatprep.subr.mxu0 0.0
    %6045 = vmatpush1.msra.mxu0 0.0
    %6046 = vmatprep.mubr.f32.mxu0 0.0
    %6047 = vmatmul.mubr.f32.gmra.mrb[0].mxu0 %v5966
    %v6048 = vpop.f32.mrb[0].mxu0
    %v6049 = vadd.f32 0.0, %v6048
    %v6050 = vpop.f32.mrb[0].mxu0
    %6051 = vmatprep.mubr.f32.mxu0 0.0
    %6052 = vmatmul.mubr.f32.gmra.mrb[0].mxu0 %v5968
    %v6053 = vpop.f32.mrb[0].mxu0
    %v6054 = vadd.f32 0.0, %v6053
    %v6055 = vpop.f32.mrb[0].mxu0
    %6056 = vmatprep.mubr.f32.mxu0 0.0
    %6057 = vmatmul.mubr.f32.gmra.mrb[0].mxu0 %v5970
    %v6058 = vpop.f32.mrb[0].mxu0
    %v6059 = vadd.f32 0.0, %v6058
    %v6060 = vpop.f32.mrb[0].mxu0
    %6061 = vmatprep.mubr.f32.mxu0 0.0
    %6062 = vmatmul.mubr.f32.gmra.mrb[0].mxu0 %v5972
    %v6063 = vpop.f32.mrb[0].mxu0
    %v6064 = vadd.f32 0.0, %v6063
    %v6065 = vpop.f32.mrb[0].mxu0
    %6066 = vmatprep.mubr.f32.mxu0 0.0
    %6067 = vmatmul.mubr.f32.gmra.mrb[0].mxu0 %v5974
    %v6068 = vpop.f32.mrb[0].mxu0
    %v6069 = vadd.f32 0.0, %v6068
    %v6070 = vpop.f32.mrb[0].mxu0
    %6071 = vmatprep.mubr.f32.mxu0 0.0
    %6072 = vmatmul.mubr.f32.gmra.mrb[0].mxu0 %v5976
    %v6073 = vpop.f32.mrb[0].mxu0
    %v6074 = vadd.f32 0.0, %v6073
    %v6075 = vpop.f32.mrb[0].mxu0
    %6076 = vmatprep.mubr.f32.mxu0 0.0
    %6077 = vmatmul.mubr.f32.gmra.mrb[0].mxu0 %v5978
    %v6078 = vpop.f32.mrb[0].mxu0
    %v6079 = vadd.f32 0.0, %v6078
    %v6080 = vpop.f32.mrb[0].mxu0
    %6081 = vmatprep.mubr.f32.mxu0 0.0
    %6082 = vmatmul.mubr.f32.gmra.mrb[0].mxu0 %v5980
    %v6083 = vpop.f32.mrb[0].mxu0
    %v6084 = vadd.f32 0.0, %v6083
    %v6085 = vpop.f32.mrb[0].mxu0
    %6086 = vdwg.mxu0
    %v6087 = vadd.f32 %v5954, %v6049
    %v6088 = vadd.f32 %v5955, %v6054
    %v6089 = vadd.f32 %v5956, %v6059
    %v6090 = vadd.f32 %v5957, %v6064
    %v6091 = vadd.f32 %v5958, %v6069
    %v6092 = vadd.f32 %v5959, %v6074
    %v6093 = vadd.f32 %v5960, %v6079
    %v6094 = vadd.f32 %v5961, %v6084
    %v6095 = vadd.f32 %v5814, %v6087
    %v6096 = vadd.f32 %v5815, %v6088
    %v6097 = vadd.f32 %v5816, %v6089
    %v6098 = vadd.f32 %v5817, %v6090
    %v6099 = vadd.f32 %v5818, %v6091
    %v6100 = vadd.f32 %v5819, %v6092
    %v6101 = vadd.f32 %v5820, %v6093
    %v6102 = vadd.f32 %v5821, %v6094
    %v6103 = vld [vmem:[#allocation3] sm:$0x1]
    %v6105 = vlaneseq
    %v6106 = vshrl.u32 %v6105, 7
    %v6107 = vsub.s32 0, %v6106
    %v6108 = vrot.slane %v6103, %v6107
    %v6110 = vmul.f32 %v6095, %v6108
    %v6111 = vmul.f32 %v6096, %v6108
    %v6112 = vmul.f32 %v6097, %v6108
    %v6113 = vmul.f32 %v6098, %v6108
    %v6114 = vmul.f32 %v6099, %v6108
    %v6115 = vmul.f32 %v6100, %v6108
    %v6116 = vmul.f32 %v6101, %v6108
    %v6117 = vmul.f32 %v6102, %v6108
    %v6118 = vsel %vm522, %v6110, 0.0
    %6119 = vadd.xlane.f32.xlu0 %v6118
    %v6120 = vpop.xlane.xlu0 %6119
    %v6121 = vsel %vm522, %v6111, 0.0
    %6122 = vadd.xlane.f32.xlu0 %v6121
    %v6123 = vpop.xlane.xlu0 %6122
    %v6124 = vsel %vm522, %v6112, 0.0
    %6125 = vadd.xlane.f32.xlu0 %v6124
    %v6126 = vpop.xlane.xlu0 %6125
    %v6127 = vsel %vm522, %v6113, 0.0
    %6128 = vadd.xlane.f32.xlu0 %v6127
    %v6129 = vpop.xlane.xlu0 %6128
    %v6130 = vsel %vm522, %v6114, 0.0
    %6131 = vadd.xlane.f32.xlu0 %v6130
    %v6132 = vpop.xlane.xlu0 %6131
    %v6133 = vsel %vm522, %v6115, 0.0
    %6134 = vadd.xlane.f32.xlu0 %v6133
    %v6135 = vpop.xlane.xlu0 %6134
    %v6136 = vsel %vm522, %v6116, 0.0
    %6137 = vadd.xlane.f32.xlu0 %v6136
    %v6138 = vpop.xlane.xlu0 %6137
    %v6139 = vsel %vm522, %v6117, 0.0
    %6140 = vadd.xlane.f32.xlu0 %v6139
    %v6141 = vpop.xlane.xlu0 %6140
    %v6142 = vld [vmem:[#allocation2] sm:$0x1]
    %v6144 = vlaneseq
    %v6145 = vshrl.u32 %v6144, 7
    %v6146 = vsub.s32 0, %v6145
    %v6147 = vrot.slane %v6142, %v6146
    %6148 = vset.pattern.permute.xlu0 0
    %6149 = vperm.xlu0 %6148, %v6147
    %v6150 = vpop.permute.xlu0 %6149
    %v6152 = vadd.f32 %v6120, %v6150
    %v6153 = vadd.f32 %v6123, %v6150
    %v6154 = vadd.f32 %v6126, %v6150
    %v6155 = vadd.f32 %v6129, %v6150
    %v6156 = vadd.f32 %v6132, %v6150
    %v6157 = vadd.f32 %v6135, %v6150
    %v6158 = vadd.f32 %v6138, %v6150
    %v6159 = vadd.f32 %v6141, %v6150
    %v6168 = vlaneseq
    %v6169 = vand.u32 %v6168, 127
    %v6170 = vlaneseq
    %v6171 = vshrl.u32 %v6170, 7
    %v6172 = vsub.s32 %v6169, %v6171
    %v6173 = vrot.slane %v6152, %v6172
    %v6174 = vadd.s32 %v6169, 4294967288
    %v6175 = vlaneseq
    %v6176 = vshrl.u32 %v6175, 7
    %v6177 = vsub.s32 %v6174, %v6176
    %v6178 = vrot.slane %v6153, %v6177
    %vm6179 = vcmask 130112
    %v6180 = vsel %vm6179, %v6178, %v6173
    %v6181 = vadd.s32 %v6169, 4294967280
    %v6182 = vlaneseq
    %v6183 = vshrl.u32 %v6182, 7
    %v6184 = vsub.s32 %v6181, %v6183
    %v6185 = vrot.slane %v6154, %v6184
    %vm6186 = vcmask 195712
    %v6187 = vsel %vm6186, %v6185, %v6180
    %v6188 = vadd.s32 %v6169, 4294967272
    %v6189 = vlaneseq
    %v6190 = vshrl.u32 %v6189, 7
    %v6191 = vsub.s32 %v6188, %v6190
    %v6192 = vrot.slane %v6155, %v6191
    %vm6193 = vcmask 261312
    %v6194 = vsel %vm6193, %v6192, %v6187
    %v6195 = vlaneseq
    %v6196 = vshrl.u32 %v6195, 7
    %v6197 = vsub.s32 %v6169, %v6196
    %v6198 = vrot.slane %v6156, %v6197
    %v6199 = vlaneseq
    %v6200 = vshrl.u32 %v6199, 7
    %v6201 = vsub.s32 %v6174, %v6200
    %v6202 = vrot.slane %v6157, %v6201
    %v6203 = vsel %vm6179, %v6202, %v6198
    %v6204 = vlaneseq
    %v6205 = vshrl.u32 %v6204, 7
    %v6206 = vsub.s32 %v6181, %v6205
    %v6207 = vrot.slane %v6158, %v6206
    %v6208 = vsel %vm6186, %v6207, %v6203
    %v6209 = vlaneseq
    %v6210 = vshrl.u32 %v6209, 7
    %v6211 = vsub.s32 %v6188, %v6210
    %v6212 = vrot.slane %v6159, %v6211
    %v6213 = vsel %vm6193, %v6212, %v6208
    %vm6214 = vcmask 1041409
    %v6215 = vsel %vm6214, %v6213, %v6194
    %vm6217 = vcmask 254976
    %6218 = vst.msk [vmem:[#allocation29] sm:$0x3] %vm6217, %v6215
    // Predicated region
    $region354: #{diffusion_forward.1} parent=1 // pred_check
      _
    $region355: #{diffusion_forward.1} parent=1 // pred_check_branch
      %6220 = sbr.rel (0) target = $region357
    $region356: #{diffusion_forward.1} parent=1 // pred_region
      %s6222 = ssub.s32 32, 32
      %6223 = vsyncadd [#allocation5], %s6222
      %s6225 = sshll.u32 [#allocation29], 4
      %s6226 = int_to_ptr.vmem [resolvable:$true] %s6225
      %6228 = dma.vmem_to_hbm [thread:$0]  %s6226, 32, %s145, [#allocation5]
    $region357: #{diffusion_forward.1} parent=1 // pred_fallthru
      _
    // Predicated region
    $region358: #{diffusion_forward.1} parent=1 // pred_check
      _
    $region359: #{diffusion_forward.1} parent=1 // pred_check_branch
      %6230 = sbr.rel (0) target = $region361
    $region360: #{diffusion_forward.1} parent=1 // pred_region
      %6231 = dma.done [#allocation5], 32
    $region361: #{diffusion_forward.1} parent=1 // pred_fallthru
      _
    %6232 = vsyncpa [#allocation4], 1
    %6233 = vsyncpa [#allocation7], 1
    %6234 = vsyncpa [#allocation10], 1
    %6235 = vsyncpa [#allocation13], 1
    %6236 = vsyncpa [#allocation16], 1
    %6237 = vsyncpa [#allocation19], 1
    %6238 = vsyncpa [#allocation22], 1
    %6239 = vsyncpa [#allocation25], 1
    %6240 = vsyncpa [#allocation28], 1
    %6241 = vsyncpa [#allocation5], 1

</llo_original>
